<compile_context>
chip_gen: v5e
topology: v5e:2x2
jax: 0.10.0
libtpu: 0.0.40
codegen_flags: <defaults>
</compile_context>

<pallas_src>
import jax
import jax.numpy as jnp
from jax.experimental import pallas as pl
from jax.experimental.pallas import tpu as pltpu

M, D = 8, 128            # parameter shape per player per game pair
PAIRS_PER_STEP = 512     # game pairs per grid step -> 4096-row MXU passes, ~2-4 MiB/step
STEP_SIZE = 0.1          # ExtrapolatedObjective.step_size
# lola=False -> create_graph=False; irrelevant for forward numerics.


def _extrapolated_objective_kernel(x_ref, y_ref, a_ref, sg_ref, f1_ref):
    P = PAIRS_PER_STEP
    # Matmuls: operands may be bf16 (wrapper-cast); accumulate in f32 on the MXU.
    xa = jnp.dot(x_ref[...], a_ref[...], preferred_element_type=jnp.float32)   # x @ A
    ysg = jnp.dot(y_ref[...], sg_ref[...], preferred_element_type=jnp.float32)  # y @ (s*A^T A)

    y = y_ref[...].astype(jnp.float32)
    # (x + s*y@A^T) @ A = xa + ysg ;  y_new = y - s*xa
    prod = (xa + ysg) * (y - STEP_SIZE * xa)                   # (P*M, D) f32

    # Per-game-pair reduction. Sum the M=8 (sublane) axis first — cheap — so the
    # expensive cross-lane reduce only sees (P, D) instead of (P*M, D).
    prod3 = prod.reshape(P, M, D)                              # free regroup: (M, D) = native tile
    per_lane = jnp.sum(prod3, axis=1)                          # (P, D) sublane reduce
    f1_ref[...] = jnp.sum(per_lane, axis=1, keepdims=True)     # (P, 1); no lane repack


def precompute_scaled_gram(a, step_size=STEP_SIZE):
    """sG = step_size * A^T A, computed once (cache across calls in a training loop)."""
    g = jnp.dot(a.T, a, preferred_element_type=jnp.float32,
                precision=jax.lax.Precision.HIGHEST)
    return step_size * g


def extrapolated_objective(x, y, a, *, sg=None, compute_dtype=jnp.float32):
    """Batched extrapolated (extragradient) bilinear-game objective.

    x, y: (B, M, D) player parameters for B independent game pairs.
    a:    (D, D)    shared game matrix.
    sg:   optional precomputed step_size * A^T A (f32); computed here if None.
    compute_dtype: jnp.float32 (exact) or jnp.bfloat16 (faster; halves HBM bytes,
                   bf16-native MXU on v5e — looser numerics).
    Returns [f1, f2], each shape (B,): extrapolated player values per pair.
    """
    B = x.shape[0]
    if sg is None:
        sg = precompute_scaled_gram(a, STEP_SIZE)

    # Pad batch to a multiple of PAIRS_PER_STEP (padded pairs are zeros -> f1 = 0, sliced off).
    Bp = ((B + PAIRS_PER_STEP - 1) // PAIRS_PER_STEP) * PAIRS_PER_STEP
    if Bp != B:
        pad = Bp - B
        x = jnp.concatenate([x, jnp.zeros((pad, M, D), x.dtype)], axis=0)
        y = jnp.concatenate([y, jnp.zeros((pad, M, D), y.dtype)], axis=0)
    num_steps = Bp // PAIRS_PER_STEP

    # HBM-side dtype: bf16 here halves input bytes for the (mem-bound) kernel.
    x2 = x.reshape(Bp * M, D).astype(compute_dtype)
    y2 = y.reshape(Bp * M, D).astype(compute_dtype)
    a_c = a.astype(compute_dtype)
    sg_c = sg.astype(compute_dtype)

    isz = jnp.dtype(compute_dtype).itemsize
    flops = 4 * Bp * M * D * D + 6 * Bp * M * D
    bytes_accessed = isz * (2 * Bp * M * D + 2 * D * D) + 4 * Bp

    out = pl.pallas_call(
        _extrapolated_objective_kernel,
        out_shape=jax.ShapeDtypeStruct((Bp, 1), jnp.float32),
        grid_spec=pltpu.PrefetchScalarGridSpec(
            num_scalar_prefetch=0,
            grid=(num_steps,),
            in_specs=[
                pl.BlockSpec((PAIRS_PER_STEP * M, D), lambda i: (i, 0)),
                pl.BlockSpec((PAIRS_PER_STEP * M, D), lambda i: (i, 0)),
                pl.BlockSpec((D, D), lambda i: (0, 0)),   # A fetched once, VMEM-resident
                pl.BlockSpec((D, D), lambda i: (0, 0)),   # sG fetched once, VMEM-resident
            ],
            out_specs=pl.BlockSpec((PAIRS_PER_STEP, 1), lambda i: (i, 0)),
        ),
        compiler_params=pltpu.CompilerParams(
            # TODO(synk): verify in xprof that this shards across both v7x TensorCores;
            # if not, switch to an explicit core-split leading grid axis.
            dimension_semantics=("parallel",),
            vmem_limit_bytes=48 * 1024 * 1024,            # 512-pair block needs > scoped default
        ),
        cost_estimate=pl.CostEstimate(
            flops=flops, transcendentals=0, bytes_accessed=bytes_accessed),
    )(x2, y2, a_c, sg_c)

    f1 = out.reshape(Bp)[:B]
    return [f1, -f1]          # f2 = -f1 exactly; no second kernel output needed


# ---------------- pure-JAX reference (mirrors torch.autograd f32 semantics) -----
def _objective(params, a):
    x, y = params
    f1 = jnp.sum(jnp.dot(x, a, precision=jax.lax.Precision.HIGHEST) * y)
    return [f1, -f1]


def _reference_forward_single(x, y, a, step_size):
    # simultaneous_grad: each value differentiated w.r.t. its own parameters
    g_x = jax.grad(lambda xx: _objective([xx, y], a)[0])(x)
    g_y = jax.grad(lambda yy: _objective([x, yy], a)[1])(y)
    f1, f2 = _objective([x + step_size * g_x, y + step_size * g_y], a)
    return f1, f2


if __name__ == "__main__":
    B = 4 * PAIRS_PER_STEP     # 2048 pairs -> 4 grid steps (>= 2 per TensorCore on v7x)
    key = jax.random.PRNGKey(0)
    kx, ky, ka = jax.random.split(key, 3)
    x = (0.1 * jax.random.normal(kx, (B, M, D))).astype(jnp.float32)
    y = (0.1 * jax.random.normal(ky, (B, M, D))).astype(jnp.float32)
    a = (0.1 * jax.random.normal(ka, (D, D))).astype(jnp.float32)

    sg = precompute_scaled_gram(a)        # computed once; cached across calls in practice

    # f32 path (exact vs torch semantics)
    f1, f2 = extrapolated_objective(x, y, a, sg=sg)
    f1 = jax.block_until_ready(f1)
    f2 = jax.block_until_ready(f2)

    ref_f1, ref_f2 = jax.vmap(
        lambda xb, yb: _reference_forward_single(xb, yb, a, STEP_SIZE))(x, y)
    assert jnp.allclose(f1, ref_f1, rtol=1e-3, atol=3e-4), (f1[:4], ref_f1[:4])
    assert jnp.allclose(f2, ref_f2, rtol=1e-3, atol=3e-4), (f2[:4], ref_f2[:4])

    # bf16 path + non-multiple batch (exercises HBM-side cast and padding);
    # looser tolerance is the intentional speed/precision tradeoff.
    Bs = 600
    f1b, _ = extrapolated_objective(x[:Bs], y[:Bs], a, sg=sg,
                                    compute_dtype=jnp.bfloat16)
    f1b = jax.block_until_ready(f1b)
    assert f1b.shape == (Bs,)
    assert jnp.allclose(f1b, ref_f1[:Bs], rtol=3e-2, atol=3e-2), (f1b[:4], ref_f1[:4])

    print("KERNEL_OK")
</pallas_src>

<mosaic_0001>
module attributes {stable_mosaic.version = 11 : i64} {
  func.func @_extrapolated_objective_kernel(%arg0: i32, %arg1: memref<4096x128xf32, #tpu.memory_space<vmem>>, %arg2: memref<4096x128xf32, #tpu.memory_space<vmem>>, %arg3: memref<128x128xf32, #tpu.memory_space<vmem>>, %arg4: memref<128x128xf32, #tpu.memory_space<vmem>>, %arg5: memref<512x1xf32, #tpu.memory_space<vmem>>) attributes {dimension_semantics = [#tpu.dimension_semantics<parallel>], iteration_bounds = array<i64: 4>, scalar_prefetch = 0 : i64, scratch_operands = 0 : i64, tpu.core_type = #tpu.core_type<tc>, window_params = [{transform_indices = @transform_0, window_bounds = array<i64: 4096, 128>}, {transform_indices = @transform_1, window_bounds = array<i64: 4096, 128>}, {pipeline_mode = #tpu.pipeline_mode<synchronous>, transform_indices = @transform_2, window_bounds = array<i64: 128, 128>}, {pipeline_mode = #tpu.pipeline_mode<synchronous>, transform_indices = @transform_3, window_bounds = array<i64: 128, 128>}, {transform_indices = @transform_4, window_bounds = array<i64: 512, 1>}]} {
    %c0 = arith.constant 0 : index
    %c0_0 = arith.constant 0 : index
    %0 = vector.load %arg1[%c0, %c0_0] : memref<4096x128xf32, #tpu.memory_space<vmem>>, vector<4096x128xf32>
    %c0_1 = arith.constant 0 : index
    %c0_2 = arith.constant 0 : index
    %1 = vector.load %arg3[%c0_1, %c0_2] : memref<128x128xf32, #tpu.memory_space<vmem>>, vector<128x128xf32>
    %cst = arith.constant dense<0.000000e+00> : vector<4096x128xf32>
    %2 = tpu.matmul %0, %1, %cst {dimension_numbers = #tpu.dot_dimension_numbers<[1], [0], [0], [1], [0, 0, 1, 1], [], []>} : vector<4096x128xf32>, vector<128x128xf32>, vector<4096x128xf32> -> vector<4096x128xf32>
    %c0_3 = arith.constant 0 : index
    %c0_4 = arith.constant 0 : index
    %3 = vector.load %arg2[%c0_3, %c0_4] : memref<4096x128xf32, #tpu.memory_space<vmem>>, vector<4096x128xf32>
    %c0_5 = arith.constant 0 : index
    %c0_6 = arith.constant 0 : index
    %4 = vector.load %arg4[%c0_5, %c0_6] : memref<128x128xf32, #tpu.memory_space<vmem>>, vector<128x128xf32>
    %cst_7 = arith.constant dense<0.000000e+00> : vector<4096x128xf32>
    %5 = tpu.matmul %3, %4, %cst_7 {dimension_numbers = #tpu.dot_dimension_numbers<[1], [0], [0], [1], [0, 0, 1, 1], [], []>} : vector<4096x128xf32>, vector<128x128xf32>, vector<4096x128xf32> -> vector<4096x128xf32>
    %c0_8 = arith.constant 0 : index
    %c0_9 = arith.constant 0 : index
    %6 = vector.load %arg2[%c0_8, %c0_9] : memref<4096x128xf32, #tpu.memory_space<vmem>>, vector<4096x128xf32>
    %7 = arith.addf %2, %5 : vector<4096x128xf32>
    %cst_10 = arith.constant 1.000000e-01 : f32
    %8 = vector.broadcast %cst_10 : f32 to vector<4096x128xf32>
    %9 = arith.mulf %8, %2 : vector<4096x128xf32>
    %10 = arith.subf %6, %9 : vector<4096x128xf32>
    %11 = arith.mulf %7, %10 : vector<4096x128xf32>
    %12 = vector.shape_cast %11 : vector<4096x128xf32> to vector<512x8x128xf32>
    %cst_11 = arith.constant dense<0.000000e+00> : vector<512x128xf32>
    %13 = vector.multi_reduction <add>, %12, %cst_11 [1] : vector<512x8x128xf32> to vector<512x128xf32>
    %cst_12 = arith.constant dense<0.000000e+00> : vector<512xf32>
    %14 = vector.multi_reduction <add>, %13, %cst_12 [1] : vector<512x128xf32> to vector<512xf32>
    %15 = vector.shape_cast %14 : vector<512xf32> to vector<512x1xf32>
    %c0_13 = arith.constant 0 : index
    %c0_14 = arith.constant 0 : index
    %16 = vector.load %arg5[%c0_13, %c0_14] : memref<512x1xf32, #tpu.memory_space<vmem>>, vector<512x1xf32>
    tpu.vector_store %arg5[%c0_13, %c0_14], %15 {strides = array<i32>} : memref<512x1xf32, #tpu.memory_space<vmem>>, vector<512x1xf32>,
    return
  }
  func.func @transform_0(%arg0: i32) -> (i32, i32) {
    %c0_i32 = arith.constant 0 : i32
    %c0_i32_0 = arith.constant 0 : i32
    return %arg0, %c0_i32 : i32, i32
  }
  func.func @transform_1(%arg0: i32) -> (i32, i32) {
    %c0_i32 = arith.constant 0 : i32
    %c0_i32_0 = arith.constant 0 : i32
    return %arg0, %c0_i32 : i32, i32
  }
  func.func @transform_2(%arg0: i32) -> (i32, i32) {
    %c0_i32 = arith.constant 0 : i32
    %c0_i32_0 = arith.constant 0 : i32
    %c0_i32_1 = arith.constant 0 : i32
    return %c0_i32, %c0_i32_0 : i32, i32
  }
  func.func @transform_3(%arg0: i32) -> (i32, i32) {
    %c0_i32 = arith.constant 0 : i32
    %c0_i32_0 = arith.constant 0 : i32
    %c0_i32_1 = arith.constant 0 : i32
    return %c0_i32, %c0_i32_0 : i32, i32
  }
  func.func @transform_4(%arg0: i32) -> (i32, i32) {
    %c0_i32 = arith.constant 0 : i32
    %c0_i32_0 = arith.constant 0 : i32
    return %arg0, %c0_i32 : i32, i32
  }
}

</mosaic_0001>

<llo_original>
// kernel: tpu_custom_call.1
$region0: #{tpu_custom_call.1}
  #allocation0 [shape = 'u32[]', space=smem, size = 0x4, offset = 0x4, fixed_abs, tag = 'smem constant byte address 0x4 - core index']
  #allocation1 [shape = 'u32[72,128]{1,0:T(1,128)}', space=vmem, size = 0x9000, scoped, tag = 'internal scratch']
  %s0 = inlined_call_operand.hbm [shape: f32[16384,128], index: 0, kind: input, shape index: {}]
  %s1 = inlined_call_operand.hbm [shape: f32[16384,128], index: 1, kind: input, shape index: {}]
  %s2 = inlined_call_operand.hbm [shape: f32[128,128], index: 2, kind: input, shape index: {}]
  %s3 = inlined_call_operand.hbm [shape: f32[128,128], index: 3, kind: input, shape index: {}]
  %s4 = inlined_call_operand.vmem [shape: f32[2048,1], index: 4, kind: output, shape index: {}]
  %s5 = sld [smem:[#allocation0]]
  $region65: #{tpu_custom_call.1} parent=0
    _
  %s7 = ssub.s32 1, %s5
  %s8 = scalar_select 0, %s7, %s5
  $region1: #{tpu_custom_call.1} parent=0
    #allocation2 [shape = 'u8[4194304]{0}', space=vmem, size = 0x400000, scoped, tag = 'input window, operand 0']
    #allocation3 [shape = 's32[2]{0}', space=sflag, size = 0x8, scoped, tag = 'scoped memory for tpu_custom_call.1']
    #allocation4 [shape = 'u8[4194304]{0}', space=vmem, size = 0x400000, scoped, tag = 'input window, operand 1']
    #allocation5 [shape = 's32[2]{0}', space=sflag, size = 0x8, scoped, tag = 'scoped memory for tpu_custom_call.1']
    #allocation6 [shape = 'u8[65536]{0}', space=vmem, size = 0x10000, scoped, tag = 'input window, operand 2, single buffered']
    #allocation7 [shape = 'u8[65536]{0}', space=vmem, size = 0x10000, scoped, tag = 'input window, operand 3, single buffered']
    #allocation8 [shape = 's32[1]{0}', space=sflag, size = 0x4, scoped, tag = 'scoped memory for tpu_custom_call.1']
    %9 = vsyncpa [#allocation3], 0
    %s10 = scalar_lea.sflag [#allocation3], 1
    %11 = vsyncpa %s10, 0
    %12 = vsyncpa [#allocation5], 0
    %s13 = scalar_lea.sflag [#allocation5], 1
    %14 = vsyncpa %s13, 0
    %15 = vsyncpa [#allocation8], 0
    loop: start=0, step=1, limit=6
    $region2: #{tpu_custom_call.1} parent=1 // loop_pre_header
      _
    $region3: #{tpu_custom_call.1} parent=1 // loop_header
      %s17 = sphi 0, %s21
      %p18 = scmp.ge.s32.totalorder %s17, 6
      %s27 = sphi 0, %s29
      %s30 = sphi 0, %s27
      %s31 = sphi 0, %s30
      %s47 = sphi 0, %s31
      %s53 = sphi 0, %s55
      %s56 = sphi 0, %s53
      %s57 = sphi 0, %s56
      %s73 = sphi 0, %s57
      %s77 = sphi 0, %s77
      %s79 = sphi 0, %s77
      %s80 = sphi 0, %s79
      %s94 = sphi 0, %s80
      %s98 = sphi 0, %s98
      %s100 = sphi 0, %s98
      %s101 = sphi 0, %s100
      %s115 = sphi 0, %s101
      %s121 = sphi 0, %s123
      %s124 = sphi 0, %s121
      %s125 = sphi 0, %s124
      %s141 = sphi 0, %s125
    $region4: #{tpu_custom_call.1} parent=1 // loop_header_branch
      %20 = sbr.rel (%p18) target = $region8
    $region5: #{tpu_custom_call.1} parent=1 // loop_body
      %s22 = ssub.s32 %s17, 1
      %s23 = ssub.s32 %s17, 2
      %s24 = sadd.s32 %s17, 1
      %s25 = ssub.s32 %s17, %s24
      %p26 = scmp.eq.s32.totalorder %s25, 0
      %s28 = sadd.s32 %s27, 1
      %s29 = scalar_select %p26, %s27, %s28
      %p32 = pneg %p26
      %p33 = scmp.eq.s32.totalorder %s17, 3
      %p34 = por %p32, %p33
      %p35 = scmp.ne.s32.totalorder %s27, %s30
      %p36 = scmp.eq.s32.totalorder %s17, 0
      %p37 = por %p35, %p36
      %p38 = scmp.ne.s32.totalorder %s27, %s30
      %p39 = scmp.eq.s32.totalorder %s22, 3
      %p40 = por %p38, %p39
      %p41 = scmp.ne.s32.totalorder %s30, %s31
      %p42 = scmp.eq.s32.totalorder %s22, 0
      %p43 = por %p41, %p42
      %p44 = scmp.ne.s32.totalorder %s30, %s31
      %p45 = scmp.eq.s32.totalorder %s23, 3
      %p46 = por %p44, %p45
      %p48 = scmp.ne.s32.totalorder %s31, %s47
      %p49 = scmp.eq.s32.totalorder %s23, 0
      %p50 = por %p48, %p49
      %s51 = ssub.s32 %s17, %s24
      %p52 = scmp.eq.s32.totalorder %s51, 0
      %s54 = sadd.s32 %s53, 1
      %s55 = scalar_select %p52, %s53, %s54
      %p58 = pneg %p52
      %p59 = scmp.eq.s32.totalorder %s17, 3
      %p60 = por %p58, %p59
      %p61 = scmp.ne.s32.totalorder %s53, %s56
      %p62 = scmp.eq.s32.totalorder %s17, 0
      %p63 = por %p61, %p62
      %p64 = scmp.ne.s32.totalorder %s53, %s56
      %p65 = scmp.eq.s32.totalorder %s22, 3
      %p66 = por %p64, %p65
      %p67 = scmp.ne.s32.totalorder %s56, %s57
      %p68 = scmp.eq.s32.totalorder %s22, 0
      %p69 = por %p67, %p68
      %p70 = scmp.ne.s32.totalorder %s56, %s57
      %p71 = scmp.eq.s32.totalorder %s23, 3
      %p72 = por %p70, %p71
      %p74 = scmp.ne.s32.totalorder %s57, %s73
      %p75 = scmp.eq.s32.totalorder %s23, 0
      %p76 = por %p74, %p75
      %s78 = sadd.s32 %s77, 1
      %p81 = scmp.eq.s32.totalorder %s17, 3
      %p82 = scmp.ne.s32.totalorder %s77, %s79
      %p83 = scmp.eq.s32.totalorder %s17, 0
      %p84 = por %p82, %p83
      %p85 = scmp.ne.s32.totalorder %s77, %s79
      %p86 = scmp.eq.s32.totalorder %s22, 3
      %p87 = por %p85, %p86
      %p88 = scmp.ne.s32.totalorder %s79, %s80
      %p89 = scmp.eq.s32.totalorder %s22, 0
      %p90 = por %p88, %p89
      %p91 = scmp.ne.s32.totalorder %s79, %s80
      %p92 = scmp.eq.s32.totalorder %s23, 3
      %p93 = por %p91, %p92
      %p95 = scmp.ne.s32.totalorder %s80, %s94
      %p96 = scmp.eq.s32.totalorder %s23, 0
      %p97 = por %p95, %p96
      %s99 = sadd.s32 %s98, 1
      %p102 = scmp.eq.s32.totalorder %s17, 3
      %p103 = scmp.ne.s32.totalorder %s98, %s100
      %p104 = scmp.eq.s32.totalorder %s17, 0
      %p105 = por %p103, %p104
      %p106 = scmp.ne.s32.totalorder %s98, %s100
      %p107 = scmp.eq.s32.totalorder %s22, 3
      %p108 = por %p106, %p107
      %p109 = scmp.ne.s32.totalorder %s100, %s101
      %p110 = scmp.eq.s32.totalorder %s22, 0
      %p111 = por %p109, %p110
      %p112 = scmp.ne.s32.totalorder %s100, %s101
      %p113 = scmp.eq.s32.totalorder %s23, 3
      %p114 = por %p112, %p113
      %p116 = scmp.ne.s32.totalorder %s101, %s115
      %p117 = scmp.eq.s32.totalorder %s23, 0
      %p118 = por %p116, %p117
      %s119 = ssub.s32 %s17, %s24
      %p120 = scmp.eq.s32.totalorder %s119, 0
      %s122 = sadd.s32 %s121, 1
      %s123 = scalar_select %p120, %s121, %s122
      %p126 = pneg %p120
      %p127 = scmp.eq.s32.totalorder %s17, 3
      %p128 = por %p126, %p127
      %p129 = scmp.ne.s32.totalorder %s121, %s124
      %p130 = scmp.eq.s32.totalorder %s17, 0
      %p131 = por %p129, %p130
      %p132 = scmp.ne.s32.totalorder %s121, %s124
      %p133 = scmp.eq.s32.totalorder %s22, 3
      %p134 = por %p132, %p133
      %p135 = scmp.ne.s32.totalorder %s124, %s125
      %p136 = scmp.eq.s32.totalorder %s22, 0
      %p137 = por %p135, %p136
      %p138 = scmp.ne.s32.totalorder %s124, %s125
      %p139 = scmp.eq.s32.totalorder %s23, 3
      %p140 = por %p138, %p139
      %p142 = scmp.ne.s32.totalorder %s125, %s141
      %p143 = scmp.eq.s32.totalorder %s23, 0
      %p144 = por %p142, %p143
      %p145 = scmp.le.s32.totalorder 1, %s17
      %p146 = scmp.lt.s32.totalorder %s17, 5
      %p147 = pnand %p145, %p146
      %p148 = pneg %p147
      // Predicated region
      $region9: #{tpu_custom_call.1} parent=5 // pred_check
        _
      $region10: #{tpu_custom_call.1} parent=5 // pred_check_branch
        %150 = sbr.rel (%p147) target = $region12
      $region11: #{tpu_custom_call.1} parent=5 // pred_region
        %s151 = ssub.s32 %s17, 1
        // Predicated region
        $region13: #{tpu_custom_call.1} parent=11 // pred_check
          %p152 = pneg %p90
        $region14: #{tpu_custom_call.1} parent=11 // pred_check_branch
          %154 = sbr.rel (%p152) target = $region16
        $region15: #{tpu_custom_call.1} parent=11 // pred_region
          %156 = vsyncadd [#allocation5], 0
          %s157 = sshll.u32 %s2, 4
          %s158 = int_to_ptr.hbm [resolvable:$true] %s157
          %s159 = sshll.u32 [#allocation6], 4
          %s160 = int_to_ptr.vmem [resolvable:$true] %s159
          %165 = dma.hbm_to_vmem [thread:$0]  %s158, 2048, %s160, [#allocation5], 128, 128, 8
        $region16: #{tpu_custom_call.1} parent=11 // pred_fallthru
          _
        // Predicated region
        $region17: #{tpu_custom_call.1} parent=11 // pred_check
          %p166 = pneg %p111
        $region18: #{tpu_custom_call.1} parent=11 // pred_check_branch
          %168 = sbr.rel (%p166) target = $region20
        $region19: #{tpu_custom_call.1} parent=11 // pred_region
          %170 = vsyncadd [#allocation8], 0
          %s171 = sshll.u32 %s3, 4
          %s172 = int_to_ptr.hbm [resolvable:$true] %s171
          %s173 = sshll.u32 [#allocation7], 4
          %s174 = int_to_ptr.vmem [resolvable:$true] %s173
          %179 = dma.hbm_to_vmem [thread:$0]  %s172, 2048, %s174, [#allocation8], 128, 128, 8
        $region20: #{tpu_custom_call.1} parent=11 // pred_fallthru
          _
      $region12: #{tpu_custom_call.1} parent=5 // pred_fallthru
        _
      %p180 = scmp.lt.s32.totalorder %s17, 4
      // Predicated region
      $region21: #{tpu_custom_call.1} parent=5 // pred_check
        %p181 = pneg %p180
      $region22: #{tpu_custom_call.1} parent=5 // pred_check_branch
        %183 = sbr.rel (%p181) target = $region24
      $region23: #{tpu_custom_call.1} parent=5 // pred_region
        // Predicated region
        $region25: #{tpu_custom_call.1} parent=23 // pred_check
          %p184 = pneg %p37
        $region26: #{tpu_custom_call.1} parent=23 // pred_check_branch
          %186 = sbr.rel (%p184) target = $region28
        $region27: #{tpu_custom_call.1} parent=23 // pred_region
          %s187 = sand.u32 %s27, 1
          %s188 = scalar_lea.sflag [#allocation3], %s187
          %s189 = sand.u32 %s27, 1
          %s190 = smul.addr %s189, 4096
          %s191 = scalar_lea.vmem [#allocation2], %s190
          %s192 = smul.u32 512, %s17
          %194 = vsyncadd %s188, 0
          %s195 = smul.addr %s192, 8
          %s196 = scalar_lea.hbm %s0, %s195
          %s197 = sshll.u32 %s196, 4
          %s198 = int_to_ptr.hbm [resolvable:$true] %s197
          %s199 = sshll.u32 %s191, 4
          %s200 = int_to_ptr.vmem [resolvable:$true] %s199
          %205 = dma.hbm_to_vmem [thread:$0]  %s198, 65536, %s200, %s188, 128, 128, 8
        $region28: #{tpu_custom_call.1} parent=23 // pred_fallthru
          _
        // Predicated region
        $region29: #{tpu_custom_call.1} parent=23 // pred_check
          %p206 = pneg %p63
        $region30: #{tpu_custom_call.1} parent=23 // pred_check_branch
          %208 = sbr.rel (%p206) target = $region32
        $region31: #{tpu_custom_call.1} parent=23 // pred_region
          %s209 = sand.u32 %s17, 1
          %s210 = scalar_lea.sflag [#allocation5], %s209
          %s211 = sand.u32 %s53, 1
          %s212 = smul.addr %s211, 4096
          %s213 = scalar_lea.vmem [#allocation4], %s212
          %s214 = smul.u32 512, %s17
          %216 = vsyncadd %s210, 0
          %s217 = smul.addr %s214, 8
          %s218 = scalar_lea.hbm %s1, %s217
          %s219 = sshll.u32 %s218, 4
          %s220 = int_to_ptr.hbm [resolvable:$true] %s219
          %s221 = sshll.u32 %s213, 4
          %s222 = int_to_ptr.vmem [resolvable:$true] %s221
          %227 = dma.hbm_to_vmem [thread:$0]  %s220, 65536, %s222, %s210, 128, 128, 8
        $region32: #{tpu_custom_call.1} parent=23 // pred_fallthru
          _
      $region24: #{tpu_custom_call.1} parent=5 // pred_fallthru
        _
      %p228 = scmp.le.s32.totalorder 1, %s17
      %p229 = scmp.lt.s32.totalorder %s17, 5
      %p230 = pnand %p228, %p229
      %p231 = pneg %p230
      // Predicated region
      $region33: #{tpu_custom_call.1} parent=5 // pred_check
        _
      $region34: #{tpu_custom_call.1} parent=5 // pred_check_branch
        %233 = sbr.rel (%p230) target = $region36
      $region35: #{tpu_custom_call.1} parent=5 // pred_region
        %s234 = ssub.s32 %s17, 1
        %s235 = sand.u32 %s30, 1
        %s236 = scalar_lea.sflag [#allocation3], %s235
        %s237 = sand.u32 %s30, 1
        %s238 = smul.addr %s237, 4096
        %s239 = scalar_lea.vmem [#allocation2], %s238
        // Predicated region
        $region37: #{tpu_custom_call.1} parent=35 // pred_check
          %p240 = pneg %p43
        $region38: #{tpu_custom_call.1} parent=35 // pred_check_branch
          %242 = sbr.rel (%p240) target = $region40
        $region39: #{tpu_custom_call.1} parent=35 // pred_region
          %244 = dma.done %s236, 65536
        $region40: #{tpu_custom_call.1} parent=35 // pred_fallthru
          _
        %s245 = sand.u32 %s22, 1
        %s246 = scalar_lea.sflag [#allocation5], %s245
        %s247 = sand.u32 %s56, 1
        %s248 = smul.addr %s247, 4096
        %s249 = scalar_lea.vmem [#allocation4], %s248
        // Predicated region
        $region41: #{tpu_custom_call.1} parent=35 // pred_check
          %p250 = pneg %p69
        $region42: #{tpu_custom_call.1} parent=35 // pred_check_branch
          %252 = sbr.rel (%p250) target = $region44
        $region43: #{tpu_custom_call.1} parent=35 // pred_region
          %254 = dma.done %s246, 65536
        $region44: #{tpu_custom_call.1} parent=35 // pred_fallthru
          _
        // Predicated region
        $region45: #{tpu_custom_call.1} parent=35 // pred_check
          %p255 = pneg %p90
        $region46: #{tpu_custom_call.1} parent=35 // pred_check_branch
          %257 = sbr.rel (%p255) target = $region48
        $region47: #{tpu_custom_call.1} parent=35 // pred_region
          %259 = dma.done [#allocation5], 2048
        $region48: #{tpu_custom_call.1} parent=35 // pred_fallthru
          _
        // Predicated region
        $region49: #{tpu_custom_call.1} parent=35 // pred_check
          %p260 = pneg %p111
        $region50: #{tpu_custom_call.1} parent=35 // pred_check_branch
          %262 = sbr.rel (%p260) target = $region52
        $region51: #{tpu_custom_call.1} parent=35 // pred_region
          %264 = dma.done [#allocation8], 2048
        $region52: #{tpu_custom_call.1} parent=35 // pred_fallthru
          _
        %s265 = sand.u32 %s30, 1
        %s266 = scalar_lea.sflag [#allocation3], %s265
        %s267 = sand.u32 %s30, 1
        %s268 = smul.addr %s267, 4096
        %s269 = scalar_lea.vmem [#allocation2], %s268
        %p270 = pneg %p43
        %p271 = pneg %p40
        %s272 = sand.u32 %s22, 1
        %s273 = scalar_lea.sflag [#allocation5], %s272
        %s274 = sand.u32 %s56, 1
        %s275 = smul.addr %s274, 4096
        %s276 = scalar_lea.vmem [#allocation4], %s275
        %p277 = pneg %p69
        %p278 = pneg %p66
        %p279 = pneg %p90
        %p280 = pneg %p87
        %p281 = pneg %p111
        %p282 = pneg %p108
        %p283 = pneg %p137
        %p284 = pneg %p134
        %s285 = smul.u32 64, %s22
        %p286 = scmp.lt.s32.totalorder %s285, 255
        %s287 = scalar_select %p286, %s285, 255
        %s288 = smul.addr %s287, 8
        %s289 = scalar_lea.vmem %s4, %s288
        %s290 = smul.u32 512, %s22
        %s291 = smul.u32 512, %s22
        %s292 = smul.u32 64, %s22
        %p293 = scmp.lt.s32.totalorder %s292, 255
        %s294 = scalar_select %p293, %s292, 255
        %s295 = smul.addr %s294, 8
        %s296 = scalar_lea.vmem %s4, %s295
        %s297 = smul.u32 64, %s22
        %v298 = vld [vmem:[%s239] sm:$0xff]
        %v299 = vld [vmem:[%s239 + $0x8] sm:$0xff]
        %v300 = vld [vmem:[%s239 + $0x10] sm:$0xff]
        %v301 = vld [vmem:[%s239 + $0x18] sm:$0xff]
        %v302 = vld [vmem:[%s239 + $0x20] sm:$0xff]
        %v303 = vld [vmem:[%s239 + $0x28] sm:$0xff]
        %v304 = vld [vmem:[%s239 + $0x30] sm:$0xff]
        %v305 = vld [vmem:[%s239 + $0x38] sm:$0xff]
        %v306 = vld [vmem:[%s239 + $0x40] sm:$0xff]
        %v307 = vld [vmem:[%s239 + $0x48] sm:$0xff]
        %v308 = vld [vmem:[%s239 + $0x50] sm:$0xff]
        %v309 = vld [vmem:[%s239 + $0x58] sm:$0xff]
        %v310 = vld [vmem:[%s239 + $0x60] sm:$0xff]
        %v311 = vld [vmem:[%s239 + $0x68] sm:$0xff]
        %v312 = vld [vmem:[%s239 + $0x70] sm:$0xff]
        %v313 = vld [vmem:[%s239 + $0x78] sm:$0xff]
        %v314 = vld [vmem:[%s239 + $0x80] sm:$0xff]
        %v315 = vld [vmem:[%s239 + $0x88] sm:$0xff]
        %v316 = vld [vmem:[%s239 + $0x90] sm:$0xff]
        %v317 = vld [vmem:[%s239 + $0x98] sm:$0xff]
        %v318 = vld [vmem:[%s239 + $0xa0] sm:$0xff]
        %v319 = vld [vmem:[%s239 + $0xa8] sm:$0xff]
        %v320 = vld [vmem:[%s239 + $0xb0] sm:$0xff]
        %v321 = vld [vmem:[%s239 + $0xb8] sm:$0xff]
        %v322 = vld [vmem:[%s239 + $0xc0] sm:$0xff]
        %v323 = vld [vmem:[%s239 + $0xc8] sm:$0xff]
        %v324 = vld [vmem:[%s239 + $0xd0] sm:$0xff]
        %v325 = vld [vmem:[%s239 + $0xd8] sm:$0xff]
        %v326 = vld [vmem:[%s239 + $0xe0] sm:$0xff]
        %v327 = vld [vmem:[%s239 + $0xe8] sm:$0xff]
        %v328 = vld [vmem:[%s239 + $0xf0] sm:$0xff]
        %v329 = vld [vmem:[%s239 + $0xf8] sm:$0xff]
        %v330 = vld [vmem:[%s239 + $0x100] sm:$0xff]
        %v331 = vld [vmem:[%s239 + $0x108] sm:$0xff]
        %v332 = vld [vmem:[%s239 + $0x110] sm:$0xff]
        %v333 = vld [vmem:[%s239 + $0x118] sm:$0xff]
        %v334 = vld [vmem:[%s239 + $0x120] sm:$0xff]
        %v335 = vld [vmem:[%s239 + $0x128] sm:$0xff]
        %v336 = vld [vmem:[%s239 + $0x130] sm:$0xff]
        %v337 = vld [vmem:[%s239 + $0x138] sm:$0xff]
        %v338 = vld [vmem:[%s239 + $0x140] sm:$0xff]
        %v339 = vld [vmem:[%s239 + $0x148] sm:$0xff]
        %v340 = vld [vmem:[%s239 + $0x150] sm:$0xff]
        %v341 = vld [vmem:[%s239 + $0x158] sm:$0xff]
        %v342 = vld [vmem:[%s239 + $0x160] sm:$0xff]
        %v343 = vld [vmem:[%s239 + $0x168] sm:$0xff]
        %v344 = vld [vmem:[%s239 + $0x170] sm:$0xff]
        %v345 = vld [vmem:[%s239 + $0x178] sm:$0xff]
        %v346 = vld [vmem:[%s239 + $0x180] sm:$0xff]
        %v347 = vld [vmem:[%s239 + $0x188] sm:$0xff]
        %v348 = vld [vmem:[%s239 + $0x190] sm:$0xff]
        %v349 = vld [vmem:[%s239 + $0x198] sm:$0xff]
        %v350 = vld [vmem:[%s239 + $0x1a0] sm:$0xff]
        %v351 = vld [vmem:[%s239 + $0x1a8] sm:$0xff]
        %v352 = vld [vmem:[%s239 + $0x1b0] sm:$0xff]
        %v353 = vld [vmem:[%s239 + $0x1b8] sm:$0xff]
        %v354 = vld [vmem:[%s239 + $0x1c0] sm:$0xff]
        %v355 = vld [vmem:[%s239 + $0x1c8] sm:$0xff]
        %v356 = vld [vmem:[%s239 + $0x1d0] sm:$0xff]
        %v357 = vld [vmem:[%s239 + $0x1d8] sm:$0xff]
        %v358 = vld [vmem:[%s239 + $0x1e0] sm:$0xff]
        %v359 = vld [vmem:[%s239 + $0x1e8] sm:$0xff]
        %v360 = vld [vmem:[%s239 + $0x1f0] sm:$0xff]
        %v361 = vld [vmem:[%s239 + $0x1f8] sm:$0xff]
        %v362 = vld [vmem:[%s239 + $0x200] sm:$0xff]
        %v363 = vld [vmem:[%s239 + $0x208] sm:$0xff]
        %v364 = vld [vmem:[%s239 + $0x210] sm:$0xff]
        %v365 = vld [vmem:[%s239 + $0x218] sm:$0xff]
        %v366 = vld [vmem:[%s239 + $0x220] sm:$0xff]
        %v367 = vld [vmem:[%s239 + $0x228] sm:$0xff]
        %v368 = vld [vmem:[%s239 + $0x230] sm:$0xff]
        %v369 = vld [vmem:[%s239 + $0x238] sm:$0xff]
        %v370 = vld [vmem:[%s239 + $0x240] sm:$0xff]
        %v371 = vld [vmem:[%s239 + $0x248] sm:$0xff]
        %v372 = vld [vmem:[%s239 + $0x250] sm:$0xff]
        %v373 = vld [vmem:[%s239 + $0x258] sm:$0xff]
        %v374 = vld [vmem:[%s239 + $0x260] sm:$0xff]
        %v375 = vld [vmem:[%s239 + $0x268] sm:$0xff]
        %v376 = vld [vmem:[%s239 + $0x270] sm:$0xff]
        %v377 = vld [vmem:[%s239 + $0x278] sm:$0xff]
        %v378 = vld [vmem:[%s239 + $0x280] sm:$0xff]
        %v379 = vld [vmem:[%s239 + $0x288] sm:$0xff]
        %v380 = vld [vmem:[%s239 + $0x290] sm:$0xff]
        %v381 = vld [vmem:[%s239 + $0x298] sm:$0xff]
        %v382 = vld [vmem:[%s239 + $0x2a0] sm:$0xff]
        %v383 = vld [vmem:[%s239 + $0x2a8] sm:$0xff]
        %v384 = vld [vmem:[%s239 + $0x2b0] sm:$0xff]
        %v385 = vld [vmem:[%s239 + $0x2b8] sm:$0xff]
        %v386 = vld [vmem:[%s239 + $0x2c0] sm:$0xff]
        %v387 = vld [vmem:[%s239 + $0x2c8] sm:$0xff]
        %v388 = vld [vmem:[%s239 + $0x2d0] sm:$0xff]
        %v389 = vld [vmem:[%s239 + $0x2d8] sm:$0xff]
        %v390 = vld [vmem:[%s239 + $0x2e0] sm:$0xff]
        %v391 = vld [vmem:[%s239 + $0x2e8] sm:$0xff]
        %v392 = vld [vmem:[%s239 + $0x2f0] sm:$0xff]
        %v393 = vld [vmem:[%s239 + $0x2f8] sm:$0xff]
        %v394 = vld [vmem:[%s239 + $0x300] sm:$0xff]
        %v395 = vld [vmem:[%s239 + $0x308] sm:$0xff]
        %v396 = vld [vmem:[%s239 + $0x310] sm:$0xff]
        %v397 = vld [vmem:[%s239 + $0x318] sm:$0xff]
        %v398 = vld [vmem:[%s239 + $0x320] sm:$0xff]
        %v399 = vld [vmem:[%s239 + $0x328] sm:$0xff]
        %v400 = vld [vmem:[%s239 + $0x330] sm:$0xff]
        %v401 = vld [vmem:[%s239 + $0x338] sm:$0xff]
        %v402 = vld [vmem:[%s239 + $0x340] sm:$0xff]
        %v403 = vld [vmem:[%s239 + $0x348] sm:$0xff]
        %v404 = vld [vmem:[%s239 + $0x350] sm:$0xff]
        %v405 = vld [vmem:[%s239 + $0x358] sm:$0xff]
        %v406 = vld [vmem:[%s239 + $0x360] sm:$0xff]
        %v407 = vld [vmem:[%s239 + $0x368] sm:$0xff]
        %v408 = vld [vmem:[%s239 + $0x370] sm:$0xff]
        %v409 = vld [vmem:[%s239 + $0x378] sm:$0xff]
        %v410 = vld [vmem:[%s239 + $0x380] sm:$0xff]
        %v411 = vld [vmem:[%s239 + $0x388] sm:$0xff]
        %v412 = vld [vmem:[%s239 + $0x390] sm:$0xff]
        %v413 = vld [vmem:[%s239 + $0x398] sm:$0xff]
        %v414 = vld [vmem:[%s239 + $0x3a0] sm:$0xff]
        %v415 = vld [vmem:[%s239 + $0x3a8] sm:$0xff]
        %v416 = vld [vmem:[%s239 + $0x3b0] sm:$0xff]
        %v417 = vld [vmem:[%s239 + $0x3b8] sm:$0xff]
        %v418 = vld [vmem:[%s239 + $0x3c0] sm:$0xff]
        %v419 = vld [vmem:[%s239 + $0x3c8] sm:$0xff]
        %v420 = vld [vmem:[%s239 + $0x3d0] sm:$0xff]
        %v421 = vld [vmem:[%s239 + $0x3d8] sm:$0xff]
        %v422 = vld [vmem:[%s239 + $0x3e0] sm:$0xff]
        %v423 = vld [vmem:[%s239 + $0x3e8] sm:$0xff]
        %v424 = vld [vmem:[%s239 + $0x3f0] sm:$0xff]
        %v425 = vld [vmem:[%s239 + $0x3f8] sm:$0xff]
        %v426 = vld [vmem:[%s239 + $0x400] sm:$0xff]
        %v427 = vld [vmem:[%s239 + $0x408] sm:$0xff]
        %v428 = vld [vmem:[%s239 + $0x410] sm:$0xff]
        %v429 = vld [vmem:[%s239 + $0x418] sm:$0xff]
        %v430 = vld [vmem:[%s239 + $0x420] sm:$0xff]
        %v431 = vld [vmem:[%s239 + $0x428] sm:$0xff]
        %v432 = vld [vmem:[%s239 + $0x430] sm:$0xff]
        %v433 = vld [vmem:[%s239 + $0x438] sm:$0xff]
        %v434 = vld [vmem:[%s239 + $0x440] sm:$0xff]
        %v435 = vld [vmem:[%s239 + $0x448] sm:$0xff]
        %v436 = vld [vmem:[%s239 + $0x450] sm:$0xff]
        %v437 = vld [vmem:[%s239 + $0x458] sm:$0xff]
        %v438 = vld [vmem:[%s239 + $0x460] sm:$0xff]
        %v439 = vld [vmem:[%s239 + $0x468] sm:$0xff]
        %v440 = vld [vmem:[%s239 + $0x470] sm:$0xff]
        %v441 = vld [vmem:[%s239 + $0x478] sm:$0xff]
        %v442 = vld [vmem:[%s239 + $0x480] sm:$0xff]
        %v443 = vld [vmem:[%s239 + $0x488] sm:$0xff]
        %v444 = vld [vmem:[%s239 + $0x490] sm:$0xff]
        %v445 = vld [vmem:[%s239 + $0x498] sm:$0xff]
        %v446 = vld [vmem:[%s239 + $0x4a0] sm:$0xff]
        %v447 = vld [vmem:[%s239 + $0x4a8] sm:$0xff]
        %v448 = vld [vmem:[%s239 + $0x4b0] sm:$0xff]
        %v449 = vld [vmem:[%s239 + $0x4b8] sm:$0xff]
        %v450 = vld [vmem:[%s239 + $0x4c0] sm:$0xff]
        %v451 = vld [vmem:[%s239 + $0x4c8] sm:$0xff]
        %v452 = vld [vmem:[%s239 + $0x4d0] sm:$0xff]
        %v453 = vld [vmem:[%s239 + $0x4d8] sm:$0xff]
        %v454 = vld [vmem:[%s239 + $0x4e0] sm:$0xff]
        %v455 = vld [vmem:[%s239 + $0x4e8] sm:$0xff]
        %v456 = vld [vmem:[%s239 + $0x4f0] sm:$0xff]
        %v457 = vld [vmem:[%s239 + $0x4f8] sm:$0xff]
        %v458 = vld [vmem:[%s239 + $0x500] sm:$0xff]
        %v459 = vld [vmem:[%s239 + $0x508] sm:$0xff]
        %v460 = vld [vmem:[%s239 + $0x510] sm:$0xff]
        %v461 = vld [vmem:[%s239 + $0x518] sm:$0xff]
        %v462 = vld [vmem:[%s239 + $0x520] sm:$0xff]
        %v463 = vld [vmem:[%s239 + $0x528] sm:$0xff]
        %v464 = vld [vmem:[%s239 + $0x530] sm:$0xff]
        %v465 = vld [vmem:[%s239 + $0x538] sm:$0xff]
        %v466 = vld [vmem:[%s239 + $0x540] sm:$0xff]
        %v467 = vld [vmem:[%s239 + $0x548] sm:$0xff]
        %v468 = vld [vmem:[%s239 + $0x550] sm:$0xff]
        %v469 = vld [vmem:[%s239 + $0x558] sm:$0xff]
        %v470 = vld [vmem:[%s239 + $0x560] sm:$0xff]
        %v471 = vld [vmem:[%s239 + $0x568] sm:$0xff]
        %v472 = vld [vmem:[%s239 + $0x570] sm:$0xff]
        %v473 = vld [vmem:[%s239 + $0x578] sm:$0xff]
        %v474 = vld [vmem:[%s239 + $0x580] sm:$0xff]
        %v475 = vld [vmem:[%s239 + $0x588] sm:$0xff]
        %v476 = vld [vmem:[%s239 + $0x590] sm:$0xff]
        %v477 = vld [vmem:[%s239 + $0x598] sm:$0xff]
        %v478 = vld [vmem:[%s239 + $0x5a0] sm:$0xff]
        %v479 = vld [vmem:[%s239 + $0x5a8] sm:$0xff]
        %v480 = vld [vmem:[%s239 + $0x5b0] sm:$0xff]
        %v481 = vld [vmem:[%s239 + $0x5b8] sm:$0xff]
        %v482 = vld [vmem:[%s239 + $0x5c0] sm:$0xff]
        %v483 = vld [vmem:[%s239 + $0x5c8] sm:$0xff]
        %v484 = vld [vmem:[%s239 + $0x5d0] sm:$0xff]
        %v485 = vld [vmem:[%s239 + $0x5d8] sm:$0xff]
        %v486 = vld [vmem:[%s239 + $0x5e0] sm:$0xff]
        %v487 = vld [vmem:[%s239 + $0x5e8] sm:$0xff]
        %v488 = vld [vmem:[%s239 + $0x5f0] sm:$0xff]
        %v489 = vld [vmem:[%s239 + $0x5f8] sm:$0xff]
        %v490 = vld [vmem:[%s239 + $0x600] sm:$0xff]
        %v491 = vld [vmem:[%s239 + $0x608] sm:$0xff]
        %v492 = vld [vmem:[%s239 + $0x610] sm:$0xff]
        %v493 = vld [vmem:[%s239 + $0x618] sm:$0xff]
        %v494 = vld [vmem:[%s239 + $0x620] sm:$0xff]
        %v495 = vld [vmem:[%s239 + $0x628] sm:$0xff]
        %v496 = vld [vmem:[%s239 + $0x630] sm:$0xff]
        %v497 = vld [vmem:[%s239 + $0x638] sm:$0xff]
        %v498 = vld [vmem:[%s239 + $0x640] sm:$0xff]
        %v499 = vld [vmem:[%s239 + $0x648] sm:$0xff]
        %v500 = vld [vmem:[%s239 + $0x650] sm:$0xff]
        %v501 = vld [vmem:[%s239 + $0x658] sm:$0xff]
        %v502 = vld [vmem:[%s239 + $0x660] sm:$0xff]
        %v503 = vld [vmem:[%s239 + $0x668] sm:$0xff]
        %v504 = vld [vmem:[%s239 + $0x670] sm:$0xff]
        %v505 = vld [vmem:[%s239 + $0x678] sm:$0xff]
        %v506 = vld [vmem:[%s239 + $0x680] sm:$0xff]
        %v507 = vld [vmem:[%s239 + $0x688] sm:$0xff]
        %v508 = vld [vmem:[%s239 + $0x690] sm:$0xff]
        %v509 = vld [vmem:[%s239 + $0x698] sm:$0xff]
        %v510 = vld [vmem:[%s239 + $0x6a0] sm:$0xff]
        %v511 = vld [vmem:[%s239 + $0x6a8] sm:$0xff]
        %v512 = vld [vmem:[%s239 + $0x6b0] sm:$0xff]
        %v513 = vld [vmem:[%s239 + $0x6b8] sm:$0xff]
        %v514 = vld [vmem:[%s239 + $0x6c0] sm:$0xff]
        %v515 = vld [vmem:[%s239 + $0x6c8] sm:$0xff]
        %v516 = vld [vmem:[%s239 + $0x6d0] sm:$0xff]
        %v517 = vld [vmem:[%s239 + $0x6d8] sm:$0xff]
        %v518 = vld [vmem:[%s239 + $0x6e0] sm:$0xff]
        %v519 = vld [vmem:[%s239 + $0x6e8] sm:$0xff]
        %v520 = vld [vmem:[%s239 + $0x6f0] sm:$0xff]
        %v521 = vld [vmem:[%s239 + $0x6f8] sm:$0xff]
        %v522 = vld [vmem:[%s239 + $0x700] sm:$0xff]
        %v523 = vld [vmem:[%s239 + $0x708] sm:$0xff]
        %v524 = vld [vmem:[%s239 + $0x710] sm:$0xff]
        %v525 = vld [vmem:[%s239 + $0x718] sm:$0xff]
        %v526 = vld [vmem:[%s239 + $0x720] sm:$0xff]
        %v527 = vld [vmem:[%s239 + $0x728] sm:$0xff]
        %v528 = vld [vmem:[%s239 + $0x730] sm:$0xff]
        %v529 = vld [vmem:[%s239 + $0x738] sm:$0xff]
        %v530 = vld [vmem:[%s239 + $0x740] sm:$0xff]
        %v531 = vld [vmem:[%s239 + $0x748] sm:$0xff]
        %v532 = vld [vmem:[%s239 + $0x750] sm:$0xff]
        %v533 = vld [vmem:[%s239 + $0x758] sm:$0xff]
        %v534 = vld [vmem:[%s239 + $0x760] sm:$0xff]
        %v535 = vld [vmem:[%s239 + $0x768] sm:$0xff]
        %v536 = vld [vmem:[%s239 + $0x770] sm:$0xff]
        %v537 = vld [vmem:[%s239 + $0x778] sm:$0xff]
        %v538 = vld [vmem:[%s239 + $0x780] sm:$0xff]
        %v539 = vld [vmem:[%s239 + $0x788] sm:$0xff]
        %v540 = vld [vmem:[%s239 + $0x790] sm:$0xff]
        %v541 = vld [vmem:[%s239 + $0x798] sm:$0xff]
        %v542 = vld [vmem:[%s239 + $0x7a0] sm:$0xff]
        %v543 = vld [vmem:[%s239 + $0x7a8] sm:$0xff]
        %v544 = vld [vmem:[%s239 + $0x7b0] sm:$0xff]
        %v545 = vld [vmem:[%s239 + $0x7b8] sm:$0xff]
        %v546 = vld [vmem:[%s239 + $0x7c0] sm:$0xff]
        %v547 = vld [vmem:[%s239 + $0x7c8] sm:$0xff]
        %v548 = vld [vmem:[%s239 + $0x7d0] sm:$0xff]
        %v549 = vld [vmem:[%s239 + $0x7d8] sm:$0xff]
        %v550 = vld [vmem:[%s239 + $0x7e0] sm:$0xff]
        %v551 = vld [vmem:[%s239 + $0x7e8] sm:$0xff]
        %v552 = vld [vmem:[%s239 + $0x7f0] sm:$0xff]
        %v553 = vld [vmem:[%s239 + $0x7f8] sm:$0xff]
        %v554 = vld [vmem:[%s239 + $0x800] sm:$0xff]
        %v555 = vld [vmem:[%s239 + $0x808] sm:$0xff]
        %v556 = vld [vmem:[%s239 + $0x810] sm:$0xff]
        %v557 = vld [vmem:[%s239 + $0x818] sm:$0xff]
        %v558 = vld [vmem:[%s239 + $0x820] sm:$0xff]
        %v559 = vld [vmem:[%s239 + $0x828] sm:$0xff]
        %v560 = vld [vmem:[%s239 + $0x830] sm:$0xff]
        %v561 = vld [vmem:[%s239 + $0x838] sm:$0xff]
        %v562 = vld [vmem:[%s239 + $0x840] sm:$0xff]
        %v563 = vld [vmem:[%s239 + $0x848] sm:$0xff]
        %v564 = vld [vmem:[%s239 + $0x850] sm:$0xff]
        %v565 = vld [vmem:[%s239 + $0x858] sm:$0xff]
        %v566 = vld [vmem:[%s239 + $0x860] sm:$0xff]
        %v567 = vld [vmem:[%s239 + $0x868] sm:$0xff]
        %v568 = vld [vmem:[%s239 + $0x870] sm:$0xff]
        %v569 = vld [vmem:[%s239 + $0x878] sm:$0xff]
        %v570 = vld [vmem:[%s239 + $0x880] sm:$0xff]
        %v571 = vld [vmem:[%s239 + $0x888] sm:$0xff]
        %v572 = vld [vmem:[%s239 + $0x890] sm:$0xff]
        %v573 = vld [vmem:[%s239 + $0x898] sm:$0xff]
        %v574 = vld [vmem:[%s239 + $0x8a0] sm:$0xff]
        %v575 = vld [vmem:[%s239 + $0x8a8] sm:$0xff]
        %v576 = vld [vmem:[%s239 + $0x8b0] sm:$0xff]
        %v577 = vld [vmem:[%s239 + $0x8b8] sm:$0xff]
        %v578 = vld [vmem:[%s239 + $0x8c0] sm:$0xff]
        %v579 = vld [vmem:[%s239 + $0x8c8] sm:$0xff]
        %v580 = vld [vmem:[%s239 + $0x8d0] sm:$0xff]
        %v581 = vld [vmem:[%s239 + $0x8d8] sm:$0xff]
        %v582 = vld [vmem:[%s239 + $0x8e0] sm:$0xff]
        %v583 = vld [vmem:[%s239 + $0x8e8] sm:$0xff]
        %v584 = vld [vmem:[%s239 + $0x8f0] sm:$0xff]
        %v585 = vld [vmem:[%s239 + $0x8f8] sm:$0xff]
        %v586 = vld [vmem:[%s239 + $0x900] sm:$0xff]
        %v587 = vld [vmem:[%s239 + $0x908] sm:$0xff]
        %v588 = vld [vmem:[%s239 + $0x910] sm:$0xff]
        %v589 = vld [vmem:[%s239 + $0x918] sm:$0xff]
        %v590 = vld [vmem:[%s239 + $0x920] sm:$0xff]
        %v591 = vld [vmem:[%s239 + $0x928] sm:$0xff]
        %v592 = vld [vmem:[%s239 + $0x930] sm:$0xff]
        %v593 = vld [vmem:[%s239 + $0x938] sm:$0xff]
        %v594 = vld [vmem:[%s239 + $0x940] sm:$0xff]
        %v595 = vld [vmem:[%s239 + $0x948] sm:$0xff]
        %v596 = vld [vmem:[%s239 + $0x950] sm:$0xff]
        %v597 = vld [vmem:[%s239 + $0x958] sm:$0xff]
        %v598 = vld [vmem:[%s239 + $0x960] sm:$0xff]
        %v599 = vld [vmem:[%s239 + $0x968] sm:$0xff]
        %v600 = vld [vmem:[%s239 + $0x970] sm:$0xff]
        %v601 = vld [vmem:[%s239 + $0x978] sm:$0xff]
        %v602 = vld [vmem:[%s239 + $0x980] sm:$0xff]
        %v603 = vld [vmem:[%s239 + $0x988] sm:$0xff]
        %v604 = vld [vmem:[%s239 + $0x990] sm:$0xff]
        %v605 = vld [vmem:[%s239 + $0x998] sm:$0xff]
        %v606 = vld [vmem:[%s239 + $0x9a0] sm:$0xff]
        %v607 = vld [vmem:[%s239 + $0x9a8] sm:$0xff]
        %v608 = vld [vmem:[%s239 + $0x9b0] sm:$0xff]
        %v609 = vld [vmem:[%s239 + $0x9b8] sm:$0xff]
        %v610 = vld [vmem:[%s239 + $0x9c0] sm:$0xff]
        %v611 = vld [vmem:[%s239 + $0x9c8] sm:$0xff]
        %v612 = vld [vmem:[%s239 + $0x9d0] sm:$0xff]
        %v613 = vld [vmem:[%s239 + $0x9d8] sm:$0xff]
        %v614 = vld [vmem:[%s239 + $0x9e0] sm:$0xff]
        %v615 = vld [vmem:[%s239 + $0x9e8] sm:$0xff]
        %v616 = vld [vmem:[%s239 + $0x9f0] sm:$0xff]
        %v617 = vld [vmem:[%s239 + $0x9f8] sm:$0xff]
        %v618 = vld [vmem:[%s239 + $0xa00] sm:$0xff]
        %v619 = vld [vmem:[%s239 + $0xa08] sm:$0xff]
        %v620 = vld [vmem:[%s239 + $0xa10] sm:$0xff]
        %v621 = vld [vmem:[%s239 + $0xa18] sm:$0xff]
        %v622 = vld [vmem:[%s239 + $0xa20] sm:$0xff]
        %v623 = vld [vmem:[%s239 + $0xa28] sm:$0xff]
        %v624 = vld [vmem:[%s239 + $0xa30] sm:$0xff]
        %v625 = vld [vmem:[%s239 + $0xa38] sm:$0xff]
        %v626 = vld [vmem:[%s239 + $0xa40] sm:$0xff]
        %v627 = vld [vmem:[%s239 + $0xa48] sm:$0xff]
        %v628 = vld [vmem:[%s239 + $0xa50] sm:$0xff]
        %v629 = vld [vmem:[%s239 + $0xa58] sm:$0xff]
        %v630 = vld [vmem:[%s239 + $0xa60] sm:$0xff]
        %v631 = vld [vmem:[%s239 + $0xa68] sm:$0xff]
        %v632 = vld [vmem:[%s239 + $0xa70] sm:$0xff]
        %v633 = vld [vmem:[%s239 + $0xa78] sm:$0xff]
        %v634 = vld [vmem:[%s239 + $0xa80] sm:$0xff]
        %v635 = vld [vmem:[%s239 + $0xa88] sm:$0xff]
        %v636 = vld [vmem:[%s239 + $0xa90] sm:$0xff]
        %v637 = vld [vmem:[%s239 + $0xa98] sm:$0xff]
        %v638 = vld [vmem:[%s239 + $0xaa0] sm:$0xff]
        %v639 = vld [vmem:[%s239 + $0xaa8] sm:$0xff]
        %v640 = vld [vmem:[%s239 + $0xab0] sm:$0xff]
        %v641 = vld [vmem:[%s239 + $0xab8] sm:$0xff]
        %v642 = vld [vmem:[%s239 + $0xac0] sm:$0xff]
        %v643 = vld [vmem:[%s239 + $0xac8] sm:$0xff]
        %v644 = vld [vmem:[%s239 + $0xad0] sm:$0xff]
        %v645 = vld [vmem:[%s239 + $0xad8] sm:$0xff]
        %v646 = vld [vmem:[%s239 + $0xae0] sm:$0xff]
        %v647 = vld [vmem:[%s239 + $0xae8] sm:$0xff]
        %v648 = vld [vmem:[%s239 + $0xaf0] sm:$0xff]
        %v649 = vld [vmem:[%s239 + $0xaf8] sm:$0xff]
        %v650 = vld [vmem:[%s239 + $0xb00] sm:$0xff]
        %v651 = vld [vmem:[%s239 + $0xb08] sm:$0xff]
        %v652 = vld [vmem:[%s239 + $0xb10] sm:$0xff]
        %v653 = vld [vmem:[%s239 + $0xb18] sm:$0xff]
        %v654 = vld [vmem:[%s239 + $0xb20] sm:$0xff]
        %v655 = vld [vmem:[%s239 + $0xb28] sm:$0xff]
        %v656 = vld [vmem:[%s239 + $0xb30] sm:$0xff]
        %v657 = vld [vmem:[%s239 + $0xb38] sm:$0xff]
        %v658 = vld [vmem:[%s239 + $0xb40] sm:$0xff]
        %v659 = vld [vmem:[%s239 + $0xb48] sm:$0xff]
        %v660 = vld [vmem:[%s239 + $0xb50] sm:$0xff]
        %v661 = vld [vmem:[%s239 + $0xb58] sm:$0xff]
        %v662 = vld [vmem:[%s239 + $0xb60] sm:$0xff]
        %v663 = vld [vmem:[%s239 + $0xb68] sm:$0xff]
        %v664 = vld [vmem:[%s239 + $0xb70] sm:$0xff]
        %v665 = vld [vmem:[%s239 + $0xb78] sm:$0xff]
        %v666 = vld [vmem:[%s239 + $0xb80] sm:$0xff]
        %v667 = vld [vmem:[%s239 + $0xb88] sm:$0xff]
        %v668 = vld [vmem:[%s239 + $0xb90] sm:$0xff]
        %v669 = vld [vmem:[%s239 + $0xb98] sm:$0xff]
        %v670 = vld [vmem:[%s239 + $0xba0] sm:$0xff]
        %v671 = vld [vmem:[%s239 + $0xba8] sm:$0xff]
        %v672 = vld [vmem:[%s239 + $0xbb0] sm:$0xff]
        %v673 = vld [vmem:[%s239 + $0xbb8] sm:$0xff]
        %v674 = vld [vmem:[%s239 + $0xbc0] sm:$0xff]
        %v675 = vld [vmem:[%s239 + $0xbc8] sm:$0xff]
        %v676 = vld [vmem:[%s239 + $0xbd0] sm:$0xff]
        %v677 = vld [vmem:[%s239 + $0xbd8] sm:$0xff]
        %v678 = vld [vmem:[%s239 + $0xbe0] sm:$0xff]
        %v679 = vld [vmem:[%s239 + $0xbe8] sm:$0xff]
        %v680 = vld [vmem:[%s239 + $0xbf0] sm:$0xff]
        %v681 = vld [vmem:[%s239 + $0xbf8] sm:$0xff]
        %v682 = vld [vmem:[%s239 + $0xc00] sm:$0xff]
        %v683 = vld [vmem:[%s239 + $0xc08] sm:$0xff]
        %v684 = vld [vmem:[%s239 + $0xc10] sm:$0xff]
        %v685 = vld [vmem:[%s239 + $0xc18] sm:$0xff]
        %v686 = vld [vmem:[%s239 + $0xc20] sm:$0xff]
        %v687 = vld [vmem:[%s239 + $0xc28] sm:$0xff]
        %v688 = vld [vmem:[%s239 + $0xc30] sm:$0xff]
        %v689 = vld [vmem:[%s239 + $0xc38] sm:$0xff]
        %v690 = vld [vmem:[%s239 + $0xc40] sm:$0xff]
        %v691 = vld [vmem:[%s239 + $0xc48] sm:$0xff]
        %v692 = vld [vmem:[%s239 + $0xc50] sm:$0xff]
        %v693 = vld [vmem:[%s239 + $0xc58] sm:$0xff]
        %v694 = vld [vmem:[%s239 + $0xc60] sm:$0xff]
        %v695 = vld [vmem:[%s239 + $0xc68] sm:$0xff]
        %v696 = vld [vmem:[%s239 + $0xc70] sm:$0xff]
        %v697 = vld [vmem:[%s239 + $0xc78] sm:$0xff]
        %v698 = vld [vmem:[%s239 + $0xc80] sm:$0xff]
        %v699 = vld [vmem:[%s239 + $0xc88] sm:$0xff]
        %v700 = vld [vmem:[%s239 + $0xc90] sm:$0xff]
        %v701 = vld [vmem:[%s239 + $0xc98] sm:$0xff]
        %v702 = vld [vmem:[%s239 + $0xca0] sm:$0xff]
        %v703 = vld [vmem:[%s239 + $0xca8] sm:$0xff]
        %v704 = vld [vmem:[%s239 + $0xcb0] sm:$0xff]
        %v705 = vld [vmem:[%s239 + $0xcb8] sm:$0xff]
        %v706 = vld [vmem:[%s239 + $0xcc0] sm:$0xff]
        %v707 = vld [vmem:[%s239 + $0xcc8] sm:$0xff]
        %v708 = vld [vmem:[%s239 + $0xcd0] sm:$0xff]
        %v709 = vld [vmem:[%s239 + $0xcd8] sm:$0xff]
        %v710 = vld [vmem:[%s239 + $0xce0] sm:$0xff]
        %v711 = vld [vmem:[%s239 + $0xce8] sm:$0xff]
        %v712 = vld [vmem:[%s239 + $0xcf0] sm:$0xff]
        %v713 = vld [vmem:[%s239 + $0xcf8] sm:$0xff]
        %v714 = vld [vmem:[%s239 + $0xd00] sm:$0xff]
        %v715 = vld [vmem:[%s239 + $0xd08] sm:$0xff]
        %v716 = vld [vmem:[%s239 + $0xd10] sm:$0xff]
        %v717 = vld [vmem:[%s239 + $0xd18] sm:$0xff]
        %v718 = vld [vmem:[%s239 + $0xd20] sm:$0xff]
        %v719 = vld [vmem:[%s239 + $0xd28] sm:$0xff]
        %v720 = vld [vmem:[%s239 + $0xd30] sm:$0xff]
        %v721 = vld [vmem:[%s239 + $0xd38] sm:$0xff]
        %v722 = vld [vmem:[%s239 + $0xd40] sm:$0xff]
        %v723 = vld [vmem:[%s239 + $0xd48] sm:$0xff]
        %v724 = vld [vmem:[%s239 + $0xd50] sm:$0xff]
        %v725 = vld [vmem:[%s239 + $0xd58] sm:$0xff]
        %v726 = vld [vmem:[%s239 + $0xd60] sm:$0xff]
        %v727 = vld [vmem:[%s239 + $0xd68] sm:$0xff]
        %v728 = vld [vmem:[%s239 + $0xd70] sm:$0xff]
        %v729 = vld [vmem:[%s239 + $0xd78] sm:$0xff]
        %v730 = vld [vmem:[%s239 + $0xd80] sm:$0xff]
        %v731 = vld [vmem:[%s239 + $0xd88] sm:$0xff]
        %v732 = vld [vmem:[%s239 + $0xd90] sm:$0xff]
        %v733 = vld [vmem:[%s239 + $0xd98] sm:$0xff]
        %v734 = vld [vmem:[%s239 + $0xda0] sm:$0xff]
        %v735 = vld [vmem:[%s239 + $0xda8] sm:$0xff]
        %v736 = vld [vmem:[%s239 + $0xdb0] sm:$0xff]
        %v737 = vld [vmem:[%s239 + $0xdb8] sm:$0xff]
        %v738 = vld [vmem:[%s239 + $0xdc0] sm:$0xff]
        %v739 = vld [vmem:[%s239 + $0xdc8] sm:$0xff]
        %v740 = vld [vmem:[%s239 + $0xdd0] sm:$0xff]
        %v741 = vld [vmem:[%s239 + $0xdd8] sm:$0xff]
        %v742 = vld [vmem:[%s239 + $0xde0] sm:$0xff]
        %v743 = vld [vmem:[%s239 + $0xde8] sm:$0xff]
        %v744 = vld [vmem:[%s239 + $0xdf0] sm:$0xff]
        %v745 = vld [vmem:[%s239 + $0xdf8] sm:$0xff]
        %v746 = vld [vmem:[%s239 + $0xe00] sm:$0xff]
        %v747 = vld [vmem:[%s239 + $0xe08] sm:$0xff]
        %v748 = vld [vmem:[%s239 + $0xe10] sm:$0xff]
        %v749 = vld [vmem:[%s239 + $0xe18] sm:$0xff]
        %v750 = vld [vmem:[%s239 + $0xe20] sm:$0xff]
        %v751 = vld [vmem:[%s239 + $0xe28] sm:$0xff]
        %v752 = vld [vmem:[%s239 + $0xe30] sm:$0xff]
        %v753 = vld [vmem:[%s239 + $0xe38] sm:$0xff]
        %v754 = vld [vmem:[%s239 + $0xe40] sm:$0xff]
        %v755 = vld [vmem:[%s239 + $0xe48] sm:$0xff]
        %v756 = vld [vmem:[%s239 + $0xe50] sm:$0xff]
        %v757 = vld [vmem:[%s239 + $0xe58] sm:$0xff]
        %v758 = vld [vmem:[%s239 + $0xe60] sm:$0xff]
        %v759 = vld [vmem:[%s239 + $0xe68] sm:$0xff]
        %v760 = vld [vmem:[%s239 + $0xe70] sm:$0xff]
        %v761 = vld [vmem:[%s239 + $0xe78] sm:$0xff]
        %v762 = vld [vmem:[%s239 + $0xe80] sm:$0xff]
        %v763 = vld [vmem:[%s239 + $0xe88] sm:$0xff]
        %v764 = vld [vmem:[%s239 + $0xe90] sm:$0xff]
        %v765 = vld [vmem:[%s239 + $0xe98] sm:$0xff]
        %v766 = vld [vmem:[%s239 + $0xea0] sm:$0xff]
        %v767 = vld [vmem:[%s239 + $0xea8] sm:$0xff]
        %v768 = vld [vmem:[%s239 + $0xeb0] sm:$0xff]
        %v769 = vld [vmem:[%s239 + $0xeb8] sm:$0xff]
        %v770 = vld [vmem:[%s239 + $0xec0] sm:$0xff]
        %v771 = vld [vmem:[%s239 + $0xec8] sm:$0xff]
        %v772 = vld [vmem:[%s239 + $0xed0] sm:$0xff]
        %v773 = vld [vmem:[%s239 + $0xed8] sm:$0xff]
        %v774 = vld [vmem:[%s239 + $0xee0] sm:$0xff]
        %v775 = vld [vmem:[%s239 + $0xee8] sm:$0xff]
        %v776 = vld [vmem:[%s239 + $0xef0] sm:$0xff]
        %v777 = vld [vmem:[%s239 + $0xef8] sm:$0xff]
        %v778 = vld [vmem:[%s239 + $0xf00] sm:$0xff]
        %v779 = vld [vmem:[%s239 + $0xf08] sm:$0xff]
        %v780 = vld [vmem:[%s239 + $0xf10] sm:$0xff]
        %v781 = vld [vmem:[%s239 + $0xf18] sm:$0xff]
        %v782 = vld [vmem:[%s239 + $0xf20] sm:$0xff]
        %v783 = vld [vmem:[%s239 + $0xf28] sm:$0xff]
        %v784 = vld [vmem:[%s239 + $0xf30] sm:$0xff]
        %v785 = vld [vmem:[%s239 + $0xf38] sm:$0xff]
        %v786 = vld [vmem:[%s239 + $0xf40] sm:$0xff]
        %v787 = vld [vmem:[%s239 + $0xf48] sm:$0xff]
        %v788 = vld [vmem:[%s239 + $0xf50] sm:$0xff]
        %v789 = vld [vmem:[%s239 + $0xf58] sm:$0xff]
        %v790 = vld [vmem:[%s239 + $0xf60] sm:$0xff]
        %v791 = vld [vmem:[%s239 + $0xf68] sm:$0xff]
        %v792 = vld [vmem:[%s239 + $0xf70] sm:$0xff]
        %v793 = vld [vmem:[%s239 + $0xf78] sm:$0xff]
        %v794 = vld [vmem:[%s239 + $0xf80] sm:$0xff]
        %v795 = vld [vmem:[%s239 + $0xf88] sm:$0xff]
        %v796 = vld [vmem:[%s239 + $0xf90] sm:$0xff]
        %v797 = vld [vmem:[%s239 + $0xf98] sm:$0xff]
        %v798 = vld [vmem:[%s239 + $0xfa0] sm:$0xff]
        %v799 = vld [vmem:[%s239 + $0xfa8] sm:$0xff]
        %v800 = vld [vmem:[%s239 + $0xfb0] sm:$0xff]
        %v801 = vld [vmem:[%s239 + $0xfb8] sm:$0xff]
        %v802 = vld [vmem:[%s239 + $0xfc0] sm:$0xff]
        %v803 = vld [vmem:[%s239 + $0xfc8] sm:$0xff]
        %v804 = vld [vmem:[%s239 + $0xfd0] sm:$0xff]
        %v805 = vld [vmem:[%s239 + $0xfd8] sm:$0xff]
        %v806 = vld [vmem:[%s239 + $0xfe0] sm:$0xff]
        %v807 = vld [vmem:[%s239 + $0xfe8] sm:$0xff]
        %v808 = vld [vmem:[%s239 + $0xff0] sm:$0xff]
        %v809 = vld [vmem:[%s239 + $0xff8] sm:$0xff]
        %v810 = vld [vmem:[#allocation6] sm:$0xff]
        %v811 = vld [vmem:[#allocation6 + $0x8] sm:$0xff]
        %v812 = vld [vmem:[#allocation6 + $0x10] sm:$0xff]
        %v813 = vld [vmem:[#allocation6 + $0x18] sm:$0xff]
        %v814 = vld [vmem:[#allocation6 + $0x20] sm:$0xff]
        %v815 = vld [vmem:[#allocation6 + $0x28] sm:$0xff]
        %v816 = vld [vmem:[#allocation6 + $0x30] sm:$0xff]
        %v817 = vld [vmem:[#allocation6 + $0x38] sm:$0xff]
        %v818 = vld [vmem:[#allocation6 + $0x40] sm:$0xff]
        %v819 = vld [vmem:[#allocation6 + $0x48] sm:$0xff]
        %v820 = vld [vmem:[#allocation6 + $0x50] sm:$0xff]
        %v821 = vld [vmem:[#allocation6 + $0x58] sm:$0xff]
        %v822 = vld [vmem:[#allocation6 + $0x60] sm:$0xff]
        %v823 = vld [vmem:[#allocation6 + $0x68] sm:$0xff]
        %v824 = vld [vmem:[#allocation6 + $0x70] sm:$0xff]
        %v825 = vld [vmem:[#allocation6 + $0x78] sm:$0xff]
        %826 = vmatpush.msra.mxu0 %v825
        %827 = vmatpush.msra.mxu0 %v824
        %828 = vmatpush.msra.mxu0 %v823
        %829 = vmatpush.msra.mxu0 %v822
        %830 = vmatpush.msra.mxu0 %v821
        %831 = vmatpush.msra.mxu0 %v820
        %832 = vmatpush.msra.mxu0 %v819
        %833 = vmatpush.msra.mxu0 %v818
        %834 = vmatpush.msra.mxu0 %v817
        %835 = vmatpush.msra.mxu0 %v816
        %836 = vmatpush.msra.mxu0 %v815
        %837 = vmatpush.msra.mxu0 %v814
        %838 = vmatpush.msra.mxu0 %v813
        %839 = vmatpush.msra.mxu0 %v812
        %840 = vmatpush.msra.mxu0 %v811
        %841 = vmatpush.msra.mxu0 %v810
        %842 = vmatmul.f32.gmra.mxu0 %v298
        %v843 = vpop.f32.mrf.mxu0
        %v844 = vadd.f32 0.0, %v843
        %845 = vmatmul.f32.gmra.mxu0 %v299
        %v846 = vpop.f32.mrf.mxu0
        %v847 = vadd.f32 0.0, %v846
        %848 = vmatmul.f32.gmra.mxu0 %v300
        %v849 = vpop.f32.mrf.mxu0
        %v850 = vadd.f32 0.0, %v849
        %851 = vmatmul.f32.gmra.mxu0 %v301
        %v852 = vpop.f32.mrf.mxu0
        %v853 = vadd.f32 0.0, %v852
        %854 = vmatmul.f32.gmra.mxu0 %v302
        %v855 = vpop.f32.mrf.mxu0
        %v856 = vadd.f32 0.0, %v855
        %857 = vmatmul.f32.gmra.mxu0 %v303
        %v858 = vpop.f32.mrf.mxu0
        %v859 = vadd.f32 0.0, %v858
        %860 = vmatmul.f32.gmra.mxu0 %v304
        %v861 = vpop.f32.mrf.mxu0
        %v862 = vadd.f32 0.0, %v861
        %863 = vmatmul.f32.gmra.mxu0 %v305
        %v864 = vpop.f32.mrf.mxu0
        %v865 = vadd.f32 0.0, %v864
        %866 = vmatmul.f32.gmra.mxu0 %v306
        %v867 = vpop.f32.mrf.mxu0
        %v868 = vadd.f32 0.0, %v867
        %869 = vmatmul.f32.gmra.mxu0 %v307
        %v870 = vpop.f32.mrf.mxu0
        %v871 = vadd.f32 0.0, %v870
        %872 = vmatmul.f32.gmra.mxu0 %v308
        %v873 = vpop.f32.mrf.mxu0
        %v874 = vadd.f32 0.0, %v873
        %875 = vmatmul.f32.gmra.mxu0 %v309
        %v876 = vpop.f32.mrf.mxu0
        %v877 = vadd.f32 0.0, %v876
        %878 = vmatmul.f32.gmra.mxu0 %v310
        %v879 = vpop.f32.mrf.mxu0
        %v880 = vadd.f32 0.0, %v879
        %881 = vmatmul.f32.gmra.mxu0 %v311
        %v882 = vpop.f32.mrf.mxu0
        %v883 = vadd.f32 0.0, %v882
        %884 = vmatmul.f32.gmra.mxu0 %v312
        %v885 = vpop.f32.mrf.mxu0
        %v886 = vadd.f32 0.0, %v885
        %887 = vmatmul.f32.gmra.mxu0 %v313
        %v888 = vpop.f32.mrf.mxu0
        %v889 = vadd.f32 0.0, %v888
        %890 = vmatmul.f32.gmra.mxu0 %v314
        %v891 = vpop.f32.mrf.mxu0
        %v892 = vadd.f32 0.0, %v891
        %893 = vmatmul.f32.gmra.mxu0 %v315
        %v894 = vpop.f32.mrf.mxu0
        %v895 = vadd.f32 0.0, %v894
        %896 = vmatmul.f32.gmra.mxu0 %v316
        %v897 = vpop.f32.mrf.mxu0
        %v898 = vadd.f32 0.0, %v897
        %899 = vmatmul.f32.gmra.mxu0 %v317
        %v900 = vpop.f32.mrf.mxu0
        %v901 = vadd.f32 0.0, %v900
        %902 = vmatmul.f32.gmra.mxu0 %v318
        %v903 = vpop.f32.mrf.mxu0
        %v904 = vadd.f32 0.0, %v903
        %905 = vmatmul.f32.gmra.mxu0 %v319
        %v906 = vpop.f32.mrf.mxu0
        %v907 = vadd.f32 0.0, %v906
        %908 = vmatmul.f32.gmra.mxu0 %v320
        %v909 = vpop.f32.mrf.mxu0
        %v910 = vadd.f32 0.0, %v909
        %911 = vmatmul.f32.gmra.mxu0 %v321
        %v912 = vpop.f32.mrf.mxu0
        %v913 = vadd.f32 0.0, %v912
        %914 = vmatmul.f32.gmra.mxu0 %v322
        %v915 = vpop.f32.mrf.mxu0
        %v916 = vadd.f32 0.0, %v915
        %917 = vmatmul.f32.gmra.mxu0 %v323
        %v918 = vpop.f32.mrf.mxu0
        %v919 = vadd.f32 0.0, %v918
        %920 = vmatmul.f32.gmra.mxu0 %v324
        %v921 = vpop.f32.mrf.mxu0
        %v922 = vadd.f32 0.0, %v921
        %923 = vmatmul.f32.gmra.mxu0 %v325
        %v924 = vpop.f32.mrf.mxu0
        %v925 = vadd.f32 0.0, %v924
        %926 = vmatmul.f32.gmra.mxu0 %v326
        %v927 = vpop.f32.mrf.mxu0
        %v928 = vadd.f32 0.0, %v927
        %929 = vmatmul.f32.gmra.mxu0 %v327
        %v930 = vpop.f32.mrf.mxu0
        %v931 = vadd.f32 0.0, %v930
        %932 = vmatmul.f32.gmra.mxu0 %v328
        %v933 = vpop.f32.mrf.mxu0
        %v934 = vadd.f32 0.0, %v933
        %935 = vmatmul.f32.gmra.mxu0 %v329
        %v936 = vpop.f32.mrf.mxu0
        %v937 = vadd.f32 0.0, %v936
        %938 = vmatmul.f32.gmra.mxu0 %v330
        %v939 = vpop.f32.mrf.mxu0
        %v940 = vadd.f32 0.0, %v939
        %941 = vmatmul.f32.gmra.mxu0 %v331
        %v942 = vpop.f32.mrf.mxu0
        %v943 = vadd.f32 0.0, %v942
        %944 = vmatmul.f32.gmra.mxu0 %v332
        %v945 = vpop.f32.mrf.mxu0
        %v946 = vadd.f32 0.0, %v945
        %947 = vmatmul.f32.gmra.mxu0 %v333
        %v948 = vpop.f32.mrf.mxu0
        %v949 = vadd.f32 0.0, %v948
        %950 = vmatmul.f32.gmra.mxu0 %v334
        %v951 = vpop.f32.mrf.mxu0
        %v952 = vadd.f32 0.0, %v951
        %953 = vmatmul.f32.gmra.mxu0 %v335
        %v954 = vpop.f32.mrf.mxu0
        %v955 = vadd.f32 0.0, %v954
        %956 = vmatmul.f32.gmra.mxu0 %v336
        %v957 = vpop.f32.mrf.mxu0
        %v958 = vadd.f32 0.0, %v957
        %959 = vmatmul.f32.gmra.mxu0 %v337
        %v960 = vpop.f32.mrf.mxu0
        %v961 = vadd.f32 0.0, %v960
        %962 = vmatmul.f32.gmra.mxu0 %v338
        %v963 = vpop.f32.mrf.mxu0
        %v964 = vadd.f32 0.0, %v963
        %965 = vmatmul.f32.gmra.mxu0 %v339
        %v966 = vpop.f32.mrf.mxu0
        %v967 = vadd.f32 0.0, %v966
        %968 = vmatmul.f32.gmra.mxu0 %v340
        %v969 = vpop.f32.mrf.mxu0
        %v970 = vadd.f32 0.0, %v969
        %971 = vmatmul.f32.gmra.mxu0 %v341
        %v972 = vpop.f32.mrf.mxu0
        %v973 = vadd.f32 0.0, %v972
        %974 = vmatmul.f32.gmra.mxu0 %v342
        %v975 = vpop.f32.mrf.mxu0
        %v976 = vadd.f32 0.0, %v975
        %977 = vmatmul.f32.gmra.mxu0 %v343
        %v978 = vpop.f32.mrf.mxu0
        %v979 = vadd.f32 0.0, %v978
        %980 = vmatmul.f32.gmra.mxu0 %v344
        %v981 = vpop.f32.mrf.mxu0
        %v982 = vadd.f32 0.0, %v981
        %983 = vmatmul.f32.gmra.mxu0 %v345
        %v984 = vpop.f32.mrf.mxu0
        %v985 = vadd.f32 0.0, %v984
        %986 = vmatmul.f32.gmra.mxu0 %v346
        %v987 = vpop.f32.mrf.mxu0
        %v988 = vadd.f32 0.0, %v987
        %989 = vmatmul.f32.gmra.mxu0 %v347
        %v990 = vpop.f32.mrf.mxu0
        %v991 = vadd.f32 0.0, %v990
        %992 = vmatmul.f32.gmra.mxu0 %v348
        %v993 = vpop.f32.mrf.mxu0
        %v994 = vadd.f32 0.0, %v993
        %995 = vmatmul.f32.gmra.mxu0 %v349
        %v996 = vpop.f32.mrf.mxu0
        %v997 = vadd.f32 0.0, %v996
        %998 = vmatmul.f32.gmra.mxu0 %v350
        %v999 = vpop.f32.mrf.mxu0
        %v1000 = vadd.f32 0.0, %v999
        %1001 = vmatmul.f32.gmra.mxu0 %v351
        %v1002 = vpop.f32.mrf.mxu0
        %v1003 = vadd.f32 0.0, %v1002
        %1004 = vmatmul.f32.gmra.mxu0 %v352
        %v1005 = vpop.f32.mrf.mxu0
        %v1006 = vadd.f32 0.0, %v1005
        %1007 = vmatmul.f32.gmra.mxu0 %v353
        %v1008 = vpop.f32.mrf.mxu0
        %v1009 = vadd.f32 0.0, %v1008
        %1010 = vmatmul.f32.gmra.mxu0 %v354
        %v1011 = vpop.f32.mrf.mxu0
        %v1012 = vadd.f32 0.0, %v1011
        %1013 = vmatmul.f32.gmra.mxu0 %v355
        %v1014 = vpop.f32.mrf.mxu0
        %v1015 = vadd.f32 0.0, %v1014
        %1016 = vmatmul.f32.gmra.mxu0 %v356
        %v1017 = vpop.f32.mrf.mxu0
        %v1018 = vadd.f32 0.0, %v1017
        %1019 = vmatmul.f32.gmra.mxu0 %v357
        %v1020 = vpop.f32.mrf.mxu0
        %v1021 = vadd.f32 0.0, %v1020
        %1022 = vmatmul.f32.gmra.mxu0 %v358
        %v1023 = vpop.f32.mrf.mxu0
        %v1024 = vadd.f32 0.0, %v1023
        %1025 = vmatmul.f32.gmra.mxu0 %v359
        %v1026 = vpop.f32.mrf.mxu0
        %v1027 = vadd.f32 0.0, %v1026
        %1028 = vmatmul.f32.gmra.mxu0 %v360
        %v1029 = vpop.f32.mrf.mxu0
        %v1030 = vadd.f32 0.0, %v1029
        %1031 = vmatmul.f32.gmra.mxu0 %v361
        %v1032 = vpop.f32.mrf.mxu0
        %v1033 = vadd.f32 0.0, %v1032
        %1034 = vmatmul.f32.gmra.mxu0 %v362
        %v1035 = vpop.f32.mrf.mxu0
        %v1036 = vadd.f32 0.0, %v1035
        %1037 = vmatmul.f32.gmra.mxu0 %v363
        %v1038 = vpop.f32.mrf.mxu0
        %v1039 = vadd.f32 0.0, %v1038
        %1040 = vmatmul.f32.gmra.mxu0 %v364
        %v1041 = vpop.f32.mrf.mxu0
        %v1042 = vadd.f32 0.0, %v1041
        %1043 = vmatmul.f32.gmra.mxu0 %v365
        %v1044 = vpop.f32.mrf.mxu0
        %v1045 = vadd.f32 0.0, %v1044
        %1046 = vmatmul.f32.gmra.mxu0 %v366
        %v1047 = vpop.f32.mrf.mxu0
        %v1048 = vadd.f32 0.0, %v1047
        %1049 = vmatmul.f32.gmra.mxu0 %v367
        %v1050 = vpop.f32.mrf.mxu0
        %v1051 = vadd.f32 0.0, %v1050
        %1052 = vmatmul.f32.gmra.mxu0 %v368
        %v1053 = vpop.f32.mrf.mxu0
        %v1054 = vadd.f32 0.0, %v1053
        %1055 = vmatmul.f32.gmra.mxu0 %v369
        %v1056 = vpop.f32.mrf.mxu0
        %v1057 = vadd.f32 0.0, %v1056
        %1058 = vmatmul.f32.gmra.mxu0 %v370
        %v1059 = vpop.f32.mrf.mxu0
        %v1060 = vadd.f32 0.0, %v1059
        %1061 = vmatmul.f32.gmra.mxu0 %v371
        %v1062 = vpop.f32.mrf.mxu0
        %v1063 = vadd.f32 0.0, %v1062
        %1064 = vmatmul.f32.gmra.mxu0 %v372
        %v1065 = vpop.f32.mrf.mxu0
        %v1066 = vadd.f32 0.0, %v1065
        %1067 = vmatmul.f32.gmra.mxu0 %v373
        %v1068 = vpop.f32.mrf.mxu0
        %v1069 = vadd.f32 0.0, %v1068
        %1070 = vmatmul.f32.gmra.mxu0 %v374
        %v1071 = vpop.f32.mrf.mxu0
        %v1072 = vadd.f32 0.0, %v1071
        %1073 = vmatmul.f32.gmra.mxu0 %v375
        %v1074 = vpop.f32.mrf.mxu0
        %v1075 = vadd.f32 0.0, %v1074
        %1076 = vmatmul.f32.gmra.mxu0 %v376
        %v1077 = vpop.f32.mrf.mxu0
        %v1078 = vadd.f32 0.0, %v1077
        %1079 = vmatmul.f32.gmra.mxu0 %v377
        %v1080 = vpop.f32.mrf.mxu0
        %v1081 = vadd.f32 0.0, %v1080
        %1082 = vmatmul.f32.gmra.mxu0 %v378
        %v1083 = vpop.f32.mrf.mxu0
        %v1084 = vadd.f32 0.0, %v1083
        %1085 = vmatmul.f32.gmra.mxu0 %v379
        %v1086 = vpop.f32.mrf.mxu0
        %v1087 = vadd.f32 0.0, %v1086
        %1088 = vmatmul.f32.gmra.mxu0 %v380
        %v1089 = vpop.f32.mrf.mxu0
        %v1090 = vadd.f32 0.0, %v1089
        %1091 = vmatmul.f32.gmra.mxu0 %v381
        %v1092 = vpop.f32.mrf.mxu0
        %v1093 = vadd.f32 0.0, %v1092
        %1094 = vmatmul.f32.gmra.mxu0 %v382
        %v1095 = vpop.f32.mrf.mxu0
        %v1096 = vadd.f32 0.0, %v1095
        %1097 = vmatmul.f32.gmra.mxu0 %v383
        %v1098 = vpop.f32.mrf.mxu0
        %v1099 = vadd.f32 0.0, %v1098
        %1100 = vmatmul.f32.gmra.mxu0 %v384
        %v1101 = vpop.f32.mrf.mxu0
        %v1102 = vadd.f32 0.0, %v1101
        %1103 = vmatmul.f32.gmra.mxu0 %v385
        %v1104 = vpop.f32.mrf.mxu0
        %v1105 = vadd.f32 0.0, %v1104
        %1106 = vmatmul.f32.gmra.mxu0 %v386
        %v1107 = vpop.f32.mrf.mxu0
        %v1108 = vadd.f32 0.0, %v1107
        %1109 = vmatmul.f32.gmra.mxu0 %v387
        %v1110 = vpop.f32.mrf.mxu0
        %v1111 = vadd.f32 0.0, %v1110
        %1112 = vmatmul.f32.gmra.mxu0 %v388
        %v1113 = vpop.f32.mrf.mxu0
        %v1114 = vadd.f32 0.0, %v1113
        %1115 = vmatmul.f32.gmra.mxu0 %v389
        %v1116 = vpop.f32.mrf.mxu0
        %v1117 = vadd.f32 0.0, %v1116
        %1118 = vmatmul.f32.gmra.mxu0 %v390
        %v1119 = vpop.f32.mrf.mxu0
        %v1120 = vadd.f32 0.0, %v1119
        %1121 = vmatmul.f32.gmra.mxu0 %v391
        %v1122 = vpop.f32.mrf.mxu0
        %v1123 = vadd.f32 0.0, %v1122
        %1124 = vmatmul.f32.gmra.mxu0 %v392
        %v1125 = vpop.f32.mrf.mxu0
        %v1126 = vadd.f32 0.0, %v1125
        %1127 = vmatmul.f32.gmra.mxu0 %v393
        %v1128 = vpop.f32.mrf.mxu0
        %v1129 = vadd.f32 0.0, %v1128
        %1130 = vmatmul.f32.gmra.mxu0 %v394
        %v1131 = vpop.f32.mrf.mxu0
        %v1132 = vadd.f32 0.0, %v1131
        %1133 = vmatmul.f32.gmra.mxu0 %v395
        %v1134 = vpop.f32.mrf.mxu0
        %v1135 = vadd.f32 0.0, %v1134
        %1136 = vmatmul.f32.gmra.mxu0 %v396
        %v1137 = vpop.f32.mrf.mxu0
        %v1138 = vadd.f32 0.0, %v1137
        %1139 = vmatmul.f32.gmra.mxu0 %v397
        %v1140 = vpop.f32.mrf.mxu0
        %v1141 = vadd.f32 0.0, %v1140
        %1142 = vmatmul.f32.gmra.mxu0 %v398
        %v1143 = vpop.f32.mrf.mxu0
        %v1144 = vadd.f32 0.0, %v1143
        %1145 = vmatmul.f32.gmra.mxu0 %v399
        %v1146 = vpop.f32.mrf.mxu0
        %v1147 = vadd.f32 0.0, %v1146
        %1148 = vmatmul.f32.gmra.mxu0 %v400
        %v1149 = vpop.f32.mrf.mxu0
        %v1150 = vadd.f32 0.0, %v1149
        %1151 = vmatmul.f32.gmra.mxu0 %v401
        %v1152 = vpop.f32.mrf.mxu0
        %v1153 = vadd.f32 0.0, %v1152
        %1154 = vmatmul.f32.gmra.mxu0 %v402
        %v1155 = vpop.f32.mrf.mxu0
        %v1156 = vadd.f32 0.0, %v1155
        %1157 = vmatmul.f32.gmra.mxu0 %v403
        %v1158 = vpop.f32.mrf.mxu0
        %v1159 = vadd.f32 0.0, %v1158
        %1160 = vmatmul.f32.gmra.mxu0 %v404
        %v1161 = vpop.f32.mrf.mxu0
        %v1162 = vadd.f32 0.0, %v1161
        %1163 = vmatmul.f32.gmra.mxu0 %v405
        %v1164 = vpop.f32.mrf.mxu0
        %v1165 = vadd.f32 0.0, %v1164
        %1166 = vmatmul.f32.gmra.mxu0 %v406
        %v1167 = vpop.f32.mrf.mxu0
        %v1168 = vadd.f32 0.0, %v1167
        %1169 = vmatmul.f32.gmra.mxu0 %v407
        %v1170 = vpop.f32.mrf.mxu0
        %v1171 = vadd.f32 0.0, %v1170
        %1172 = vmatmul.f32.gmra.mxu0 %v408
        %v1173 = vpop.f32.mrf.mxu0
        %v1174 = vadd.f32 0.0, %v1173
        %1175 = vmatmul.f32.gmra.mxu0 %v409
        %v1176 = vpop.f32.mrf.mxu0
        %v1177 = vadd.f32 0.0, %v1176
        %1178 = vmatmul.f32.gmra.mxu0 %v410
        %v1179 = vpop.f32.mrf.mxu0
        %v1180 = vadd.f32 0.0, %v1179
        %1181 = vmatmul.f32.gmra.mxu0 %v411
        %v1182 = vpop.f32.mrf.mxu0
        %v1183 = vadd.f32 0.0, %v1182
        %1184 = vmatmul.f32.gmra.mxu0 %v412
        %v1185 = vpop.f32.mrf.mxu0
        %v1186 = vadd.f32 0.0, %v1185
        %1187 = vmatmul.f32.gmra.mxu0 %v413
        %v1188 = vpop.f32.mrf.mxu0
        %v1189 = vadd.f32 0.0, %v1188
        %1190 = vmatmul.f32.gmra.mxu0 %v414
        %v1191 = vpop.f32.mrf.mxu0
        %v1192 = vadd.f32 0.0, %v1191
        %1193 = vmatmul.f32.gmra.mxu0 %v415
        %v1194 = vpop.f32.mrf.mxu0
        %v1195 = vadd.f32 0.0, %v1194
        %1196 = vmatmul.f32.gmra.mxu0 %v416
        %v1197 = vpop.f32.mrf.mxu0
        %v1198 = vadd.f32 0.0, %v1197
        %1199 = vmatmul.f32.gmra.mxu0 %v417
        %v1200 = vpop.f32.mrf.mxu0
        %v1201 = vadd.f32 0.0, %v1200
        %1202 = vmatmul.f32.gmra.mxu0 %v418
        %v1203 = vpop.f32.mrf.mxu0
        %v1204 = vadd.f32 0.0, %v1203
        %1205 = vmatmul.f32.gmra.mxu0 %v419
        %v1206 = vpop.f32.mrf.mxu0
        %v1207 = vadd.f32 0.0, %v1206
        %1208 = vmatmul.f32.gmra.mxu0 %v420
        %v1209 = vpop.f32.mrf.mxu0
        %v1210 = vadd.f32 0.0, %v1209
        %1211 = vmatmul.f32.gmra.mxu0 %v421
        %v1212 = vpop.f32.mrf.mxu0
        %v1213 = vadd.f32 0.0, %v1212
        %1214 = vmatmul.f32.gmra.mxu0 %v422
        %v1215 = vpop.f32.mrf.mxu0
        %v1216 = vadd.f32 0.0, %v1215
        %1217 = vmatmul.f32.gmra.mxu0 %v423
        %v1218 = vpop.f32.mrf.mxu0
        %v1219 = vadd.f32 0.0, %v1218
        %1220 = vmatmul.f32.gmra.mxu0 %v424
        %v1221 = vpop.f32.mrf.mxu0
        %v1222 = vadd.f32 0.0, %v1221
        %1223 = vmatmul.f32.gmra.mxu0 %v425
        %v1224 = vpop.f32.mrf.mxu0
        %v1225 = vadd.f32 0.0, %v1224
        %1226 = vmatmul.f32.gmra.mxu0 %v426
        %v1227 = vpop.f32.mrf.mxu0
        %v1228 = vadd.f32 0.0, %v1227
        %1229 = vmatmul.f32.gmra.mxu0 %v427
        %v1230 = vpop.f32.mrf.mxu0
        %v1231 = vadd.f32 0.0, %v1230
        %1232 = vmatmul.f32.gmra.mxu0 %v428
        %v1233 = vpop.f32.mrf.mxu0
        %v1234 = vadd.f32 0.0, %v1233
        %1235 = vmatmul.f32.gmra.mxu0 %v429
        %v1236 = vpop.f32.mrf.mxu0
        %v1237 = vadd.f32 0.0, %v1236
        %1238 = vmatmul.f32.gmra.mxu0 %v430
        %v1239 = vpop.f32.mrf.mxu0
        %v1240 = vadd.f32 0.0, %v1239
        %1241 = vmatmul.f32.gmra.mxu0 %v431
        %v1242 = vpop.f32.mrf.mxu0
        %v1243 = vadd.f32 0.0, %v1242
        %1244 = vmatmul.f32.gmra.mxu0 %v432
        %v1245 = vpop.f32.mrf.mxu0
        %v1246 = vadd.f32 0.0, %v1245
        %1247 = vmatmul.f32.gmra.mxu0 %v433
        %v1248 = vpop.f32.mrf.mxu0
        %v1249 = vadd.f32 0.0, %v1248
        %1250 = vmatmul.f32.gmra.mxu0 %v434
        %v1251 = vpop.f32.mrf.mxu0
        %v1252 = vadd.f32 0.0, %v1251
        %1253 = vmatmul.f32.gmra.mxu0 %v435
        %v1254 = vpop.f32.mrf.mxu0
        %v1255 = vadd.f32 0.0, %v1254
        %1256 = vmatmul.f32.gmra.mxu0 %v436
        %v1257 = vpop.f32.mrf.mxu0
        %v1258 = vadd.f32 0.0, %v1257
        %1259 = vmatmul.f32.gmra.mxu0 %v437
        %v1260 = vpop.f32.mrf.mxu0
        %v1261 = vadd.f32 0.0, %v1260
        %1262 = vmatmul.f32.gmra.mxu0 %v438
        %v1263 = vpop.f32.mrf.mxu0
        %v1264 = vadd.f32 0.0, %v1263
        %1265 = vmatmul.f32.gmra.mxu0 %v439
        %v1266 = vpop.f32.mrf.mxu0
        %v1267 = vadd.f32 0.0, %v1266
        %1268 = vmatmul.f32.gmra.mxu0 %v440
        %v1269 = vpop.f32.mrf.mxu0
        %v1270 = vadd.f32 0.0, %v1269
        %1271 = vmatmul.f32.gmra.mxu0 %v441
        %v1272 = vpop.f32.mrf.mxu0
        %v1273 = vadd.f32 0.0, %v1272
        %1274 = vmatmul.f32.gmra.mxu0 %v442
        %v1275 = vpop.f32.mrf.mxu0
        %v1276 = vadd.f32 0.0, %v1275
        %1277 = vmatmul.f32.gmra.mxu0 %v443
        %v1278 = vpop.f32.mrf.mxu0
        %v1279 = vadd.f32 0.0, %v1278
        %1280 = vmatmul.f32.gmra.mxu0 %v444
        %v1281 = vpop.f32.mrf.mxu0
        %v1282 = vadd.f32 0.0, %v1281
        %1283 = vmatmul.f32.gmra.mxu0 %v445
        %v1284 = vpop.f32.mrf.mxu0
        %v1285 = vadd.f32 0.0, %v1284
        %1286 = vmatmul.f32.gmra.mxu0 %v446
        %v1287 = vpop.f32.mrf.mxu0
        %v1288 = vadd.f32 0.0, %v1287
        %1289 = vmatmul.f32.gmra.mxu0 %v447
        %v1290 = vpop.f32.mrf.mxu0
        %v1291 = vadd.f32 0.0, %v1290
        %1292 = vmatmul.f32.gmra.mxu0 %v448
        %v1293 = vpop.f32.mrf.mxu0
        %v1294 = vadd.f32 0.0, %v1293
        %1295 = vmatmul.f32.gmra.mxu0 %v449
        %v1296 = vpop.f32.mrf.mxu0
        %v1297 = vadd.f32 0.0, %v1296
        %1298 = vmatmul.f32.gmra.mxu0 %v450
        %v1299 = vpop.f32.mrf.mxu0
        %v1300 = vadd.f32 0.0, %v1299
        %1301 = vmatmul.f32.gmra.mxu0 %v451
        %v1302 = vpop.f32.mrf.mxu0
        %v1303 = vadd.f32 0.0, %v1302
        %1304 = vmatmul.f32.gmra.mxu0 %v452
        %v1305 = vpop.f32.mrf.mxu0
        %v1306 = vadd.f32 0.0, %v1305
        %1307 = vmatmul.f32.gmra.mxu0 %v453
        %v1308 = vpop.f32.mrf.mxu0
        %v1309 = vadd.f32 0.0, %v1308
        %1310 = vmatmul.f32.gmra.mxu0 %v454
        %v1311 = vpop.f32.mrf.mxu0
        %v1312 = vadd.f32 0.0, %v1311
        %1313 = vmatmul.f32.gmra.mxu0 %v455
        %v1314 = vpop.f32.mrf.mxu0
        %v1315 = vadd.f32 0.0, %v1314
        %1316 = vmatmul.f32.gmra.mxu0 %v456
        %v1317 = vpop.f32.mrf.mxu0
        %v1318 = vadd.f32 0.0, %v1317
        %1319 = vmatmul.f32.gmra.mxu0 %v457
        %v1320 = vpop.f32.mrf.mxu0
        %v1321 = vadd.f32 0.0, %v1320
        %1322 = vmatmul.f32.gmra.mxu0 %v458
        %v1323 = vpop.f32.mrf.mxu0
        %v1324 = vadd.f32 0.0, %v1323
        %1325 = vmatmul.f32.gmra.mxu0 %v459
        %v1326 = vpop.f32.mrf.mxu0
        %v1327 = vadd.f32 0.0, %v1326
        %1328 = vmatmul.f32.gmra.mxu0 %v460
        %v1329 = vpop.f32.mrf.mxu0
        %v1330 = vadd.f32 0.0, %v1329
        %1331 = vmatmul.f32.gmra.mxu0 %v461
        %v1332 = vpop.f32.mrf.mxu0
        %v1333 = vadd.f32 0.0, %v1332
        %1334 = vmatmul.f32.gmra.mxu0 %v462
        %v1335 = vpop.f32.mrf.mxu0
        %v1336 = vadd.f32 0.0, %v1335
        %1337 = vmatmul.f32.gmra.mxu0 %v463
        %v1338 = vpop.f32.mrf.mxu0
        %v1339 = vadd.f32 0.0, %v1338
        %1340 = vmatmul.f32.gmra.mxu0 %v464
        %v1341 = vpop.f32.mrf.mxu0
        %v1342 = vadd.f32 0.0, %v1341
        %1343 = vmatmul.f32.gmra.mxu0 %v465
        %v1344 = vpop.f32.mrf.mxu0
        %v1345 = vadd.f32 0.0, %v1344
        %1346 = vmatmul.f32.gmra.mxu0 %v466
        %v1347 = vpop.f32.mrf.mxu0
        %v1348 = vadd.f32 0.0, %v1347
        %1349 = vmatmul.f32.gmra.mxu0 %v467
        %v1350 = vpop.f32.mrf.mxu0
        %v1351 = vadd.f32 0.0, %v1350
        %1352 = vmatmul.f32.gmra.mxu0 %v468
        %v1353 = vpop.f32.mrf.mxu0
        %v1354 = vadd.f32 0.0, %v1353
        %1355 = vmatmul.f32.gmra.mxu0 %v469
        %v1356 = vpop.f32.mrf.mxu0
        %v1357 = vadd.f32 0.0, %v1356
        %1358 = vmatmul.f32.gmra.mxu0 %v470
        %v1359 = vpop.f32.mrf.mxu0
        %v1360 = vadd.f32 0.0, %v1359
        %1361 = vmatmul.f32.gmra.mxu0 %v471
        %v1362 = vpop.f32.mrf.mxu0
        %v1363 = vadd.f32 0.0, %v1362
        %1364 = vmatmul.f32.gmra.mxu0 %v472
        %v1365 = vpop.f32.mrf.mxu0
        %v1366 = vadd.f32 0.0, %v1365
        %1367 = vmatmul.f32.gmra.mxu0 %v473
        %v1368 = vpop.f32.mrf.mxu0
        %v1369 = vadd.f32 0.0, %v1368
        %1370 = vmatmul.f32.gmra.mxu0 %v474
        %v1371 = vpop.f32.mrf.mxu0
        %v1372 = vadd.f32 0.0, %v1371
        %1373 = vmatmul.f32.gmra.mxu0 %v475
        %v1374 = vpop.f32.mrf.mxu0
        %v1375 = vadd.f32 0.0, %v1374
        %1376 = vmatmul.f32.gmra.mxu0 %v476
        %v1377 = vpop.f32.mrf.mxu0
        %v1378 = vadd.f32 0.0, %v1377
        %1379 = vmatmul.f32.gmra.mxu0 %v477
        %v1380 = vpop.f32.mrf.mxu0
        %v1381 = vadd.f32 0.0, %v1380
        %1382 = vmatmul.f32.gmra.mxu0 %v478
        %v1383 = vpop.f32.mrf.mxu0
        %v1384 = vadd.f32 0.0, %v1383
        %1385 = vmatmul.f32.gmra.mxu0 %v479
        %v1386 = vpop.f32.mrf.mxu0
        %v1387 = vadd.f32 0.0, %v1386
        %1388 = vmatmul.f32.gmra.mxu0 %v480
        %v1389 = vpop.f32.mrf.mxu0
        %v1390 = vadd.f32 0.0, %v1389
        %1391 = vmatmul.f32.gmra.mxu0 %v481
        %v1392 = vpop.f32.mrf.mxu0
        %v1393 = vadd.f32 0.0, %v1392
        %1394 = vmatmul.f32.gmra.mxu0 %v482
        %v1395 = vpop.f32.mrf.mxu0
        %v1396 = vadd.f32 0.0, %v1395
        %1397 = vmatmul.f32.gmra.mxu0 %v483
        %v1398 = vpop.f32.mrf.mxu0
        %v1399 = vadd.f32 0.0, %v1398
        %1400 = vmatmul.f32.gmra.mxu0 %v484
        %v1401 = vpop.f32.mrf.mxu0
        %v1402 = vadd.f32 0.0, %v1401
        %1403 = vmatmul.f32.gmra.mxu0 %v485
        %v1404 = vpop.f32.mrf.mxu0
        %v1405 = vadd.f32 0.0, %v1404
        %1406 = vmatmul.f32.gmra.mxu0 %v486
        %v1407 = vpop.f32.mrf.mxu0
        %v1408 = vadd.f32 0.0, %v1407
        %1409 = vmatmul.f32.gmra.mxu0 %v487
        %v1410 = vpop.f32.mrf.mxu0
        %v1411 = vadd.f32 0.0, %v1410
        %1412 = vmatmul.f32.gmra.mxu0 %v488
        %v1413 = vpop.f32.mrf.mxu0
        %v1414 = vadd.f32 0.0, %v1413
        %1415 = vmatmul.f32.gmra.mxu0 %v489
        %v1416 = vpop.f32.mrf.mxu0
        %v1417 = vadd.f32 0.0, %v1416
        %1418 = vmatmul.f32.gmra.mxu0 %v490
        %v1419 = vpop.f32.mrf.mxu0
        %v1420 = vadd.f32 0.0, %v1419
        %1421 = vmatmul.f32.gmra.mxu0 %v491
        %v1422 = vpop.f32.mrf.mxu0
        %v1423 = vadd.f32 0.0, %v1422
        %1424 = vmatmul.f32.gmra.mxu0 %v492
        %v1425 = vpop.f32.mrf.mxu0
        %v1426 = vadd.f32 0.0, %v1425
        %1427 = vmatmul.f32.gmra.mxu0 %v493
        %v1428 = vpop.f32.mrf.mxu0
        %v1429 = vadd.f32 0.0, %v1428
        %1430 = vmatmul.f32.gmra.mxu0 %v494
        %v1431 = vpop.f32.mrf.mxu0
        %v1432 = vadd.f32 0.0, %v1431
        %1433 = vmatmul.f32.gmra.mxu0 %v495
        %v1434 = vpop.f32.mrf.mxu0
        %v1435 = vadd.f32 0.0, %v1434
        %1436 = vmatmul.f32.gmra.mxu0 %v496
        %v1437 = vpop.f32.mrf.mxu0
        %v1438 = vadd.f32 0.0, %v1437
        %1439 = vmatmul.f32.gmra.mxu0 %v497
        %v1440 = vpop.f32.mrf.mxu0
        %v1441 = vadd.f32 0.0, %v1440
        %1442 = vmatmul.f32.gmra.mxu0 %v498
        %v1443 = vpop.f32.mrf.mxu0
        %v1444 = vadd.f32 0.0, %v1443
        %1445 = vmatmul.f32.gmra.mxu0 %v499
        %v1446 = vpop.f32.mrf.mxu0
        %v1447 = vadd.f32 0.0, %v1446
        %1448 = vmatmul.f32.gmra.mxu0 %v500
        %v1449 = vpop.f32.mrf.mxu0
        %v1450 = vadd.f32 0.0, %v1449
        %1451 = vmatmul.f32.gmra.mxu0 %v501
        %v1452 = vpop.f32.mrf.mxu0
        %v1453 = vadd.f32 0.0, %v1452
        %1454 = vmatmul.f32.gmra.mxu0 %v502
        %v1455 = vpop.f32.mrf.mxu0
        %v1456 = vadd.f32 0.0, %v1455
        %1457 = vmatmul.f32.gmra.mxu0 %v503
        %v1458 = vpop.f32.mrf.mxu0
        %v1459 = vadd.f32 0.0, %v1458
        %1460 = vmatmul.f32.gmra.mxu0 %v504
        %v1461 = vpop.f32.mrf.mxu0
        %v1462 = vadd.f32 0.0, %v1461
        %1463 = vmatmul.f32.gmra.mxu0 %v505
        %v1464 = vpop.f32.mrf.mxu0
        %v1465 = vadd.f32 0.0, %v1464
        %1466 = vmatmul.f32.gmra.mxu0 %v506
        %v1467 = vpop.f32.mrf.mxu0
        %v1468 = vadd.f32 0.0, %v1467
        %1469 = vmatmul.f32.gmra.mxu0 %v507
        %v1470 = vpop.f32.mrf.mxu0
        %v1471 = vadd.f32 0.0, %v1470
        %1472 = vmatmul.f32.gmra.mxu0 %v508
        %v1473 = vpop.f32.mrf.mxu0
        %v1474 = vadd.f32 0.0, %v1473
        %1475 = vmatmul.f32.gmra.mxu0 %v509
        %v1476 = vpop.f32.mrf.mxu0
        %v1477 = vadd.f32 0.0, %v1476
        %1478 = vmatmul.f32.gmra.mxu0 %v510
        %v1479 = vpop.f32.mrf.mxu0
        %v1480 = vadd.f32 0.0, %v1479
        %1481 = vmatmul.f32.gmra.mxu0 %v511
        %v1482 = vpop.f32.mrf.mxu0
        %v1483 = vadd.f32 0.0, %v1482
        %1484 = vmatmul.f32.gmra.mxu0 %v512
        %v1485 = vpop.f32.mrf.mxu0
        %v1486 = vadd.f32 0.0, %v1485
        %1487 = vmatmul.f32.gmra.mxu0 %v513
        %v1488 = vpop.f32.mrf.mxu0
        %v1489 = vadd.f32 0.0, %v1488
        %1490 = vmatmul.f32.gmra.mxu0 %v514
        %v1491 = vpop.f32.mrf.mxu0
        %v1492 = vadd.f32 0.0, %v1491
        %1493 = vmatmul.f32.gmra.mxu0 %v515
        %v1494 = vpop.f32.mrf.mxu0
        %v1495 = vadd.f32 0.0, %v1494
        %1496 = vmatmul.f32.gmra.mxu0 %v516
        %v1497 = vpop.f32.mrf.mxu0
        %v1498 = vadd.f32 0.0, %v1497
        %1499 = vmatmul.f32.gmra.mxu0 %v517
        %v1500 = vpop.f32.mrf.mxu0
        %v1501 = vadd.f32 0.0, %v1500
        %1502 = vmatmul.f32.gmra.mxu0 %v518
        %v1503 = vpop.f32.mrf.mxu0
        %v1504 = vadd.f32 0.0, %v1503
        %1505 = vmatmul.f32.gmra.mxu0 %v519
        %v1506 = vpop.f32.mrf.mxu0
        %v1507 = vadd.f32 0.0, %v1506
        %1508 = vmatmul.f32.gmra.mxu0 %v520
        %v1509 = vpop.f32.mrf.mxu0
        %v1510 = vadd.f32 0.0, %v1509
        %1511 = vmatmul.f32.gmra.mxu0 %v521
        %v1512 = vpop.f32.mrf.mxu0
        %v1513 = vadd.f32 0.0, %v1512
        %1514 = vmatmul.f32.gmra.mxu0 %v522
        %v1515 = vpop.f32.mrf.mxu0
        %v1516 = vadd.f32 0.0, %v1515
        %1517 = vmatmul.f32.gmra.mxu0 %v523
        %v1518 = vpop.f32.mrf.mxu0
        %v1519 = vadd.f32 0.0, %v1518
        %1520 = vmatmul.f32.gmra.mxu0 %v524
        %v1521 = vpop.f32.mrf.mxu0
        %v1522 = vadd.f32 0.0, %v1521
        %1523 = vmatmul.f32.gmra.mxu0 %v525
        %v1524 = vpop.f32.mrf.mxu0
        %v1525 = vadd.f32 0.0, %v1524
        %1526 = vmatmul.f32.gmra.mxu0 %v526
        %v1527 = vpop.f32.mrf.mxu0
        %v1528 = vadd.f32 0.0, %v1527
        %1529 = vmatmul.f32.gmra.mxu0 %v527
        %v1530 = vpop.f32.mrf.mxu0
        %v1531 = vadd.f32 0.0, %v1530
        %1532 = vmatmul.f32.gmra.mxu0 %v528
        %v1533 = vpop.f32.mrf.mxu0
        %v1534 = vadd.f32 0.0, %v1533
        %1535 = vmatmul.f32.gmra.mxu0 %v529
        %v1536 = vpop.f32.mrf.mxu0
        %v1537 = vadd.f32 0.0, %v1536
        %1538 = vmatmul.f32.gmra.mxu0 %v530
        %v1539 = vpop.f32.mrf.mxu0
        %v1540 = vadd.f32 0.0, %v1539
        %1541 = vmatmul.f32.gmra.mxu0 %v531
        %v1542 = vpop.f32.mrf.mxu0
        %v1543 = vadd.f32 0.0, %v1542
        %1544 = vmatmul.f32.gmra.mxu0 %v532
        %v1545 = vpop.f32.mrf.mxu0
        %v1546 = vadd.f32 0.0, %v1545
        %1547 = vmatmul.f32.gmra.mxu0 %v533
        %v1548 = vpop.f32.mrf.mxu0
        %v1549 = vadd.f32 0.0, %v1548
        %1550 = vmatmul.f32.gmra.mxu0 %v534
        %v1551 = vpop.f32.mrf.mxu0
        %v1552 = vadd.f32 0.0, %v1551
        %1553 = vmatmul.f32.gmra.mxu0 %v535
        %v1554 = vpop.f32.mrf.mxu0
        %v1555 = vadd.f32 0.0, %v1554
        %1556 = vmatmul.f32.gmra.mxu0 %v536
        %v1557 = vpop.f32.mrf.mxu0
        %v1558 = vadd.f32 0.0, %v1557
        %1559 = vmatmul.f32.gmra.mxu0 %v537
        %v1560 = vpop.f32.mrf.mxu0
        %v1561 = vadd.f32 0.0, %v1560
        %1562 = vmatmul.f32.gmra.mxu0 %v538
        %v1563 = vpop.f32.mrf.mxu0
        %v1564 = vadd.f32 0.0, %v1563
        %1565 = vmatmul.f32.gmra.mxu0 %v539
        %v1566 = vpop.f32.mrf.mxu0
        %v1567 = vadd.f32 0.0, %v1566
        %1568 = vmatmul.f32.gmra.mxu0 %v540
        %v1569 = vpop.f32.mrf.mxu0
        %v1570 = vadd.f32 0.0, %v1569
        %1571 = vmatmul.f32.gmra.mxu0 %v541
        %v1572 = vpop.f32.mrf.mxu0
        %v1573 = vadd.f32 0.0, %v1572
        %1574 = vmatmul.f32.gmra.mxu0 %v542
        %v1575 = vpop.f32.mrf.mxu0
        %v1576 = vadd.f32 0.0, %v1575
        %1577 = vmatmul.f32.gmra.mxu0 %v543
        %v1578 = vpop.f32.mrf.mxu0
        %v1579 = vadd.f32 0.0, %v1578
        %1580 = vmatmul.f32.gmra.mxu0 %v544
        %v1581 = vpop.f32.mrf.mxu0
        %v1582 = vadd.f32 0.0, %v1581
        %1583 = vmatmul.f32.gmra.mxu0 %v545
        %v1584 = vpop.f32.mrf.mxu0
        %v1585 = vadd.f32 0.0, %v1584
        %1586 = vmatmul.f32.gmra.mxu0 %v546
        %v1587 = vpop.f32.mrf.mxu0
        %v1588 = vadd.f32 0.0, %v1587
        %1589 = vmatmul.f32.gmra.mxu0 %v547
        %v1590 = vpop.f32.mrf.mxu0
        %v1591 = vadd.f32 0.0, %v1590
        %1592 = vmatmul.f32.gmra.mxu0 %v548
        %v1593 = vpop.f32.mrf.mxu0
        %v1594 = vadd.f32 0.0, %v1593
        %1595 = vmatmul.f32.gmra.mxu0 %v549
        %v1596 = vpop.f32.mrf.mxu0
        %v1597 = vadd.f32 0.0, %v1596
        %1598 = vmatmul.f32.gmra.mxu0 %v550
        %v1599 = vpop.f32.mrf.mxu0
        %v1600 = vadd.f32 0.0, %v1599
        %1601 = vmatmul.f32.gmra.mxu0 %v551
        %v1602 = vpop.f32.mrf.mxu0
        %v1603 = vadd.f32 0.0, %v1602
        %1604 = vmatmul.f32.gmra.mxu0 %v552
        %v1605 = vpop.f32.mrf.mxu0
        %v1606 = vadd.f32 0.0, %v1605
        %1607 = vmatmul.f32.gmra.mxu0 %v553
        %v1608 = vpop.f32.mrf.mxu0
        %v1609 = vadd.f32 0.0, %v1608
        %1610 = vmatmul.f32.gmra.mxu0 %v554
        %v1611 = vpop.f32.mrf.mxu0
        %v1612 = vadd.f32 0.0, %v1611
        %1613 = vmatmul.f32.gmra.mxu0 %v555
        %v1614 = vpop.f32.mrf.mxu0
        %v1615 = vadd.f32 0.0, %v1614
        %1616 = vmatmul.f32.gmra.mxu0 %v556
        %v1617 = vpop.f32.mrf.mxu0
        %v1618 = vadd.f32 0.0, %v1617
        %1619 = vmatmul.f32.gmra.mxu0 %v557
        %v1620 = vpop.f32.mrf.mxu0
        %v1621 = vadd.f32 0.0, %v1620
        %1622 = vmatmul.f32.gmra.mxu0 %v558
        %v1623 = vpop.f32.mrf.mxu0
        %v1624 = vadd.f32 0.0, %v1623
        %1625 = vmatmul.f32.gmra.mxu0 %v559
        %v1626 = vpop.f32.mrf.mxu0
        %v1627 = vadd.f32 0.0, %v1626
        %1628 = vmatmul.f32.gmra.mxu0 %v560
        %v1629 = vpop.f32.mrf.mxu0
        %v1630 = vadd.f32 0.0, %v1629
        %1631 = vmatmul.f32.gmra.mxu0 %v561
        %v1632 = vpop.f32.mrf.mxu0
        %v1633 = vadd.f32 0.0, %v1632
        %1634 = vmatmul.f32.gmra.mxu0 %v562
        %v1635 = vpop.f32.mrf.mxu0
        %v1636 = vadd.f32 0.0, %v1635
        %1637 = vmatmul.f32.gmra.mxu0 %v563
        %v1638 = vpop.f32.mrf.mxu0
        %v1639 = vadd.f32 0.0, %v1638
        %1640 = vmatmul.f32.gmra.mxu0 %v564
        %v1641 = vpop.f32.mrf.mxu0
        %v1642 = vadd.f32 0.0, %v1641
        %1643 = vmatmul.f32.gmra.mxu0 %v565
        %v1644 = vpop.f32.mrf.mxu0
        %v1645 = vadd.f32 0.0, %v1644
        %1646 = vmatmul.f32.gmra.mxu0 %v566
        %v1647 = vpop.f32.mrf.mxu0
        %v1648 = vadd.f32 0.0, %v1647
        %1649 = vmatmul.f32.gmra.mxu0 %v567
        %v1650 = vpop.f32.mrf.mxu0
        %v1651 = vadd.f32 0.0, %v1650
        %1652 = vmatmul.f32.gmra.mxu0 %v568
        %v1653 = vpop.f32.mrf.mxu0
        %v1654 = vadd.f32 0.0, %v1653
        %1655 = vmatmul.f32.gmra.mxu0 %v569
        %v1656 = vpop.f32.mrf.mxu0
        %v1657 = vadd.f32 0.0, %v1656
        %1658 = vmatmul.f32.gmra.mxu0 %v570
        %v1659 = vpop.f32.mrf.mxu0
        %v1660 = vadd.f32 0.0, %v1659
        %1661 = vmatmul.f32.gmra.mxu0 %v571
        %v1662 = vpop.f32.mrf.mxu0
        %v1663 = vadd.f32 0.0, %v1662
        %1664 = vmatmul.f32.gmra.mxu0 %v572
        %v1665 = vpop.f32.mrf.mxu0
        %v1666 = vadd.f32 0.0, %v1665
        %1667 = vmatmul.f32.gmra.mxu0 %v573
        %v1668 = vpop.f32.mrf.mxu0
        %v1669 = vadd.f32 0.0, %v1668
        %1670 = vmatmul.f32.gmra.mxu0 %v574
        %v1671 = vpop.f32.mrf.mxu0
        %v1672 = vadd.f32 0.0, %v1671
        %1673 = vmatmul.f32.gmra.mxu0 %v575
        %v1674 = vpop.f32.mrf.mxu0
        %v1675 = vadd.f32 0.0, %v1674
        %1676 = vmatmul.f32.gmra.mxu0 %v576
        %v1677 = vpop.f32.mrf.mxu0
        %v1678 = vadd.f32 0.0, %v1677
        %1679 = vmatmul.f32.gmra.mxu0 %v577
        %v1680 = vpop.f32.mrf.mxu0
        %v1681 = vadd.f32 0.0, %v1680
        %1682 = vmatmul.f32.gmra.mxu0 %v578
        %v1683 = vpop.f32.mrf.mxu0
        %v1684 = vadd.f32 0.0, %v1683
        %1685 = vmatmul.f32.gmra.mxu0 %v579
        %v1686 = vpop.f32.mrf.mxu0
        %v1687 = vadd.f32 0.0, %v1686
        %1688 = vmatmul.f32.gmra.mxu0 %v580
        %v1689 = vpop.f32.mrf.mxu0
        %v1690 = vadd.f32 0.0, %v1689
        %1691 = vmatmul.f32.gmra.mxu0 %v581
        %v1692 = vpop.f32.mrf.mxu0
        %v1693 = vadd.f32 0.0, %v1692
        %1694 = vmatmul.f32.gmra.mxu0 %v582
        %v1695 = vpop.f32.mrf.mxu0
        %v1696 = vadd.f32 0.0, %v1695
        %1697 = vmatmul.f32.gmra.mxu0 %v583
        %v1698 = vpop.f32.mrf.mxu0
        %v1699 = vadd.f32 0.0, %v1698
        %1700 = vmatmul.f32.gmra.mxu0 %v584
        %v1701 = vpop.f32.mrf.mxu0
        %v1702 = vadd.f32 0.0, %v1701
        %1703 = vmatmul.f32.gmra.mxu0 %v585
        %v1704 = vpop.f32.mrf.mxu0
        %v1705 = vadd.f32 0.0, %v1704
        %1706 = vmatmul.f32.gmra.mxu0 %v586
        %v1707 = vpop.f32.mrf.mxu0
        %v1708 = vadd.f32 0.0, %v1707
        %1709 = vmatmul.f32.gmra.mxu0 %v587
        %v1710 = vpop.f32.mrf.mxu0
        %v1711 = vadd.f32 0.0, %v1710
        %1712 = vmatmul.f32.gmra.mxu0 %v588
        %v1713 = vpop.f32.mrf.mxu0
        %v1714 = vadd.f32 0.0, %v1713
        %1715 = vmatmul.f32.gmra.mxu0 %v589
        %v1716 = vpop.f32.mrf.mxu0
        %v1717 = vadd.f32 0.0, %v1716
        %1718 = vmatmul.f32.gmra.mxu0 %v590
        %v1719 = vpop.f32.mrf.mxu0
        %v1720 = vadd.f32 0.0, %v1719
        %1721 = vmatmul.f32.gmra.mxu0 %v591
        %v1722 = vpop.f32.mrf.mxu0
        %v1723 = vadd.f32 0.0, %v1722
        %1724 = vmatmul.f32.gmra.mxu0 %v592
        %v1725 = vpop.f32.mrf.mxu0
        %v1726 = vadd.f32 0.0, %v1725
        %1727 = vmatmul.f32.gmra.mxu0 %v593
        %v1728 = vpop.f32.mrf.mxu0
        %v1729 = vadd.f32 0.0, %v1728
        %1730 = vmatmul.f32.gmra.mxu0 %v594
        %v1731 = vpop.f32.mrf.mxu0
        %v1732 = vadd.f32 0.0, %v1731
        %1733 = vmatmul.f32.gmra.mxu0 %v595
        %v1734 = vpop.f32.mrf.mxu0
        %v1735 = vadd.f32 0.0, %v1734
        %1736 = vmatmul.f32.gmra.mxu0 %v596
        %v1737 = vpop.f32.mrf.mxu0
        %v1738 = vadd.f32 0.0, %v1737
        %1739 = vmatmul.f32.gmra.mxu0 %v597
        %v1740 = vpop.f32.mrf.mxu0
        %v1741 = vadd.f32 0.0, %v1740
        %1742 = vmatmul.f32.gmra.mxu0 %v598
        %v1743 = vpop.f32.mrf.mxu0
        %v1744 = vadd.f32 0.0, %v1743
        %1745 = vmatmul.f32.gmra.mxu0 %v599
        %v1746 = vpop.f32.mrf.mxu0
        %v1747 = vadd.f32 0.0, %v1746
        %1748 = vmatmul.f32.gmra.mxu0 %v600
        %v1749 = vpop.f32.mrf.mxu0
        %v1750 = vadd.f32 0.0, %v1749
        %1751 = vmatmul.f32.gmra.mxu0 %v601
        %v1752 = vpop.f32.mrf.mxu0
        %v1753 = vadd.f32 0.0, %v1752
        %1754 = vmatmul.f32.gmra.mxu0 %v602
        %v1755 = vpop.f32.mrf.mxu0
        %v1756 = vadd.f32 0.0, %v1755
        %1757 = vmatmul.f32.gmra.mxu0 %v603
        %v1758 = vpop.f32.mrf.mxu0
        %v1759 = vadd.f32 0.0, %v1758
        %1760 = vmatmul.f32.gmra.mxu0 %v604
        %v1761 = vpop.f32.mrf.mxu0
        %v1762 = vadd.f32 0.0, %v1761
        %1763 = vmatmul.f32.gmra.mxu0 %v605
        %v1764 = vpop.f32.mrf.mxu0
        %v1765 = vadd.f32 0.0, %v1764
        %1766 = vmatmul.f32.gmra.mxu0 %v606
        %v1767 = vpop.f32.mrf.mxu0
        %v1768 = vadd.f32 0.0, %v1767
        %1769 = vmatmul.f32.gmra.mxu0 %v607
        %v1770 = vpop.f32.mrf.mxu0
        %v1771 = vadd.f32 0.0, %v1770
        %1772 = vmatmul.f32.gmra.mxu0 %v608
        %v1773 = vpop.f32.mrf.mxu0
        %v1774 = vadd.f32 0.0, %v1773
        %1775 = vmatmul.f32.gmra.mxu0 %v609
        %v1776 = vpop.f32.mrf.mxu0
        %v1777 = vadd.f32 0.0, %v1776
        %1778 = vmatmul.f32.gmra.mxu0 %v610
        %v1779 = vpop.f32.mrf.mxu0
        %v1780 = vadd.f32 0.0, %v1779
        %1781 = vmatmul.f32.gmra.mxu0 %v611
        %v1782 = vpop.f32.mrf.mxu0
        %v1783 = vadd.f32 0.0, %v1782
        %1784 = vmatmul.f32.gmra.mxu0 %v612
        %v1785 = vpop.f32.mrf.mxu0
        %v1786 = vadd.f32 0.0, %v1785
        %1787 = vmatmul.f32.gmra.mxu0 %v613
        %v1788 = vpop.f32.mrf.mxu0
        %v1789 = vadd.f32 0.0, %v1788
        %1790 = vmatmul.f32.gmra.mxu0 %v614
        %v1791 = vpop.f32.mrf.mxu0
        %v1792 = vadd.f32 0.0, %v1791
        %1793 = vmatmul.f32.gmra.mxu0 %v615
        %v1794 = vpop.f32.mrf.mxu0
        %v1795 = vadd.f32 0.0, %v1794
        %1796 = vmatmul.f32.gmra.mxu0 %v616
        %v1797 = vpop.f32.mrf.mxu0
        %v1798 = vadd.f32 0.0, %v1797
        %1799 = vmatmul.f32.gmra.mxu0 %v617
        %v1800 = vpop.f32.mrf.mxu0
        %v1801 = vadd.f32 0.0, %v1800
        %1802 = vmatmul.f32.gmra.mxu0 %v618
        %v1803 = vpop.f32.mrf.mxu0
        %v1804 = vadd.f32 0.0, %v1803
        %1805 = vmatmul.f32.gmra.mxu0 %v619
        %v1806 = vpop.f32.mrf.mxu0
        %v1807 = vadd.f32 0.0, %v1806
        %1808 = vmatmul.f32.gmra.mxu0 %v620
        %v1809 = vpop.f32.mrf.mxu0
        %v1810 = vadd.f32 0.0, %v1809
        %1811 = vmatmul.f32.gmra.mxu0 %v621
        %v1812 = vpop.f32.mrf.mxu0
        %v1813 = vadd.f32 0.0, %v1812
        %1814 = vmatmul.f32.gmra.mxu0 %v622
        %v1815 = vpop.f32.mrf.mxu0
        %v1816 = vadd.f32 0.0, %v1815
        %1817 = vmatmul.f32.gmra.mxu0 %v623
        %v1818 = vpop.f32.mrf.mxu0
        %v1819 = vadd.f32 0.0, %v1818
        %1820 = vmatmul.f32.gmra.mxu0 %v624
        %v1821 = vpop.f32.mrf.mxu0
        %v1822 = vadd.f32 0.0, %v1821
        %1823 = vmatmul.f32.gmra.mxu0 %v625
        %v1824 = vpop.f32.mrf.mxu0
        %v1825 = vadd.f32 0.0, %v1824
        %1826 = vmatmul.f32.gmra.mxu0 %v626
        %v1827 = vpop.f32.mrf.mxu0
        %v1828 = vadd.f32 0.0, %v1827
        %1829 = vmatmul.f32.gmra.mxu0 %v627
        %v1830 = vpop.f32.mrf.mxu0
        %v1831 = vadd.f32 0.0, %v1830
        %1832 = vmatmul.f32.gmra.mxu0 %v628
        %v1833 = vpop.f32.mrf.mxu0
        %v1834 = vadd.f32 0.0, %v1833
        %1835 = vmatmul.f32.gmra.mxu0 %v629
        %v1836 = vpop.f32.mrf.mxu0
        %v1837 = vadd.f32 0.0, %v1836
        %1838 = vmatmul.f32.gmra.mxu0 %v630
        %v1839 = vpop.f32.mrf.mxu0
        %v1840 = vadd.f32 0.0, %v1839
        %1841 = vmatmul.f32.gmra.mxu0 %v631
        %v1842 = vpop.f32.mrf.mxu0
        %v1843 = vadd.f32 0.0, %v1842
        %1844 = vmatmul.f32.gmra.mxu0 %v632
        %v1845 = vpop.f32.mrf.mxu0
        %v1846 = vadd.f32 0.0, %v1845
        %1847 = vmatmul.f32.gmra.mxu0 %v633
        %v1848 = vpop.f32.mrf.mxu0
        %v1849 = vadd.f32 0.0, %v1848
        %1850 = vmatmul.f32.gmra.mxu0 %v634
        %v1851 = vpop.f32.mrf.mxu0
        %v1852 = vadd.f32 0.0, %v1851
        %1853 = vmatmul.f32.gmra.mxu0 %v635
        %v1854 = vpop.f32.mrf.mxu0
        %v1855 = vadd.f32 0.0, %v1854
        %1856 = vmatmul.f32.gmra.mxu0 %v636
        %v1857 = vpop.f32.mrf.mxu0
        %v1858 = vadd.f32 0.0, %v1857
        %1859 = vmatmul.f32.gmra.mxu0 %v637
        %v1860 = vpop.f32.mrf.mxu0
        %v1861 = vadd.f32 0.0, %v1860
        %1862 = vmatmul.f32.gmra.mxu0 %v638
        %v1863 = vpop.f32.mrf.mxu0
        %v1864 = vadd.f32 0.0, %v1863
        %1865 = vmatmul.f32.gmra.mxu0 %v639
        %v1866 = vpop.f32.mrf.mxu0
        %v1867 = vadd.f32 0.0, %v1866
        %1868 = vmatmul.f32.gmra.mxu0 %v640
        %v1869 = vpop.f32.mrf.mxu0
        %v1870 = vadd.f32 0.0, %v1869
        %1871 = vmatmul.f32.gmra.mxu0 %v641
        %v1872 = vpop.f32.mrf.mxu0
        %v1873 = vadd.f32 0.0, %v1872
        %1874 = vmatmul.f32.gmra.mxu0 %v642
        %v1875 = vpop.f32.mrf.mxu0
        %v1876 = vadd.f32 0.0, %v1875
        %1877 = vmatmul.f32.gmra.mxu0 %v643
        %v1878 = vpop.f32.mrf.mxu0
        %v1879 = vadd.f32 0.0, %v1878
        %1880 = vmatmul.f32.gmra.mxu0 %v644
        %v1881 = vpop.f32.mrf.mxu0
        %v1882 = vadd.f32 0.0, %v1881
        %1883 = vmatmul.f32.gmra.mxu0 %v645
        %v1884 = vpop.f32.mrf.mxu0
        %v1885 = vadd.f32 0.0, %v1884
        %1886 = vmatmul.f32.gmra.mxu0 %v646
        %v1887 = vpop.f32.mrf.mxu0
        %v1888 = vadd.f32 0.0, %v1887
        %1889 = vmatmul.f32.gmra.mxu0 %v647
        %v1890 = vpop.f32.mrf.mxu0
        %v1891 = vadd.f32 0.0, %v1890
        %1892 = vmatmul.f32.gmra.mxu0 %v648
        %v1893 = vpop.f32.mrf.mxu0
        %v1894 = vadd.f32 0.0, %v1893
        %1895 = vmatmul.f32.gmra.mxu0 %v649
        %v1896 = vpop.f32.mrf.mxu0
        %v1897 = vadd.f32 0.0, %v1896
        %1898 = vmatmul.f32.gmra.mxu0 %v650
        %v1899 = vpop.f32.mrf.mxu0
        %v1900 = vadd.f32 0.0, %v1899
        %1901 = vmatmul.f32.gmra.mxu0 %v651
        %v1902 = vpop.f32.mrf.mxu0
        %v1903 = vadd.f32 0.0, %v1902
        %1904 = vmatmul.f32.gmra.mxu0 %v652
        %v1905 = vpop.f32.mrf.mxu0
        %v1906 = vadd.f32 0.0, %v1905
        %1907 = vmatmul.f32.gmra.mxu0 %v653
        %v1908 = vpop.f32.mrf.mxu0
        %v1909 = vadd.f32 0.0, %v1908
        %1910 = vmatmul.f32.gmra.mxu0 %v654
        %v1911 = vpop.f32.mrf.mxu0
        %v1912 = vadd.f32 0.0, %v1911
        %1913 = vmatmul.f32.gmra.mxu0 %v655
        %v1914 = vpop.f32.mrf.mxu0
        %v1915 = vadd.f32 0.0, %v1914
        %1916 = vmatmul.f32.gmra.mxu0 %v656
        %v1917 = vpop.f32.mrf.mxu0
        %v1918 = vadd.f32 0.0, %v1917
        %1919 = vmatmul.f32.gmra.mxu0 %v657
        %v1920 = vpop.f32.mrf.mxu0
        %v1921 = vadd.f32 0.0, %v1920
        %1922 = vmatmul.f32.gmra.mxu0 %v658
        %v1923 = vpop.f32.mrf.mxu0
        %v1924 = vadd.f32 0.0, %v1923
        %1925 = vmatmul.f32.gmra.mxu0 %v659
        %v1926 = vpop.f32.mrf.mxu0
        %v1927 = vadd.f32 0.0, %v1926
        %1928 = vmatmul.f32.gmra.mxu0 %v660
        %v1929 = vpop.f32.mrf.mxu0
        %v1930 = vadd.f32 0.0, %v1929
        %1931 = vmatmul.f32.gmra.mxu0 %v661
        %v1932 = vpop.f32.mrf.mxu0
        %v1933 = vadd.f32 0.0, %v1932
        %1934 = vmatmul.f32.gmra.mxu0 %v662
        %v1935 = vpop.f32.mrf.mxu0
        %v1936 = vadd.f32 0.0, %v1935
        %1937 = vmatmul.f32.gmra.mxu0 %v663
        %v1938 = vpop.f32.mrf.mxu0
        %v1939 = vadd.f32 0.0, %v1938
        %1940 = vmatmul.f32.gmra.mxu0 %v664
        %v1941 = vpop.f32.mrf.mxu0
        %v1942 = vadd.f32 0.0, %v1941
        %1943 = vmatmul.f32.gmra.mxu0 %v665
        %v1944 = vpop.f32.mrf.mxu0
        %v1945 = vadd.f32 0.0, %v1944
        %1946 = vmatmul.f32.gmra.mxu0 %v666
        %v1947 = vpop.f32.mrf.mxu0
        %v1948 = vadd.f32 0.0, %v1947
        %1949 = vmatmul.f32.gmra.mxu0 %v667
        %v1950 = vpop.f32.mrf.mxu0
        %v1951 = vadd.f32 0.0, %v1950
        %1952 = vmatmul.f32.gmra.mxu0 %v668
        %v1953 = vpop.f32.mrf.mxu0
        %v1954 = vadd.f32 0.0, %v1953
        %1955 = vmatmul.f32.gmra.mxu0 %v669
        %v1956 = vpop.f32.mrf.mxu0
        %v1957 = vadd.f32 0.0, %v1956
        %1958 = vmatmul.f32.gmra.mxu0 %v670
        %v1959 = vpop.f32.mrf.mxu0
        %v1960 = vadd.f32 0.0, %v1959
        %1961 = vmatmul.f32.gmra.mxu0 %v671
        %v1962 = vpop.f32.mrf.mxu0
        %v1963 = vadd.f32 0.0, %v1962
        %1964 = vmatmul.f32.gmra.mxu0 %v672
        %v1965 = vpop.f32.mrf.mxu0
        %v1966 = vadd.f32 0.0, %v1965
        %1967 = vmatmul.f32.gmra.mxu0 %v673
        %v1968 = vpop.f32.mrf.mxu0
        %v1969 = vadd.f32 0.0, %v1968
        %1970 = vmatmul.f32.gmra.mxu0 %v674
        %v1971 = vpop.f32.mrf.mxu0
        %v1972 = vadd.f32 0.0, %v1971
        %1973 = vmatmul.f32.gmra.mxu0 %v675
        %v1974 = vpop.f32.mrf.mxu0
        %v1975 = vadd.f32 0.0, %v1974
        %1976 = vmatmul.f32.gmra.mxu0 %v676
        %v1977 = vpop.f32.mrf.mxu0
        %v1978 = vadd.f32 0.0, %v1977
        %1979 = vmatmul.f32.gmra.mxu0 %v677
        %v1980 = vpop.f32.mrf.mxu0
        %v1981 = vadd.f32 0.0, %v1980
        %1982 = vmatmul.f32.gmra.mxu0 %v678
        %v1983 = vpop.f32.mrf.mxu0
        %v1984 = vadd.f32 0.0, %v1983
        %1985 = vmatmul.f32.gmra.mxu0 %v679
        %v1986 = vpop.f32.mrf.mxu0
        %v1987 = vadd.f32 0.0, %v1986
        %1988 = vmatmul.f32.gmra.mxu0 %v680
        %v1989 = vpop.f32.mrf.mxu0
        %v1990 = vadd.f32 0.0, %v1989
        %1991 = vmatmul.f32.gmra.mxu0 %v681
        %v1992 = vpop.f32.mrf.mxu0
        %v1993 = vadd.f32 0.0, %v1992
        %1994 = vmatmul.f32.gmra.mxu0 %v682
        %v1995 = vpop.f32.mrf.mxu0
        %v1996 = vadd.f32 0.0, %v1995
        %1997 = vmatmul.f32.gmra.mxu0 %v683
        %v1998 = vpop.f32.mrf.mxu0
        %v1999 = vadd.f32 0.0, %v1998
        %2000 = vmatmul.f32.gmra.mxu0 %v684
        %v2001 = vpop.f32.mrf.mxu0
        %v2002 = vadd.f32 0.0, %v2001
        %2003 = vmatmul.f32.gmra.mxu0 %v685
        %v2004 = vpop.f32.mrf.mxu0
        %v2005 = vadd.f32 0.0, %v2004
        %2006 = vmatmul.f32.gmra.mxu0 %v686
        %v2007 = vpop.f32.mrf.mxu0
        %v2008 = vadd.f32 0.0, %v2007
        %2009 = vmatmul.f32.gmra.mxu0 %v687
        %v2010 = vpop.f32.mrf.mxu0
        %v2011 = vadd.f32 0.0, %v2010
        %2012 = vmatmul.f32.gmra.mxu0 %v688
        %v2013 = vpop.f32.mrf.mxu0
        %v2014 = vadd.f32 0.0, %v2013
        %2015 = vmatmul.f32.gmra.mxu0 %v689
        %v2016 = vpop.f32.mrf.mxu0
        %v2017 = vadd.f32 0.0, %v2016
        %2018 = vmatmul.f32.gmra.mxu0 %v690
        %v2019 = vpop.f32.mrf.mxu0
        %v2020 = vadd.f32 0.0, %v2019
        %2021 = vmatmul.f32.gmra.mxu0 %v691
        %v2022 = vpop.f32.mrf.mxu0
        %v2023 = vadd.f32 0.0, %v2022
        %2024 = vmatmul.f32.gmra.mxu0 %v692
        %v2025 = vpop.f32.mrf.mxu0
        %v2026 = vadd.f32 0.0, %v2025
        %2027 = vmatmul.f32.gmra.mxu0 %v693
        %v2028 = vpop.f32.mrf.mxu0
        %v2029 = vadd.f32 0.0, %v2028
        %2030 = vmatmul.f32.gmra.mxu0 %v694
        %v2031 = vpop.f32.mrf.mxu0
        %v2032 = vadd.f32 0.0, %v2031
        %2033 = vmatmul.f32.gmra.mxu0 %v695
        %v2034 = vpop.f32.mrf.mxu0
        %v2035 = vadd.f32 0.0, %v2034
        %2036 = vmatmul.f32.gmra.mxu0 %v696
        %v2037 = vpop.f32.mrf.mxu0
        %v2038 = vadd.f32 0.0, %v2037
        %2039 = vmatmul.f32.gmra.mxu0 %v697
        %v2040 = vpop.f32.mrf.mxu0
        %v2041 = vadd.f32 0.0, %v2040
        %2042 = vmatmul.f32.gmra.mxu0 %v698
        %v2043 = vpop.f32.mrf.mxu0
        %v2044 = vadd.f32 0.0, %v2043
        %2045 = vmatmul.f32.gmra.mxu0 %v699
        %v2046 = vpop.f32.mrf.mxu0
        %v2047 = vadd.f32 0.0, %v2046
        %2048 = vmatmul.f32.gmra.mxu0 %v700
        %v2049 = vpop.f32.mrf.mxu0
        %v2050 = vadd.f32 0.0, %v2049
        %2051 = vmatmul.f32.gmra.mxu0 %v701
        %v2052 = vpop.f32.mrf.mxu0
        %v2053 = vadd.f32 0.0, %v2052
        %2054 = vmatmul.f32.gmra.mxu0 %v702
        %v2055 = vpop.f32.mrf.mxu0
        %v2056 = vadd.f32 0.0, %v2055
        %2057 = vmatmul.f32.gmra.mxu0 %v703
        %v2058 = vpop.f32.mrf.mxu0
        %v2059 = vadd.f32 0.0, %v2058
        %2060 = vmatmul.f32.gmra.mxu0 %v704
        %v2061 = vpop.f32.mrf.mxu0
        %v2062 = vadd.f32 0.0, %v2061
        %2063 = vmatmul.f32.gmra.mxu0 %v705
        %v2064 = vpop.f32.mrf.mxu0
        %v2065 = vadd.f32 0.0, %v2064
        %2066 = vmatmul.f32.gmra.mxu0 %v706
        %v2067 = vpop.f32.mrf.mxu0
        %v2068 = vadd.f32 0.0, %v2067
        %2069 = vmatmul.f32.gmra.mxu0 %v707
        %v2070 = vpop.f32.mrf.mxu0
        %v2071 = vadd.f32 0.0, %v2070
        %2072 = vmatmul.f32.gmra.mxu0 %v708
        %v2073 = vpop.f32.mrf.mxu0
        %v2074 = vadd.f32 0.0, %v2073
        %2075 = vmatmul.f32.gmra.mxu0 %v709
        %v2076 = vpop.f32.mrf.mxu0
        %v2077 = vadd.f32 0.0, %v2076
        %2078 = vmatmul.f32.gmra.mxu0 %v710
        %v2079 = vpop.f32.mrf.mxu0
        %v2080 = vadd.f32 0.0, %v2079
        %2081 = vmatmul.f32.gmra.mxu0 %v711
        %v2082 = vpop.f32.mrf.mxu0
        %v2083 = vadd.f32 0.0, %v2082
        %2084 = vmatmul.f32.gmra.mxu0 %v712
        %v2085 = vpop.f32.mrf.mxu0
        %v2086 = vadd.f32 0.0, %v2085
        %2087 = vmatmul.f32.gmra.mxu0 %v713
        %v2088 = vpop.f32.mrf.mxu0
        %v2089 = vadd.f32 0.0, %v2088
        %2090 = vmatmul.f32.gmra.mxu0 %v714
        %v2091 = vpop.f32.mrf.mxu0
        %v2092 = vadd.f32 0.0, %v2091
        %2093 = vmatmul.f32.gmra.mxu0 %v715
        %v2094 = vpop.f32.mrf.mxu0
        %v2095 = vadd.f32 0.0, %v2094
        %2096 = vmatmul.f32.gmra.mxu0 %v716
        %v2097 = vpop.f32.mrf.mxu0
        %v2098 = vadd.f32 0.0, %v2097
        %2099 = vmatmul.f32.gmra.mxu0 %v717
        %v2100 = vpop.f32.mrf.mxu0
        %v2101 = vadd.f32 0.0, %v2100
        %2102 = vmatmul.f32.gmra.mxu0 %v718
        %v2103 = vpop.f32.mrf.mxu0
        %v2104 = vadd.f32 0.0, %v2103
        %2105 = vmatmul.f32.gmra.mxu0 %v719
        %v2106 = vpop.f32.mrf.mxu0
        %v2107 = vadd.f32 0.0, %v2106
        %2108 = vmatmul.f32.gmra.mxu0 %v720
        %v2109 = vpop.f32.mrf.mxu0
        %v2110 = vadd.f32 0.0, %v2109
        %2111 = vmatmul.f32.gmra.mxu0 %v721
        %v2112 = vpop.f32.mrf.mxu0
        %v2113 = vadd.f32 0.0, %v2112
        %2114 = vmatmul.f32.gmra.mxu0 %v722
        %v2115 = vpop.f32.mrf.mxu0
        %v2116 = vadd.f32 0.0, %v2115
        %2117 = vmatmul.f32.gmra.mxu0 %v723
        %v2118 = vpop.f32.mrf.mxu0
        %v2119 = vadd.f32 0.0, %v2118
        %2120 = vmatmul.f32.gmra.mxu0 %v724
        %v2121 = vpop.f32.mrf.mxu0
        %v2122 = vadd.f32 0.0, %v2121
        %2123 = vmatmul.f32.gmra.mxu0 %v725
        %v2124 = vpop.f32.mrf.mxu0
        %v2125 = vadd.f32 0.0, %v2124
        %2126 = vmatmul.f32.gmra.mxu0 %v726
        %v2127 = vpop.f32.mrf.mxu0
        %v2128 = vadd.f32 0.0, %v2127
        %2129 = vmatmul.f32.gmra.mxu0 %v727
        %v2130 = vpop.f32.mrf.mxu0
        %v2131 = vadd.f32 0.0, %v2130
        %2132 = vmatmul.f32.gmra.mxu0 %v728
        %v2133 = vpop.f32.mrf.mxu0
        %v2134 = vadd.f32 0.0, %v2133
        %2135 = vmatmul.f32.gmra.mxu0 %v729
        %v2136 = vpop.f32.mrf.mxu0
        %v2137 = vadd.f32 0.0, %v2136
        %2138 = vmatmul.f32.gmra.mxu0 %v730
        %v2139 = vpop.f32.mrf.mxu0
        %v2140 = vadd.f32 0.0, %v2139
        %2141 = vmatmul.f32.gmra.mxu0 %v731
        %v2142 = vpop.f32.mrf.mxu0
        %v2143 = vadd.f32 0.0, %v2142
        %2144 = vmatmul.f32.gmra.mxu0 %v732
        %v2145 = vpop.f32.mrf.mxu0
        %v2146 = vadd.f32 0.0, %v2145
        %2147 = vmatmul.f32.gmra.mxu0 %v733
        %v2148 = vpop.f32.mrf.mxu0
        %v2149 = vadd.f32 0.0, %v2148
        %2150 = vmatmul.f32.gmra.mxu0 %v734
        %v2151 = vpop.f32.mrf.mxu0
        %v2152 = vadd.f32 0.0, %v2151
        %2153 = vmatmul.f32.gmra.mxu0 %v735
        %v2154 = vpop.f32.mrf.mxu0
        %v2155 = vadd.f32 0.0, %v2154
        %2156 = vmatmul.f32.gmra.mxu0 %v736
        %v2157 = vpop.f32.mrf.mxu0
        %v2158 = vadd.f32 0.0, %v2157
        %2159 = vmatmul.f32.gmra.mxu0 %v737
        %v2160 = vpop.f32.mrf.mxu0
        %v2161 = vadd.f32 0.0, %v2160
        %2162 = vmatmul.f32.gmra.mxu0 %v738
        %v2163 = vpop.f32.mrf.mxu0
        %v2164 = vadd.f32 0.0, %v2163
        %2165 = vmatmul.f32.gmra.mxu0 %v739
        %v2166 = vpop.f32.mrf.mxu0
        %v2167 = vadd.f32 0.0, %v2166
        %2168 = vmatmul.f32.gmra.mxu0 %v740
        %v2169 = vpop.f32.mrf.mxu0
        %v2170 = vadd.f32 0.0, %v2169
        %2171 = vmatmul.f32.gmra.mxu0 %v741
        %v2172 = vpop.f32.mrf.mxu0
        %v2173 = vadd.f32 0.0, %v2172
        %2174 = vmatmul.f32.gmra.mxu0 %v742
        %v2175 = vpop.f32.mrf.mxu0
        %v2176 = vadd.f32 0.0, %v2175
        %2177 = vmatmul.f32.gmra.mxu0 %v743
        %v2178 = vpop.f32.mrf.mxu0
        %v2179 = vadd.f32 0.0, %v2178
        %2180 = vmatmul.f32.gmra.mxu0 %v744
        %v2181 = vpop.f32.mrf.mxu0
        %v2182 = vadd.f32 0.0, %v2181
        %2183 = vmatmul.f32.gmra.mxu0 %v745
        %v2184 = vpop.f32.mrf.mxu0
        %v2185 = vadd.f32 0.0, %v2184
        %2186 = vmatmul.f32.gmra.mxu0 %v746
        %v2187 = vpop.f32.mrf.mxu0
        %v2188 = vadd.f32 0.0, %v2187
        %2189 = vmatmul.f32.gmra.mxu0 %v747
        %v2190 = vpop.f32.mrf.mxu0
        %v2191 = vadd.f32 0.0, %v2190
        %2192 = vmatmul.f32.gmra.mxu0 %v748
        %v2193 = vpop.f32.mrf.mxu0
        %v2194 = vadd.f32 0.0, %v2193
        %2195 = vmatmul.f32.gmra.mxu0 %v749
        %v2196 = vpop.f32.mrf.mxu0
        %v2197 = vadd.f32 0.0, %v2196
        %2198 = vmatmul.f32.gmra.mxu0 %v750
        %v2199 = vpop.f32.mrf.mxu0
        %v2200 = vadd.f32 0.0, %v2199
        %2201 = vmatmul.f32.gmra.mxu0 %v751
        %v2202 = vpop.f32.mrf.mxu0
        %v2203 = vadd.f32 0.0, %v2202
        %2204 = vmatmul.f32.gmra.mxu0 %v752
        %v2205 = vpop.f32.mrf.mxu0
        %v2206 = vadd.f32 0.0, %v2205
        %2207 = vmatmul.f32.gmra.mxu0 %v753
        %v2208 = vpop.f32.mrf.mxu0
        %v2209 = vadd.f32 0.0, %v2208
        %2210 = vmatmul.f32.gmra.mxu0 %v754
        %v2211 = vpop.f32.mrf.mxu0
        %v2212 = vadd.f32 0.0, %v2211
        %2213 = vmatmul.f32.gmra.mxu0 %v755
        %v2214 = vpop.f32.mrf.mxu0
        %v2215 = vadd.f32 0.0, %v2214
        %2216 = vmatmul.f32.gmra.mxu0 %v756
        %v2217 = vpop.f32.mrf.mxu0
        %v2218 = vadd.f32 0.0, %v2217
        %2219 = vmatmul.f32.gmra.mxu0 %v757
        %v2220 = vpop.f32.mrf.mxu0
        %v2221 = vadd.f32 0.0, %v2220
        %2222 = vmatmul.f32.gmra.mxu0 %v758
        %v2223 = vpop.f32.mrf.mxu0
        %v2224 = vadd.f32 0.0, %v2223
        %2225 = vmatmul.f32.gmra.mxu0 %v759
        %v2226 = vpop.f32.mrf.mxu0
        %v2227 = vadd.f32 0.0, %v2226
        %2228 = vmatmul.f32.gmra.mxu0 %v760
        %v2229 = vpop.f32.mrf.mxu0
        %v2230 = vadd.f32 0.0, %v2229
        %2231 = vmatmul.f32.gmra.mxu0 %v761
        %v2232 = vpop.f32.mrf.mxu0
        %v2233 = vadd.f32 0.0, %v2232
        %2234 = vmatmul.f32.gmra.mxu0 %v762
        %v2235 = vpop.f32.mrf.mxu0
        %v2236 = vadd.f32 0.0, %v2235
        %2237 = vmatmul.f32.gmra.mxu0 %v763
        %v2238 = vpop.f32.mrf.mxu0
        %v2239 = vadd.f32 0.0, %v2238
        %2240 = vmatmul.f32.gmra.mxu0 %v764
        %v2241 = vpop.f32.mrf.mxu0
        %v2242 = vadd.f32 0.0, %v2241
        %2243 = vmatmul.f32.gmra.mxu0 %v765
        %v2244 = vpop.f32.mrf.mxu0
        %v2245 = vadd.f32 0.0, %v2244
        %2246 = vmatmul.f32.gmra.mxu0 %v766
        %v2247 = vpop.f32.mrf.mxu0
        %v2248 = vadd.f32 0.0, %v2247
        %2249 = vmatmul.f32.gmra.mxu0 %v767
        %v2250 = vpop.f32.mrf.mxu0
        %v2251 = vadd.f32 0.0, %v2250
        %2252 = vmatmul.f32.gmra.mxu0 %v768
        %v2253 = vpop.f32.mrf.mxu0
        %v2254 = vadd.f32 0.0, %v2253
        %2255 = vmatmul.f32.gmra.mxu0 %v769
        %v2256 = vpop.f32.mrf.mxu0
        %v2257 = vadd.f32 0.0, %v2256
        %2258 = vmatmul.f32.gmra.mxu0 %v770
        %v2259 = vpop.f32.mrf.mxu0
        %v2260 = vadd.f32 0.0, %v2259
        %2261 = vmatmul.f32.gmra.mxu0 %v771
        %v2262 = vpop.f32.mrf.mxu0
        %v2263 = vadd.f32 0.0, %v2262
        %2264 = vmatmul.f32.gmra.mxu0 %v772
        %v2265 = vpop.f32.mrf.mxu0
        %v2266 = vadd.f32 0.0, %v2265
        %2267 = vmatmul.f32.gmra.mxu0 %v773
        %v2268 = vpop.f32.mrf.mxu0
        %v2269 = vadd.f32 0.0, %v2268
        %2270 = vmatmul.f32.gmra.mxu0 %v774
        %v2271 = vpop.f32.mrf.mxu0
        %v2272 = vadd.f32 0.0, %v2271
        %2273 = vmatmul.f32.gmra.mxu0 %v775
        %v2274 = vpop.f32.mrf.mxu0
        %v2275 = vadd.f32 0.0, %v2274
        %2276 = vmatmul.f32.gmra.mxu0 %v776
        %v2277 = vpop.f32.mrf.mxu0
        %v2278 = vadd.f32 0.0, %v2277
        %2279 = vmatmul.f32.gmra.mxu0 %v777
        %v2280 = vpop.f32.mrf.mxu0
        %v2281 = vadd.f32 0.0, %v2280
        %2282 = vmatmul.f32.gmra.mxu0 %v778
        %v2283 = vpop.f32.mrf.mxu0
        %v2284 = vadd.f32 0.0, %v2283
        %2285 = vmatmul.f32.gmra.mxu0 %v779
        %v2286 = vpop.f32.mrf.mxu0
        %v2287 = vadd.f32 0.0, %v2286
        %2288 = vmatmul.f32.gmra.mxu0 %v780
        %v2289 = vpop.f32.mrf.mxu0
        %v2290 = vadd.f32 0.0, %v2289
        %2291 = vmatmul.f32.gmra.mxu0 %v781
        %v2292 = vpop.f32.mrf.mxu0
        %v2293 = vadd.f32 0.0, %v2292
        %2294 = vmatmul.f32.gmra.mxu0 %v782
        %v2295 = vpop.f32.mrf.mxu0
        %v2296 = vadd.f32 0.0, %v2295
        %2297 = vmatmul.f32.gmra.mxu0 %v783
        %v2298 = vpop.f32.mrf.mxu0
        %v2299 = vadd.f32 0.0, %v2298
        %2300 = vmatmul.f32.gmra.mxu0 %v784
        %v2301 = vpop.f32.mrf.mxu0
        %v2302 = vadd.f32 0.0, %v2301
        %2303 = vmatmul.f32.gmra.mxu0 %v785
        %v2304 = vpop.f32.mrf.mxu0
        %v2305 = vadd.f32 0.0, %v2304
        %2306 = vmatmul.f32.gmra.mxu0 %v786
        %v2307 = vpop.f32.mrf.mxu0
        %v2308 = vadd.f32 0.0, %v2307
        %2309 = vmatmul.f32.gmra.mxu0 %v787
        %v2310 = vpop.f32.mrf.mxu0
        %v2311 = vadd.f32 0.0, %v2310
        %2312 = vmatmul.f32.gmra.mxu0 %v788
        %v2313 = vpop.f32.mrf.mxu0
        %v2314 = vadd.f32 0.0, %v2313
        %2315 = vmatmul.f32.gmra.mxu0 %v789
        %v2316 = vpop.f32.mrf.mxu0
        %v2317 = vadd.f32 0.0, %v2316
        %2318 = vmatmul.f32.gmra.mxu0 %v790
        %v2319 = vpop.f32.mrf.mxu0
        %v2320 = vadd.f32 0.0, %v2319
        %2321 = vmatmul.f32.gmra.mxu0 %v791
        %v2322 = vpop.f32.mrf.mxu0
        %v2323 = vadd.f32 0.0, %v2322
        %2324 = vmatmul.f32.gmra.mxu0 %v792
        %v2325 = vpop.f32.mrf.mxu0
        %v2326 = vadd.f32 0.0, %v2325
        %2327 = vmatmul.f32.gmra.mxu0 %v793
        %v2328 = vpop.f32.mrf.mxu0
        %v2329 = vadd.f32 0.0, %v2328
        %2330 = vmatmul.f32.gmra.mxu0 %v794
        %v2331 = vpop.f32.mrf.mxu0
        %v2332 = vadd.f32 0.0, %v2331
        %2333 = vmatmul.f32.gmra.mxu0 %v795
        %v2334 = vpop.f32.mrf.mxu0
        %v2335 = vadd.f32 0.0, %v2334
        %2336 = vmatmul.f32.gmra.mxu0 %v796
        %v2337 = vpop.f32.mrf.mxu0
        %v2338 = vadd.f32 0.0, %v2337
        %2339 = vmatmul.f32.gmra.mxu0 %v797
        %v2340 = vpop.f32.mrf.mxu0
        %v2341 = vadd.f32 0.0, %v2340
        %2342 = vmatmul.f32.gmra.mxu0 %v798
        %v2343 = vpop.f32.mrf.mxu0
        %v2344 = vadd.f32 0.0, %v2343
        %2345 = vmatmul.f32.gmra.mxu0 %v799
        %v2346 = vpop.f32.mrf.mxu0
        %v2347 = vadd.f32 0.0, %v2346
        %2348 = vmatmul.f32.gmra.mxu0 %v800
        %v2349 = vpop.f32.mrf.mxu0
        %v2350 = vadd.f32 0.0, %v2349
        %2351 = vmatmul.f32.gmra.mxu0 %v801
        %v2352 = vpop.f32.mrf.mxu0
        %v2353 = vadd.f32 0.0, %v2352
        %2354 = vmatmul.f32.gmra.mxu0 %v802
        %v2355 = vpop.f32.mrf.mxu0
        %v2356 = vadd.f32 0.0, %v2355
        %2357 = vmatmul.f32.gmra.mxu0 %v803
        %v2358 = vpop.f32.mrf.mxu0
        %v2359 = vadd.f32 0.0, %v2358
        %2360 = vmatmul.f32.gmra.mxu0 %v804
        %v2361 = vpop.f32.mrf.mxu0
        %v2362 = vadd.f32 0.0, %v2361
        %2363 = vmatmul.f32.gmra.mxu0 %v805
        %v2364 = vpop.f32.mrf.mxu0
        %v2365 = vadd.f32 0.0, %v2364
        %2366 = vmatmul.f32.gmra.mxu0 %v806
        %v2367 = vpop.f32.mrf.mxu0
        %v2368 = vadd.f32 0.0, %v2367
        %2369 = vmatmul.f32.gmra.mxu0 %v807
        %v2370 = vpop.f32.mrf.mxu0
        %v2371 = vadd.f32 0.0, %v2370
        %2372 = vmatmul.f32.gmra.mxu0 %v808
        %v2373 = vpop.f32.mrf.mxu0
        %v2374 = vadd.f32 0.0, %v2373
        %2375 = vmatmul.f32.gmra.mxu0 %v809
        %v2376 = vpop.f32.mrf.mxu0
        %v2377 = vadd.f32 0.0, %v2376
        %2378 = vdwg.mxu0
        %v2379 = vld [vmem:[%s249] sm:$0xff]
        %v2380 = vld [vmem:[%s249 + $0x8] sm:$0xff]
        %v2381 = vld [vmem:[%s249 + $0x10] sm:$0xff]
        %v2382 = vld [vmem:[%s249 + $0x18] sm:$0xff]
        %v2383 = vld [vmem:[%s249 + $0x20] sm:$0xff]
        %v2384 = vld [vmem:[%s249 + $0x28] sm:$0xff]
        %v2385 = vld [vmem:[%s249 + $0x30] sm:$0xff]
        %v2386 = vld [vmem:[%s249 + $0x38] sm:$0xff]
        %v2387 = vld [vmem:[%s249 + $0x40] sm:$0xff]
        %v2388 = vld [vmem:[%s249 + $0x48] sm:$0xff]
        %v2389 = vld [vmem:[%s249 + $0x50] sm:$0xff]
        %v2390 = vld [vmem:[%s249 + $0x58] sm:$0xff]
        %v2391 = vld [vmem:[%s249 + $0x60] sm:$0xff]
        %v2392 = vld [vmem:[%s249 + $0x68] sm:$0xff]
        %v2393 = vld [vmem:[%s249 + $0x70] sm:$0xff]
        %v2394 = vld [vmem:[%s249 + $0x78] sm:$0xff]
        %v2395 = vld [vmem:[%s249 + $0x80] sm:$0xff]
        %v2396 = vld [vmem:[%s249 + $0x88] sm:$0xff]
        %v2397 = vld [vmem:[%s249 + $0x90] sm:$0xff]
        %v2398 = vld [vmem:[%s249 + $0x98] sm:$0xff]
        %v2399 = vld [vmem:[%s249 + $0xa0] sm:$0xff]
        %v2400 = vld [vmem:[%s249 + $0xa8] sm:$0xff]
        %v2401 = vld [vmem:[%s249 + $0xb0] sm:$0xff]
        %v2402 = vld [vmem:[%s249 + $0xb8] sm:$0xff]
        %v2403 = vld [vmem:[%s249 + $0xc0] sm:$0xff]
        %v2404 = vld [vmem:[%s249 + $0xc8] sm:$0xff]
        %v2405 = vld [vmem:[%s249 + $0xd0] sm:$0xff]
        %v2406 = vld [vmem:[%s249 + $0xd8] sm:$0xff]
        %v2407 = vld [vmem:[%s249 + $0xe0] sm:$0xff]
        %v2408 = vld [vmem:[%s249 + $0xe8] sm:$0xff]
        %v2409 = vld [vmem:[%s249 + $0xf0] sm:$0xff]
        %v2410 = vld [vmem:[%s249 + $0xf8] sm:$0xff]
        %v2411 = vld [vmem:[%s249 + $0x100] sm:$0xff]
        %v2412 = vld [vmem:[%s249 + $0x108] sm:$0xff]
        %v2413 = vld [vmem:[%s249 + $0x110] sm:$0xff]
        %v2414 = vld [vmem:[%s249 + $0x118] sm:$0xff]
        %v2415 = vld [vmem:[%s249 + $0x120] sm:$0xff]
        %v2416 = vld [vmem:[%s249 + $0x128] sm:$0xff]
        %v2417 = vld [vmem:[%s249 + $0x130] sm:$0xff]
        %v2418 = vld [vmem:[%s249 + $0x138] sm:$0xff]
        %v2419 = vld [vmem:[%s249 + $0x140] sm:$0xff]
        %v2420 = vld [vmem:[%s249 + $0x148] sm:$0xff]
        %v2421 = vld [vmem:[%s249 + $0x150] sm:$0xff]
        %v2422 = vld [vmem:[%s249 + $0x158] sm:$0xff]
        %v2423 = vld [vmem:[%s249 + $0x160] sm:$0xff]
        %v2424 = vld [vmem:[%s249 + $0x168] sm:$0xff]
        %v2425 = vld [vmem:[%s249 + $0x170] sm:$0xff]
        %v2426 = vld [vmem:[%s249 + $0x178] sm:$0xff]
        %v2427 = vld [vmem:[%s249 + $0x180] sm:$0xff]
        %v2428 = vld [vmem:[%s249 + $0x188] sm:$0xff]
        %v2429 = vld [vmem:[%s249 + $0x190] sm:$0xff]
        %v2430 = vld [vmem:[%s249 + $0x198] sm:$0xff]
        %v2431 = vld [vmem:[%s249 + $0x1a0] sm:$0xff]
        %v2432 = vld [vmem:[%s249 + $0x1a8] sm:$0xff]
        %v2433 = vld [vmem:[%s249 + $0x1b0] sm:$0xff]
        %v2434 = vld [vmem:[%s249 + $0x1b8] sm:$0xff]
        %v2435 = vld [vmem:[%s249 + $0x1c0] sm:$0xff]
        %v2436 = vld [vmem:[%s249 + $0x1c8] sm:$0xff]
        %v2437 = vld [vmem:[%s249 + $0x1d0] sm:$0xff]
        %v2438 = vld [vmem:[%s249 + $0x1d8] sm:$0xff]
        %v2439 = vld [vmem:[%s249 + $0x1e0] sm:$0xff]
        %v2440 = vld [vmem:[%s249 + $0x1e8] sm:$0xff]
        %v2441 = vld [vmem:[%s249 + $0x1f0] sm:$0xff]
        %v2442 = vld [vmem:[%s249 + $0x1f8] sm:$0xff]
        %v2443 = vld [vmem:[%s249 + $0x200] sm:$0xff]
        %v2444 = vld [vmem:[%s249 + $0x208] sm:$0xff]
        %v2445 = vld [vmem:[%s249 + $0x210] sm:$0xff]
        %v2446 = vld [vmem:[%s249 + $0x218] sm:$0xff]
        %v2447 = vld [vmem:[%s249 + $0x220] sm:$0xff]
        %v2448 = vld [vmem:[%s249 + $0x228] sm:$0xff]
        %v2449 = vld [vmem:[%s249 + $0x230] sm:$0xff]
        %v2450 = vld [vmem:[%s249 + $0x238] sm:$0xff]
        %v2451 = vld [vmem:[%s249 + $0x240] sm:$0xff]
        %v2452 = vld [vmem:[%s249 + $0x248] sm:$0xff]
        %v2453 = vld [vmem:[%s249 + $0x250] sm:$0xff]
        %v2454 = vld [vmem:[%s249 + $0x258] sm:$0xff]
        %v2455 = vld [vmem:[%s249 + $0x260] sm:$0xff]
        %v2456 = vld [vmem:[%s249 + $0x268] sm:$0xff]
        %v2457 = vld [vmem:[%s249 + $0x270] sm:$0xff]
        %v2458 = vld [vmem:[%s249 + $0x278] sm:$0xff]
        %v2459 = vld [vmem:[%s249 + $0x280] sm:$0xff]
        %v2460 = vld [vmem:[%s249 + $0x288] sm:$0xff]
        %v2461 = vld [vmem:[%s249 + $0x290] sm:$0xff]
        %v2462 = vld [vmem:[%s249 + $0x298] sm:$0xff]
        %v2463 = vld [vmem:[%s249 + $0x2a0] sm:$0xff]
        %v2464 = vld [vmem:[%s249 + $0x2a8] sm:$0xff]
        %v2465 = vld [vmem:[%s249 + $0x2b0] sm:$0xff]
        %v2466 = vld [vmem:[%s249 + $0x2b8] sm:$0xff]
        %v2467 = vld [vmem:[%s249 + $0x2c0] sm:$0xff]
        %v2468 = vld [vmem:[%s249 + $0x2c8] sm:$0xff]
        %v2469 = vld [vmem:[%s249 + $0x2d0] sm:$0xff]
        %v2470 = vld [vmem:[%s249 + $0x2d8] sm:$0xff]
        %v2471 = vld [vmem:[%s249 + $0x2e0] sm:$0xff]
        %v2472 = vld [vmem:[%s249 + $0x2e8] sm:$0xff]
        %v2473 = vld [vmem:[%s249 + $0x2f0] sm:$0xff]
        %v2474 = vld [vmem:[%s249 + $0x2f8] sm:$0xff]
        %v2475 = vld [vmem:[%s249 + $0x300] sm:$0xff]
        %v2476 = vld [vmem:[%s249 + $0x308] sm:$0xff]
        %v2477 = vld [vmem:[%s249 + $0x310] sm:$0xff]
        %v2478 = vld [vmem:[%s249 + $0x318] sm:$0xff]
        %v2479 = vld [vmem:[%s249 + $0x320] sm:$0xff]
        %v2480 = vld [vmem:[%s249 + $0x328] sm:$0xff]
        %v2481 = vld [vmem:[%s249 + $0x330] sm:$0xff]
        %v2482 = vld [vmem:[%s249 + $0x338] sm:$0xff]
        %v2483 = vld [vmem:[%s249 + $0x340] sm:$0xff]
        %v2484 = vld [vmem:[%s249 + $0x348] sm:$0xff]
        %v2485 = vld [vmem:[%s249 + $0x350] sm:$0xff]
        %v2486 = vld [vmem:[%s249 + $0x358] sm:$0xff]
        %v2487 = vld [vmem:[%s249 + $0x360] sm:$0xff]
        %v2488 = vld [vmem:[%s249 + $0x368] sm:$0xff]
        %v2489 = vld [vmem:[%s249 + $0x370] sm:$0xff]
        %v2490 = vld [vmem:[%s249 + $0x378] sm:$0xff]
        %v2491 = vld [vmem:[%s249 + $0x380] sm:$0xff]
        %v2492 = vld [vmem:[%s249 + $0x388] sm:$0xff]
        %v2493 = vld [vmem:[%s249 + $0x390] sm:$0xff]
        %v2494 = vld [vmem:[%s249 + $0x398] sm:$0xff]
        %v2495 = vld [vmem:[%s249 + $0x3a0] sm:$0xff]
        %v2496 = vld [vmem:[%s249 + $0x3a8] sm:$0xff]
        %v2497 = vld [vmem:[%s249 + $0x3b0] sm:$0xff]
        %v2498 = vld [vmem:[%s249 + $0x3b8] sm:$0xff]
        %v2499 = vld [vmem:[%s249 + $0x3c0] sm:$0xff]
        %v2500 = vld [vmem:[%s249 + $0x3c8] sm:$0xff]
        %v2501 = vld [vmem:[%s249 + $0x3d0] sm:$0xff]
        %v2502 = vld [vmem:[%s249 + $0x3d8] sm:$0xff]
        %v2503 = vld [vmem:[%s249 + $0x3e0] sm:$0xff]
        %v2504 = vld [vmem:[%s249 + $0x3e8] sm:$0xff]
        %v2505 = vld [vmem:[%s249 + $0x3f0] sm:$0xff]
        %v2506 = vld [vmem:[%s249 + $0x3f8] sm:$0xff]
        %v2507 = vld [vmem:[%s249 + $0x400] sm:$0xff]
        %v2508 = vld [vmem:[%s249 + $0x408] sm:$0xff]
        %v2509 = vld [vmem:[%s249 + $0x410] sm:$0xff]
        %v2510 = vld [vmem:[%s249 + $0x418] sm:$0xff]
        %v2511 = vld [vmem:[%s249 + $0x420] sm:$0xff]
        %v2512 = vld [vmem:[%s249 + $0x428] sm:$0xff]
        %v2513 = vld [vmem:[%s249 + $0x430] sm:$0xff]
        %v2514 = vld [vmem:[%s249 + $0x438] sm:$0xff]
        %v2515 = vld [vmem:[%s249 + $0x440] sm:$0xff]
        %v2516 = vld [vmem:[%s249 + $0x448] sm:$0xff]
        %v2517 = vld [vmem:[%s249 + $0x450] sm:$0xff]
        %v2518 = vld [vmem:[%s249 + $0x458] sm:$0xff]
        %v2519 = vld [vmem:[%s249 + $0x460] sm:$0xff]
        %v2520 = vld [vmem:[%s249 + $0x468] sm:$0xff]
        %v2521 = vld [vmem:[%s249 + $0x470] sm:$0xff]
        %v2522 = vld [vmem:[%s249 + $0x478] sm:$0xff]
        %v2523 = vld [vmem:[%s249 + $0x480] sm:$0xff]
        %v2524 = vld [vmem:[%s249 + $0x488] sm:$0xff]
        %v2525 = vld [vmem:[%s249 + $0x490] sm:$0xff]
        %v2526 = vld [vmem:[%s249 + $0x498] sm:$0xff]
        %v2527 = vld [vmem:[%s249 + $0x4a0] sm:$0xff]
        %v2528 = vld [vmem:[%s249 + $0x4a8] sm:$0xff]
        %v2529 = vld [vmem:[%s249 + $0x4b0] sm:$0xff]
        %v2530 = vld [vmem:[%s249 + $0x4b8] sm:$0xff]
        %v2531 = vld [vmem:[%s249 + $0x4c0] sm:$0xff]
        %v2532 = vld [vmem:[%s249 + $0x4c8] sm:$0xff]
        %v2533 = vld [vmem:[%s249 + $0x4d0] sm:$0xff]
        %v2534 = vld [vmem:[%s249 + $0x4d8] sm:$0xff]
        %v2535 = vld [vmem:[%s249 + $0x4e0] sm:$0xff]
        %v2536 = vld [vmem:[%s249 + $0x4e8] sm:$0xff]
        %v2537 = vld [vmem:[%s249 + $0x4f0] sm:$0xff]
        %v2538 = vld [vmem:[%s249 + $0x4f8] sm:$0xff]
        %v2539 = vld [vmem:[%s249 + $0x500] sm:$0xff]
        %v2540 = vld [vmem:[%s249 + $0x508] sm:$0xff]
        %v2541 = vld [vmem:[%s249 + $0x510] sm:$0xff]
        %v2542 = vld [vmem:[%s249 + $0x518] sm:$0xff]
        %v2543 = vld [vmem:[%s249 + $0x520] sm:$0xff]
        %v2544 = vld [vmem:[%s249 + $0x528] sm:$0xff]
        %v2545 = vld [vmem:[%s249 + $0x530] sm:$0xff]
        %v2546 = vld [vmem:[%s249 + $0x538] sm:$0xff]
        %v2547 = vld [vmem:[%s249 + $0x540] sm:$0xff]
        %v2548 = vld [vmem:[%s249 + $0x548] sm:$0xff]
        %v2549 = vld [vmem:[%s249 + $0x550] sm:$0xff]
        %v2550 = vld [vmem:[%s249 + $0x558] sm:$0xff]
        %v2551 = vld [vmem:[%s249 + $0x560] sm:$0xff]
        %v2552 = vld [vmem:[%s249 + $0x568] sm:$0xff]
        %v2553 = vld [vmem:[%s249 + $0x570] sm:$0xff]
        %v2554 = vld [vmem:[%s249 + $0x578] sm:$0xff]
        %v2555 = vld [vmem:[%s249 + $0x580] sm:$0xff]
        %v2556 = vld [vmem:[%s249 + $0x588] sm:$0xff]
        %v2557 = vld [vmem:[%s249 + $0x590] sm:$0xff]
        %v2558 = vld [vmem:[%s249 + $0x598] sm:$0xff]
        %v2559 = vld [vmem:[%s249 + $0x5a0] sm:$0xff]
        %v2560 = vld [vmem:[%s249 + $0x5a8] sm:$0xff]
        %v2561 = vld [vmem:[%s249 + $0x5b0] sm:$0xff]
        %v2562 = vld [vmem:[%s249 + $0x5b8] sm:$0xff]
        %v2563 = vld [vmem:[%s249 + $0x5c0] sm:$0xff]
        %v2564 = vld [vmem:[%s249 + $0x5c8] sm:$0xff]
        %v2565 = vld [vmem:[%s249 + $0x5d0] sm:$0xff]
        %v2566 = vld [vmem:[%s249 + $0x5d8] sm:$0xff]
        %v2567 = vld [vmem:[%s249 + $0x5e0] sm:$0xff]
        %v2568 = vld [vmem:[%s249 + $0x5e8] sm:$0xff]
        %v2569 = vld [vmem:[%s249 + $0x5f0] sm:$0xff]
        %v2570 = vld [vmem:[%s249 + $0x5f8] sm:$0xff]
        %v2571 = vld [vmem:[%s249 + $0x600] sm:$0xff]
        %v2572 = vld [vmem:[%s249 + $0x608] sm:$0xff]
        %v2573 = vld [vmem:[%s249 + $0x610] sm:$0xff]
        %v2574 = vld [vmem:[%s249 + $0x618] sm:$0xff]
        %v2575 = vld [vmem:[%s249 + $0x620] sm:$0xff]
        %v2576 = vld [vmem:[%s249 + $0x628] sm:$0xff]
        %v2577 = vld [vmem:[%s249 + $0x630] sm:$0xff]
        %v2578 = vld [vmem:[%s249 + $0x638] sm:$0xff]
        %v2579 = vld [vmem:[%s249 + $0x640] sm:$0xff]
        %v2580 = vld [vmem:[%s249 + $0x648] sm:$0xff]
        %v2581 = vld [vmem:[%s249 + $0x650] sm:$0xff]
        %v2582 = vld [vmem:[%s249 + $0x658] sm:$0xff]
        %v2583 = vld [vmem:[%s249 + $0x660] sm:$0xff]
        %v2584 = vld [vmem:[%s249 + $0x668] sm:$0xff]
        %v2585 = vld [vmem:[%s249 + $0x670] sm:$0xff]
        %v2586 = vld [vmem:[%s249 + $0x678] sm:$0xff]
        %v2587 = vld [vmem:[%s249 + $0x680] sm:$0xff]
        %v2588 = vld [vmem:[%s249 + $0x688] sm:$0xff]
        %v2589 = vld [vmem:[%s249 + $0x690] sm:$0xff]
        %v2590 = vld [vmem:[%s249 + $0x698] sm:$0xff]
        %v2591 = vld [vmem:[%s249 + $0x6a0] sm:$0xff]
        %v2592 = vld [vmem:[%s249 + $0x6a8] sm:$0xff]
        %v2593 = vld [vmem:[%s249 + $0x6b0] sm:$0xff]
        %v2594 = vld [vmem:[%s249 + $0x6b8] sm:$0xff]
        %v2595 = vld [vmem:[%s249 + $0x6c0] sm:$0xff]
        %v2596 = vld [vmem:[%s249 + $0x6c8] sm:$0xff]
        %v2597 = vld [vmem:[%s249 + $0x6d0] sm:$0xff]
        %v2598 = vld [vmem:[%s249 + $0x6d8] sm:$0xff]
        %v2599 = vld [vmem:[%s249 + $0x6e0] sm:$0xff]
        %v2600 = vld [vmem:[%s249 + $0x6e8] sm:$0xff]
        %v2601 = vld [vmem:[%s249 + $0x6f0] sm:$0xff]
        %v2602 = vld [vmem:[%s249 + $0x6f8] sm:$0xff]
        %v2603 = vld [vmem:[%s249 + $0x700] sm:$0xff]
        %v2604 = vld [vmem:[%s249 + $0x708] sm:$0xff]
        %v2605 = vld [vmem:[%s249 + $0x710] sm:$0xff]
        %v2606 = vld [vmem:[%s249 + $0x718] sm:$0xff]
        %v2607 = vld [vmem:[%s249 + $0x720] sm:$0xff]
        %v2608 = vld [vmem:[%s249 + $0x728] sm:$0xff]
        %v2609 = vld [vmem:[%s249 + $0x730] sm:$0xff]
        %v2610 = vld [vmem:[%s249 + $0x738] sm:$0xff]
        %v2611 = vld [vmem:[%s249 + $0x740] sm:$0xff]
        %v2612 = vld [vmem:[%s249 + $0x748] sm:$0xff]
        %v2613 = vld [vmem:[%s249 + $0x750] sm:$0xff]
        %v2614 = vld [vmem:[%s249 + $0x758] sm:$0xff]
        %v2615 = vld [vmem:[%s249 + $0x760] sm:$0xff]
        %v2616 = vld [vmem:[%s249 + $0x768] sm:$0xff]
        %v2617 = vld [vmem:[%s249 + $0x770] sm:$0xff]
        %v2618 = vld [vmem:[%s249 + $0x778] sm:$0xff]
        %v2619 = vld [vmem:[%s249 + $0x780] sm:$0xff]
        %v2620 = vld [vmem:[%s249 + $0x788] sm:$0xff]
        %v2621 = vld [vmem:[%s249 + $0x790] sm:$0xff]
        %v2622 = vld [vmem:[%s249 + $0x798] sm:$0xff]
        %v2623 = vld [vmem:[%s249 + $0x7a0] sm:$0xff]
        %v2624 = vld [vmem:[%s249 + $0x7a8] sm:$0xff]
        %v2625 = vld [vmem:[%s249 + $0x7b0] sm:$0xff]
        %v2626 = vld [vmem:[%s249 + $0x7b8] sm:$0xff]
        %v2627 = vld [vmem:[%s249 + $0x7c0] sm:$0xff]
        %v2628 = vld [vmem:[%s249 + $0x7c8] sm:$0xff]
        %v2629 = vld [vmem:[%s249 + $0x7d0] sm:$0xff]
        %v2630 = vld [vmem:[%s249 + $0x7d8] sm:$0xff]
        %v2631 = vld [vmem:[%s249 + $0x7e0] sm:$0xff]
        %v2632 = vld [vmem:[%s249 + $0x7e8] sm:$0xff]
        %v2633 = vld [vmem:[%s249 + $0x7f0] sm:$0xff]
        %v2634 = vld [vmem:[%s249 + $0x7f8] sm:$0xff]
        %v2635 = vld [vmem:[%s249 + $0x800] sm:$0xff]
        %v2636 = vld [vmem:[%s249 + $0x808] sm:$0xff]
        %v2637 = vld [vmem:[%s249 + $0x810] sm:$0xff]
        %v2638 = vld [vmem:[%s249 + $0x818] sm:$0xff]
        %v2639 = vld [vmem:[%s249 + $0x820] sm:$0xff]
        %v2640 = vld [vmem:[%s249 + $0x828] sm:$0xff]
        %v2641 = vld [vmem:[%s249 + $0x830] sm:$0xff]
        %v2642 = vld [vmem:[%s249 + $0x838] sm:$0xff]
        %v2643 = vld [vmem:[%s249 + $0x840] sm:$0xff]
        %v2644 = vld [vmem:[%s249 + $0x848] sm:$0xff]
        %v2645 = vld [vmem:[%s249 + $0x850] sm:$0xff]
        %v2646 = vld [vmem:[%s249 + $0x858] sm:$0xff]
        %v2647 = vld [vmem:[%s249 + $0x860] sm:$0xff]
        %v2648 = vld [vmem:[%s249 + $0x868] sm:$0xff]
        %v2649 = vld [vmem:[%s249 + $0x870] sm:$0xff]
        %v2650 = vld [vmem:[%s249 + $0x878] sm:$0xff]
        %v2651 = vld [vmem:[%s249 + $0x880] sm:$0xff]
        %v2652 = vld [vmem:[%s249 + $0x888] sm:$0xff]
        %v2653 = vld [vmem:[%s249 + $0x890] sm:$0xff]
        %v2654 = vld [vmem:[%s249 + $0x898] sm:$0xff]
        %v2655 = vld [vmem:[%s249 + $0x8a0] sm:$0xff]
        %v2656 = vld [vmem:[%s249 + $0x8a8] sm:$0xff]
        %v2657 = vld [vmem:[%s249 + $0x8b0] sm:$0xff]
        %v2658 = vld [vmem:[%s249 + $0x8b8] sm:$0xff]
        %v2659 = vld [vmem:[%s249 + $0x8c0] sm:$0xff]
        %v2660 = vld [vmem:[%s249 + $0x8c8] sm:$0xff]
        %v2661 = vld [vmem:[%s249 + $0x8d0] sm:$0xff]
        %v2662 = vld [vmem:[%s249 + $0x8d8] sm:$0xff]
        %v2663 = vld [vmem:[%s249 + $0x8e0] sm:$0xff]
        %v2664 = vld [vmem:[%s249 + $0x8e8] sm:$0xff]
        %v2665 = vld [vmem:[%s249 + $0x8f0] sm:$0xff]
        %v2666 = vld [vmem:[%s249 + $0x8f8] sm:$0xff]
        %v2667 = vld [vmem:[%s249 + $0x900] sm:$0xff]
        %v2668 = vld [vmem:[%s249 + $0x908] sm:$0xff]
        %v2669 = vld [vmem:[%s249 + $0x910] sm:$0xff]
        %v2670 = vld [vmem:[%s249 + $0x918] sm:$0xff]
        %v2671 = vld [vmem:[%s249 + $0x920] sm:$0xff]
        %v2672 = vld [vmem:[%s249 + $0x928] sm:$0xff]
        %v2673 = vld [vmem:[%s249 + $0x930] sm:$0xff]
        %v2674 = vld [vmem:[%s249 + $0x938] sm:$0xff]
        %v2675 = vld [vmem:[%s249 + $0x940] sm:$0xff]
        %v2676 = vld [vmem:[%s249 + $0x948] sm:$0xff]
        %v2677 = vld [vmem:[%s249 + $0x950] sm:$0xff]
        %v2678 = vld [vmem:[%s249 + $0x958] sm:$0xff]
        %v2679 = vld [vmem:[%s249 + $0x960] sm:$0xff]
        %v2680 = vld [vmem:[%s249 + $0x968] sm:$0xff]
        %v2681 = vld [vmem:[%s249 + $0x970] sm:$0xff]
        %v2682 = vld [vmem:[%s249 + $0x978] sm:$0xff]
        %v2683 = vld [vmem:[%s249 + $0x980] sm:$0xff]
        %v2684 = vld [vmem:[%s249 + $0x988] sm:$0xff]
        %v2685 = vld [vmem:[%s249 + $0x990] sm:$0xff]
        %v2686 = vld [vmem:[%s249 + $0x998] sm:$0xff]
        %v2687 = vld [vmem:[%s249 + $0x9a0] sm:$0xff]
        %v2688 = vld [vmem:[%s249 + $0x9a8] sm:$0xff]
        %v2689 = vld [vmem:[%s249 + $0x9b0] sm:$0xff]
        %v2690 = vld [vmem:[%s249 + $0x9b8] sm:$0xff]
        %v2691 = vld [vmem:[%s249 + $0x9c0] sm:$0xff]
        %v2692 = vld [vmem:[%s249 + $0x9c8] sm:$0xff]
        %v2693 = vld [vmem:[%s249 + $0x9d0] sm:$0xff]
        %v2694 = vld [vmem:[%s249 + $0x9d8] sm:$0xff]
        %v2695 = vld [vmem:[%s249 + $0x9e0] sm:$0xff]
        %v2696 = vld [vmem:[%s249 + $0x9e8] sm:$0xff]
        %v2697 = vld [vmem:[%s249 + $0x9f0] sm:$0xff]
        %v2698 = vld [vmem:[%s249 + $0x9f8] sm:$0xff]
        %v2699 = vld [vmem:[%s249 + $0xa00] sm:$0xff]
        %v2700 = vld [vmem:[%s249 + $0xa08] sm:$0xff]
        %v2701 = vld [vmem:[%s249 + $0xa10] sm:$0xff]
        %v2702 = vld [vmem:[%s249 + $0xa18] sm:$0xff]
        %v2703 = vld [vmem:[%s249 + $0xa20] sm:$0xff]
        %v2704 = vld [vmem:[%s249 + $0xa28] sm:$0xff]
        %v2705 = vld [vmem:[%s249 + $0xa30] sm:$0xff]
        %v2706 = vld [vmem:[%s249 + $0xa38] sm:$0xff]
        %v2707 = vld [vmem:[%s249 + $0xa40] sm:$0xff]
        %v2708 = vld [vmem:[%s249 + $0xa48] sm:$0xff]
        %v2709 = vld [vmem:[%s249 + $0xa50] sm:$0xff]
        %v2710 = vld [vmem:[%s249 + $0xa58] sm:$0xff]
        %v2711 = vld [vmem:[%s249 + $0xa60] sm:$0xff]
        %v2712 = vld [vmem:[%s249 + $0xa68] sm:$0xff]
        %v2713 = vld [vmem:[%s249 + $0xa70] sm:$0xff]
        %v2714 = vld [vmem:[%s249 + $0xa78] sm:$0xff]
        %v2715 = vld [vmem:[%s249 + $0xa80] sm:$0xff]
        %v2716 = vld [vmem:[%s249 + $0xa88] sm:$0xff]
        %v2717 = vld [vmem:[%s249 + $0xa90] sm:$0xff]
        %v2718 = vld [vmem:[%s249 + $0xa98] sm:$0xff]
        %v2719 = vld [vmem:[%s249 + $0xaa0] sm:$0xff]
        %v2720 = vld [vmem:[%s249 + $0xaa8] sm:$0xff]
        %v2721 = vld [vmem:[%s249 + $0xab0] sm:$0xff]
        %v2722 = vld [vmem:[%s249 + $0xab8] sm:$0xff]
        %v2723 = vld [vmem:[%s249 + $0xac0] sm:$0xff]
        %v2724 = vld [vmem:[%s249 + $0xac8] sm:$0xff]
        %v2725 = vld [vmem:[%s249 + $0xad0] sm:$0xff]
        %v2726 = vld [vmem:[%s249 + $0xad8] sm:$0xff]
        %v2727 = vld [vmem:[%s249 + $0xae0] sm:$0xff]
        %v2728 = vld [vmem:[%s249 + $0xae8] sm:$0xff]
        %v2729 = vld [vmem:[%s249 + $0xaf0] sm:$0xff]
        %v2730 = vld [vmem:[%s249 + $0xaf8] sm:$0xff]
        %v2731 = vld [vmem:[%s249 + $0xb00] sm:$0xff]
        %v2732 = vld [vmem:[%s249 + $0xb08] sm:$0xff]
        %v2733 = vld [vmem:[%s249 + $0xb10] sm:$0xff]
        %v2734 = vld [vmem:[%s249 + $0xb18] sm:$0xff]
        %v2735 = vld [vmem:[%s249 + $0xb20] sm:$0xff]
        %v2736 = vld [vmem:[%s249 + $0xb28] sm:$0xff]
        %v2737 = vld [vmem:[%s249 + $0xb30] sm:$0xff]
        %v2738 = vld [vmem:[%s249 + $0xb38] sm:$0xff]
        %v2739 = vld [vmem:[%s249 + $0xb40] sm:$0xff]
        %v2740 = vld [vmem:[%s249 + $0xb48] sm:$0xff]
        %v2741 = vld [vmem:[%s249 + $0xb50] sm:$0xff]
        %v2742 = vld [vmem:[%s249 + $0xb58] sm:$0xff]
        %v2743 = vld [vmem:[%s249 + $0xb60] sm:$0xff]
        %v2744 = vld [vmem:[%s249 + $0xb68] sm:$0xff]
        %v2745 = vld [vmem:[%s249 + $0xb70] sm:$0xff]
        %v2746 = vld [vmem:[%s249 + $0xb78] sm:$0xff]
        %v2747 = vld [vmem:[%s249 + $0xb80] sm:$0xff]
        %v2748 = vld [vmem:[%s249 + $0xb88] sm:$0xff]
        %v2749 = vld [vmem:[%s249 + $0xb90] sm:$0xff]
        %v2750 = vld [vmem:[%s249 + $0xb98] sm:$0xff]
        %v2751 = vld [vmem:[%s249 + $0xba0] sm:$0xff]
        %v2752 = vld [vmem:[%s249 + $0xba8] sm:$0xff]
        %v2753 = vld [vmem:[%s249 + $0xbb0] sm:$0xff]
        %v2754 = vld [vmem:[%s249 + $0xbb8] sm:$0xff]
        %v2755 = vld [vmem:[%s249 + $0xbc0] sm:$0xff]
        %v2756 = vld [vmem:[%s249 + $0xbc8] sm:$0xff]
        %v2757 = vld [vmem:[%s249 + $0xbd0] sm:$0xff]
        %v2758 = vld [vmem:[%s249 + $0xbd8] sm:$0xff]
        %v2759 = vld [vmem:[%s249 + $0xbe0] sm:$0xff]
        %v2760 = vld [vmem:[%s249 + $0xbe8] sm:$0xff]
        %v2761 = vld [vmem:[%s249 + $0xbf0] sm:$0xff]
        %v2762 = vld [vmem:[%s249 + $0xbf8] sm:$0xff]
        %v2763 = vld [vmem:[%s249 + $0xc00] sm:$0xff]
        %v2764 = vld [vmem:[%s249 + $0xc08] sm:$0xff]
        %v2765 = vld [vmem:[%s249 + $0xc10] sm:$0xff]
        %v2766 = vld [vmem:[%s249 + $0xc18] sm:$0xff]
        %v2767 = vld [vmem:[%s249 + $0xc20] sm:$0xff]
        %v2768 = vld [vmem:[%s249 + $0xc28] sm:$0xff]
        %v2769 = vld [vmem:[%s249 + $0xc30] sm:$0xff]
        %v2770 = vld [vmem:[%s249 + $0xc38] sm:$0xff]
        %v2771 = vld [vmem:[%s249 + $0xc40] sm:$0xff]
        %v2772 = vld [vmem:[%s249 + $0xc48] sm:$0xff]
        %v2773 = vld [vmem:[%s249 + $0xc50] sm:$0xff]
        %v2774 = vld [vmem:[%s249 + $0xc58] sm:$0xff]
        %v2775 = vld [vmem:[%s249 + $0xc60] sm:$0xff]
        %v2776 = vld [vmem:[%s249 + $0xc68] sm:$0xff]
        %v2777 = vld [vmem:[%s249 + $0xc70] sm:$0xff]
        %v2778 = vld [vmem:[%s249 + $0xc78] sm:$0xff]
        %v2779 = vld [vmem:[%s249 + $0xc80] sm:$0xff]
        %v2780 = vld [vmem:[%s249 + $0xc88] sm:$0xff]
        %v2781 = vld [vmem:[%s249 + $0xc90] sm:$0xff]
        %v2782 = vld [vmem:[%s249 + $0xc98] sm:$0xff]
        %v2783 = vld [vmem:[%s249 + $0xca0] sm:$0xff]
        %v2784 = vld [vmem:[%s249 + $0xca8] sm:$0xff]
        %v2785 = vld [vmem:[%s249 + $0xcb0] sm:$0xff]
        %v2786 = vld [vmem:[%s249 + $0xcb8] sm:$0xff]
        %v2787 = vld [vmem:[%s249 + $0xcc0] sm:$0xff]
        %v2788 = vld [vmem:[%s249 + $0xcc8] sm:$0xff]
        %v2789 = vld [vmem:[%s249 + $0xcd0] sm:$0xff]
        %v2790 = vld [vmem:[%s249 + $0xcd8] sm:$0xff]
        %v2791 = vld [vmem:[%s249 + $0xce0] sm:$0xff]
        %v2792 = vld [vmem:[%s249 + $0xce8] sm:$0xff]
        %v2793 = vld [vmem:[%s249 + $0xcf0] sm:$0xff]
        %v2794 = vld [vmem:[%s249 + $0xcf8] sm:$0xff]
        %v2795 = vld [vmem:[%s249 + $0xd00] sm:$0xff]
        %v2796 = vld [vmem:[%s249 + $0xd08] sm:$0xff]
        %v2797 = vld [vmem:[%s249 + $0xd10] sm:$0xff]
        %v2798 = vld [vmem:[%s249 + $0xd18] sm:$0xff]
        %v2799 = vld [vmem:[%s249 + $0xd20] sm:$0xff]
        %v2800 = vld [vmem:[%s249 + $0xd28] sm:$0xff]
        %v2801 = vld [vmem:[%s249 + $0xd30] sm:$0xff]
        %v2802 = vld [vmem:[%s249 + $0xd38] sm:$0xff]
        %v2803 = vld [vmem:[%s249 + $0xd40] sm:$0xff]
        %v2804 = vld [vmem:[%s249 + $0xd48] sm:$0xff]
        %v2805 = vld [vmem:[%s249 + $0xd50] sm:$0xff]
        %v2806 = vld [vmem:[%s249 + $0xd58] sm:$0xff]
        %v2807 = vld [vmem:[%s249 + $0xd60] sm:$0xff]
        %v2808 = vld [vmem:[%s249 + $0xd68] sm:$0xff]
        %v2809 = vld [vmem:[%s249 + $0xd70] sm:$0xff]
        %v2810 = vld [vmem:[%s249 + $0xd78] sm:$0xff]
        %v2811 = vld [vmem:[%s249 + $0xd80] sm:$0xff]
        %v2812 = vld [vmem:[%s249 + $0xd88] sm:$0xff]
        %v2813 = vld [vmem:[%s249 + $0xd90] sm:$0xff]
        %v2814 = vld [vmem:[%s249 + $0xd98] sm:$0xff]
        %v2815 = vld [vmem:[%s249 + $0xda0] sm:$0xff]
        %v2816 = vld [vmem:[%s249 + $0xda8] sm:$0xff]
        %v2817 = vld [vmem:[%s249 + $0xdb0] sm:$0xff]
        %v2818 = vld [vmem:[%s249 + $0xdb8] sm:$0xff]
        %v2819 = vld [vmem:[%s249 + $0xdc0] sm:$0xff]
        %v2820 = vld [vmem:[%s249 + $0xdc8] sm:$0xff]
        %v2821 = vld [vmem:[%s249 + $0xdd0] sm:$0xff]
        %v2822 = vld [vmem:[%s249 + $0xdd8] sm:$0xff]
        %v2823 = vld [vmem:[%s249 + $0xde0] sm:$0xff]
        %v2824 = vld [vmem:[%s249 + $0xde8] sm:$0xff]
        %v2825 = vld [vmem:[%s249 + $0xdf0] sm:$0xff]
        %v2826 = vld [vmem:[%s249 + $0xdf8] sm:$0xff]
        %v2827 = vld [vmem:[%s249 + $0xe00] sm:$0xff]
        %v2828 = vld [vmem:[%s249 + $0xe08] sm:$0xff]
        %v2829 = vld [vmem:[%s249 + $0xe10] sm:$0xff]
        %v2830 = vld [vmem:[%s249 + $0xe18] sm:$0xff]
        %v2831 = vld [vmem:[%s249 + $0xe20] sm:$0xff]
        %v2832 = vld [vmem:[%s249 + $0xe28] sm:$0xff]
        %v2833 = vld [vmem:[%s249 + $0xe30] sm:$0xff]
        %v2834 = vld [vmem:[%s249 + $0xe38] sm:$0xff]
        %v2835 = vld [vmem:[%s249 + $0xe40] sm:$0xff]
        %v2836 = vld [vmem:[%s249 + $0xe48] sm:$0xff]
        %v2837 = vld [vmem:[%s249 + $0xe50] sm:$0xff]
        %v2838 = vld [vmem:[%s249 + $0xe58] sm:$0xff]
        %v2839 = vld [vmem:[%s249 + $0xe60] sm:$0xff]
        %v2840 = vld [vmem:[%s249 + $0xe68] sm:$0xff]
        %v2841 = vld [vmem:[%s249 + $0xe70] sm:$0xff]
        %v2842 = vld [vmem:[%s249 + $0xe78] sm:$0xff]
        %v2843 = vld [vmem:[%s249 + $0xe80] sm:$0xff]
        %v2844 = vld [vmem:[%s249 + $0xe88] sm:$0xff]
        %v2845 = vld [vmem:[%s249 + $0xe90] sm:$0xff]
        %v2846 = vld [vmem:[%s249 + $0xe98] sm:$0xff]
        %v2847 = vld [vmem:[%s249 + $0xea0] sm:$0xff]
        %v2848 = vld [vmem:[%s249 + $0xea8] sm:$0xff]
        %v2849 = vld [vmem:[%s249 + $0xeb0] sm:$0xff]
        %v2850 = vld [vmem:[%s249 + $0xeb8] sm:$0xff]
        %v2851 = vld [vmem:[%s249 + $0xec0] sm:$0xff]
        %v2852 = vld [vmem:[%s249 + $0xec8] sm:$0xff]
        %v2853 = vld [vmem:[%s249 + $0xed0] sm:$0xff]
        %v2854 = vld [vmem:[%s249 + $0xed8] sm:$0xff]
        %v2855 = vld [vmem:[%s249 + $0xee0] sm:$0xff]
        %v2856 = vld [vmem:[%s249 + $0xee8] sm:$0xff]
        %v2857 = vld [vmem:[%s249 + $0xef0] sm:$0xff]
        %v2858 = vld [vmem:[%s249 + $0xef8] sm:$0xff]
        %v2859 = vld [vmem:[%s249 + $0xf00] sm:$0xff]
        %v2860 = vld [vmem:[%s249 + $0xf08] sm:$0xff]
        %v2861 = vld [vmem:[%s249 + $0xf10] sm:$0xff]
        %v2862 = vld [vmem:[%s249 + $0xf18] sm:$0xff]
        %v2863 = vld [vmem:[%s249 + $0xf20] sm:$0xff]
        %v2864 = vld [vmem:[%s249 + $0xf28] sm:$0xff]
        %v2865 = vld [vmem:[%s249 + $0xf30] sm:$0xff]
        %v2866 = vld [vmem:[%s249 + $0xf38] sm:$0xff]
        %v2867 = vld [vmem:[%s249 + $0xf40] sm:$0xff]
        %v2868 = vld [vmem:[%s249 + $0xf48] sm:$0xff]
        %v2869 = vld [vmem:[%s249 + $0xf50] sm:$0xff]
        %v2870 = vld [vmem:[%s249 + $0xf58] sm:$0xff]
        %v2871 = vld [vmem:[%s249 + $0xf60] sm:$0xff]
        %v2872 = vld [vmem:[%s249 + $0xf68] sm:$0xff]
        %v2873 = vld [vmem:[%s249 + $0xf70] sm:$0xff]
        %v2874 = vld [vmem:[%s249 + $0xf78] sm:$0xff]
        %v2875 = vld [vmem:[%s249 + $0xf80] sm:$0xff]
        %v2876 = vld [vmem:[%s249 + $0xf88] sm:$0xff]
        %v2877 = vld [vmem:[%s249 + $0xf90] sm:$0xff]
        %v2878 = vld [vmem:[%s249 + $0xf98] sm:$0xff]
        %v2879 = vld [vmem:[%s249 + $0xfa0] sm:$0xff]
        %v2880 = vld [vmem:[%s249 + $0xfa8] sm:$0xff]
        %v2881 = vld [vmem:[%s249 + $0xfb0] sm:$0xff]
        %v2882 = vld [vmem:[%s249 + $0xfb8] sm:$0xff]
        %v2883 = vld [vmem:[%s249 + $0xfc0] sm:$0xff]
        %v2884 = vld [vmem:[%s249 + $0xfc8] sm:$0xff]
        %v2885 = vld [vmem:[%s249 + $0xfd0] sm:$0xff]
        %v2886 = vld [vmem:[%s249 + $0xfd8] sm:$0xff]
        %v2887 = vld [vmem:[%s249 + $0xfe0] sm:$0xff]
        %v2888 = vld [vmem:[%s249 + $0xfe8] sm:$0xff]
        %v2889 = vld [vmem:[%s249 + $0xff0] sm:$0xff]
        %v2890 = vld [vmem:[%s249 + $0xff8] sm:$0xff]
        %v2891 = vld [vmem:[#allocation7] sm:$0xff]
        %v2892 = vld [vmem:[#allocation7 + $0x8] sm:$0xff]
        %v2893 = vld [vmem:[#allocation7 + $0x10] sm:$0xff]
        %v2894 = vld [vmem:[#allocation7 + $0x18] sm:$0xff]
        %v2895 = vld [vmem:[#allocation7 + $0x20] sm:$0xff]
        %v2896 = vld [vmem:[#allocation7 + $0x28] sm:$0xff]
        %v2897 = vld [vmem:[#allocation7 + $0x30] sm:$0xff]
        %v2898 = vld [vmem:[#allocation7 + $0x38] sm:$0xff]
        %v2899 = vld [vmem:[#allocation7 + $0x40] sm:$0xff]
        %v2900 = vld [vmem:[#allocation7 + $0x48] sm:$0xff]
        %v2901 = vld [vmem:[#allocation7 + $0x50] sm:$0xff]
        %v2902 = vld [vmem:[#allocation7 + $0x58] sm:$0xff]
        %v2903 = vld [vmem:[#allocation7 + $0x60] sm:$0xff]
        %v2904 = vld [vmem:[#allocation7 + $0x68] sm:$0xff]
        %v2905 = vld [vmem:[#allocation7 + $0x70] sm:$0xff]
        %v2906 = vld [vmem:[#allocation7 + $0x78] sm:$0xff]
        %2907 = vmatpush.msra.mxu0 %v2906
        %2908 = vmatpush.msra.mxu0 %v2905
        %2909 = vmatpush.msra.mxu0 %v2904
        %2910 = vmatpush.msra.mxu0 %v2903
        %2911 = vmatpush.msra.mxu0 %v2902
        %2912 = vmatpush.msra.mxu0 %v2901
        %2913 = vmatpush.msra.mxu0 %v2900
        %2914 = vmatpush.msra.mxu0 %v2899
        %2915 = vmatpush.msra.mxu0 %v2898
        %2916 = vmatpush.msra.mxu0 %v2897
        %2917 = vmatpush.msra.mxu0 %v2896
        %2918 = vmatpush.msra.mxu0 %v2895
        %2919 = vmatpush.msra.mxu0 %v2894
        %2920 = vmatpush.msra.mxu0 %v2893
        %2921 = vmatpush.msra.mxu0 %v2892
        %2922 = vmatpush.msra.mxu0 %v2891
        %2923 = vmatmul.f32.gmra.mxu0 %v2379
        %v2924 = vpop.f32.mrf.mxu0
        %v2925 = vadd.f32 0.0, %v2924
        %2926 = vmatmul.f32.gmra.mxu0 %v2380
        %v2927 = vpop.f32.mrf.mxu0
        %v2928 = vadd.f32 0.0, %v2927
        %2929 = vmatmul.f32.gmra.mxu0 %v2381
        %v2930 = vpop.f32.mrf.mxu0
        %v2931 = vadd.f32 0.0, %v2930
        %2932 = vmatmul.f32.gmra.mxu0 %v2382
        %v2933 = vpop.f32.mrf.mxu0
        %v2934 = vadd.f32 0.0, %v2933
        %2935 = vmatmul.f32.gmra.mxu0 %v2383
        %v2936 = vpop.f32.mrf.mxu0
        %v2937 = vadd.f32 0.0, %v2936
        %2938 = vmatmul.f32.gmra.mxu0 %v2384
        %v2939 = vpop.f32.mrf.mxu0
        %v2940 = vadd.f32 0.0, %v2939
        %2941 = vmatmul.f32.gmra.mxu0 %v2385
        %v2942 = vpop.f32.mrf.mxu0
        %v2943 = vadd.f32 0.0, %v2942
        %2944 = vmatmul.f32.gmra.mxu0 %v2386
        %v2945 = vpop.f32.mrf.mxu0
        %v2946 = vadd.f32 0.0, %v2945
        %2947 = vmatmul.f32.gmra.mxu0 %v2387
        %v2948 = vpop.f32.mrf.mxu0
        %v2949 = vadd.f32 0.0, %v2948
        %2950 = vmatmul.f32.gmra.mxu0 %v2388
        %v2951 = vpop.f32.mrf.mxu0
        %v2952 = vadd.f32 0.0, %v2951
        %2953 = vmatmul.f32.gmra.mxu0 %v2389
        %v2954 = vpop.f32.mrf.mxu0
        %v2955 = vadd.f32 0.0, %v2954
        %2956 = vmatmul.f32.gmra.mxu0 %v2390
        %v2957 = vpop.f32.mrf.mxu0
        %v2958 = vadd.f32 0.0, %v2957
        %2959 = vmatmul.f32.gmra.mxu0 %v2391
        %v2960 = vpop.f32.mrf.mxu0
        %v2961 = vadd.f32 0.0, %v2960
        %2962 = vmatmul.f32.gmra.mxu0 %v2392
        %v2963 = vpop.f32.mrf.mxu0
        %v2964 = vadd.f32 0.0, %v2963
        %2965 = vmatmul.f32.gmra.mxu0 %v2393
        %v2966 = vpop.f32.mrf.mxu0
        %v2967 = vadd.f32 0.0, %v2966
        %2968 = vmatmul.f32.gmra.mxu0 %v2394
        %v2969 = vpop.f32.mrf.mxu0
        %v2970 = vadd.f32 0.0, %v2969
        %2971 = vmatmul.f32.gmra.mxu0 %v2395
        %v2972 = vpop.f32.mrf.mxu0
        %v2973 = vadd.f32 0.0, %v2972
        %2974 = vmatmul.f32.gmra.mxu0 %v2396
        %v2975 = vpop.f32.mrf.mxu0
        %v2976 = vadd.f32 0.0, %v2975
        %2977 = vmatmul.f32.gmra.mxu0 %v2397
        %v2978 = vpop.f32.mrf.mxu0
        %v2979 = vadd.f32 0.0, %v2978
        %2980 = vmatmul.f32.gmra.mxu0 %v2398
        %v2981 = vpop.f32.mrf.mxu0
        %v2982 = vadd.f32 0.0, %v2981
        %2983 = vmatmul.f32.gmra.mxu0 %v2399
        %v2984 = vpop.f32.mrf.mxu0
        %v2985 = vadd.f32 0.0, %v2984
        %2986 = vmatmul.f32.gmra.mxu0 %v2400
        %v2987 = vpop.f32.mrf.mxu0
        %v2988 = vadd.f32 0.0, %v2987
        %2989 = vmatmul.f32.gmra.mxu0 %v2401
        %v2990 = vpop.f32.mrf.mxu0
        %v2991 = vadd.f32 0.0, %v2990
        %2992 = vmatmul.f32.gmra.mxu0 %v2402
        %v2993 = vpop.f32.mrf.mxu0
        %v2994 = vadd.f32 0.0, %v2993
        %2995 = vmatmul.f32.gmra.mxu0 %v2403
        %v2996 = vpop.f32.mrf.mxu0
        %v2997 = vadd.f32 0.0, %v2996
        %2998 = vmatmul.f32.gmra.mxu0 %v2404
        %v2999 = vpop.f32.mrf.mxu0
        %v3000 = vadd.f32 0.0, %v2999
        %3001 = vmatmul.f32.gmra.mxu0 %v2405
        %v3002 = vpop.f32.mrf.mxu0
        %v3003 = vadd.f32 0.0, %v3002
        %3004 = vmatmul.f32.gmra.mxu0 %v2406
        %v3005 = vpop.f32.mrf.mxu0
        %v3006 = vadd.f32 0.0, %v3005
        %3007 = vmatmul.f32.gmra.mxu0 %v2407
        %v3008 = vpop.f32.mrf.mxu0
        %v3009 = vadd.f32 0.0, %v3008
        %3010 = vmatmul.f32.gmra.mxu0 %v2408
        %v3011 = vpop.f32.mrf.mxu0
        %v3012 = vadd.f32 0.0, %v3011
        %3013 = vmatmul.f32.gmra.mxu0 %v2409
        %v3014 = vpop.f32.mrf.mxu0
        %v3015 = vadd.f32 0.0, %v3014
        %3016 = vmatmul.f32.gmra.mxu0 %v2410
        %v3017 = vpop.f32.mrf.mxu0
        %v3018 = vadd.f32 0.0, %v3017
        %3019 = vmatmul.f32.gmra.mxu0 %v2411
        %v3020 = vpop.f32.mrf.mxu0
        %v3021 = vadd.f32 0.0, %v3020
        %3022 = vmatmul.f32.gmra.mxu0 %v2412
        %v3023 = vpop.f32.mrf.mxu0
        %v3024 = vadd.f32 0.0, %v3023
        %3025 = vmatmul.f32.gmra.mxu0 %v2413
        %v3026 = vpop.f32.mrf.mxu0
        %v3027 = vadd.f32 0.0, %v3026
        %3028 = vmatmul.f32.gmra.mxu0 %v2414
        %v3029 = vpop.f32.mrf.mxu0
        %v3030 = vadd.f32 0.0, %v3029
        %3031 = vmatmul.f32.gmra.mxu0 %v2415
        %v3032 = vpop.f32.mrf.mxu0
        %v3033 = vadd.f32 0.0, %v3032
        %3034 = vmatmul.f32.gmra.mxu0 %v2416
        %v3035 = vpop.f32.mrf.mxu0
        %v3036 = vadd.f32 0.0, %v3035
        %3037 = vmatmul.f32.gmra.mxu0 %v2417
        %v3038 = vpop.f32.mrf.mxu0
        %v3039 = vadd.f32 0.0, %v3038
        %3040 = vmatmul.f32.gmra.mxu0 %v2418
        %v3041 = vpop.f32.mrf.mxu0
        %v3042 = vadd.f32 0.0, %v3041
        %3043 = vmatmul.f32.gmra.mxu0 %v2419
        %v3044 = vpop.f32.mrf.mxu0
        %v3045 = vadd.f32 0.0, %v3044
        %3046 = vmatmul.f32.gmra.mxu0 %v2420
        %v3047 = vpop.f32.mrf.mxu0
        %v3048 = vadd.f32 0.0, %v3047
        %3049 = vmatmul.f32.gmra.mxu0 %v2421
        %v3050 = vpop.f32.mrf.mxu0
        %v3051 = vadd.f32 0.0, %v3050
        %3052 = vmatmul.f32.gmra.mxu0 %v2422
        %v3053 = vpop.f32.mrf.mxu0
        %v3054 = vadd.f32 0.0, %v3053
        %3055 = vmatmul.f32.gmra.mxu0 %v2423
        %v3056 = vpop.f32.mrf.mxu0
        %v3057 = vadd.f32 0.0, %v3056
        %3058 = vmatmul.f32.gmra.mxu0 %v2424
        %v3059 = vpop.f32.mrf.mxu0
        %v3060 = vadd.f32 0.0, %v3059
        %3061 = vmatmul.f32.gmra.mxu0 %v2425
        %v3062 = vpop.f32.mrf.mxu0
        %v3063 = vadd.f32 0.0, %v3062
        %3064 = vmatmul.f32.gmra.mxu0 %v2426
        %v3065 = vpop.f32.mrf.mxu0
        %v3066 = vadd.f32 0.0, %v3065
        %3067 = vmatmul.f32.gmra.mxu0 %v2427
        %v3068 = vpop.f32.mrf.mxu0
        %v3069 = vadd.f32 0.0, %v3068
        %3070 = vmatmul.f32.gmra.mxu0 %v2428
        %v3071 = vpop.f32.mrf.mxu0
        %v3072 = vadd.f32 0.0, %v3071
        %3073 = vmatmul.f32.gmra.mxu0 %v2429
        %v3074 = vpop.f32.mrf.mxu0
        %v3075 = vadd.f32 0.0, %v3074
        %3076 = vmatmul.f32.gmra.mxu0 %v2430
        %v3077 = vpop.f32.mrf.mxu0
        %v3078 = vadd.f32 0.0, %v3077
        %3079 = vmatmul.f32.gmra.mxu0 %v2431
        %v3080 = vpop.f32.mrf.mxu0
        %v3081 = vadd.f32 0.0, %v3080
        %3082 = vmatmul.f32.gmra.mxu0 %v2432
        %v3083 = vpop.f32.mrf.mxu0
        %v3084 = vadd.f32 0.0, %v3083
        %3085 = vmatmul.f32.gmra.mxu0 %v2433
        %v3086 = vpop.f32.mrf.mxu0
        %v3087 = vadd.f32 0.0, %v3086
        %3088 = vmatmul.f32.gmra.mxu0 %v2434
        %v3089 = vpop.f32.mrf.mxu0
        %v3090 = vadd.f32 0.0, %v3089
        %3091 = vmatmul.f32.gmra.mxu0 %v2435
        %v3092 = vpop.f32.mrf.mxu0
        %v3093 = vadd.f32 0.0, %v3092
        %3094 = vmatmul.f32.gmra.mxu0 %v2436
        %v3095 = vpop.f32.mrf.mxu0
        %v3096 = vadd.f32 0.0, %v3095
        %3097 = vmatmul.f32.gmra.mxu0 %v2437
        %v3098 = vpop.f32.mrf.mxu0
        %v3099 = vadd.f32 0.0, %v3098
        %3100 = vmatmul.f32.gmra.mxu0 %v2438
        %v3101 = vpop.f32.mrf.mxu0
        %v3102 = vadd.f32 0.0, %v3101
        %3103 = vmatmul.f32.gmra.mxu0 %v2439
        %v3104 = vpop.f32.mrf.mxu0
        %v3105 = vadd.f32 0.0, %v3104
        %3106 = vmatmul.f32.gmra.mxu0 %v2440
        %v3107 = vpop.f32.mrf.mxu0
        %v3108 = vadd.f32 0.0, %v3107
        %3109 = vmatmul.f32.gmra.mxu0 %v2441
        %v3110 = vpop.f32.mrf.mxu0
        %v3111 = vadd.f32 0.0, %v3110
        %3112 = vmatmul.f32.gmra.mxu0 %v2442
        %v3113 = vpop.f32.mrf.mxu0
        %v3114 = vadd.f32 0.0, %v3113
        %3115 = vmatmul.f32.gmra.mxu0 %v2443
        %v3116 = vpop.f32.mrf.mxu0
        %v3117 = vadd.f32 0.0, %v3116
        %3118 = vmatmul.f32.gmra.mxu0 %v2444
        %v3119 = vpop.f32.mrf.mxu0
        %v3120 = vadd.f32 0.0, %v3119
        %3121 = vmatmul.f32.gmra.mxu0 %v2445
        %v3122 = vpop.f32.mrf.mxu0
        %v3123 = vadd.f32 0.0, %v3122
        %3124 = vmatmul.f32.gmra.mxu0 %v2446
        %v3125 = vpop.f32.mrf.mxu0
        %v3126 = vadd.f32 0.0, %v3125
        %3127 = vmatmul.f32.gmra.mxu0 %v2447
        %v3128 = vpop.f32.mrf.mxu0
        %v3129 = vadd.f32 0.0, %v3128
        %3130 = vmatmul.f32.gmra.mxu0 %v2448
        %v3131 = vpop.f32.mrf.mxu0
        %v3132 = vadd.f32 0.0, %v3131
        %3133 = vmatmul.f32.gmra.mxu0 %v2449
        %v3134 = vpop.f32.mrf.mxu0
        %v3135 = vadd.f32 0.0, %v3134
        %3136 = vmatmul.f32.gmra.mxu0 %v2450
        %v3137 = vpop.f32.mrf.mxu0
        %v3138 = vadd.f32 0.0, %v3137
        %3139 = vmatmul.f32.gmra.mxu0 %v2451
        %v3140 = vpop.f32.mrf.mxu0
        %v3141 = vadd.f32 0.0, %v3140
        %3142 = vmatmul.f32.gmra.mxu0 %v2452
        %v3143 = vpop.f32.mrf.mxu0
        %v3144 = vadd.f32 0.0, %v3143
        %3145 = vmatmul.f32.gmra.mxu0 %v2453
        %v3146 = vpop.f32.mrf.mxu0
        %v3147 = vadd.f32 0.0, %v3146
        %3148 = vmatmul.f32.gmra.mxu0 %v2454
        %v3149 = vpop.f32.mrf.mxu0
        %v3150 = vadd.f32 0.0, %v3149
        %3151 = vmatmul.f32.gmra.mxu0 %v2455
        %v3152 = vpop.f32.mrf.mxu0
        %v3153 = vadd.f32 0.0, %v3152
        %3154 = vmatmul.f32.gmra.mxu0 %v2456
        %v3155 = vpop.f32.mrf.mxu0
        %v3156 = vadd.f32 0.0, %v3155
        %3157 = vmatmul.f32.gmra.mxu0 %v2457
        %v3158 = vpop.f32.mrf.mxu0
        %v3159 = vadd.f32 0.0, %v3158
        %3160 = vmatmul.f32.gmra.mxu0 %v2458
        %v3161 = vpop.f32.mrf.mxu0
        %v3162 = vadd.f32 0.0, %v3161
        %3163 = vmatmul.f32.gmra.mxu0 %v2459
        %v3164 = vpop.f32.mrf.mxu0
        %v3165 = vadd.f32 0.0, %v3164
        %3166 = vmatmul.f32.gmra.mxu0 %v2460
        %v3167 = vpop.f32.mrf.mxu0
        %v3168 = vadd.f32 0.0, %v3167
        %3169 = vmatmul.f32.gmra.mxu0 %v2461
        %v3170 = vpop.f32.mrf.mxu0
        %v3171 = vadd.f32 0.0, %v3170
        %3172 = vmatmul.f32.gmra.mxu0 %v2462
        %v3173 = vpop.f32.mrf.mxu0
        %v3174 = vadd.f32 0.0, %v3173
        %3175 = vmatmul.f32.gmra.mxu0 %v2463
        %v3176 = vpop.f32.mrf.mxu0
        %v3177 = vadd.f32 0.0, %v3176
        %3178 = vmatmul.f32.gmra.mxu0 %v2464
        %v3179 = vpop.f32.mrf.mxu0
        %v3180 = vadd.f32 0.0, %v3179
        %3181 = vmatmul.f32.gmra.mxu0 %v2465
        %v3182 = vpop.f32.mrf.mxu0
        %v3183 = vadd.f32 0.0, %v3182
        %3184 = vmatmul.f32.gmra.mxu0 %v2466
        %v3185 = vpop.f32.mrf.mxu0
        %v3186 = vadd.f32 0.0, %v3185
        %3187 = vmatmul.f32.gmra.mxu0 %v2467
        %v3188 = vpop.f32.mrf.mxu0
        %v3189 = vadd.f32 0.0, %v3188
        %3190 = vmatmul.f32.gmra.mxu0 %v2468
        %v3191 = vpop.f32.mrf.mxu0
        %v3192 = vadd.f32 0.0, %v3191
        %3193 = vmatmul.f32.gmra.mxu0 %v2469
        %v3194 = vpop.f32.mrf.mxu0
        %v3195 = vadd.f32 0.0, %v3194
        %3196 = vmatmul.f32.gmra.mxu0 %v2470
        %v3197 = vpop.f32.mrf.mxu0
        %v3198 = vadd.f32 0.0, %v3197
        %3199 = vmatmul.f32.gmra.mxu0 %v2471
        %v3200 = vpop.f32.mrf.mxu0
        %v3201 = vadd.f32 0.0, %v3200
        %3202 = vmatmul.f32.gmra.mxu0 %v2472
        %v3203 = vpop.f32.mrf.mxu0
        %v3204 = vadd.f32 0.0, %v3203
        %3205 = vmatmul.f32.gmra.mxu0 %v2473
        %v3206 = vpop.f32.mrf.mxu0
        %v3207 = vadd.f32 0.0, %v3206
        %3208 = vmatmul.f32.gmra.mxu0 %v2474
        %v3209 = vpop.f32.mrf.mxu0
        %v3210 = vadd.f32 0.0, %v3209
        %3211 = vmatmul.f32.gmra.mxu0 %v2475
        %v3212 = vpop.f32.mrf.mxu0
        %v3213 = vadd.f32 0.0, %v3212
        %3214 = vmatmul.f32.gmra.mxu0 %v2476
        %v3215 = vpop.f32.mrf.mxu0
        %v3216 = vadd.f32 0.0, %v3215
        %3217 = vmatmul.f32.gmra.mxu0 %v2477
        %v3218 = vpop.f32.mrf.mxu0
        %v3219 = vadd.f32 0.0, %v3218
        %3220 = vmatmul.f32.gmra.mxu0 %v2478
        %v3221 = vpop.f32.mrf.mxu0
        %v3222 = vadd.f32 0.0, %v3221
        %3223 = vmatmul.f32.gmra.mxu0 %v2479
        %v3224 = vpop.f32.mrf.mxu0
        %v3225 = vadd.f32 0.0, %v3224
        %3226 = vmatmul.f32.gmra.mxu0 %v2480
        %v3227 = vpop.f32.mrf.mxu0
        %v3228 = vadd.f32 0.0, %v3227
        %3229 = vmatmul.f32.gmra.mxu0 %v2481
        %v3230 = vpop.f32.mrf.mxu0
        %v3231 = vadd.f32 0.0, %v3230
        %3232 = vmatmul.f32.gmra.mxu0 %v2482
        %v3233 = vpop.f32.mrf.mxu0
        %v3234 = vadd.f32 0.0, %v3233
        %3235 = vmatmul.f32.gmra.mxu0 %v2483
        %v3236 = vpop.f32.mrf.mxu0
        %v3237 = vadd.f32 0.0, %v3236
        %3238 = vmatmul.f32.gmra.mxu0 %v2484
        %v3239 = vpop.f32.mrf.mxu0
        %v3240 = vadd.f32 0.0, %v3239
        %3241 = vmatmul.f32.gmra.mxu0 %v2485
        %v3242 = vpop.f32.mrf.mxu0
        %v3243 = vadd.f32 0.0, %v3242
        %3244 = vmatmul.f32.gmra.mxu0 %v2486
        %v3245 = vpop.f32.mrf.mxu0
        %v3246 = vadd.f32 0.0, %v3245
        %3247 = vmatmul.f32.gmra.mxu0 %v2487
        %v3248 = vpop.f32.mrf.mxu0
        %v3249 = vadd.f32 0.0, %v3248
        %3250 = vmatmul.f32.gmra.mxu0 %v2488
        %v3251 = vpop.f32.mrf.mxu0
        %v3252 = vadd.f32 0.0, %v3251
        %3253 = vmatmul.f32.gmra.mxu0 %v2489
        %v3254 = vpop.f32.mrf.mxu0
        %v3255 = vadd.f32 0.0, %v3254
        %3256 = vmatmul.f32.gmra.mxu0 %v2490
        %v3257 = vpop.f32.mrf.mxu0
        %v3258 = vadd.f32 0.0, %v3257
        %3259 = vmatmul.f32.gmra.mxu0 %v2491
        %v3260 = vpop.f32.mrf.mxu0
        %v3261 = vadd.f32 0.0, %v3260
        %3262 = vmatmul.f32.gmra.mxu0 %v2492
        %v3263 = vpop.f32.mrf.mxu0
        %v3264 = vadd.f32 0.0, %v3263
        %3265 = vmatmul.f32.gmra.mxu0 %v2493
        %v3266 = vpop.f32.mrf.mxu0
        %v3267 = vadd.f32 0.0, %v3266
        %3268 = vmatmul.f32.gmra.mxu0 %v2494
        %v3269 = vpop.f32.mrf.mxu0
        %v3270 = vadd.f32 0.0, %v3269
        %3271 = vmatmul.f32.gmra.mxu0 %v2495
        %v3272 = vpop.f32.mrf.mxu0
        %v3273 = vadd.f32 0.0, %v3272
        %3274 = vmatmul.f32.gmra.mxu0 %v2496
        %v3275 = vpop.f32.mrf.mxu0
        %v3276 = vadd.f32 0.0, %v3275
        %3277 = vmatmul.f32.gmra.mxu0 %v2497
        %v3278 = vpop.f32.mrf.mxu0
        %v3279 = vadd.f32 0.0, %v3278
        %3280 = vmatmul.f32.gmra.mxu0 %v2498
        %v3281 = vpop.f32.mrf.mxu0
        %v3282 = vadd.f32 0.0, %v3281
        %3283 = vmatmul.f32.gmra.mxu0 %v2499
        %v3284 = vpop.f32.mrf.mxu0
        %v3285 = vadd.f32 0.0, %v3284
        %3286 = vmatmul.f32.gmra.mxu0 %v2500
        %v3287 = vpop.f32.mrf.mxu0
        %v3288 = vadd.f32 0.0, %v3287
        %3289 = vmatmul.f32.gmra.mxu0 %v2501
        %v3290 = vpop.f32.mrf.mxu0
        %v3291 = vadd.f32 0.0, %v3290
        %3292 = vmatmul.f32.gmra.mxu0 %v2502
        %v3293 = vpop.f32.mrf.mxu0
        %v3294 = vadd.f32 0.0, %v3293
        %3295 = vmatmul.f32.gmra.mxu0 %v2503
        %v3296 = vpop.f32.mrf.mxu0
        %v3297 = vadd.f32 0.0, %v3296
        %3298 = vmatmul.f32.gmra.mxu0 %v2504
        %v3299 = vpop.f32.mrf.mxu0
        %v3300 = vadd.f32 0.0, %v3299
        %3301 = vmatmul.f32.gmra.mxu0 %v2505
        %v3302 = vpop.f32.mrf.mxu0
        %v3303 = vadd.f32 0.0, %v3302
        %3304 = vmatmul.f32.gmra.mxu0 %v2506
        %v3305 = vpop.f32.mrf.mxu0
        %v3306 = vadd.f32 0.0, %v3305
        %3307 = vmatmul.f32.gmra.mxu0 %v2507
        %v3308 = vpop.f32.mrf.mxu0
        %v3309 = vadd.f32 0.0, %v3308
        %3310 = vmatmul.f32.gmra.mxu0 %v2508
        %v3311 = vpop.f32.mrf.mxu0
        %v3312 = vadd.f32 0.0, %v3311
        %3313 = vmatmul.f32.gmra.mxu0 %v2509
        %v3314 = vpop.f32.mrf.mxu0
        %v3315 = vadd.f32 0.0, %v3314
        %3316 = vmatmul.f32.gmra.mxu0 %v2510
        %v3317 = vpop.f32.mrf.mxu0
        %v3318 = vadd.f32 0.0, %v3317
        %3319 = vmatmul.f32.gmra.mxu0 %v2511
        %v3320 = vpop.f32.mrf.mxu0
        %v3321 = vadd.f32 0.0, %v3320
        %3322 = vmatmul.f32.gmra.mxu0 %v2512
        %v3323 = vpop.f32.mrf.mxu0
        %v3324 = vadd.f32 0.0, %v3323
        %3325 = vmatmul.f32.gmra.mxu0 %v2513
        %v3326 = vpop.f32.mrf.mxu0
        %v3327 = vadd.f32 0.0, %v3326
        %3328 = vmatmul.f32.gmra.mxu0 %v2514
        %v3329 = vpop.f32.mrf.mxu0
        %v3330 = vadd.f32 0.0, %v3329
        %3331 = vmatmul.f32.gmra.mxu0 %v2515
        %v3332 = vpop.f32.mrf.mxu0
        %v3333 = vadd.f32 0.0, %v3332
        %3334 = vmatmul.f32.gmra.mxu0 %v2516
        %v3335 = vpop.f32.mrf.mxu0
        %v3336 = vadd.f32 0.0, %v3335
        %3337 = vmatmul.f32.gmra.mxu0 %v2517
        %v3338 = vpop.f32.mrf.mxu0
        %v3339 = vadd.f32 0.0, %v3338
        %3340 = vmatmul.f32.gmra.mxu0 %v2518
        %v3341 = vpop.f32.mrf.mxu0
        %v3342 = vadd.f32 0.0, %v3341
        %3343 = vmatmul.f32.gmra.mxu0 %v2519
        %v3344 = vpop.f32.mrf.mxu0
        %v3345 = vadd.f32 0.0, %v3344
        %3346 = vmatmul.f32.gmra.mxu0 %v2520
        %v3347 = vpop.f32.mrf.mxu0
        %v3348 = vadd.f32 0.0, %v3347
        %3349 = vmatmul.f32.gmra.mxu0 %v2521
        %v3350 = vpop.f32.mrf.mxu0
        %v3351 = vadd.f32 0.0, %v3350
        %3352 = vmatmul.f32.gmra.mxu0 %v2522
        %v3353 = vpop.f32.mrf.mxu0
        %v3354 = vadd.f32 0.0, %v3353
        %3355 = vmatmul.f32.gmra.mxu0 %v2523
        %v3356 = vpop.f32.mrf.mxu0
        %v3357 = vadd.f32 0.0, %v3356
        %3358 = vmatmul.f32.gmra.mxu0 %v2524
        %v3359 = vpop.f32.mrf.mxu0
        %v3360 = vadd.f32 0.0, %v3359
        %3361 = vmatmul.f32.gmra.mxu0 %v2525
        %v3362 = vpop.f32.mrf.mxu0
        %v3363 = vadd.f32 0.0, %v3362
        %3364 = vmatmul.f32.gmra.mxu0 %v2526
        %v3365 = vpop.f32.mrf.mxu0
        %v3366 = vadd.f32 0.0, %v3365
        %3367 = vmatmul.f32.gmra.mxu0 %v2527
        %v3368 = vpop.f32.mrf.mxu0
        %v3369 = vadd.f32 0.0, %v3368
        %3370 = vmatmul.f32.gmra.mxu0 %v2528
        %v3371 = vpop.f32.mrf.mxu0
        %v3372 = vadd.f32 0.0, %v3371
        %3373 = vmatmul.f32.gmra.mxu0 %v2529
        %v3374 = vpop.f32.mrf.mxu0
        %v3375 = vadd.f32 0.0, %v3374
        %3376 = vmatmul.f32.gmra.mxu0 %v2530
        %v3377 = vpop.f32.mrf.mxu0
        %v3378 = vadd.f32 0.0, %v3377
        %3379 = vmatmul.f32.gmra.mxu0 %v2531
        %v3380 = vpop.f32.mrf.mxu0
        %v3381 = vadd.f32 0.0, %v3380
        %3382 = vmatmul.f32.gmra.mxu0 %v2532
        %v3383 = vpop.f32.mrf.mxu0
        %v3384 = vadd.f32 0.0, %v3383
        %3385 = vmatmul.f32.gmra.mxu0 %v2533
        %v3386 = vpop.f32.mrf.mxu0
        %v3387 = vadd.f32 0.0, %v3386
        %3388 = vmatmul.f32.gmra.mxu0 %v2534
        %v3389 = vpop.f32.mrf.mxu0
        %v3390 = vadd.f32 0.0, %v3389
        %3391 = vmatmul.f32.gmra.mxu0 %v2535
        %v3392 = vpop.f32.mrf.mxu0
        %v3393 = vadd.f32 0.0, %v3392
        %3394 = vmatmul.f32.gmra.mxu0 %v2536
        %v3395 = vpop.f32.mrf.mxu0
        %v3396 = vadd.f32 0.0, %v3395
        %3397 = vmatmul.f32.gmra.mxu0 %v2537
        %v3398 = vpop.f32.mrf.mxu0
        %v3399 = vadd.f32 0.0, %v3398
        %3400 = vmatmul.f32.gmra.mxu0 %v2538
        %v3401 = vpop.f32.mrf.mxu0
        %v3402 = vadd.f32 0.0, %v3401
        %3403 = vmatmul.f32.gmra.mxu0 %v2539
        %v3404 = vpop.f32.mrf.mxu0
        %v3405 = vadd.f32 0.0, %v3404
        %3406 = vmatmul.f32.gmra.mxu0 %v2540
        %v3407 = vpop.f32.mrf.mxu0
        %v3408 = vadd.f32 0.0, %v3407
        %3409 = vmatmul.f32.gmra.mxu0 %v2541
        %v3410 = vpop.f32.mrf.mxu0
        %v3411 = vadd.f32 0.0, %v3410
        %3412 = vmatmul.f32.gmra.mxu0 %v2542
        %v3413 = vpop.f32.mrf.mxu0
        %v3414 = vadd.f32 0.0, %v3413
        %3415 = vmatmul.f32.gmra.mxu0 %v2543
        %v3416 = vpop.f32.mrf.mxu0
        %v3417 = vadd.f32 0.0, %v3416
        %3418 = vmatmul.f32.gmra.mxu0 %v2544
        %v3419 = vpop.f32.mrf.mxu0
        %v3420 = vadd.f32 0.0, %v3419
        %3421 = vmatmul.f32.gmra.mxu0 %v2545
        %v3422 = vpop.f32.mrf.mxu0
        %v3423 = vadd.f32 0.0, %v3422
        %3424 = vmatmul.f32.gmra.mxu0 %v2546
        %v3425 = vpop.f32.mrf.mxu0
        %v3426 = vadd.f32 0.0, %v3425
        %3427 = vmatmul.f32.gmra.mxu0 %v2547
        %v3428 = vpop.f32.mrf.mxu0
        %v3429 = vadd.f32 0.0, %v3428
        %3430 = vmatmul.f32.gmra.mxu0 %v2548
        %v3431 = vpop.f32.mrf.mxu0
        %v3432 = vadd.f32 0.0, %v3431
        %3433 = vmatmul.f32.gmra.mxu0 %v2549
        %v3434 = vpop.f32.mrf.mxu0
        %v3435 = vadd.f32 0.0, %v3434
        %3436 = vmatmul.f32.gmra.mxu0 %v2550
        %v3437 = vpop.f32.mrf.mxu0
        %v3438 = vadd.f32 0.0, %v3437
        %3439 = vmatmul.f32.gmra.mxu0 %v2551
        %v3440 = vpop.f32.mrf.mxu0
        %v3441 = vadd.f32 0.0, %v3440
        %3442 = vmatmul.f32.gmra.mxu0 %v2552
        %v3443 = vpop.f32.mrf.mxu0
        %v3444 = vadd.f32 0.0, %v3443
        %3445 = vmatmul.f32.gmra.mxu0 %v2553
        %v3446 = vpop.f32.mrf.mxu0
        %v3447 = vadd.f32 0.0, %v3446
        %3448 = vmatmul.f32.gmra.mxu0 %v2554
        %v3449 = vpop.f32.mrf.mxu0
        %v3450 = vadd.f32 0.0, %v3449
        %3451 = vmatmul.f32.gmra.mxu0 %v2555
        %v3452 = vpop.f32.mrf.mxu0
        %v3453 = vadd.f32 0.0, %v3452
        %3454 = vmatmul.f32.gmra.mxu0 %v2556
        %v3455 = vpop.f32.mrf.mxu0
        %v3456 = vadd.f32 0.0, %v3455
        %3457 = vmatmul.f32.gmra.mxu0 %v2557
        %v3458 = vpop.f32.mrf.mxu0
        %v3459 = vadd.f32 0.0, %v3458
        %3460 = vmatmul.f32.gmra.mxu0 %v2558
        %v3461 = vpop.f32.mrf.mxu0
        %v3462 = vadd.f32 0.0, %v3461
        %3463 = vmatmul.f32.gmra.mxu0 %v2559
        %v3464 = vpop.f32.mrf.mxu0
        %v3465 = vadd.f32 0.0, %v3464
        %3466 = vmatmul.f32.gmra.mxu0 %v2560
        %v3467 = vpop.f32.mrf.mxu0
        %v3468 = vadd.f32 0.0, %v3467
        %3469 = vmatmul.f32.gmra.mxu0 %v2561
        %v3470 = vpop.f32.mrf.mxu0
        %v3471 = vadd.f32 0.0, %v3470
        %3472 = vmatmul.f32.gmra.mxu0 %v2562
        %v3473 = vpop.f32.mrf.mxu0
        %v3474 = vadd.f32 0.0, %v3473
        %3475 = vmatmul.f32.gmra.mxu0 %v2563
        %v3476 = vpop.f32.mrf.mxu0
        %v3477 = vadd.f32 0.0, %v3476
        %3478 = vmatmul.f32.gmra.mxu0 %v2564
        %v3479 = vpop.f32.mrf.mxu0
        %v3480 = vadd.f32 0.0, %v3479
        %3481 = vmatmul.f32.gmra.mxu0 %v2565
        %v3482 = vpop.f32.mrf.mxu0
        %v3483 = vadd.f32 0.0, %v3482
        %3484 = vmatmul.f32.gmra.mxu0 %v2566
        %v3485 = vpop.f32.mrf.mxu0
        %v3486 = vadd.f32 0.0, %v3485
        %3487 = vmatmul.f32.gmra.mxu0 %v2567
        %v3488 = vpop.f32.mrf.mxu0
        %v3489 = vadd.f32 0.0, %v3488
        %3490 = vmatmul.f32.gmra.mxu0 %v2568
        %v3491 = vpop.f32.mrf.mxu0
        %v3492 = vadd.f32 0.0, %v3491
        %3493 = vmatmul.f32.gmra.mxu0 %v2569
        %v3494 = vpop.f32.mrf.mxu0
        %v3495 = vadd.f32 0.0, %v3494
        %3496 = vmatmul.f32.gmra.mxu0 %v2570
        %v3497 = vpop.f32.mrf.mxu0
        %v3498 = vadd.f32 0.0, %v3497
        %3499 = vmatmul.f32.gmra.mxu0 %v2571
        %v3500 = vpop.f32.mrf.mxu0
        %v3501 = vadd.f32 0.0, %v3500
        %3502 = vmatmul.f32.gmra.mxu0 %v2572
        %v3503 = vpop.f32.mrf.mxu0
        %v3504 = vadd.f32 0.0, %v3503
        %3505 = vmatmul.f32.gmra.mxu0 %v2573
        %v3506 = vpop.f32.mrf.mxu0
        %v3507 = vadd.f32 0.0, %v3506
        %3508 = vmatmul.f32.gmra.mxu0 %v2574
        %v3509 = vpop.f32.mrf.mxu0
        %v3510 = vadd.f32 0.0, %v3509
        %3511 = vmatmul.f32.gmra.mxu0 %v2575
        %v3512 = vpop.f32.mrf.mxu0
        %v3513 = vadd.f32 0.0, %v3512
        %3514 = vmatmul.f32.gmra.mxu0 %v2576
        %v3515 = vpop.f32.mrf.mxu0
        %v3516 = vadd.f32 0.0, %v3515
        %3517 = vmatmul.f32.gmra.mxu0 %v2577
        %v3518 = vpop.f32.mrf.mxu0
        %v3519 = vadd.f32 0.0, %v3518
        %3520 = vmatmul.f32.gmra.mxu0 %v2578
        %v3521 = vpop.f32.mrf.mxu0
        %v3522 = vadd.f32 0.0, %v3521
        %3523 = vmatmul.f32.gmra.mxu0 %v2579
        %v3524 = vpop.f32.mrf.mxu0
        %v3525 = vadd.f32 0.0, %v3524
        %3526 = vmatmul.f32.gmra.mxu0 %v2580
        %v3527 = vpop.f32.mrf.mxu0
        %v3528 = vadd.f32 0.0, %v3527
        %3529 = vmatmul.f32.gmra.mxu0 %v2581
        %v3530 = vpop.f32.mrf.mxu0
        %v3531 = vadd.f32 0.0, %v3530
        %3532 = vmatmul.f32.gmra.mxu0 %v2582
        %v3533 = vpop.f32.mrf.mxu0
        %v3534 = vadd.f32 0.0, %v3533
        %3535 = vmatmul.f32.gmra.mxu0 %v2583
        %v3536 = vpop.f32.mrf.mxu0
        %v3537 = vadd.f32 0.0, %v3536
        %3538 = vmatmul.f32.gmra.mxu0 %v2584
        %v3539 = vpop.f32.mrf.mxu0
        %v3540 = vadd.f32 0.0, %v3539
        %3541 = vmatmul.f32.gmra.mxu0 %v2585
        %v3542 = vpop.f32.mrf.mxu0
        %v3543 = vadd.f32 0.0, %v3542
        %3544 = vmatmul.f32.gmra.mxu0 %v2586
        %v3545 = vpop.f32.mrf.mxu0
        %v3546 = vadd.f32 0.0, %v3545
        %3547 = vmatmul.f32.gmra.mxu0 %v2587
        %v3548 = vpop.f32.mrf.mxu0
        %v3549 = vadd.f32 0.0, %v3548
        %3550 = vmatmul.f32.gmra.mxu0 %v2588
        %v3551 = vpop.f32.mrf.mxu0
        %v3552 = vadd.f32 0.0, %v3551
        %3553 = vmatmul.f32.gmra.mxu0 %v2589
        %v3554 = vpop.f32.mrf.mxu0
        %v3555 = vadd.f32 0.0, %v3554
        %3556 = vmatmul.f32.gmra.mxu0 %v2590
        %v3557 = vpop.f32.mrf.mxu0
        %v3558 = vadd.f32 0.0, %v3557
        %3559 = vmatmul.f32.gmra.mxu0 %v2591
        %v3560 = vpop.f32.mrf.mxu0
        %v3561 = vadd.f32 0.0, %v3560
        %3562 = vmatmul.f32.gmra.mxu0 %v2592
        %v3563 = vpop.f32.mrf.mxu0
        %v3564 = vadd.f32 0.0, %v3563
        %3565 = vmatmul.f32.gmra.mxu0 %v2593
        %v3566 = vpop.f32.mrf.mxu0
        %v3567 = vadd.f32 0.0, %v3566
        %3568 = vmatmul.f32.gmra.mxu0 %v2594
        %v3569 = vpop.f32.mrf.mxu0
        %v3570 = vadd.f32 0.0, %v3569
        %3571 = vmatmul.f32.gmra.mxu0 %v2595
        %v3572 = vpop.f32.mrf.mxu0
        %v3573 = vadd.f32 0.0, %v3572
        %3574 = vmatmul.f32.gmra.mxu0 %v2596
        %v3575 = vpop.f32.mrf.mxu0
        %v3576 = vadd.f32 0.0, %v3575
        %3577 = vmatmul.f32.gmra.mxu0 %v2597
        %v3578 = vpop.f32.mrf.mxu0
        %v3579 = vadd.f32 0.0, %v3578
        %3580 = vmatmul.f32.gmra.mxu0 %v2598
        %v3581 = vpop.f32.mrf.mxu0
        %v3582 = vadd.f32 0.0, %v3581
        %3583 = vmatmul.f32.gmra.mxu0 %v2599
        %v3584 = vpop.f32.mrf.mxu0
        %v3585 = vadd.f32 0.0, %v3584
        %3586 = vmatmul.f32.gmra.mxu0 %v2600
        %v3587 = vpop.f32.mrf.mxu0
        %v3588 = vadd.f32 0.0, %v3587
        %3589 = vmatmul.f32.gmra.mxu0 %v2601
        %v3590 = vpop.f32.mrf.mxu0
        %v3591 = vadd.f32 0.0, %v3590
        %3592 = vmatmul.f32.gmra.mxu0 %v2602
        %v3593 = vpop.f32.mrf.mxu0
        %v3594 = vadd.f32 0.0, %v3593
        %3595 = vmatmul.f32.gmra.mxu0 %v2603
        %v3596 = vpop.f32.mrf.mxu0
        %v3597 = vadd.f32 0.0, %v3596
        %3598 = vmatmul.f32.gmra.mxu0 %v2604
        %v3599 = vpop.f32.mrf.mxu0
        %v3600 = vadd.f32 0.0, %v3599
        %3601 = vmatmul.f32.gmra.mxu0 %v2605
        %v3602 = vpop.f32.mrf.mxu0
        %v3603 = vadd.f32 0.0, %v3602
        %3604 = vmatmul.f32.gmra.mxu0 %v2606
        %v3605 = vpop.f32.mrf.mxu0
        %v3606 = vadd.f32 0.0, %v3605
        %3607 = vmatmul.f32.gmra.mxu0 %v2607
        %v3608 = vpop.f32.mrf.mxu0
        %v3609 = vadd.f32 0.0, %v3608
        %3610 = vmatmul.f32.gmra.mxu0 %v2608
        %v3611 = vpop.f32.mrf.mxu0
        %v3612 = vadd.f32 0.0, %v3611
        %3613 = vmatmul.f32.gmra.mxu0 %v2609
        %v3614 = vpop.f32.mrf.mxu0
        %v3615 = vadd.f32 0.0, %v3614
        %3616 = vmatmul.f32.gmra.mxu0 %v2610
        %v3617 = vpop.f32.mrf.mxu0
        %v3618 = vadd.f32 0.0, %v3617
        %3619 = vmatmul.f32.gmra.mxu0 %v2611
        %v3620 = vpop.f32.mrf.mxu0
        %v3621 = vadd.f32 0.0, %v3620
        %3622 = vmatmul.f32.gmra.mxu0 %v2612
        %v3623 = vpop.f32.mrf.mxu0
        %v3624 = vadd.f32 0.0, %v3623
        %3625 = vmatmul.f32.gmra.mxu0 %v2613
        %v3626 = vpop.f32.mrf.mxu0
        %v3627 = vadd.f32 0.0, %v3626
        %3628 = vmatmul.f32.gmra.mxu0 %v2614
        %v3629 = vpop.f32.mrf.mxu0
        %v3630 = vadd.f32 0.0, %v3629
        %3631 = vmatmul.f32.gmra.mxu0 %v2615
        %v3632 = vpop.f32.mrf.mxu0
        %v3633 = vadd.f32 0.0, %v3632
        %3634 = vmatmul.f32.gmra.mxu0 %v2616
        %v3635 = vpop.f32.mrf.mxu0
        %v3636 = vadd.f32 0.0, %v3635
        %3637 = vmatmul.f32.gmra.mxu0 %v2617
        %v3638 = vpop.f32.mrf.mxu0
        %v3639 = vadd.f32 0.0, %v3638
        %3640 = vmatmul.f32.gmra.mxu0 %v2618
        %v3641 = vpop.f32.mrf.mxu0
        %v3642 = vadd.f32 0.0, %v3641
        %3643 = vmatmul.f32.gmra.mxu0 %v2619
        %v3644 = vpop.f32.mrf.mxu0
        %v3645 = vadd.f32 0.0, %v3644
        %3646 = vmatmul.f32.gmra.mxu0 %v2620
        %v3647 = vpop.f32.mrf.mxu0
        %v3648 = vadd.f32 0.0, %v3647
        %3649 = vmatmul.f32.gmra.mxu0 %v2621
        %v3650 = vpop.f32.mrf.mxu0
        %v3651 = vadd.f32 0.0, %v3650
        %3652 = vmatmul.f32.gmra.mxu0 %v2622
        %v3653 = vpop.f32.mrf.mxu0
        %v3654 = vadd.f32 0.0, %v3653
        %3655 = vmatmul.f32.gmra.mxu0 %v2623
        %v3656 = vpop.f32.mrf.mxu0
        %v3657 = vadd.f32 0.0, %v3656
        %3658 = vmatmul.f32.gmra.mxu0 %v2624
        %v3659 = vpop.f32.mrf.mxu0
        %v3660 = vadd.f32 0.0, %v3659
        %3661 = vmatmul.f32.gmra.mxu0 %v2625
        %v3662 = vpop.f32.mrf.mxu0
        %v3663 = vadd.f32 0.0, %v3662
        %3664 = vmatmul.f32.gmra.mxu0 %v2626
        %v3665 = vpop.f32.mrf.mxu0
        %v3666 = vadd.f32 0.0, %v3665
        %3667 = vmatmul.f32.gmra.mxu0 %v2627
        %v3668 = vpop.f32.mrf.mxu0
        %v3669 = vadd.f32 0.0, %v3668
        %3670 = vmatmul.f32.gmra.mxu0 %v2628
        %v3671 = vpop.f32.mrf.mxu0
        %v3672 = vadd.f32 0.0, %v3671
        %3673 = vmatmul.f32.gmra.mxu0 %v2629
        %v3674 = vpop.f32.mrf.mxu0
        %v3675 = vadd.f32 0.0, %v3674
        %3676 = vmatmul.f32.gmra.mxu0 %v2630
        %v3677 = vpop.f32.mrf.mxu0
        %v3678 = vadd.f32 0.0, %v3677
        %3679 = vmatmul.f32.gmra.mxu0 %v2631
        %v3680 = vpop.f32.mrf.mxu0
        %v3681 = vadd.f32 0.0, %v3680
        %3682 = vmatmul.f32.gmra.mxu0 %v2632
        %v3683 = vpop.f32.mrf.mxu0
        %v3684 = vadd.f32 0.0, %v3683
        %3685 = vmatmul.f32.gmra.mxu0 %v2633
        %v3686 = vpop.f32.mrf.mxu0
        %v3687 = vadd.f32 0.0, %v3686
        %3688 = vmatmul.f32.gmra.mxu0 %v2634
        %v3689 = vpop.f32.mrf.mxu0
        %v3690 = vadd.f32 0.0, %v3689
        %3691 = vmatmul.f32.gmra.mxu0 %v2635
        %v3692 = vpop.f32.mrf.mxu0
        %v3693 = vadd.f32 0.0, %v3692
        %3694 = vmatmul.f32.gmra.mxu0 %v2636
        %v3695 = vpop.f32.mrf.mxu0
        %v3696 = vadd.f32 0.0, %v3695
        %3697 = vmatmul.f32.gmra.mxu0 %v2637
        %v3698 = vpop.f32.mrf.mxu0
        %v3699 = vadd.f32 0.0, %v3698
        %3700 = vmatmul.f32.gmra.mxu0 %v2638
        %v3701 = vpop.f32.mrf.mxu0
        %v3702 = vadd.f32 0.0, %v3701
        %3703 = vmatmul.f32.gmra.mxu0 %v2639
        %v3704 = vpop.f32.mrf.mxu0
        %v3705 = vadd.f32 0.0, %v3704
        %3706 = vmatmul.f32.gmra.mxu0 %v2640
        %v3707 = vpop.f32.mrf.mxu0
        %v3708 = vadd.f32 0.0, %v3707
        %3709 = vmatmul.f32.gmra.mxu0 %v2641
        %v3710 = vpop.f32.mrf.mxu0
        %v3711 = vadd.f32 0.0, %v3710
        %3712 = vmatmul.f32.gmra.mxu0 %v2642
        %v3713 = vpop.f32.mrf.mxu0
        %v3714 = vadd.f32 0.0, %v3713
        %3715 = vmatmul.f32.gmra.mxu0 %v2643
        %v3716 = vpop.f32.mrf.mxu0
        %v3717 = vadd.f32 0.0, %v3716
        %3718 = vmatmul.f32.gmra.mxu0 %v2644
        %v3719 = vpop.f32.mrf.mxu0
        %v3720 = vadd.f32 0.0, %v3719
        %3721 = vmatmul.f32.gmra.mxu0 %v2645
        %v3722 = vpop.f32.mrf.mxu0
        %v3723 = vadd.f32 0.0, %v3722
        %3724 = vmatmul.f32.gmra.mxu0 %v2646
        %v3725 = vpop.f32.mrf.mxu0
        %v3726 = vadd.f32 0.0, %v3725
        %3727 = vmatmul.f32.gmra.mxu0 %v2647
        %v3728 = vpop.f32.mrf.mxu0
        %v3729 = vadd.f32 0.0, %v3728
        %3730 = vmatmul.f32.gmra.mxu0 %v2648
        %v3731 = vpop.f32.mrf.mxu0
        %v3732 = vadd.f32 0.0, %v3731
        %3733 = vmatmul.f32.gmra.mxu0 %v2649
        %v3734 = vpop.f32.mrf.mxu0
        %v3735 = vadd.f32 0.0, %v3734
        %3736 = vmatmul.f32.gmra.mxu0 %v2650
        %v3737 = vpop.f32.mrf.mxu0
        %v3738 = vadd.f32 0.0, %v3737
        %3739 = vmatmul.f32.gmra.mxu0 %v2651
        %v3740 = vpop.f32.mrf.mxu0
        %v3741 = vadd.f32 0.0, %v3740
        %3742 = vmatmul.f32.gmra.mxu0 %v2652
        %v3743 = vpop.f32.mrf.mxu0
        %v3744 = vadd.f32 0.0, %v3743
        %3745 = vmatmul.f32.gmra.mxu0 %v2653
        %v3746 = vpop.f32.mrf.mxu0
        %v3747 = vadd.f32 0.0, %v3746
        %3748 = vmatmul.f32.gmra.mxu0 %v2654
        %v3749 = vpop.f32.mrf.mxu0
        %v3750 = vadd.f32 0.0, %v3749
        %3751 = vmatmul.f32.gmra.mxu0 %v2655
        %v3752 = vpop.f32.mrf.mxu0
        %v3753 = vadd.f32 0.0, %v3752
        %3754 = vmatmul.f32.gmra.mxu0 %v2656
        %v3755 = vpop.f32.mrf.mxu0
        %v3756 = vadd.f32 0.0, %v3755
        %3757 = vmatmul.f32.gmra.mxu0 %v2657
        %v3758 = vpop.f32.mrf.mxu0
        %v3759 = vadd.f32 0.0, %v3758
        %3760 = vmatmul.f32.gmra.mxu0 %v2658
        %v3761 = vpop.f32.mrf.mxu0
        %v3762 = vadd.f32 0.0, %v3761
        %3763 = vmatmul.f32.gmra.mxu0 %v2659
        %v3764 = vpop.f32.mrf.mxu0
        %v3765 = vadd.f32 0.0, %v3764
        %3766 = vmatmul.f32.gmra.mxu0 %v2660
        %v3767 = vpop.f32.mrf.mxu0
        %v3768 = vadd.f32 0.0, %v3767
        %3769 = vmatmul.f32.gmra.mxu0 %v2661
        %v3770 = vpop.f32.mrf.mxu0
        %v3771 = vadd.f32 0.0, %v3770
        %3772 = vmatmul.f32.gmra.mxu0 %v2662
        %v3773 = vpop.f32.mrf.mxu0
        %v3774 = vadd.f32 0.0, %v3773
        %3775 = vmatmul.f32.gmra.mxu0 %v2663
        %v3776 = vpop.f32.mrf.mxu0
        %v3777 = vadd.f32 0.0, %v3776
        %3778 = vmatmul.f32.gmra.mxu0 %v2664
        %v3779 = vpop.f32.mrf.mxu0
        %v3780 = vadd.f32 0.0, %v3779
        %3781 = vmatmul.f32.gmra.mxu0 %v2665
        %v3782 = vpop.f32.mrf.mxu0
        %v3783 = vadd.f32 0.0, %v3782
        %3784 = vmatmul.f32.gmra.mxu0 %v2666
        %v3785 = vpop.f32.mrf.mxu0
        %v3786 = vadd.f32 0.0, %v3785
        %3787 = vmatmul.f32.gmra.mxu0 %v2667
        %v3788 = vpop.f32.mrf.mxu0
        %v3789 = vadd.f32 0.0, %v3788
        %3790 = vmatmul.f32.gmra.mxu0 %v2668
        %v3791 = vpop.f32.mrf.mxu0
        %v3792 = vadd.f32 0.0, %v3791
        %3793 = vmatmul.f32.gmra.mxu0 %v2669
        %v3794 = vpop.f32.mrf.mxu0
        %v3795 = vadd.f32 0.0, %v3794
        %3796 = vmatmul.f32.gmra.mxu0 %v2670
        %v3797 = vpop.f32.mrf.mxu0
        %v3798 = vadd.f32 0.0, %v3797
        %3799 = vmatmul.f32.gmra.mxu0 %v2671
        %v3800 = vpop.f32.mrf.mxu0
        %v3801 = vadd.f32 0.0, %v3800
        %3802 = vmatmul.f32.gmra.mxu0 %v2672
        %v3803 = vpop.f32.mrf.mxu0
        %v3804 = vadd.f32 0.0, %v3803
        %3805 = vmatmul.f32.gmra.mxu0 %v2673
        %v3806 = vpop.f32.mrf.mxu0
        %v3807 = vadd.f32 0.0, %v3806
        %3808 = vmatmul.f32.gmra.mxu0 %v2674
        %v3809 = vpop.f32.mrf.mxu0
        %v3810 = vadd.f32 0.0, %v3809
        %3811 = vmatmul.f32.gmra.mxu0 %v2675
        %v3812 = vpop.f32.mrf.mxu0
        %v3813 = vadd.f32 0.0, %v3812
        %3814 = vmatmul.f32.gmra.mxu0 %v2676
        %v3815 = vpop.f32.mrf.mxu0
        %v3816 = vadd.f32 0.0, %v3815
        %3817 = vmatmul.f32.gmra.mxu0 %v2677
        %v3818 = vpop.f32.mrf.mxu0
        %v3819 = vadd.f32 0.0, %v3818
        %3820 = vmatmul.f32.gmra.mxu0 %v2678
        %v3821 = vpop.f32.mrf.mxu0
        %v3822 = vadd.f32 0.0, %v3821
        %3823 = vmatmul.f32.gmra.mxu0 %v2679
        %v3824 = vpop.f32.mrf.mxu0
        %v3825 = vadd.f32 0.0, %v3824
        %3826 = vmatmul.f32.gmra.mxu0 %v2680
        %v3827 = vpop.f32.mrf.mxu0
        %v3828 = vadd.f32 0.0, %v3827
        %3829 = vmatmul.f32.gmra.mxu0 %v2681
        %v3830 = vpop.f32.mrf.mxu0
        %v3831 = vadd.f32 0.0, %v3830
        %3832 = vmatmul.f32.gmra.mxu0 %v2682
        %v3833 = vpop.f32.mrf.mxu0
        %v3834 = vadd.f32 0.0, %v3833
        %3835 = vmatmul.f32.gmra.mxu0 %v2683
        %v3836 = vpop.f32.mrf.mxu0
        %v3837 = vadd.f32 0.0, %v3836
        %3838 = vmatmul.f32.gmra.mxu0 %v2684
        %v3839 = vpop.f32.mrf.mxu0
        %v3840 = vadd.f32 0.0, %v3839
        %3841 = vmatmul.f32.gmra.mxu0 %v2685
        %v3842 = vpop.f32.mrf.mxu0
        %v3843 = vadd.f32 0.0, %v3842
        %3844 = vmatmul.f32.gmra.mxu0 %v2686
        %v3845 = vpop.f32.mrf.mxu0
        %v3846 = vadd.f32 0.0, %v3845
        %3847 = vmatmul.f32.gmra.mxu0 %v2687
        %v3848 = vpop.f32.mrf.mxu0
        %v3849 = vadd.f32 0.0, %v3848
        %3850 = vmatmul.f32.gmra.mxu0 %v2688
        %v3851 = vpop.f32.mrf.mxu0
        %v3852 = vadd.f32 0.0, %v3851
        %3853 = vmatmul.f32.gmra.mxu0 %v2689
        %v3854 = vpop.f32.mrf.mxu0
        %v3855 = vadd.f32 0.0, %v3854
        %3856 = vmatmul.f32.gmra.mxu0 %v2690
        %v3857 = vpop.f32.mrf.mxu0
        %v3858 = vadd.f32 0.0, %v3857
        %3859 = vmatmul.f32.gmra.mxu0 %v2691
        %v3860 = vpop.f32.mrf.mxu0
        %v3861 = vadd.f32 0.0, %v3860
        %3862 = vmatmul.f32.gmra.mxu0 %v2692
        %v3863 = vpop.f32.mrf.mxu0
        %v3864 = vadd.f32 0.0, %v3863
        %3865 = vmatmul.f32.gmra.mxu0 %v2693
        %v3866 = vpop.f32.mrf.mxu0
        %v3867 = vadd.f32 0.0, %v3866
        %3868 = vmatmul.f32.gmra.mxu0 %v2694
        %v3869 = vpop.f32.mrf.mxu0
        %v3870 = vadd.f32 0.0, %v3869
        %3871 = vmatmul.f32.gmra.mxu0 %v2695
        %v3872 = vpop.f32.mrf.mxu0
        %v3873 = vadd.f32 0.0, %v3872
        %3874 = vmatmul.f32.gmra.mxu0 %v2696
        %v3875 = vpop.f32.mrf.mxu0
        %v3876 = vadd.f32 0.0, %v3875
        %3877 = vmatmul.f32.gmra.mxu0 %v2697
        %v3878 = vpop.f32.mrf.mxu0
        %v3879 = vadd.f32 0.0, %v3878
        %3880 = vmatmul.f32.gmra.mxu0 %v2698
        %v3881 = vpop.f32.mrf.mxu0
        %v3882 = vadd.f32 0.0, %v3881
        %3883 = vmatmul.f32.gmra.mxu0 %v2699
        %v3884 = vpop.f32.mrf.mxu0
        %v3885 = vadd.f32 0.0, %v3884
        %3886 = vmatmul.f32.gmra.mxu0 %v2700
        %v3887 = vpop.f32.mrf.mxu0
        %v3888 = vadd.f32 0.0, %v3887
        %3889 = vmatmul.f32.gmra.mxu0 %v2701
        %v3890 = vpop.f32.mrf.mxu0
        %v3891 = vadd.f32 0.0, %v3890
        %3892 = vmatmul.f32.gmra.mxu0 %v2702
        %v3893 = vpop.f32.mrf.mxu0
        %v3894 = vadd.f32 0.0, %v3893
        %3895 = vmatmul.f32.gmra.mxu0 %v2703
        %v3896 = vpop.f32.mrf.mxu0
        %v3897 = vadd.f32 0.0, %v3896
        %3898 = vmatmul.f32.gmra.mxu0 %v2704
        %v3899 = vpop.f32.mrf.mxu0
        %v3900 = vadd.f32 0.0, %v3899
        %3901 = vmatmul.f32.gmra.mxu0 %v2705
        %v3902 = vpop.f32.mrf.mxu0
        %v3903 = vadd.f32 0.0, %v3902
        %3904 = vmatmul.f32.gmra.mxu0 %v2706
        %v3905 = vpop.f32.mrf.mxu0
        %v3906 = vadd.f32 0.0, %v3905
        %3907 = vmatmul.f32.gmra.mxu0 %v2707
        %v3908 = vpop.f32.mrf.mxu0
        %v3909 = vadd.f32 0.0, %v3908
        %3910 = vmatmul.f32.gmra.mxu0 %v2708
        %v3911 = vpop.f32.mrf.mxu0
        %v3912 = vadd.f32 0.0, %v3911
        %3913 = vmatmul.f32.gmra.mxu0 %v2709
        %v3914 = vpop.f32.mrf.mxu0
        %v3915 = vadd.f32 0.0, %v3914
        %3916 = vmatmul.f32.gmra.mxu0 %v2710
        %v3917 = vpop.f32.mrf.mxu0
        %v3918 = vadd.f32 0.0, %v3917
        %3919 = vmatmul.f32.gmra.mxu0 %v2711
        %v3920 = vpop.f32.mrf.mxu0
        %v3921 = vadd.f32 0.0, %v3920
        %3922 = vmatmul.f32.gmra.mxu0 %v2712
        %v3923 = vpop.f32.mrf.mxu0
        %v3924 = vadd.f32 0.0, %v3923
        %3925 = vmatmul.f32.gmra.mxu0 %v2713
        %v3926 = vpop.f32.mrf.mxu0
        %v3927 = vadd.f32 0.0, %v3926
        %3928 = vmatmul.f32.gmra.mxu0 %v2714
        %v3929 = vpop.f32.mrf.mxu0
        %v3930 = vadd.f32 0.0, %v3929
        %3931 = vmatmul.f32.gmra.mxu0 %v2715
        %v3932 = vpop.f32.mrf.mxu0
        %v3933 = vadd.f32 0.0, %v3932
        %3934 = vmatmul.f32.gmra.mxu0 %v2716
        %v3935 = vpop.f32.mrf.mxu0
        %v3936 = vadd.f32 0.0, %v3935
        %3937 = vmatmul.f32.gmra.mxu0 %v2717
        %v3938 = vpop.f32.mrf.mxu0
        %v3939 = vadd.f32 0.0, %v3938
        %3940 = vmatmul.f32.gmra.mxu0 %v2718
        %v3941 = vpop.f32.mrf.mxu0
        %v3942 = vadd.f32 0.0, %v3941
        %3943 = vmatmul.f32.gmra.mxu0 %v2719
        %v3944 = vpop.f32.mrf.mxu0
        %v3945 = vadd.f32 0.0, %v3944
        %3946 = vmatmul.f32.gmra.mxu0 %v2720
        %v3947 = vpop.f32.mrf.mxu0
        %v3948 = vadd.f32 0.0, %v3947
        %3949 = vmatmul.f32.gmra.mxu0 %v2721
        %v3950 = vpop.f32.mrf.mxu0
        %v3951 = vadd.f32 0.0, %v3950
        %3952 = vmatmul.f32.gmra.mxu0 %v2722
        %v3953 = vpop.f32.mrf.mxu0
        %v3954 = vadd.f32 0.0, %v3953
        %3955 = vmatmul.f32.gmra.mxu0 %v2723
        %v3956 = vpop.f32.mrf.mxu0
        %v3957 = vadd.f32 0.0, %v3956
        %3958 = vmatmul.f32.gmra.mxu0 %v2724
        %v3959 = vpop.f32.mrf.mxu0
        %v3960 = vadd.f32 0.0, %v3959
        %3961 = vmatmul.f32.gmra.mxu0 %v2725
        %v3962 = vpop.f32.mrf.mxu0
        %v3963 = vadd.f32 0.0, %v3962
        %3964 = vmatmul.f32.gmra.mxu0 %v2726
        %v3965 = vpop.f32.mrf.mxu0
        %v3966 = vadd.f32 0.0, %v3965
        %3967 = vmatmul.f32.gmra.mxu0 %v2727
        %v3968 = vpop.f32.mrf.mxu0
        %v3969 = vadd.f32 0.0, %v3968
        %3970 = vmatmul.f32.gmra.mxu0 %v2728
        %v3971 = vpop.f32.mrf.mxu0
        %v3972 = vadd.f32 0.0, %v3971
        %3973 = vmatmul.f32.gmra.mxu0 %v2729
        %v3974 = vpop.f32.mrf.mxu0
        %v3975 = vadd.f32 0.0, %v3974
        %3976 = vmatmul.f32.gmra.mxu0 %v2730
        %v3977 = vpop.f32.mrf.mxu0
        %v3978 = vadd.f32 0.0, %v3977
        %3979 = vmatmul.f32.gmra.mxu0 %v2731
        %v3980 = vpop.f32.mrf.mxu0
        %v3981 = vadd.f32 0.0, %v3980
        %3982 = vmatmul.f32.gmra.mxu0 %v2732
        %v3983 = vpop.f32.mrf.mxu0
        %v3984 = vadd.f32 0.0, %v3983
        %3985 = vmatmul.f32.gmra.mxu0 %v2733
        %v3986 = vpop.f32.mrf.mxu0
        %v3987 = vadd.f32 0.0, %v3986
        %3988 = vmatmul.f32.gmra.mxu0 %v2734
        %v3989 = vpop.f32.mrf.mxu0
        %v3990 = vadd.f32 0.0, %v3989
        %3991 = vmatmul.f32.gmra.mxu0 %v2735
        %v3992 = vpop.f32.mrf.mxu0
        %v3993 = vadd.f32 0.0, %v3992
        %3994 = vmatmul.f32.gmra.mxu0 %v2736
        %v3995 = vpop.f32.mrf.mxu0
        %v3996 = vadd.f32 0.0, %v3995
        %3997 = vmatmul.f32.gmra.mxu0 %v2737
        %v3998 = vpop.f32.mrf.mxu0
        %v3999 = vadd.f32 0.0, %v3998
        %4000 = vmatmul.f32.gmra.mxu0 %v2738
        %v4001 = vpop.f32.mrf.mxu0
        %v4002 = vadd.f32 0.0, %v4001
        %4003 = vmatmul.f32.gmra.mxu0 %v2739
        %v4004 = vpop.f32.mrf.mxu0
        %v4005 = vadd.f32 0.0, %v4004
        %4006 = vmatmul.f32.gmra.mxu0 %v2740
        %v4007 = vpop.f32.mrf.mxu0
        %v4008 = vadd.f32 0.0, %v4007
        %4009 = vmatmul.f32.gmra.mxu0 %v2741
        %v4010 = vpop.f32.mrf.mxu0
        %v4011 = vadd.f32 0.0, %v4010
        %4012 = vmatmul.f32.gmra.mxu0 %v2742
        %v4013 = vpop.f32.mrf.mxu0
        %v4014 = vadd.f32 0.0, %v4013
        %4015 = vmatmul.f32.gmra.mxu0 %v2743
        %v4016 = vpop.f32.mrf.mxu0
        %v4017 = vadd.f32 0.0, %v4016
        %4018 = vmatmul.f32.gmra.mxu0 %v2744
        %v4019 = vpop.f32.mrf.mxu0
        %v4020 = vadd.f32 0.0, %v4019
        %4021 = vmatmul.f32.gmra.mxu0 %v2745
        %v4022 = vpop.f32.mrf.mxu0
        %v4023 = vadd.f32 0.0, %v4022
        %4024 = vmatmul.f32.gmra.mxu0 %v2746
        %v4025 = vpop.f32.mrf.mxu0
        %v4026 = vadd.f32 0.0, %v4025
        %4027 = vmatmul.f32.gmra.mxu0 %v2747
        %v4028 = vpop.f32.mrf.mxu0
        %v4029 = vadd.f32 0.0, %v4028
        %4030 = vmatmul.f32.gmra.mxu0 %v2748
        %v4031 = vpop.f32.mrf.mxu0
        %v4032 = vadd.f32 0.0, %v4031
        %4033 = vmatmul.f32.gmra.mxu0 %v2749
        %v4034 = vpop.f32.mrf.mxu0
        %v4035 = vadd.f32 0.0, %v4034
        %4036 = vmatmul.f32.gmra.mxu0 %v2750
        %v4037 = vpop.f32.mrf.mxu0
        %v4038 = vadd.f32 0.0, %v4037
        %4039 = vmatmul.f32.gmra.mxu0 %v2751
        %v4040 = vpop.f32.mrf.mxu0
        %v4041 = vadd.f32 0.0, %v4040
        %4042 = vmatmul.f32.gmra.mxu0 %v2752
        %v4043 = vpop.f32.mrf.mxu0
        %v4044 = vadd.f32 0.0, %v4043
        %4045 = vmatmul.f32.gmra.mxu0 %v2753
        %v4046 = vpop.f32.mrf.mxu0
        %v4047 = vadd.f32 0.0, %v4046
        %4048 = vmatmul.f32.gmra.mxu0 %v2754
        %v4049 = vpop.f32.mrf.mxu0
        %v4050 = vadd.f32 0.0, %v4049
        %4051 = vmatmul.f32.gmra.mxu0 %v2755
        %v4052 = vpop.f32.mrf.mxu0
        %v4053 = vadd.f32 0.0, %v4052
        %4054 = vmatmul.f32.gmra.mxu0 %v2756
        %v4055 = vpop.f32.mrf.mxu0
        %v4056 = vadd.f32 0.0, %v4055
        %4057 = vmatmul.f32.gmra.mxu0 %v2757
        %v4058 = vpop.f32.mrf.mxu0
        %v4059 = vadd.f32 0.0, %v4058
        %4060 = vmatmul.f32.gmra.mxu0 %v2758
        %v4061 = vpop.f32.mrf.mxu0
        %v4062 = vadd.f32 0.0, %v4061
        %4063 = vmatmul.f32.gmra.mxu0 %v2759
        %v4064 = vpop.f32.mrf.mxu0
        %v4065 = vadd.f32 0.0, %v4064
        %4066 = vmatmul.f32.gmra.mxu0 %v2760
        %v4067 = vpop.f32.mrf.mxu0
        %v4068 = vadd.f32 0.0, %v4067
        %4069 = vmatmul.f32.gmra.mxu0 %v2761
        %v4070 = vpop.f32.mrf.mxu0
        %v4071 = vadd.f32 0.0, %v4070
        %4072 = vmatmul.f32.gmra.mxu0 %v2762
        %v4073 = vpop.f32.mrf.mxu0
        %v4074 = vadd.f32 0.0, %v4073
        %4075 = vmatmul.f32.gmra.mxu0 %v2763
        %v4076 = vpop.f32.mrf.mxu0
        %v4077 = vadd.f32 0.0, %v4076
        %4078 = vmatmul.f32.gmra.mxu0 %v2764
        %v4079 = vpop.f32.mrf.mxu0
        %v4080 = vadd.f32 0.0, %v4079
        %4081 = vmatmul.f32.gmra.mxu0 %v2765
        %v4082 = vpop.f32.mrf.mxu0
        %v4083 = vadd.f32 0.0, %v4082
        %4084 = vmatmul.f32.gmra.mxu0 %v2766
        %v4085 = vpop.f32.mrf.mxu0
        %v4086 = vadd.f32 0.0, %v4085
        %4087 = vmatmul.f32.gmra.mxu0 %v2767
        %v4088 = vpop.f32.mrf.mxu0
        %v4089 = vadd.f32 0.0, %v4088
        %4090 = vmatmul.f32.gmra.mxu0 %v2768
        %v4091 = vpop.f32.mrf.mxu0
        %v4092 = vadd.f32 0.0, %v4091
        %4093 = vmatmul.f32.gmra.mxu0 %v2769
        %v4094 = vpop.f32.mrf.mxu0
        %v4095 = vadd.f32 0.0, %v4094
        %4096 = vmatmul.f32.gmra.mxu0 %v2770
        %v4097 = vpop.f32.mrf.mxu0
        %v4098 = vadd.f32 0.0, %v4097
        %4099 = vmatmul.f32.gmra.mxu0 %v2771
        %v4100 = vpop.f32.mrf.mxu0
        %v4101 = vadd.f32 0.0, %v4100
        %4102 = vmatmul.f32.gmra.mxu0 %v2772
        %v4103 = vpop.f32.mrf.mxu0
        %v4104 = vadd.f32 0.0, %v4103
        %4105 = vmatmul.f32.gmra.mxu0 %v2773
        %v4106 = vpop.f32.mrf.mxu0
        %v4107 = vadd.f32 0.0, %v4106
        %4108 = vmatmul.f32.gmra.mxu0 %v2774
        %v4109 = vpop.f32.mrf.mxu0
        %v4110 = vadd.f32 0.0, %v4109
        %4111 = vmatmul.f32.gmra.mxu0 %v2775
        %v4112 = vpop.f32.mrf.mxu0
        %v4113 = vadd.f32 0.0, %v4112
        %4114 = vmatmul.f32.gmra.mxu0 %v2776
        %v4115 = vpop.f32.mrf.mxu0
        %v4116 = vadd.f32 0.0, %v4115
        %4117 = vmatmul.f32.gmra.mxu0 %v2777
        %v4118 = vpop.f32.mrf.mxu0
        %v4119 = vadd.f32 0.0, %v4118
        %4120 = vmatmul.f32.gmra.mxu0 %v2778
        %v4121 = vpop.f32.mrf.mxu0
        %v4122 = vadd.f32 0.0, %v4121
        %4123 = vmatmul.f32.gmra.mxu0 %v2779
        %v4124 = vpop.f32.mrf.mxu0
        %v4125 = vadd.f32 0.0, %v4124
        %4126 = vmatmul.f32.gmra.mxu0 %v2780
        %v4127 = vpop.f32.mrf.mxu0
        %v4128 = vadd.f32 0.0, %v4127
        %4129 = vmatmul.f32.gmra.mxu0 %v2781
        %v4130 = vpop.f32.mrf.mxu0
        %v4131 = vadd.f32 0.0, %v4130
        %4132 = vmatmul.f32.gmra.mxu0 %v2782
        %v4133 = vpop.f32.mrf.mxu0
        %v4134 = vadd.f32 0.0, %v4133
        %4135 = vmatmul.f32.gmra.mxu0 %v2783
        %v4136 = vpop.f32.mrf.mxu0
        %v4137 = vadd.f32 0.0, %v4136
        %4138 = vmatmul.f32.gmra.mxu0 %v2784
        %v4139 = vpop.f32.mrf.mxu0
        %v4140 = vadd.f32 0.0, %v4139
        %4141 = vmatmul.f32.gmra.mxu0 %v2785
        %v4142 = vpop.f32.mrf.mxu0
        %v4143 = vadd.f32 0.0, %v4142
        %4144 = vmatmul.f32.gmra.mxu0 %v2786
        %v4145 = vpop.f32.mrf.mxu0
        %v4146 = vadd.f32 0.0, %v4145
        %4147 = vmatmul.f32.gmra.mxu0 %v2787
        %v4148 = vpop.f32.mrf.mxu0
        %v4149 = vadd.f32 0.0, %v4148
        %4150 = vmatmul.f32.gmra.mxu0 %v2788
        %v4151 = vpop.f32.mrf.mxu0
        %v4152 = vadd.f32 0.0, %v4151
        %4153 = vmatmul.f32.gmra.mxu0 %v2789
        %v4154 = vpop.f32.mrf.mxu0
        %v4155 = vadd.f32 0.0, %v4154
        %4156 = vmatmul.f32.gmra.mxu0 %v2790
        %v4157 = vpop.f32.mrf.mxu0
        %v4158 = vadd.f32 0.0, %v4157
        %4159 = vmatmul.f32.gmra.mxu0 %v2791
        %v4160 = vpop.f32.mrf.mxu0
        %v4161 = vadd.f32 0.0, %v4160
        %4162 = vmatmul.f32.gmra.mxu0 %v2792
        %v4163 = vpop.f32.mrf.mxu0
        %v4164 = vadd.f32 0.0, %v4163
        %4165 = vmatmul.f32.gmra.mxu0 %v2793
        %v4166 = vpop.f32.mrf.mxu0
        %v4167 = vadd.f32 0.0, %v4166
        %4168 = vmatmul.f32.gmra.mxu0 %v2794
        %v4169 = vpop.f32.mrf.mxu0
        %v4170 = vadd.f32 0.0, %v4169
        %4171 = vmatmul.f32.gmra.mxu0 %v2795
        %v4172 = vpop.f32.mrf.mxu0
        %v4173 = vadd.f32 0.0, %v4172
        %4174 = vmatmul.f32.gmra.mxu0 %v2796
        %v4175 = vpop.f32.mrf.mxu0
        %v4176 = vadd.f32 0.0, %v4175
        %4177 = vmatmul.f32.gmra.mxu0 %v2797
        %v4178 = vpop.f32.mrf.mxu0
        %v4179 = vadd.f32 0.0, %v4178
        %4180 = vmatmul.f32.gmra.mxu0 %v2798
        %v4181 = vpop.f32.mrf.mxu0
        %v4182 = vadd.f32 0.0, %v4181
        %4183 = vmatmul.f32.gmra.mxu0 %v2799
        %v4184 = vpop.f32.mrf.mxu0
        %v4185 = vadd.f32 0.0, %v4184
        %4186 = vmatmul.f32.gmra.mxu0 %v2800
        %v4187 = vpop.f32.mrf.mxu0
        %v4188 = vadd.f32 0.0, %v4187
        %4189 = vmatmul.f32.gmra.mxu0 %v2801
        %v4190 = vpop.f32.mrf.mxu0
        %v4191 = vadd.f32 0.0, %v4190
        %4192 = vmatmul.f32.gmra.mxu0 %v2802
        %v4193 = vpop.f32.mrf.mxu0
        %v4194 = vadd.f32 0.0, %v4193
        %4195 = vmatmul.f32.gmra.mxu0 %v2803
        %v4196 = vpop.f32.mrf.mxu0
        %v4197 = vadd.f32 0.0, %v4196
        %4198 = vmatmul.f32.gmra.mxu0 %v2804
        %v4199 = vpop.f32.mrf.mxu0
        %v4200 = vadd.f32 0.0, %v4199
        %4201 = vmatmul.f32.gmra.mxu0 %v2805
        %v4202 = vpop.f32.mrf.mxu0
        %v4203 = vadd.f32 0.0, %v4202
        %4204 = vmatmul.f32.gmra.mxu0 %v2806
        %v4205 = vpop.f32.mrf.mxu0
        %v4206 = vadd.f32 0.0, %v4205
        %4207 = vmatmul.f32.gmra.mxu0 %v2807
        %v4208 = vpop.f32.mrf.mxu0
        %v4209 = vadd.f32 0.0, %v4208
        %4210 = vmatmul.f32.gmra.mxu0 %v2808
        %v4211 = vpop.f32.mrf.mxu0
        %v4212 = vadd.f32 0.0, %v4211
        %4213 = vmatmul.f32.gmra.mxu0 %v2809
        %v4214 = vpop.f32.mrf.mxu0
        %v4215 = vadd.f32 0.0, %v4214
        %4216 = vmatmul.f32.gmra.mxu0 %v2810
        %v4217 = vpop.f32.mrf.mxu0
        %v4218 = vadd.f32 0.0, %v4217
        %4219 = vmatmul.f32.gmra.mxu0 %v2811
        %v4220 = vpop.f32.mrf.mxu0
        %v4221 = vadd.f32 0.0, %v4220
        %4222 = vmatmul.f32.gmra.mxu0 %v2812
        %v4223 = vpop.f32.mrf.mxu0
        %v4224 = vadd.f32 0.0, %v4223
        %4225 = vmatmul.f32.gmra.mxu0 %v2813
        %v4226 = vpop.f32.mrf.mxu0
        %v4227 = vadd.f32 0.0, %v4226
        %4228 = vmatmul.f32.gmra.mxu0 %v2814
        %v4229 = vpop.f32.mrf.mxu0
        %v4230 = vadd.f32 0.0, %v4229
        %4231 = vmatmul.f32.gmra.mxu0 %v2815
        %v4232 = vpop.f32.mrf.mxu0
        %v4233 = vadd.f32 0.0, %v4232
        %4234 = vmatmul.f32.gmra.mxu0 %v2816
        %v4235 = vpop.f32.mrf.mxu0
        %v4236 = vadd.f32 0.0, %v4235
        %4237 = vmatmul.f32.gmra.mxu0 %v2817
        %v4238 = vpop.f32.mrf.mxu0
        %v4239 = vadd.f32 0.0, %v4238
        %4240 = vmatmul.f32.gmra.mxu0 %v2818
        %v4241 = vpop.f32.mrf.mxu0
        %v4242 = vadd.f32 0.0, %v4241
        %4243 = vmatmul.f32.gmra.mxu0 %v2819
        %v4244 = vpop.f32.mrf.mxu0
        %v4245 = vadd.f32 0.0, %v4244
        %4246 = vmatmul.f32.gmra.mxu0 %v2820
        %v4247 = vpop.f32.mrf.mxu0
        %v4248 = vadd.f32 0.0, %v4247
        %4249 = vmatmul.f32.gmra.mxu0 %v2821
        %v4250 = vpop.f32.mrf.mxu0
        %v4251 = vadd.f32 0.0, %v4250
        %4252 = vmatmul.f32.gmra.mxu0 %v2822
        %v4253 = vpop.f32.mrf.mxu0
        %v4254 = vadd.f32 0.0, %v4253
        %4255 = vmatmul.f32.gmra.mxu0 %v2823
        %v4256 = vpop.f32.mrf.mxu0
        %v4257 = vadd.f32 0.0, %v4256
        %4258 = vmatmul.f32.gmra.mxu0 %v2824
        %v4259 = vpop.f32.mrf.mxu0
        %v4260 = vadd.f32 0.0, %v4259
        %4261 = vmatmul.f32.gmra.mxu0 %v2825
        %v4262 = vpop.f32.mrf.mxu0
        %v4263 = vadd.f32 0.0, %v4262
        %4264 = vmatmul.f32.gmra.mxu0 %v2826
        %v4265 = vpop.f32.mrf.mxu0
        %v4266 = vadd.f32 0.0, %v4265
        %4267 = vmatmul.f32.gmra.mxu0 %v2827
        %v4268 = vpop.f32.mrf.mxu0
        %v4269 = vadd.f32 0.0, %v4268
        %4270 = vmatmul.f32.gmra.mxu0 %v2828
        %v4271 = vpop.f32.mrf.mxu0
        %v4272 = vadd.f32 0.0, %v4271
        %4273 = vmatmul.f32.gmra.mxu0 %v2829
        %v4274 = vpop.f32.mrf.mxu0
        %v4275 = vadd.f32 0.0, %v4274
        %4276 = vmatmul.f32.gmra.mxu0 %v2830
        %v4277 = vpop.f32.mrf.mxu0
        %v4278 = vadd.f32 0.0, %v4277
        %4279 = vmatmul.f32.gmra.mxu0 %v2831
        %v4280 = vpop.f32.mrf.mxu0
        %v4281 = vadd.f32 0.0, %v4280
        %4282 = vmatmul.f32.gmra.mxu0 %v2832
        %v4283 = vpop.f32.mrf.mxu0
        %v4284 = vadd.f32 0.0, %v4283
        %4285 = vmatmul.f32.gmra.mxu0 %v2833
        %v4286 = vpop.f32.mrf.mxu0
        %v4287 = vadd.f32 0.0, %v4286
        %4288 = vmatmul.f32.gmra.mxu0 %v2834
        %v4289 = vpop.f32.mrf.mxu0
        %v4290 = vadd.f32 0.0, %v4289
        %4291 = vmatmul.f32.gmra.mxu0 %v2835
        %v4292 = vpop.f32.mrf.mxu0
        %v4293 = vadd.f32 0.0, %v4292
        %4294 = vmatmul.f32.gmra.mxu0 %v2836
        %v4295 = vpop.f32.mrf.mxu0
        %v4296 = vadd.f32 0.0, %v4295
        %4297 = vmatmul.f32.gmra.mxu0 %v2837
        %v4298 = vpop.f32.mrf.mxu0
        %v4299 = vadd.f32 0.0, %v4298
        %4300 = vmatmul.f32.gmra.mxu0 %v2838
        %v4301 = vpop.f32.mrf.mxu0
        %v4302 = vadd.f32 0.0, %v4301
        %4303 = vmatmul.f32.gmra.mxu0 %v2839
        %v4304 = vpop.f32.mrf.mxu0
        %v4305 = vadd.f32 0.0, %v4304
        %4306 = vmatmul.f32.gmra.mxu0 %v2840
        %v4307 = vpop.f32.mrf.mxu0
        %v4308 = vadd.f32 0.0, %v4307
        %4309 = vmatmul.f32.gmra.mxu0 %v2841
        %v4310 = vpop.f32.mrf.mxu0
        %v4311 = vadd.f32 0.0, %v4310
        %4312 = vmatmul.f32.gmra.mxu0 %v2842
        %v4313 = vpop.f32.mrf.mxu0
        %v4314 = vadd.f32 0.0, %v4313
        %4315 = vmatmul.f32.gmra.mxu0 %v2843
        %v4316 = vpop.f32.mrf.mxu0
        %v4317 = vadd.f32 0.0, %v4316
        %4318 = vmatmul.f32.gmra.mxu0 %v2844
        %v4319 = vpop.f32.mrf.mxu0
        %v4320 = vadd.f32 0.0, %v4319
        %4321 = vmatmul.f32.gmra.mxu0 %v2845
        %v4322 = vpop.f32.mrf.mxu0
        %v4323 = vadd.f32 0.0, %v4322
        %4324 = vmatmul.f32.gmra.mxu0 %v2846
        %v4325 = vpop.f32.mrf.mxu0
        %v4326 = vadd.f32 0.0, %v4325
        %4327 = vmatmul.f32.gmra.mxu0 %v2847
        %v4328 = vpop.f32.mrf.mxu0
        %v4329 = vadd.f32 0.0, %v4328
        %4330 = vmatmul.f32.gmra.mxu0 %v2848
        %v4331 = vpop.f32.mrf.mxu0
        %v4332 = vadd.f32 0.0, %v4331
        %4333 = vmatmul.f32.gmra.mxu0 %v2849
        %v4334 = vpop.f32.mrf.mxu0
        %v4335 = vadd.f32 0.0, %v4334
        %4336 = vmatmul.f32.gmra.mxu0 %v2850
        %v4337 = vpop.f32.mrf.mxu0
        %v4338 = vadd.f32 0.0, %v4337
        %4339 = vmatmul.f32.gmra.mxu0 %v2851
        %v4340 = vpop.f32.mrf.mxu0
        %v4341 = vadd.f32 0.0, %v4340
        %4342 = vmatmul.f32.gmra.mxu0 %v2852
        %v4343 = vpop.f32.mrf.mxu0
        %v4344 = vadd.f32 0.0, %v4343
        %4345 = vmatmul.f32.gmra.mxu0 %v2853
        %v4346 = vpop.f32.mrf.mxu0
        %v4347 = vadd.f32 0.0, %v4346
        %4348 = vmatmul.f32.gmra.mxu0 %v2854
        %v4349 = vpop.f32.mrf.mxu0
        %v4350 = vadd.f32 0.0, %v4349
        %4351 = vmatmul.f32.gmra.mxu0 %v2855
        %v4352 = vpop.f32.mrf.mxu0
        %v4353 = vadd.f32 0.0, %v4352
        %4354 = vmatmul.f32.gmra.mxu0 %v2856
        %v4355 = vpop.f32.mrf.mxu0
        %v4356 = vadd.f32 0.0, %v4355
        %4357 = vmatmul.f32.gmra.mxu0 %v2857
        %v4358 = vpop.f32.mrf.mxu0
        %v4359 = vadd.f32 0.0, %v4358
        %4360 = vmatmul.f32.gmra.mxu0 %v2858
        %v4361 = vpop.f32.mrf.mxu0
        %v4362 = vadd.f32 0.0, %v4361
        %4363 = vmatmul.f32.gmra.mxu0 %v2859
        %v4364 = vpop.f32.mrf.mxu0
        %v4365 = vadd.f32 0.0, %v4364
        %4366 = vmatmul.f32.gmra.mxu0 %v2860
        %v4367 = vpop.f32.mrf.mxu0
        %v4368 = vadd.f32 0.0, %v4367
        %4369 = vmatmul.f32.gmra.mxu0 %v2861
        %v4370 = vpop.f32.mrf.mxu0
        %v4371 = vadd.f32 0.0, %v4370
        %4372 = vmatmul.f32.gmra.mxu0 %v2862
        %v4373 = vpop.f32.mrf.mxu0
        %v4374 = vadd.f32 0.0, %v4373
        %4375 = vmatmul.f32.gmra.mxu0 %v2863
        %v4376 = vpop.f32.mrf.mxu0
        %v4377 = vadd.f32 0.0, %v4376
        %4378 = vmatmul.f32.gmra.mxu0 %v2864
        %v4379 = vpop.f32.mrf.mxu0
        %v4380 = vadd.f32 0.0, %v4379
        %4381 = vmatmul.f32.gmra.mxu0 %v2865
        %v4382 = vpop.f32.mrf.mxu0
        %v4383 = vadd.f32 0.0, %v4382
        %4384 = vmatmul.f32.gmra.mxu0 %v2866
        %v4385 = vpop.f32.mrf.mxu0
        %v4386 = vadd.f32 0.0, %v4385
        %4387 = vmatmul.f32.gmra.mxu0 %v2867
        %v4388 = vpop.f32.mrf.mxu0
        %v4389 = vadd.f32 0.0, %v4388
        %4390 = vmatmul.f32.gmra.mxu0 %v2868
        %v4391 = vpop.f32.mrf.mxu0
        %v4392 = vadd.f32 0.0, %v4391
        %4393 = vmatmul.f32.gmra.mxu0 %v2869
        %v4394 = vpop.f32.mrf.mxu0
        %v4395 = vadd.f32 0.0, %v4394
        %4396 = vmatmul.f32.gmra.mxu0 %v2870
        %v4397 = vpop.f32.mrf.mxu0
        %v4398 = vadd.f32 0.0, %v4397
        %4399 = vmatmul.f32.gmra.mxu0 %v2871
        %v4400 = vpop.f32.mrf.mxu0
        %v4401 = vadd.f32 0.0, %v4400
        %4402 = vmatmul.f32.gmra.mxu0 %v2872
        %v4403 = vpop.f32.mrf.mxu0
        %v4404 = vadd.f32 0.0, %v4403
        %4405 = vmatmul.f32.gmra.mxu0 %v2873
        %v4406 = vpop.f32.mrf.mxu0
        %v4407 = vadd.f32 0.0, %v4406
        %4408 = vmatmul.f32.gmra.mxu0 %v2874
        %v4409 = vpop.f32.mrf.mxu0
        %v4410 = vadd.f32 0.0, %v4409
        %4411 = vmatmul.f32.gmra.mxu0 %v2875
        %v4412 = vpop.f32.mrf.mxu0
        %v4413 = vadd.f32 0.0, %v4412
        %4414 = vmatmul.f32.gmra.mxu0 %v2876
        %v4415 = vpop.f32.mrf.mxu0
        %v4416 = vadd.f32 0.0, %v4415
        %4417 = vmatmul.f32.gmra.mxu0 %v2877
        %v4418 = vpop.f32.mrf.mxu0
        %v4419 = vadd.f32 0.0, %v4418
        %4420 = vmatmul.f32.gmra.mxu0 %v2878
        %v4421 = vpop.f32.mrf.mxu0
        %v4422 = vadd.f32 0.0, %v4421
        %4423 = vmatmul.f32.gmra.mxu0 %v2879
        %v4424 = vpop.f32.mrf.mxu0
        %v4425 = vadd.f32 0.0, %v4424
        %4426 = vmatmul.f32.gmra.mxu0 %v2880
        %v4427 = vpop.f32.mrf.mxu0
        %v4428 = vadd.f32 0.0, %v4427
        %4429 = vmatmul.f32.gmra.mxu0 %v2881
        %v4430 = vpop.f32.mrf.mxu0
        %v4431 = vadd.f32 0.0, %v4430
        %4432 = vmatmul.f32.gmra.mxu0 %v2882
        %v4433 = vpop.f32.mrf.mxu0
        %v4434 = vadd.f32 0.0, %v4433
        %4435 = vmatmul.f32.gmra.mxu0 %v2883
        %v4436 = vpop.f32.mrf.mxu0
        %v4437 = vadd.f32 0.0, %v4436
        %4438 = vmatmul.f32.gmra.mxu0 %v2884
        %v4439 = vpop.f32.mrf.mxu0
        %v4440 = vadd.f32 0.0, %v4439
        %4441 = vmatmul.f32.gmra.mxu0 %v2885
        %v4442 = vpop.f32.mrf.mxu0
        %v4443 = vadd.f32 0.0, %v4442
        %4444 = vmatmul.f32.gmra.mxu0 %v2886
        %v4445 = vpop.f32.mrf.mxu0
        %v4446 = vadd.f32 0.0, %v4445
        %4447 = vmatmul.f32.gmra.mxu0 %v2887
        %v4448 = vpop.f32.mrf.mxu0
        %v4449 = vadd.f32 0.0, %v4448
        %4450 = vmatmul.f32.gmra.mxu0 %v2888
        %v4451 = vpop.f32.mrf.mxu0
        %v4452 = vadd.f32 0.0, %v4451
        %4453 = vmatmul.f32.gmra.mxu0 %v2889
        %v4454 = vpop.f32.mrf.mxu0
        %v4455 = vadd.f32 0.0, %v4454
        %4456 = vmatmul.f32.gmra.mxu0 %v2890
        %v4457 = vpop.f32.mrf.mxu0
        %v4458 = vadd.f32 0.0, %v4457
        %4459 = vdwg.mxu0
        %v4460 = vadd.f32 %v844, %v2925
        %v4461 = vadd.f32 %v847, %v2928
        %v4462 = vadd.f32 %v850, %v2931
        %v4463 = vadd.f32 %v853, %v2934
        %v4464 = vadd.f32 %v856, %v2937
        %v4465 = vadd.f32 %v859, %v2940
        %v4466 = vadd.f32 %v862, %v2943
        %v4467 = vadd.f32 %v865, %v2946
        %v4468 = vadd.f32 %v868, %v2949
        %v4469 = vadd.f32 %v871, %v2952
        %v4470 = vadd.f32 %v874, %v2955
        %v4471 = vadd.f32 %v877, %v2958
        %v4472 = vadd.f32 %v880, %v2961
        %v4473 = vadd.f32 %v883, %v2964
        %v4474 = vadd.f32 %v886, %v2967
        %v4475 = vadd.f32 %v889, %v2970
        %v4476 = vadd.f32 %v892, %v2973
        %v4477 = vadd.f32 %v895, %v2976
        %v4478 = vadd.f32 %v898, %v2979
        %v4479 = vadd.f32 %v901, %v2982
        %v4480 = vadd.f32 %v904, %v2985
        %v4481 = vadd.f32 %v907, %v2988
        %v4482 = vadd.f32 %v910, %v2991
        %v4483 = vadd.f32 %v913, %v2994
        %v4484 = vadd.f32 %v916, %v2997
        %v4485 = vadd.f32 %v919, %v3000
        %v4486 = vadd.f32 %v922, %v3003
        %v4487 = vadd.f32 %v925, %v3006
        %v4488 = vadd.f32 %v928, %v3009
        %v4489 = vadd.f32 %v931, %v3012
        %v4490 = vadd.f32 %v934, %v3015
        %v4491 = vadd.f32 %v937, %v3018
        %v4492 = vadd.f32 %v940, %v3021
        %v4493 = vadd.f32 %v943, %v3024
        %v4494 = vadd.f32 %v946, %v3027
        %v4495 = vadd.f32 %v949, %v3030
        %v4496 = vadd.f32 %v952, %v3033
        %v4497 = vadd.f32 %v955, %v3036
        %v4498 = vadd.f32 %v958, %v3039
        %v4499 = vadd.f32 %v961, %v3042
        %v4500 = vadd.f32 %v964, %v3045
        %v4501 = vadd.f32 %v967, %v3048
        %v4502 = vadd.f32 %v970, %v3051
        %v4503 = vadd.f32 %v973, %v3054
        %v4504 = vadd.f32 %v976, %v3057
        %v4505 = vadd.f32 %v979, %v3060
        %v4506 = vadd.f32 %v982, %v3063
        %v4507 = vadd.f32 %v985, %v3066
        %v4508 = vadd.f32 %v988, %v3069
        %v4509 = vadd.f32 %v991, %v3072
        %v4510 = vadd.f32 %v994, %v3075
        %v4511 = vadd.f32 %v997, %v3078
        %v4512 = vadd.f32 %v1000, %v3081
        %v4513 = vadd.f32 %v1003, %v3084
        %v4514 = vadd.f32 %v1006, %v3087
        %v4515 = vadd.f32 %v1009, %v3090
        %v4516 = vadd.f32 %v1012, %v3093
        %v4517 = vadd.f32 %v1015, %v3096
        %v4518 = vadd.f32 %v1018, %v3099
        %v4519 = vadd.f32 %v1021, %v3102
        %v4520 = vadd.f32 %v1024, %v3105
        %v4521 = vadd.f32 %v1027, %v3108
        %v4522 = vadd.f32 %v1030, %v3111
        %v4523 = vadd.f32 %v1033, %v3114
        %v4524 = vadd.f32 %v1036, %v3117
        %v4525 = vadd.f32 %v1039, %v3120
        %v4526 = vadd.f32 %v1042, %v3123
        %v4527 = vadd.f32 %v1045, %v3126
        %v4528 = vadd.f32 %v1048, %v3129
        %v4529 = vadd.f32 %v1051, %v3132
        %v4530 = vadd.f32 %v1054, %v3135
        %v4531 = vadd.f32 %v1057, %v3138
        %v4532 = vadd.f32 %v1060, %v3141
        %v4533 = vadd.f32 %v1063, %v3144
        %v4534 = vadd.f32 %v1066, %v3147
        %v4535 = vadd.f32 %v1069, %v3150
        %v4536 = vadd.f32 %v1072, %v3153
        %v4537 = vadd.f32 %v1075, %v3156
        %v4538 = vadd.f32 %v1078, %v3159
        %v4539 = vadd.f32 %v1081, %v3162
        %v4540 = vadd.f32 %v1084, %v3165
        %v4541 = vadd.f32 %v1087, %v3168
        %v4542 = vadd.f32 %v1090, %v3171
        %v4543 = vadd.f32 %v1093, %v3174
        %v4544 = vadd.f32 %v1096, %v3177
        %v4545 = vadd.f32 %v1099, %v3180
        %v4546 = vadd.f32 %v1102, %v3183
        %v4547 = vadd.f32 %v1105, %v3186
        %v4548 = vadd.f32 %v1108, %v3189
        %v4549 = vadd.f32 %v1111, %v3192
        %v4550 = vadd.f32 %v1114, %v3195
        %v4551 = vadd.f32 %v1117, %v3198
        %v4552 = vadd.f32 %v1120, %v3201
        %v4553 = vadd.f32 %v1123, %v3204
        %v4554 = vadd.f32 %v1126, %v3207
        %v4555 = vadd.f32 %v1129, %v3210
        %v4556 = vadd.f32 %v1132, %v3213
        %v4557 = vadd.f32 %v1135, %v3216
        %v4558 = vadd.f32 %v1138, %v3219
        %v4559 = vadd.f32 %v1141, %v3222
        %v4560 = vadd.f32 %v1144, %v3225
        %v4561 = vadd.f32 %v1147, %v3228
        %v4562 = vadd.f32 %v1150, %v3231
        %v4563 = vadd.f32 %v1153, %v3234
        %v4564 = vadd.f32 %v1156, %v3237
        %v4565 = vadd.f32 %v1159, %v3240
        %v4566 = vadd.f32 %v1162, %v3243
        %v4567 = vadd.f32 %v1165, %v3246
        %v4568 = vadd.f32 %v1168, %v3249
        %v4569 = vadd.f32 %v1171, %v3252
        %v4570 = vadd.f32 %v1174, %v3255
        %v4571 = vadd.f32 %v1177, %v3258
        %v4572 = vadd.f32 %v1180, %v3261
        %v4573 = vadd.f32 %v1183, %v3264
        %v4574 = vadd.f32 %v1186, %v3267
        %v4575 = vadd.f32 %v1189, %v3270
        %v4576 = vadd.f32 %v1192, %v3273
        %v4577 = vadd.f32 %v1195, %v3276
        %v4578 = vadd.f32 %v1198, %v3279
        %v4579 = vadd.f32 %v1201, %v3282
        %v4580 = vadd.f32 %v1204, %v3285
        %v4581 = vadd.f32 %v1207, %v3288
        %v4582 = vadd.f32 %v1210, %v3291
        %v4583 = vadd.f32 %v1213, %v3294
        %v4584 = vadd.f32 %v1216, %v3297
        %v4585 = vadd.f32 %v1219, %v3300
        %v4586 = vadd.f32 %v1222, %v3303
        %v4587 = vadd.f32 %v1225, %v3306
        %v4588 = vadd.f32 %v1228, %v3309
        %v4589 = vadd.f32 %v1231, %v3312
        %v4590 = vadd.f32 %v1234, %v3315
        %v4591 = vadd.f32 %v1237, %v3318
        %v4592 = vadd.f32 %v1240, %v3321
        %v4593 = vadd.f32 %v1243, %v3324
        %v4594 = vadd.f32 %v1246, %v3327
        %v4595 = vadd.f32 %v1249, %v3330
        %v4596 = vadd.f32 %v1252, %v3333
        %v4597 = vadd.f32 %v1255, %v3336
        %v4598 = vadd.f32 %v1258, %v3339
        %v4599 = vadd.f32 %v1261, %v3342
        %v4600 = vadd.f32 %v1264, %v3345
        %v4601 = vadd.f32 %v1267, %v3348
        %v4602 = vadd.f32 %v1270, %v3351
        %v4603 = vadd.f32 %v1273, %v3354
        %v4604 = vadd.f32 %v1276, %v3357
        %v4605 = vadd.f32 %v1279, %v3360
        %v4606 = vadd.f32 %v1282, %v3363
        %v4607 = vadd.f32 %v1285, %v3366
        %v4608 = vadd.f32 %v1288, %v3369
        %v4609 = vadd.f32 %v1291, %v3372
        %v4610 = vadd.f32 %v1294, %v3375
        %v4611 = vadd.f32 %v1297, %v3378
        %v4612 = vadd.f32 %v1300, %v3381
        %v4613 = vadd.f32 %v1303, %v3384
        %v4614 = vadd.f32 %v1306, %v3387
        %v4615 = vadd.f32 %v1309, %v3390
        %v4616 = vadd.f32 %v1312, %v3393
        %v4617 = vadd.f32 %v1315, %v3396
        %v4618 = vadd.f32 %v1318, %v3399
        %v4619 = vadd.f32 %v1321, %v3402
        %v4620 = vadd.f32 %v1324, %v3405
        %v4621 = vadd.f32 %v1327, %v3408
        %v4622 = vadd.f32 %v1330, %v3411
        %v4623 = vadd.f32 %v1333, %v3414
        %v4624 = vadd.f32 %v1336, %v3417
        %v4625 = vadd.f32 %v1339, %v3420
        %v4626 = vadd.f32 %v1342, %v3423
        %v4627 = vadd.f32 %v1345, %v3426
        %v4628 = vadd.f32 %v1348, %v3429
        %v4629 = vadd.f32 %v1351, %v3432
        %v4630 = vadd.f32 %v1354, %v3435
        %v4631 = vadd.f32 %v1357, %v3438
        %v4632 = vadd.f32 %v1360, %v3441
        %v4633 = vadd.f32 %v1363, %v3444
        %v4634 = vadd.f32 %v1366, %v3447
        %v4635 = vadd.f32 %v1369, %v3450
        %v4636 = vadd.f32 %v1372, %v3453
        %v4637 = vadd.f32 %v1375, %v3456
        %v4638 = vadd.f32 %v1378, %v3459
        %v4639 = vadd.f32 %v1381, %v3462
        %v4640 = vadd.f32 %v1384, %v3465
        %v4641 = vadd.f32 %v1387, %v3468
        %v4642 = vadd.f32 %v1390, %v3471
        %v4643 = vadd.f32 %v1393, %v3474
        %v4644 = vadd.f32 %v1396, %v3477
        %v4645 = vadd.f32 %v1399, %v3480
        %v4646 = vadd.f32 %v1402, %v3483
        %v4647 = vadd.f32 %v1405, %v3486
        %v4648 = vadd.f32 %v1408, %v3489
        %v4649 = vadd.f32 %v1411, %v3492
        %v4650 = vadd.f32 %v1414, %v3495
        %v4651 = vadd.f32 %v1417, %v3498
        %v4652 = vadd.f32 %v1420, %v3501
        %v4653 = vadd.f32 %v1423, %v3504
        %v4654 = vadd.f32 %v1426, %v3507
        %v4655 = vadd.f32 %v1429, %v3510
        %v4656 = vadd.f32 %v1432, %v3513
        %v4657 = vadd.f32 %v1435, %v3516
        %v4658 = vadd.f32 %v1438, %v3519
        %v4659 = vadd.f32 %v1441, %v3522
        %v4660 = vadd.f32 %v1444, %v3525
        %v4661 = vadd.f32 %v1447, %v3528
        %v4662 = vadd.f32 %v1450, %v3531
        %v4663 = vadd.f32 %v1453, %v3534
        %v4664 = vadd.f32 %v1456, %v3537
        %v4665 = vadd.f32 %v1459, %v3540
        %v4666 = vadd.f32 %v1462, %v3543
        %v4667 = vadd.f32 %v1465, %v3546
        %v4668 = vadd.f32 %v1468, %v3549
        %v4669 = vadd.f32 %v1471, %v3552
        %v4670 = vadd.f32 %v1474, %v3555
        %v4671 = vadd.f32 %v1477, %v3558
        %v4672 = vadd.f32 %v1480, %v3561
        %v4673 = vadd.f32 %v1483, %v3564
        %v4674 = vadd.f32 %v1486, %v3567
        %v4675 = vadd.f32 %v1489, %v3570
        %v4676 = vadd.f32 %v1492, %v3573
        %v4677 = vadd.f32 %v1495, %v3576
        %v4678 = vadd.f32 %v1498, %v3579
        %v4679 = vadd.f32 %v1501, %v3582
        %v4680 = vadd.f32 %v1504, %v3585
        %v4681 = vadd.f32 %v1507, %v3588
        %v4682 = vadd.f32 %v1510, %v3591
        %v4683 = vadd.f32 %v1513, %v3594
        %v4684 = vadd.f32 %v1516, %v3597
        %v4685 = vadd.f32 %v1519, %v3600
        %v4686 = vadd.f32 %v1522, %v3603
        %v4687 = vadd.f32 %v1525, %v3606
        %v4688 = vadd.f32 %v1528, %v3609
        %v4689 = vadd.f32 %v1531, %v3612
        %v4690 = vadd.f32 %v1534, %v3615
        %v4691 = vadd.f32 %v1537, %v3618
        %v4692 = vadd.f32 %v1540, %v3621
        %v4693 = vadd.f32 %v1543, %v3624
        %v4694 = vadd.f32 %v1546, %v3627
        %v4695 = vadd.f32 %v1549, %v3630
        %v4696 = vadd.f32 %v1552, %v3633
        %v4697 = vadd.f32 %v1555, %v3636
        %v4698 = vadd.f32 %v1558, %v3639
        %v4699 = vadd.f32 %v1561, %v3642
        %v4700 = vadd.f32 %v1564, %v3645
        %v4701 = vadd.f32 %v1567, %v3648
        %v4702 = vadd.f32 %v1570, %v3651
        %v4703 = vadd.f32 %v1573, %v3654
        %v4704 = vadd.f32 %v1576, %v3657
        %v4705 = vadd.f32 %v1579, %v3660
        %v4706 = vadd.f32 %v1582, %v3663
        %v4707 = vadd.f32 %v1585, %v3666
        %v4708 = vadd.f32 %v1588, %v3669
        %v4709 = vadd.f32 %v1591, %v3672
        %v4710 = vadd.f32 %v1594, %v3675
        %v4711 = vadd.f32 %v1597, %v3678
        %v4712 = vadd.f32 %v1600, %v3681
        %v4713 = vadd.f32 %v1603, %v3684
        %v4714 = vadd.f32 %v1606, %v3687
        %v4715 = vadd.f32 %v1609, %v3690
        %v4716 = vadd.f32 %v1612, %v3693
        %v4717 = vadd.f32 %v1615, %v3696
        %v4718 = vadd.f32 %v1618, %v3699
        %v4719 = vadd.f32 %v1621, %v3702
        %v4720 = vadd.f32 %v1624, %v3705
        %v4721 = vadd.f32 %v1627, %v3708
        %v4722 = vadd.f32 %v1630, %v3711
        %v4723 = vadd.f32 %v1633, %v3714
        %v4724 = vadd.f32 %v1636, %v3717
        %v4725 = vadd.f32 %v1639, %v3720
        %v4726 = vadd.f32 %v1642, %v3723
        %v4727 = vadd.f32 %v1645, %v3726
        %v4728 = vadd.f32 %v1648, %v3729
        %v4729 = vadd.f32 %v1651, %v3732
        %v4730 = vadd.f32 %v1654, %v3735
        %v4731 = vadd.f32 %v1657, %v3738
        %v4732 = vadd.f32 %v1660, %v3741
        %v4733 = vadd.f32 %v1663, %v3744
        %v4734 = vadd.f32 %v1666, %v3747
        %v4735 = vadd.f32 %v1669, %v3750
        %v4736 = vadd.f32 %v1672, %v3753
        %v4737 = vadd.f32 %v1675, %v3756
        %v4738 = vadd.f32 %v1678, %v3759
        %v4739 = vadd.f32 %v1681, %v3762
        %v4740 = vadd.f32 %v1684, %v3765
        %v4741 = vadd.f32 %v1687, %v3768
        %v4742 = vadd.f32 %v1690, %v3771
        %v4743 = vadd.f32 %v1693, %v3774
        %v4744 = vadd.f32 %v1696, %v3777
        %v4745 = vadd.f32 %v1699, %v3780
        %v4746 = vadd.f32 %v1702, %v3783
        %v4747 = vadd.f32 %v1705, %v3786
        %v4748 = vadd.f32 %v1708, %v3789
        %v4749 = vadd.f32 %v1711, %v3792
        %v4750 = vadd.f32 %v1714, %v3795
        %v4751 = vadd.f32 %v1717, %v3798
        %v4752 = vadd.f32 %v1720, %v3801
        %v4753 = vadd.f32 %v1723, %v3804
        %v4754 = vadd.f32 %v1726, %v3807
        %v4755 = vadd.f32 %v1729, %v3810
        %v4756 = vadd.f32 %v1732, %v3813
        %v4757 = vadd.f32 %v1735, %v3816
        %v4758 = vadd.f32 %v1738, %v3819
        %v4759 = vadd.f32 %v1741, %v3822
        %v4760 = vadd.f32 %v1744, %v3825
        %v4761 = vadd.f32 %v1747, %v3828
        %v4762 = vadd.f32 %v1750, %v3831
        %v4763 = vadd.f32 %v1753, %v3834
        %v4764 = vadd.f32 %v1756, %v3837
        %v4765 = vadd.f32 %v1759, %v3840
        %v4766 = vadd.f32 %v1762, %v3843
        %v4767 = vadd.f32 %v1765, %v3846
        %v4768 = vadd.f32 %v1768, %v3849
        %v4769 = vadd.f32 %v1771, %v3852
        %v4770 = vadd.f32 %v1774, %v3855
        %v4771 = vadd.f32 %v1777, %v3858
        %v4772 = vadd.f32 %v1780, %v3861
        %v4773 = vadd.f32 %v1783, %v3864
        %v4774 = vadd.f32 %v1786, %v3867
        %v4775 = vadd.f32 %v1789, %v3870
        %v4776 = vadd.f32 %v1792, %v3873
        %v4777 = vadd.f32 %v1795, %v3876
        %v4778 = vadd.f32 %v1798, %v3879
        %v4779 = vadd.f32 %v1801, %v3882
        %v4780 = vadd.f32 %v1804, %v3885
        %v4781 = vadd.f32 %v1807, %v3888
        %v4782 = vadd.f32 %v1810, %v3891
        %v4783 = vadd.f32 %v1813, %v3894
        %v4784 = vadd.f32 %v1816, %v3897
        %v4785 = vadd.f32 %v1819, %v3900
        %v4786 = vadd.f32 %v1822, %v3903
        %v4787 = vadd.f32 %v1825, %v3906
        %v4788 = vadd.f32 %v1828, %v3909
        %v4789 = vadd.f32 %v1831, %v3912
        %v4790 = vadd.f32 %v1834, %v3915
        %v4791 = vadd.f32 %v1837, %v3918
        %v4792 = vadd.f32 %v1840, %v3921
        %v4793 = vadd.f32 %v1843, %v3924
        %v4794 = vadd.f32 %v1846, %v3927
        %v4795 = vadd.f32 %v1849, %v3930
        %v4796 = vadd.f32 %v1852, %v3933
        %v4797 = vadd.f32 %v1855, %v3936
        %v4798 = vadd.f32 %v1858, %v3939
        %v4799 = vadd.f32 %v1861, %v3942
        %v4800 = vadd.f32 %v1864, %v3945
        %v4801 = vadd.f32 %v1867, %v3948
        %v4802 = vadd.f32 %v1870, %v3951
        %v4803 = vadd.f32 %v1873, %v3954
        %v4804 = vadd.f32 %v1876, %v3957
        %v4805 = vadd.f32 %v1879, %v3960
        %v4806 = vadd.f32 %v1882, %v3963
        %v4807 = vadd.f32 %v1885, %v3966
        %v4808 = vadd.f32 %v1888, %v3969
        %v4809 = vadd.f32 %v1891, %v3972
        %v4810 = vadd.f32 %v1894, %v3975
        %v4811 = vadd.f32 %v1897, %v3978
        %v4812 = vadd.f32 %v1900, %v3981
        %v4813 = vadd.f32 %v1903, %v3984
        %v4814 = vadd.f32 %v1906, %v3987
        %v4815 = vadd.f32 %v1909, %v3990
        %v4816 = vadd.f32 %v1912, %v3993
        %v4817 = vadd.f32 %v1915, %v3996
        %v4818 = vadd.f32 %v1918, %v3999
        %v4819 = vadd.f32 %v1921, %v4002
        %v4820 = vadd.f32 %v1924, %v4005
        %v4821 = vadd.f32 %v1927, %v4008
        %v4822 = vadd.f32 %v1930, %v4011
        %v4823 = vadd.f32 %v1933, %v4014
        %v4824 = vadd.f32 %v1936, %v4017
        %v4825 = vadd.f32 %v1939, %v4020
        %v4826 = vadd.f32 %v1942, %v4023
        %v4827 = vadd.f32 %v1945, %v4026
        %v4828 = vadd.f32 %v1948, %v4029
        %v4829 = vadd.f32 %v1951, %v4032
        %v4830 = vadd.f32 %v1954, %v4035
        %v4831 = vadd.f32 %v1957, %v4038
        %v4832 = vadd.f32 %v1960, %v4041
        %v4833 = vadd.f32 %v1963, %v4044
        %v4834 = vadd.f32 %v1966, %v4047
        %v4835 = vadd.f32 %v1969, %v4050
        %v4836 = vadd.f32 %v1972, %v4053
        %v4837 = vadd.f32 %v1975, %v4056
        %v4838 = vadd.f32 %v1978, %v4059
        %v4839 = vadd.f32 %v1981, %v4062
        %v4840 = vadd.f32 %v1984, %v4065
        %v4841 = vadd.f32 %v1987, %v4068
        %v4842 = vadd.f32 %v1990, %v4071
        %v4843 = vadd.f32 %v1993, %v4074
        %v4844 = vadd.f32 %v1996, %v4077
        %v4845 = vadd.f32 %v1999, %v4080
        %v4846 = vadd.f32 %v2002, %v4083
        %v4847 = vadd.f32 %v2005, %v4086
        %v4848 = vadd.f32 %v2008, %v4089
        %v4849 = vadd.f32 %v2011, %v4092
        %v4850 = vadd.f32 %v2014, %v4095
        %v4851 = vadd.f32 %v2017, %v4098
        %v4852 = vadd.f32 %v2020, %v4101
        %v4853 = vadd.f32 %v2023, %v4104
        %v4854 = vadd.f32 %v2026, %v4107
        %v4855 = vadd.f32 %v2029, %v4110
        %v4856 = vadd.f32 %v2032, %v4113
        %v4857 = vadd.f32 %v2035, %v4116
        %v4858 = vadd.f32 %v2038, %v4119
        %v4859 = vadd.f32 %v2041, %v4122
        %v4860 = vadd.f32 %v2044, %v4125
        %v4861 = vadd.f32 %v2047, %v4128
        %v4862 = vadd.f32 %v2050, %v4131
        %v4863 = vadd.f32 %v2053, %v4134
        %v4864 = vadd.f32 %v2056, %v4137
        %v4865 = vadd.f32 %v2059, %v4140
        %v4866 = vadd.f32 %v2062, %v4143
        %v4867 = vadd.f32 %v2065, %v4146
        %v4868 = vadd.f32 %v2068, %v4149
        %v4869 = vadd.f32 %v2071, %v4152
        %v4870 = vadd.f32 %v2074, %v4155
        %v4871 = vadd.f32 %v2077, %v4158
        %v4872 = vadd.f32 %v2080, %v4161
        %v4873 = vadd.f32 %v2083, %v4164
        %v4874 = vadd.f32 %v2086, %v4167
        %v4875 = vadd.f32 %v2089, %v4170
        %v4876 = vadd.f32 %v2092, %v4173
        %v4877 = vadd.f32 %v2095, %v4176
        %v4878 = vadd.f32 %v2098, %v4179
        %v4879 = vadd.f32 %v2101, %v4182
        %v4880 = vadd.f32 %v2104, %v4185
        %v4881 = vadd.f32 %v2107, %v4188
        %v4882 = vadd.f32 %v2110, %v4191
        %v4883 = vadd.f32 %v2113, %v4194
        %v4884 = vadd.f32 %v2116, %v4197
        %v4885 = vadd.f32 %v2119, %v4200
        %v4886 = vadd.f32 %v2122, %v4203
        %v4887 = vadd.f32 %v2125, %v4206
        %v4888 = vadd.f32 %v2128, %v4209
        %v4889 = vadd.f32 %v2131, %v4212
        %v4890 = vadd.f32 %v2134, %v4215
        %v4891 = vadd.f32 %v2137, %v4218
        %v4892 = vadd.f32 %v2140, %v4221
        %v4893 = vadd.f32 %v2143, %v4224
        %v4894 = vadd.f32 %v2146, %v4227
        %v4895 = vadd.f32 %v2149, %v4230
        %v4896 = vadd.f32 %v2152, %v4233
        %v4897 = vadd.f32 %v2155, %v4236
        %v4898 = vadd.f32 %v2158, %v4239
        %v4899 = vadd.f32 %v2161, %v4242
        %v4900 = vadd.f32 %v2164, %v4245
        %v4901 = vadd.f32 %v2167, %v4248
        %v4902 = vadd.f32 %v2170, %v4251
        %v4903 = vadd.f32 %v2173, %v4254
        %v4904 = vadd.f32 %v2176, %v4257
        %v4905 = vadd.f32 %v2179, %v4260
        %v4906 = vadd.f32 %v2182, %v4263
        %v4907 = vadd.f32 %v2185, %v4266
        %v4908 = vadd.f32 %v2188, %v4269
        %v4909 = vadd.f32 %v2191, %v4272
        %v4910 = vadd.f32 %v2194, %v4275
        %v4911 = vadd.f32 %v2197, %v4278
        %v4912 = vadd.f32 %v2200, %v4281
        %v4913 = vadd.f32 %v2203, %v4284
        %v4914 = vadd.f32 %v2206, %v4287
        %v4915 = vadd.f32 %v2209, %v4290
        %v4916 = vadd.f32 %v2212, %v4293
        %v4917 = vadd.f32 %v2215, %v4296
        %v4918 = vadd.f32 %v2218, %v4299
        %v4919 = vadd.f32 %v2221, %v4302
        %v4920 = vadd.f32 %v2224, %v4305
        %v4921 = vadd.f32 %v2227, %v4308
        %v4922 = vadd.f32 %v2230, %v4311
        %v4923 = vadd.f32 %v2233, %v4314
        %v4924 = vadd.f32 %v2236, %v4317
        %v4925 = vadd.f32 %v2239, %v4320
        %v4926 = vadd.f32 %v2242, %v4323
        %v4927 = vadd.f32 %v2245, %v4326
        %v4928 = vadd.f32 %v2248, %v4329
        %v4929 = vadd.f32 %v2251, %v4332
        %v4930 = vadd.f32 %v2254, %v4335
        %v4931 = vadd.f32 %v2257, %v4338
        %v4932 = vadd.f32 %v2260, %v4341
        %v4933 = vadd.f32 %v2263, %v4344
        %v4934 = vadd.f32 %v2266, %v4347
        %v4935 = vadd.f32 %v2269, %v4350
        %v4936 = vadd.f32 %v2272, %v4353
        %v4937 = vadd.f32 %v2275, %v4356
        %v4938 = vadd.f32 %v2278, %v4359
        %v4939 = vadd.f32 %v2281, %v4362
        %v4940 = vadd.f32 %v2284, %v4365
        %v4941 = vadd.f32 %v2287, %v4368
        %v4942 = vadd.f32 %v2290, %v4371
        %v4943 = vadd.f32 %v2293, %v4374
        %v4944 = vadd.f32 %v2296, %v4377
        %v4945 = vadd.f32 %v2299, %v4380
        %v4946 = vadd.f32 %v2302, %v4383
        %v4947 = vadd.f32 %v2305, %v4386
        %v4948 = vadd.f32 %v2308, %v4389
        %v4949 = vadd.f32 %v2311, %v4392
        %v4950 = vadd.f32 %v2314, %v4395
        %v4951 = vadd.f32 %v2317, %v4398
        %v4952 = vadd.f32 %v2320, %v4401
        %v4953 = vadd.f32 %v2323, %v4404
        %v4954 = vadd.f32 %v2326, %v4407
        %v4955 = vadd.f32 %v2329, %v4410
        %v4956 = vadd.f32 %v2332, %v4413
        %v4957 = vadd.f32 %v2335, %v4416
        %v4958 = vadd.f32 %v2338, %v4419
        %v4959 = vadd.f32 %v2341, %v4422
        %v4960 = vadd.f32 %v2344, %v4425
        %v4961 = vadd.f32 %v2347, %v4428
        %v4962 = vadd.f32 %v2350, %v4431
        %v4963 = vadd.f32 %v2353, %v4434
        %v4964 = vadd.f32 %v2356, %v4437
        %v4965 = vadd.f32 %v2359, %v4440
        %v4966 = vadd.f32 %v2362, %v4443
        %v4967 = vadd.f32 %v2365, %v4446
        %v4968 = vadd.f32 %v2368, %v4449
        %v4969 = vadd.f32 %v2371, %v4452
        %v4970 = vadd.f32 %v2374, %v4455
        %v4971 = vadd.f32 %v2377, %v4458
        %v4972 = vmul.f32 %v844, 0.1
        %v4973 = vmul.f32 %v847, 0.1
        %v4974 = vmul.f32 %v850, 0.1
        %v4975 = vmul.f32 %v853, 0.1
        %v4976 = vmul.f32 %v856, 0.1
        %v4977 = vmul.f32 %v859, 0.1
        %v4978 = vmul.f32 %v862, 0.1
        %v4979 = vmul.f32 %v865, 0.1
        %v4980 = vmul.f32 %v868, 0.1
        %v4981 = vmul.f32 %v871, 0.1
        %v4982 = vmul.f32 %v874, 0.1
        %v4983 = vmul.f32 %v877, 0.1
        %v4984 = vmul.f32 %v880, 0.1
        %v4985 = vmul.f32 %v883, 0.1
        %v4986 = vmul.f32 %v886, 0.1
        %v4987 = vmul.f32 %v889, 0.1
        %v4988 = vmul.f32 %v892, 0.1
        %v4989 = vmul.f32 %v895, 0.1
        %v4990 = vmul.f32 %v898, 0.1
        %v4991 = vmul.f32 %v901, 0.1
        %v4992 = vmul.f32 %v904, 0.1
        %v4993 = vmul.f32 %v907, 0.1
        %v4994 = vmul.f32 %v910, 0.1
        %v4995 = vmul.f32 %v913, 0.1
        %v4996 = vmul.f32 %v916, 0.1
        %v4997 = vmul.f32 %v919, 0.1
        %v4998 = vmul.f32 %v922, 0.1
        %v4999 = vmul.f32 %v925, 0.1
        %v5000 = vmul.f32 %v928, 0.1
        %v5001 = vmul.f32 %v931, 0.1
        %v5002 = vmul.f32 %v934, 0.1
        %v5003 = vmul.f32 %v937, 0.1
        %v5004 = vmul.f32 %v940, 0.1
        %v5005 = vmul.f32 %v943, 0.1
        %v5006 = vmul.f32 %v946, 0.1
        %v5007 = vmul.f32 %v949, 0.1
        %v5008 = vmul.f32 %v952, 0.1
        %v5009 = vmul.f32 %v955, 0.1
        %v5010 = vmul.f32 %v958, 0.1
        %v5011 = vmul.f32 %v961, 0.1
        %v5012 = vmul.f32 %v964, 0.1
        %v5013 = vmul.f32 %v967, 0.1
        %v5014 = vmul.f32 %v970, 0.1
        %v5015 = vmul.f32 %v973, 0.1
        %v5016 = vmul.f32 %v976, 0.1
        %v5017 = vmul.f32 %v979, 0.1
        %v5018 = vmul.f32 %v982, 0.1
        %v5019 = vmul.f32 %v985, 0.1
        %v5020 = vmul.f32 %v988, 0.1
        %v5021 = vmul.f32 %v991, 0.1
        %v5022 = vmul.f32 %v994, 0.1
        %v5023 = vmul.f32 %v997, 0.1
        %v5024 = vmul.f32 %v1000, 0.1
        %v5025 = vmul.f32 %v1003, 0.1
        %v5026 = vmul.f32 %v1006, 0.1
        %v5027 = vmul.f32 %v1009, 0.1
        %v5028 = vmul.f32 %v1012, 0.1
        %v5029 = vmul.f32 %v1015, 0.1
        %v5030 = vmul.f32 %v1018, 0.1
        %v5031 = vmul.f32 %v1021, 0.1
        %v5032 = vmul.f32 %v1024, 0.1
        %v5033 = vmul.f32 %v1027, 0.1
        %v5034 = vmul.f32 %v1030, 0.1
        %v5035 = vmul.f32 %v1033, 0.1
        %v5036 = vmul.f32 %v1036, 0.1
        %v5037 = vmul.f32 %v1039, 0.1
        %v5038 = vmul.f32 %v1042, 0.1
        %v5039 = vmul.f32 %v1045, 0.1
        %v5040 = vmul.f32 %v1048, 0.1
        %v5041 = vmul.f32 %v1051, 0.1
        %v5042 = vmul.f32 %v1054, 0.1
        %v5043 = vmul.f32 %v1057, 0.1
        %v5044 = vmul.f32 %v1060, 0.1
        %v5045 = vmul.f32 %v1063, 0.1
        %v5046 = vmul.f32 %v1066, 0.1
        %v5047 = vmul.f32 %v1069, 0.1
        %v5048 = vmul.f32 %v1072, 0.1
        %v5049 = vmul.f32 %v1075, 0.1
        %v5050 = vmul.f32 %v1078, 0.1
        %v5051 = vmul.f32 %v1081, 0.1
        %v5052 = vmul.f32 %v1084, 0.1
        %v5053 = vmul.f32 %v1087, 0.1
        %v5054 = vmul.f32 %v1090, 0.1
        %v5055 = vmul.f32 %v1093, 0.1
        %v5056 = vmul.f32 %v1096, 0.1
        %v5057 = vmul.f32 %v1099, 0.1
        %v5058 = vmul.f32 %v1102, 0.1
        %v5059 = vmul.f32 %v1105, 0.1
        %v5060 = vmul.f32 %v1108, 0.1
        %v5061 = vmul.f32 %v1111, 0.1
        %v5062 = vmul.f32 %v1114, 0.1
        %v5063 = vmul.f32 %v1117, 0.1
        %v5064 = vmul.f32 %v1120, 0.1
        %v5065 = vmul.f32 %v1123, 0.1
        %v5066 = vmul.f32 %v1126, 0.1
        %v5067 = vmul.f32 %v1129, 0.1
        %v5068 = vmul.f32 %v1132, 0.1
        %v5069 = vmul.f32 %v1135, 0.1
        %v5070 = vmul.f32 %v1138, 0.1
        %v5071 = vmul.f32 %v1141, 0.1
        %v5072 = vmul.f32 %v1144, 0.1
        %v5073 = vmul.f32 %v1147, 0.1
        %v5074 = vmul.f32 %v1150, 0.1
        %v5075 = vmul.f32 %v1153, 0.1
        %v5076 = vmul.f32 %v1156, 0.1
        %v5077 = vmul.f32 %v1159, 0.1
        %v5078 = vmul.f32 %v1162, 0.1
        %v5079 = vmul.f32 %v1165, 0.1
        %v5080 = vmul.f32 %v1168, 0.1
        %v5081 = vmul.f32 %v1171, 0.1
        %v5082 = vmul.f32 %v1174, 0.1
        %v5083 = vmul.f32 %v1177, 0.1
        %v5084 = vmul.f32 %v1180, 0.1
        %v5085 = vmul.f32 %v1183, 0.1
        %v5086 = vmul.f32 %v1186, 0.1
        %v5087 = vmul.f32 %v1189, 0.1
        %v5088 = vmul.f32 %v1192, 0.1
        %v5089 = vmul.f32 %v1195, 0.1
        %v5090 = vmul.f32 %v1198, 0.1
        %v5091 = vmul.f32 %v1201, 0.1
        %v5092 = vmul.f32 %v1204, 0.1
        %v5093 = vmul.f32 %v1207, 0.1
        %v5094 = vmul.f32 %v1210, 0.1
        %v5095 = vmul.f32 %v1213, 0.1
        %v5096 = vmul.f32 %v1216, 0.1
        %v5097 = vmul.f32 %v1219, 0.1
        %v5098 = vmul.f32 %v1222, 0.1
        %v5099 = vmul.f32 %v1225, 0.1
        %v5100 = vmul.f32 %v1228, 0.1
        %v5101 = vmul.f32 %v1231, 0.1
        %v5102 = vmul.f32 %v1234, 0.1
        %v5103 = vmul.f32 %v1237, 0.1
        %v5104 = vmul.f32 %v1240, 0.1
        %v5105 = vmul.f32 %v1243, 0.1
        %v5106 = vmul.f32 %v1246, 0.1
        %v5107 = vmul.f32 %v1249, 0.1
        %v5108 = vmul.f32 %v1252, 0.1
        %v5109 = vmul.f32 %v1255, 0.1
        %v5110 = vmul.f32 %v1258, 0.1
        %v5111 = vmul.f32 %v1261, 0.1
        %v5112 = vmul.f32 %v1264, 0.1
        %v5113 = vmul.f32 %v1267, 0.1
        %v5114 = vmul.f32 %v1270, 0.1
        %v5115 = vmul.f32 %v1273, 0.1
        %v5116 = vmul.f32 %v1276, 0.1
        %v5117 = vmul.f32 %v1279, 0.1
        %v5118 = vmul.f32 %v1282, 0.1
        %v5119 = vmul.f32 %v1285, 0.1
        %v5120 = vmul.f32 %v1288, 0.1
        %v5121 = vmul.f32 %v1291, 0.1
        %v5122 = vmul.f32 %v1294, 0.1
        %v5123 = vmul.f32 %v1297, 0.1
        %v5124 = vmul.f32 %v1300, 0.1
        %v5125 = vmul.f32 %v1303, 0.1
        %v5126 = vmul.f32 %v1306, 0.1
        %v5127 = vmul.f32 %v1309, 0.1
        %v5128 = vmul.f32 %v1312, 0.1
        %v5129 = vmul.f32 %v1315, 0.1
        %v5130 = vmul.f32 %v1318, 0.1
        %v5131 = vmul.f32 %v1321, 0.1
        %v5132 = vmul.f32 %v1324, 0.1
        %v5133 = vmul.f32 %v1327, 0.1
        %v5134 = vmul.f32 %v1330, 0.1
        %v5135 = vmul.f32 %v1333, 0.1
        %v5136 = vmul.f32 %v1336, 0.1
        %v5137 = vmul.f32 %v1339, 0.1
        %v5138 = vmul.f32 %v1342, 0.1
        %v5139 = vmul.f32 %v1345, 0.1
        %v5140 = vmul.f32 %v1348, 0.1
        %v5141 = vmul.f32 %v1351, 0.1
        %v5142 = vmul.f32 %v1354, 0.1
        %v5143 = vmul.f32 %v1357, 0.1
        %v5144 = vmul.f32 %v1360, 0.1
        %v5145 = vmul.f32 %v1363, 0.1
        %v5146 = vmul.f32 %v1366, 0.1
        %v5147 = vmul.f32 %v1369, 0.1
        %v5148 = vmul.f32 %v1372, 0.1
        %v5149 = vmul.f32 %v1375, 0.1
        %v5150 = vmul.f32 %v1378, 0.1
        %v5151 = vmul.f32 %v1381, 0.1
        %v5152 = vmul.f32 %v1384, 0.1
        %v5153 = vmul.f32 %v1387, 0.1
        %v5154 = vmul.f32 %v1390, 0.1
        %v5155 = vmul.f32 %v1393, 0.1
        %v5156 = vmul.f32 %v1396, 0.1
        %v5157 = vmul.f32 %v1399, 0.1
        %v5158 = vmul.f32 %v1402, 0.1
        %v5159 = vmul.f32 %v1405, 0.1
        %v5160 = vmul.f32 %v1408, 0.1
        %v5161 = vmul.f32 %v1411, 0.1
        %v5162 = vmul.f32 %v1414, 0.1
        %v5163 = vmul.f32 %v1417, 0.1
        %v5164 = vmul.f32 %v1420, 0.1
        %v5165 = vmul.f32 %v1423, 0.1
        %v5166 = vmul.f32 %v1426, 0.1
        %v5167 = vmul.f32 %v1429, 0.1
        %v5168 = vmul.f32 %v1432, 0.1
        %v5169 = vmul.f32 %v1435, 0.1
        %v5170 = vmul.f32 %v1438, 0.1
        %v5171 = vmul.f32 %v1441, 0.1
        %v5172 = vmul.f32 %v1444, 0.1
        %v5173 = vmul.f32 %v1447, 0.1
        %v5174 = vmul.f32 %v1450, 0.1
        %v5175 = vmul.f32 %v1453, 0.1
        %v5176 = vmul.f32 %v1456, 0.1
        %v5177 = vmul.f32 %v1459, 0.1
        %v5178 = vmul.f32 %v1462, 0.1
        %v5179 = vmul.f32 %v1465, 0.1
        %v5180 = vmul.f32 %v1468, 0.1
        %v5181 = vmul.f32 %v1471, 0.1
        %v5182 = vmul.f32 %v1474, 0.1
        %v5183 = vmul.f32 %v1477, 0.1
        %v5184 = vmul.f32 %v1480, 0.1
        %v5185 = vmul.f32 %v1483, 0.1
        %v5186 = vmul.f32 %v1486, 0.1
        %v5187 = vmul.f32 %v1489, 0.1
        %v5188 = vmul.f32 %v1492, 0.1
        %v5189 = vmul.f32 %v1495, 0.1
        %v5190 = vmul.f32 %v1498, 0.1
        %v5191 = vmul.f32 %v1501, 0.1
        %v5192 = vmul.f32 %v1504, 0.1
        %v5193 = vmul.f32 %v1507, 0.1
        %v5194 = vmul.f32 %v1510, 0.1
        %v5195 = vmul.f32 %v1513, 0.1
        %v5196 = vmul.f32 %v1516, 0.1
        %v5197 = vmul.f32 %v1519, 0.1
        %v5198 = vmul.f32 %v1522, 0.1
        %v5199 = vmul.f32 %v1525, 0.1
        %v5200 = vmul.f32 %v1528, 0.1
        %v5201 = vmul.f32 %v1531, 0.1
        %v5202 = vmul.f32 %v1534, 0.1
        %v5203 = vmul.f32 %v1537, 0.1
        %v5204 = vmul.f32 %v1540, 0.1
        %v5205 = vmul.f32 %v1543, 0.1
        %v5206 = vmul.f32 %v1546, 0.1
        %v5207 = vmul.f32 %v1549, 0.1
        %v5208 = vmul.f32 %v1552, 0.1
        %v5209 = vmul.f32 %v1555, 0.1
        %v5210 = vmul.f32 %v1558, 0.1
        %v5211 = vmul.f32 %v1561, 0.1
        %v5212 = vmul.f32 %v1564, 0.1
        %v5213 = vmul.f32 %v1567, 0.1
        %v5214 = vmul.f32 %v1570, 0.1
        %v5215 = vmul.f32 %v1573, 0.1
        %v5216 = vmul.f32 %v1576, 0.1
        %v5217 = vmul.f32 %v1579, 0.1
        %v5218 = vmul.f32 %v1582, 0.1
        %v5219 = vmul.f32 %v1585, 0.1
        %v5220 = vmul.f32 %v1588, 0.1
        %v5221 = vmul.f32 %v1591, 0.1
        %v5222 = vmul.f32 %v1594, 0.1
        %v5223 = vmul.f32 %v1597, 0.1
        %v5224 = vmul.f32 %v1600, 0.1
        %v5225 = vmul.f32 %v1603, 0.1
        %v5226 = vmul.f32 %v1606, 0.1
        %v5227 = vmul.f32 %v1609, 0.1
        %v5228 = vmul.f32 %v1612, 0.1
        %v5229 = vmul.f32 %v1615, 0.1
        %v5230 = vmul.f32 %v1618, 0.1
        %v5231 = vmul.f32 %v1621, 0.1
        %v5232 = vmul.f32 %v1624, 0.1
        %v5233 = vmul.f32 %v1627, 0.1
        %v5234 = vmul.f32 %v1630, 0.1
        %v5235 = vmul.f32 %v1633, 0.1
        %v5236 = vmul.f32 %v1636, 0.1
        %v5237 = vmul.f32 %v1639, 0.1
        %v5238 = vmul.f32 %v1642, 0.1
        %v5239 = vmul.f32 %v1645, 0.1
        %v5240 = vmul.f32 %v1648, 0.1
        %v5241 = vmul.f32 %v1651, 0.1
        %v5242 = vmul.f32 %v1654, 0.1
        %v5243 = vmul.f32 %v1657, 0.1
        %v5244 = vmul.f32 %v1660, 0.1
        %v5245 = vmul.f32 %v1663, 0.1
        %v5246 = vmul.f32 %v1666, 0.1
        %v5247 = vmul.f32 %v1669, 0.1
        %v5248 = vmul.f32 %v1672, 0.1
        %v5249 = vmul.f32 %v1675, 0.1
        %v5250 = vmul.f32 %v1678, 0.1
        %v5251 = vmul.f32 %v1681, 0.1
        %v5252 = vmul.f32 %v1684, 0.1
        %v5253 = vmul.f32 %v1687, 0.1
        %v5254 = vmul.f32 %v1690, 0.1
        %v5255 = vmul.f32 %v1693, 0.1
        %v5256 = vmul.f32 %v1696, 0.1
        %v5257 = vmul.f32 %v1699, 0.1
        %v5258 = vmul.f32 %v1702, 0.1
        %v5259 = vmul.f32 %v1705, 0.1
        %v5260 = vmul.f32 %v1708, 0.1
        %v5261 = vmul.f32 %v1711, 0.1
        %v5262 = vmul.f32 %v1714, 0.1
        %v5263 = vmul.f32 %v1717, 0.1
        %v5264 = vmul.f32 %v1720, 0.1
        %v5265 = vmul.f32 %v1723, 0.1
        %v5266 = vmul.f32 %v1726, 0.1
        %v5267 = vmul.f32 %v1729, 0.1
        %v5268 = vmul.f32 %v1732, 0.1
        %v5269 = vmul.f32 %v1735, 0.1
        %v5270 = vmul.f32 %v1738, 0.1
        %v5271 = vmul.f32 %v1741, 0.1
        %v5272 = vmul.f32 %v1744, 0.1
        %v5273 = vmul.f32 %v1747, 0.1
        %v5274 = vmul.f32 %v1750, 0.1
        %v5275 = vmul.f32 %v1753, 0.1
        %v5276 = vmul.f32 %v1756, 0.1
        %v5277 = vmul.f32 %v1759, 0.1
        %v5278 = vmul.f32 %v1762, 0.1
        %v5279 = vmul.f32 %v1765, 0.1
        %v5280 = vmul.f32 %v1768, 0.1
        %v5281 = vmul.f32 %v1771, 0.1
        %v5282 = vmul.f32 %v1774, 0.1
        %v5283 = vmul.f32 %v1777, 0.1
        %v5284 = vmul.f32 %v1780, 0.1
        %v5285 = vmul.f32 %v1783, 0.1
        %v5286 = vmul.f32 %v1786, 0.1
        %v5287 = vmul.f32 %v1789, 0.1
        %v5288 = vmul.f32 %v1792, 0.1
        %v5289 = vmul.f32 %v1795, 0.1
        %v5290 = vmul.f32 %v1798, 0.1
        %v5291 = vmul.f32 %v1801, 0.1
        %v5292 = vmul.f32 %v1804, 0.1
        %v5293 = vmul.f32 %v1807, 0.1
        %v5294 = vmul.f32 %v1810, 0.1
        %v5295 = vmul.f32 %v1813, 0.1
        %v5296 = vmul.f32 %v1816, 0.1
        %v5297 = vmul.f32 %v1819, 0.1
        %v5298 = vmul.f32 %v1822, 0.1
        %v5299 = vmul.f32 %v1825, 0.1
        %v5300 = vmul.f32 %v1828, 0.1
        %v5301 = vmul.f32 %v1831, 0.1
        %v5302 = vmul.f32 %v1834, 0.1
        %v5303 = vmul.f32 %v1837, 0.1
        %v5304 = vmul.f32 %v1840, 0.1
        %v5305 = vmul.f32 %v1843, 0.1
        %v5306 = vmul.f32 %v1846, 0.1
        %v5307 = vmul.f32 %v1849, 0.1
        %v5308 = vmul.f32 %v1852, 0.1
        %v5309 = vmul.f32 %v1855, 0.1
        %v5310 = vmul.f32 %v1858, 0.1
        %v5311 = vmul.f32 %v1861, 0.1
        %v5312 = vmul.f32 %v1864, 0.1
        %v5313 = vmul.f32 %v1867, 0.1
        %v5314 = vmul.f32 %v1870, 0.1
        %v5315 = vmul.f32 %v1873, 0.1
        %v5316 = vmul.f32 %v1876, 0.1
        %v5317 = vmul.f32 %v1879, 0.1
        %v5318 = vmul.f32 %v1882, 0.1
        %v5319 = vmul.f32 %v1885, 0.1
        %v5320 = vmul.f32 %v1888, 0.1
        %v5321 = vmul.f32 %v1891, 0.1
        %v5322 = vmul.f32 %v1894, 0.1
        %v5323 = vmul.f32 %v1897, 0.1
        %v5324 = vmul.f32 %v1900, 0.1
        %v5325 = vmul.f32 %v1903, 0.1
        %v5326 = vmul.f32 %v1906, 0.1
        %v5327 = vmul.f32 %v1909, 0.1
        %v5328 = vmul.f32 %v1912, 0.1
        %v5329 = vmul.f32 %v1915, 0.1
        %v5330 = vmul.f32 %v1918, 0.1
        %v5331 = vmul.f32 %v1921, 0.1
        %v5332 = vmul.f32 %v1924, 0.1
        %v5333 = vmul.f32 %v1927, 0.1
        %v5334 = vmul.f32 %v1930, 0.1
        %v5335 = vmul.f32 %v1933, 0.1
        %v5336 = vmul.f32 %v1936, 0.1
        %v5337 = vmul.f32 %v1939, 0.1
        %v5338 = vmul.f32 %v1942, 0.1
        %v5339 = vmul.f32 %v1945, 0.1
        %v5340 = vmul.f32 %v1948, 0.1
        %v5341 = vmul.f32 %v1951, 0.1
        %v5342 = vmul.f32 %v1954, 0.1
        %v5343 = vmul.f32 %v1957, 0.1
        %v5344 = vmul.f32 %v1960, 0.1
        %v5345 = vmul.f32 %v1963, 0.1
        %v5346 = vmul.f32 %v1966, 0.1
        %v5347 = vmul.f32 %v1969, 0.1
        %v5348 = vmul.f32 %v1972, 0.1
        %v5349 = vmul.f32 %v1975, 0.1
        %v5350 = vmul.f32 %v1978, 0.1
        %v5351 = vmul.f32 %v1981, 0.1
        %v5352 = vmul.f32 %v1984, 0.1
        %v5353 = vmul.f32 %v1987, 0.1
        %v5354 = vmul.f32 %v1990, 0.1
        %v5355 = vmul.f32 %v1993, 0.1
        %v5356 = vmul.f32 %v1996, 0.1
        %v5357 = vmul.f32 %v1999, 0.1
        %v5358 = vmul.f32 %v2002, 0.1
        %v5359 = vmul.f32 %v2005, 0.1
        %v5360 = vmul.f32 %v2008, 0.1
        %v5361 = vmul.f32 %v2011, 0.1
        %v5362 = vmul.f32 %v2014, 0.1
        %v5363 = vmul.f32 %v2017, 0.1
        %v5364 = vmul.f32 %v2020, 0.1
        %v5365 = vmul.f32 %v2023, 0.1
        %v5366 = vmul.f32 %v2026, 0.1
        %v5367 = vmul.f32 %v2029, 0.1
        %v5368 = vmul.f32 %v2032, 0.1
        %v5369 = vmul.f32 %v2035, 0.1
        %v5370 = vmul.f32 %v2038, 0.1
        %v5371 = vmul.f32 %v2041, 0.1
        %v5372 = vmul.f32 %v2044, 0.1
        %v5373 = vmul.f32 %v2047, 0.1
        %v5374 = vmul.f32 %v2050, 0.1
        %v5375 = vmul.f32 %v2053, 0.1
        %v5376 = vmul.f32 %v2056, 0.1
        %v5377 = vmul.f32 %v2059, 0.1
        %v5378 = vmul.f32 %v2062, 0.1
        %v5379 = vmul.f32 %v2065, 0.1
        %v5380 = vmul.f32 %v2068, 0.1
        %v5381 = vmul.f32 %v2071, 0.1
        %v5382 = vmul.f32 %v2074, 0.1
        %v5383 = vmul.f32 %v2077, 0.1
        %v5384 = vmul.f32 %v2080, 0.1
        %v5385 = vmul.f32 %v2083, 0.1
        %v5386 = vmul.f32 %v2086, 0.1
        %v5387 = vmul.f32 %v2089, 0.1
        %v5388 = vmul.f32 %v2092, 0.1
        %v5389 = vmul.f32 %v2095, 0.1
        %v5390 = vmul.f32 %v2098, 0.1
        %v5391 = vmul.f32 %v2101, 0.1
        %v5392 = vmul.f32 %v2104, 0.1
        %v5393 = vmul.f32 %v2107, 0.1
        %v5394 = vmul.f32 %v2110, 0.1
        %v5395 = vmul.f32 %v2113, 0.1
        %v5396 = vmul.f32 %v2116, 0.1
        %v5397 = vmul.f32 %v2119, 0.1
        %v5398 = vmul.f32 %v2122, 0.1
        %v5399 = vmul.f32 %v2125, 0.1
        %v5400 = vmul.f32 %v2128, 0.1
        %v5401 = vmul.f32 %v2131, 0.1
        %v5402 = vmul.f32 %v2134, 0.1
        %v5403 = vmul.f32 %v2137, 0.1
        %v5404 = vmul.f32 %v2140, 0.1
        %v5405 = vmul.f32 %v2143, 0.1
        %v5406 = vmul.f32 %v2146, 0.1
        %v5407 = vmul.f32 %v2149, 0.1
        %v5408 = vmul.f32 %v2152, 0.1
        %v5409 = vmul.f32 %v2155, 0.1
        %v5410 = vmul.f32 %v2158, 0.1
        %v5411 = vmul.f32 %v2161, 0.1
        %v5412 = vmul.f32 %v2164, 0.1
        %v5413 = vmul.f32 %v2167, 0.1
        %v5414 = vmul.f32 %v2170, 0.1
        %v5415 = vmul.f32 %v2173, 0.1
        %v5416 = vmul.f32 %v2176, 0.1
        %v5417 = vmul.f32 %v2179, 0.1
        %v5418 = vmul.f32 %v2182, 0.1
        %v5419 = vmul.f32 %v2185, 0.1
        %v5420 = vmul.f32 %v2188, 0.1
        %v5421 = vmul.f32 %v2191, 0.1
        %v5422 = vmul.f32 %v2194, 0.1
        %v5423 = vmul.f32 %v2197, 0.1
        %v5424 = vmul.f32 %v2200, 0.1
        %v5425 = vmul.f32 %v2203, 0.1
        %v5426 = vmul.f32 %v2206, 0.1
        %v5427 = vmul.f32 %v2209, 0.1
        %v5428 = vmul.f32 %v2212, 0.1
        %v5429 = vmul.f32 %v2215, 0.1
        %v5430 = vmul.f32 %v2218, 0.1
        %v5431 = vmul.f32 %v2221, 0.1
        %v5432 = vmul.f32 %v2224, 0.1
        %v5433 = vmul.f32 %v2227, 0.1
        %v5434 = vmul.f32 %v2230, 0.1
        %v5435 = vmul.f32 %v2233, 0.1
        %v5436 = vmul.f32 %v2236, 0.1
        %v5437 = vmul.f32 %v2239, 0.1
        %v5438 = vmul.f32 %v2242, 0.1
        %v5439 = vmul.f32 %v2245, 0.1
        %v5440 = vmul.f32 %v2248, 0.1
        %v5441 = vmul.f32 %v2251, 0.1
        %v5442 = vmul.f32 %v2254, 0.1
        %v5443 = vmul.f32 %v2257, 0.1
        %v5444 = vmul.f32 %v2260, 0.1
        %v5445 = vmul.f32 %v2263, 0.1
        %v5446 = vmul.f32 %v2266, 0.1
        %v5447 = vmul.f32 %v2269, 0.1
        %v5448 = vmul.f32 %v2272, 0.1
        %v5449 = vmul.f32 %v2275, 0.1
        %v5450 = vmul.f32 %v2278, 0.1
        %v5451 = vmul.f32 %v2281, 0.1
        %v5452 = vmul.f32 %v2284, 0.1
        %v5453 = vmul.f32 %v2287, 0.1
        %v5454 = vmul.f32 %v2290, 0.1
        %v5455 = vmul.f32 %v2293, 0.1
        %v5456 = vmul.f32 %v2296, 0.1
        %v5457 = vmul.f32 %v2299, 0.1
        %v5458 = vmul.f32 %v2302, 0.1
        %v5459 = vmul.f32 %v2305, 0.1
        %v5460 = vmul.f32 %v2308, 0.1
        %v5461 = vmul.f32 %v2311, 0.1
        %v5462 = vmul.f32 %v2314, 0.1
        %v5463 = vmul.f32 %v2317, 0.1
        %v5464 = vmul.f32 %v2320, 0.1
        %v5465 = vmul.f32 %v2323, 0.1
        %v5466 = vmul.f32 %v2326, 0.1
        %v5467 = vmul.f32 %v2329, 0.1
        %v5468 = vmul.f32 %v2332, 0.1
        %v5469 = vmul.f32 %v2335, 0.1
        %v5470 = vmul.f32 %v2338, 0.1
        %v5471 = vmul.f32 %v2341, 0.1
        %v5472 = vmul.f32 %v2344, 0.1
        %v5473 = vmul.f32 %v2347, 0.1
        %v5474 = vmul.f32 %v2350, 0.1
        %v5475 = vmul.f32 %v2353, 0.1
        %v5476 = vmul.f32 %v2356, 0.1
        %v5477 = vmul.f32 %v2359, 0.1
        %v5478 = vmul.f32 %v2362, 0.1
        %v5479 = vmul.f32 %v2365, 0.1
        %v5480 = vmul.f32 %v2368, 0.1
        %v5481 = vmul.f32 %v2371, 0.1
        %v5482 = vmul.f32 %v2374, 0.1
        %v5483 = vmul.f32 %v2377, 0.1
        %v5484 = vsub.f32 %v2379, %v4972
        %v5485 = vsub.f32 %v2380, %v4973
        %v5486 = vsub.f32 %v2381, %v4974
        %v5487 = vsub.f32 %v2382, %v4975
        %v5488 = vsub.f32 %v2383, %v4976
        %v5489 = vsub.f32 %v2384, %v4977
        %v5490 = vsub.f32 %v2385, %v4978
        %v5491 = vsub.f32 %v2386, %v4979
        %v5492 = vsub.f32 %v2387, %v4980
        %v5493 = vsub.f32 %v2388, %v4981
        %v5494 = vsub.f32 %v2389, %v4982
        %v5495 = vsub.f32 %v2390, %v4983
        %v5496 = vsub.f32 %v2391, %v4984
        %v5497 = vsub.f32 %v2392, %v4985
        %v5498 = vsub.f32 %v2393, %v4986
        %v5499 = vsub.f32 %v2394, %v4987
        %v5500 = vsub.f32 %v2395, %v4988
        %v5501 = vsub.f32 %v2396, %v4989
        %v5502 = vsub.f32 %v2397, %v4990
        %v5503 = vsub.f32 %v2398, %v4991
        %v5504 = vsub.f32 %v2399, %v4992
        %v5505 = vsub.f32 %v2400, %v4993
        %v5506 = vsub.f32 %v2401, %v4994
        %v5507 = vsub.f32 %v2402, %v4995
        %v5508 = vsub.f32 %v2403, %v4996
        %v5509 = vsub.f32 %v2404, %v4997
        %v5510 = vsub.f32 %v2405, %v4998
        %v5511 = vsub.f32 %v2406, %v4999
        %v5512 = vsub.f32 %v2407, %v5000
        %v5513 = vsub.f32 %v2408, %v5001
        %v5514 = vsub.f32 %v2409, %v5002
        %v5515 = vsub.f32 %v2410, %v5003
        %v5516 = vsub.f32 %v2411, %v5004
        %v5517 = vsub.f32 %v2412, %v5005
        %v5518 = vsub.f32 %v2413, %v5006
        %v5519 = vsub.f32 %v2414, %v5007
        %v5520 = vsub.f32 %v2415, %v5008
        %v5521 = vsub.f32 %v2416, %v5009
        %v5522 = vsub.f32 %v2417, %v5010
        %v5523 = vsub.f32 %v2418, %v5011
        %v5524 = vsub.f32 %v2419, %v5012
        %v5525 = vsub.f32 %v2420, %v5013
        %v5526 = vsub.f32 %v2421, %v5014
        %v5527 = vsub.f32 %v2422, %v5015
        %v5528 = vsub.f32 %v2423, %v5016
        %v5529 = vsub.f32 %v2424, %v5017
        %v5530 = vsub.f32 %v2425, %v5018
        %v5531 = vsub.f32 %v2426, %v5019
        %v5532 = vsub.f32 %v2427, %v5020
        %v5533 = vsub.f32 %v2428, %v5021
        %v5534 = vsub.f32 %v2429, %v5022
        %v5535 = vsub.f32 %v2430, %v5023
        %v5536 = vsub.f32 %v2431, %v5024
        %v5537 = vsub.f32 %v2432, %v5025
        %v5538 = vsub.f32 %v2433, %v5026
        %v5539 = vsub.f32 %v2434, %v5027
        %v5540 = vsub.f32 %v2435, %v5028
        %v5541 = vsub.f32 %v2436, %v5029
        %v5542 = vsub.f32 %v2437, %v5030
        %v5543 = vsub.f32 %v2438, %v5031
        %v5544 = vsub.f32 %v2439, %v5032
        %v5545 = vsub.f32 %v2440, %v5033
        %v5546 = vsub.f32 %v2441, %v5034
        %v5547 = vsub.f32 %v2442, %v5035
        %v5548 = vsub.f32 %v2443, %v5036
        %v5549 = vsub.f32 %v2444, %v5037
        %v5550 = vsub.f32 %v2445, %v5038
        %v5551 = vsub.f32 %v2446, %v5039
        %v5552 = vsub.f32 %v2447, %v5040
        %v5553 = vsub.f32 %v2448, %v5041
        %v5554 = vsub.f32 %v2449, %v5042
        %v5555 = vsub.f32 %v2450, %v5043
        %v5556 = vsub.f32 %v2451, %v5044
        %v5557 = vsub.f32 %v2452, %v5045
        %v5558 = vsub.f32 %v2453, %v5046
        %v5559 = vsub.f32 %v2454, %v5047
        %v5560 = vsub.f32 %v2455, %v5048
        %v5561 = vsub.f32 %v2456, %v5049
        %v5562 = vsub.f32 %v2457, %v5050
        %v5563 = vsub.f32 %v2458, %v5051
        %v5564 = vsub.f32 %v2459, %v5052
        %v5565 = vsub.f32 %v2460, %v5053
        %v5566 = vsub.f32 %v2461, %v5054
        %v5567 = vsub.f32 %v2462, %v5055
        %v5568 = vsub.f32 %v2463, %v5056
        %v5569 = vsub.f32 %v2464, %v5057
        %v5570 = vsub.f32 %v2465, %v5058
        %v5571 = vsub.f32 %v2466, %v5059
        %v5572 = vsub.f32 %v2467, %v5060
        %v5573 = vsub.f32 %v2468, %v5061
        %v5574 = vsub.f32 %v2469, %v5062
        %v5575 = vsub.f32 %v2470, %v5063
        %v5576 = vsub.f32 %v2471, %v5064
        %v5577 = vsub.f32 %v2472, %v5065
        %v5578 = vsub.f32 %v2473, %v5066
        %v5579 = vsub.f32 %v2474, %v5067
        %v5580 = vsub.f32 %v2475, %v5068
        %v5581 = vsub.f32 %v2476, %v5069
        %v5582 = vsub.f32 %v2477, %v5070
        %v5583 = vsub.f32 %v2478, %v5071
        %v5584 = vsub.f32 %v2479, %v5072
        %v5585 = vsub.f32 %v2480, %v5073
        %v5586 = vsub.f32 %v2481, %v5074
        %v5587 = vsub.f32 %v2482, %v5075
        %v5588 = vsub.f32 %v2483, %v5076
        %v5589 = vsub.f32 %v2484, %v5077
        %v5590 = vsub.f32 %v2485, %v5078
        %v5591 = vsub.f32 %v2486, %v5079
        %v5592 = vsub.f32 %v2487, %v5080
        %v5593 = vsub.f32 %v2488, %v5081
        %v5594 = vsub.f32 %v2489, %v5082
        %v5595 = vsub.f32 %v2490, %v5083
        %v5596 = vsub.f32 %v2491, %v5084
        %v5597 = vsub.f32 %v2492, %v5085
        %v5598 = vsub.f32 %v2493, %v5086
        %v5599 = vsub.f32 %v2494, %v5087
        %v5600 = vsub.f32 %v2495, %v5088
        %v5601 = vsub.f32 %v2496, %v5089
        %v5602 = vsub.f32 %v2497, %v5090
        %v5603 = vsub.f32 %v2498, %v5091
        %v5604 = vsub.f32 %v2499, %v5092
        %v5605 = vsub.f32 %v2500, %v5093
        %v5606 = vsub.f32 %v2501, %v5094
        %v5607 = vsub.f32 %v2502, %v5095
        %v5608 = vsub.f32 %v2503, %v5096
        %v5609 = vsub.f32 %v2504, %v5097
        %v5610 = vsub.f32 %v2505, %v5098
        %v5611 = vsub.f32 %v2506, %v5099
        %v5612 = vsub.f32 %v2507, %v5100
        %v5613 = vsub.f32 %v2508, %v5101
        %v5614 = vsub.f32 %v2509, %v5102
        %v5615 = vsub.f32 %v2510, %v5103
        %v5616 = vsub.f32 %v2511, %v5104
        %v5617 = vsub.f32 %v2512, %v5105
        %v5618 = vsub.f32 %v2513, %v5106
        %v5619 = vsub.f32 %v2514, %v5107
        %v5620 = vsub.f32 %v2515, %v5108
        %v5621 = vsub.f32 %v2516, %v5109
        %v5622 = vsub.f32 %v2517, %v5110
        %v5623 = vsub.f32 %v2518, %v5111
        %v5624 = vsub.f32 %v2519, %v5112
        %v5625 = vsub.f32 %v2520, %v5113
        %v5626 = vsub.f32 %v2521, %v5114
        %v5627 = vsub.f32 %v2522, %v5115
        %v5628 = vsub.f32 %v2523, %v5116
        %v5629 = vsub.f32 %v2524, %v5117
        %v5630 = vsub.f32 %v2525, %v5118
        %v5631 = vsub.f32 %v2526, %v5119
        %v5632 = vsub.f32 %v2527, %v5120
        %v5633 = vsub.f32 %v2528, %v5121
        %v5634 = vsub.f32 %v2529, %v5122
        %v5635 = vsub.f32 %v2530, %v5123
        %v5636 = vsub.f32 %v2531, %v5124
        %v5637 = vsub.f32 %v2532, %v5125
        %v5638 = vsub.f32 %v2533, %v5126
        %v5639 = vsub.f32 %v2534, %v5127
        %v5640 = vsub.f32 %v2535, %v5128
        %v5641 = vsub.f32 %v2536, %v5129
        %v5642 = vsub.f32 %v2537, %v5130
        %v5643 = vsub.f32 %v2538, %v5131
        %v5644 = vsub.f32 %v2539, %v5132
        %v5645 = vsub.f32 %v2540, %v5133
        %v5646 = vsub.f32 %v2541, %v5134
        %v5647 = vsub.f32 %v2542, %v5135
        %v5648 = vsub.f32 %v2543, %v5136
        %v5649 = vsub.f32 %v2544, %v5137
        %v5650 = vsub.f32 %v2545, %v5138
        %v5651 = vsub.f32 %v2546, %v5139
        %v5652 = vsub.f32 %v2547, %v5140
        %v5653 = vsub.f32 %v2548, %v5141
        %v5654 = vsub.f32 %v2549, %v5142
        %v5655 = vsub.f32 %v2550, %v5143
        %v5656 = vsub.f32 %v2551, %v5144
        %v5657 = vsub.f32 %v2552, %v5145
        %v5658 = vsub.f32 %v2553, %v5146
        %v5659 = vsub.f32 %v2554, %v5147
        %v5660 = vsub.f32 %v2555, %v5148
        %v5661 = vsub.f32 %v2556, %v5149
        %v5662 = vsub.f32 %v2557, %v5150
        %v5663 = vsub.f32 %v2558, %v5151
        %v5664 = vsub.f32 %v2559, %v5152
        %v5665 = vsub.f32 %v2560, %v5153
        %v5666 = vsub.f32 %v2561, %v5154
        %v5667 = vsub.f32 %v2562, %v5155
        %v5668 = vsub.f32 %v2563, %v5156
        %v5669 = vsub.f32 %v2564, %v5157
        %v5670 = vsub.f32 %v2565, %v5158
        %v5671 = vsub.f32 %v2566, %v5159
        %v5672 = vsub.f32 %v2567, %v5160
        %v5673 = vsub.f32 %v2568, %v5161
        %v5674 = vsub.f32 %v2569, %v5162
        %v5675 = vsub.f32 %v2570, %v5163
        %v5676 = vsub.f32 %v2571, %v5164
        %v5677 = vsub.f32 %v2572, %v5165
        %v5678 = vsub.f32 %v2573, %v5166
        %v5679 = vsub.f32 %v2574, %v5167
        %v5680 = vsub.f32 %v2575, %v5168
        %v5681 = vsub.f32 %v2576, %v5169
        %v5682 = vsub.f32 %v2577, %v5170
        %v5683 = vsub.f32 %v2578, %v5171
        %v5684 = vsub.f32 %v2579, %v5172
        %v5685 = vsub.f32 %v2580, %v5173
        %v5686 = vsub.f32 %v2581, %v5174
        %v5687 = vsub.f32 %v2582, %v5175
        %v5688 = vsub.f32 %v2583, %v5176
        %v5689 = vsub.f32 %v2584, %v5177
        %v5690 = vsub.f32 %v2585, %v5178
        %v5691 = vsub.f32 %v2586, %v5179
        %v5692 = vsub.f32 %v2587, %v5180
        %v5693 = vsub.f32 %v2588, %v5181
        %v5694 = vsub.f32 %v2589, %v5182
        %v5695 = vsub.f32 %v2590, %v5183
        %v5696 = vsub.f32 %v2591, %v5184
        %v5697 = vsub.f32 %v2592, %v5185
        %v5698 = vsub.f32 %v2593, %v5186
        %v5699 = vsub.f32 %v2594, %v5187
        %v5700 = vsub.f32 %v2595, %v5188
        %v5701 = vsub.f32 %v2596, %v5189
        %v5702 = vsub.f32 %v2597, %v5190
        %v5703 = vsub.f32 %v2598, %v5191
        %v5704 = vsub.f32 %v2599, %v5192
        %v5705 = vsub.f32 %v2600, %v5193
        %v5706 = vsub.f32 %v2601, %v5194
        %v5707 = vsub.f32 %v2602, %v5195
        %v5708 = vsub.f32 %v2603, %v5196
        %v5709 = vsub.f32 %v2604, %v5197
        %v5710 = vsub.f32 %v2605, %v5198
        %v5711 = vsub.f32 %v2606, %v5199
        %v5712 = vsub.f32 %v2607, %v5200
        %v5713 = vsub.f32 %v2608, %v5201
        %v5714 = vsub.f32 %v2609, %v5202
        %v5715 = vsub.f32 %v2610, %v5203
        %v5716 = vsub.f32 %v2611, %v5204
        %v5717 = vsub.f32 %v2612, %v5205
        %v5718 = vsub.f32 %v2613, %v5206
        %v5719 = vsub.f32 %v2614, %v5207
        %v5720 = vsub.f32 %v2615, %v5208
        %v5721 = vsub.f32 %v2616, %v5209
        %v5722 = vsub.f32 %v2617, %v5210
        %v5723 = vsub.f32 %v2618, %v5211
        %v5724 = vsub.f32 %v2619, %v5212
        %v5725 = vsub.f32 %v2620, %v5213
        %v5726 = vsub.f32 %v2621, %v5214
        %v5727 = vsub.f32 %v2622, %v5215
        %v5728 = vsub.f32 %v2623, %v5216
        %v5729 = vsub.f32 %v2624, %v5217
        %v5730 = vsub.f32 %v2625, %v5218
        %v5731 = vsub.f32 %v2626, %v5219
        %v5732 = vsub.f32 %v2627, %v5220
        %v5733 = vsub.f32 %v2628, %v5221
        %v5734 = vsub.f32 %v2629, %v5222
        %v5735 = vsub.f32 %v2630, %v5223
        %v5736 = vsub.f32 %v2631, %v5224
        %v5737 = vsub.f32 %v2632, %v5225
        %v5738 = vsub.f32 %v2633, %v5226
        %v5739 = vsub.f32 %v2634, %v5227
        %v5740 = vsub.f32 %v2635, %v5228
        %v5741 = vsub.f32 %v2636, %v5229
        %v5742 = vsub.f32 %v2637, %v5230
        %v5743 = vsub.f32 %v2638, %v5231
        %v5744 = vsub.f32 %v2639, %v5232
        %v5745 = vsub.f32 %v2640, %v5233
        %v5746 = vsub.f32 %v2641, %v5234
        %v5747 = vsub.f32 %v2642, %v5235
        %v5748 = vsub.f32 %v2643, %v5236
        %v5749 = vsub.f32 %v2644, %v5237
        %v5750 = vsub.f32 %v2645, %v5238
        %v5751 = vsub.f32 %v2646, %v5239
        %v5752 = vsub.f32 %v2647, %v5240
        %v5753 = vsub.f32 %v2648, %v5241
        %v5754 = vsub.f32 %v2649, %v5242
        %v5755 = vsub.f32 %v2650, %v5243
        %v5756 = vsub.f32 %v2651, %v5244
        %v5757 = vsub.f32 %v2652, %v5245
        %v5758 = vsub.f32 %v2653, %v5246
        %v5759 = vsub.f32 %v2654, %v5247
        %v5760 = vsub.f32 %v2655, %v5248
        %v5761 = vsub.f32 %v2656, %v5249
        %v5762 = vsub.f32 %v2657, %v5250
        %v5763 = vsub.f32 %v2658, %v5251
        %v5764 = vsub.f32 %v2659, %v5252
        %v5765 = vsub.f32 %v2660, %v5253
        %v5766 = vsub.f32 %v2661, %v5254
        %v5767 = vsub.f32 %v2662, %v5255
        %v5768 = vsub.f32 %v2663, %v5256
        %v5769 = vsub.f32 %v2664, %v5257
        %v5770 = vsub.f32 %v2665, %v5258
        %v5771 = vsub.f32 %v2666, %v5259
        %v5772 = vsub.f32 %v2667, %v5260
        %v5773 = vsub.f32 %v2668, %v5261
        %v5774 = vsub.f32 %v2669, %v5262
        %v5775 = vsub.f32 %v2670, %v5263
        %v5776 = vsub.f32 %v2671, %v5264
        %v5777 = vsub.f32 %v2672, %v5265
        %v5778 = vsub.f32 %v2673, %v5266
        %v5779 = vsub.f32 %v2674, %v5267
        %v5780 = vsub.f32 %v2675, %v5268
        %v5781 = vsub.f32 %v2676, %v5269
        %v5782 = vsub.f32 %v2677, %v5270
        %v5783 = vsub.f32 %v2678, %v5271
        %v5784 = vsub.f32 %v2679, %v5272
        %v5785 = vsub.f32 %v2680, %v5273
        %v5786 = vsub.f32 %v2681, %v5274
        %v5787 = vsub.f32 %v2682, %v5275
        %v5788 = vsub.f32 %v2683, %v5276
        %v5789 = vsub.f32 %v2684, %v5277
        %v5790 = vsub.f32 %v2685, %v5278
        %v5791 = vsub.f32 %v2686, %v5279
        %v5792 = vsub.f32 %v2687, %v5280
        %v5793 = vsub.f32 %v2688, %v5281
        %v5794 = vsub.f32 %v2689, %v5282
        %v5795 = vsub.f32 %v2690, %v5283
        %v5796 = vsub.f32 %v2691, %v5284
        %v5797 = vsub.f32 %v2692, %v5285
        %v5798 = vsub.f32 %v2693, %v5286
        %v5799 = vsub.f32 %v2694, %v5287
        %v5800 = vsub.f32 %v2695, %v5288
        %v5801 = vsub.f32 %v2696, %v5289
        %v5802 = vsub.f32 %v2697, %v5290
        %v5803 = vsub.f32 %v2698, %v5291
        %v5804 = vsub.f32 %v2699, %v5292
        %v5805 = vsub.f32 %v2700, %v5293
        %v5806 = vsub.f32 %v2701, %v5294
        %v5807 = vsub.f32 %v2702, %v5295
        %v5808 = vsub.f32 %v2703, %v5296
        %v5809 = vsub.f32 %v2704, %v5297
        %v5810 = vsub.f32 %v2705, %v5298
        %v5811 = vsub.f32 %v2706, %v5299
        %v5812 = vsub.f32 %v2707, %v5300
        %v5813 = vsub.f32 %v2708, %v5301
        %v5814 = vsub.f32 %v2709, %v5302
        %v5815 = vsub.f32 %v2710, %v5303
        %v5816 = vsub.f32 %v2711, %v5304
        %v5817 = vsub.f32 %v2712, %v5305
        %v5818 = vsub.f32 %v2713, %v5306
        %v5819 = vsub.f32 %v2714, %v5307
        %v5820 = vsub.f32 %v2715, %v5308
        %v5821 = vsub.f32 %v2716, %v5309
        %v5822 = vsub.f32 %v2717, %v5310
        %v5823 = vsub.f32 %v2718, %v5311
        %v5824 = vsub.f32 %v2719, %v5312
        %v5825 = vsub.f32 %v2720, %v5313
        %v5826 = vsub.f32 %v2721, %v5314
        %v5827 = vsub.f32 %v2722, %v5315
        %v5828 = vsub.f32 %v2723, %v5316
        %v5829 = vsub.f32 %v2724, %v5317
        %v5830 = vsub.f32 %v2725, %v5318
        %v5831 = vsub.f32 %v2726, %v5319
        %v5832 = vsub.f32 %v2727, %v5320
        %v5833 = vsub.f32 %v2728, %v5321
        %v5834 = vsub.f32 %v2729, %v5322
        %v5835 = vsub.f32 %v2730, %v5323
        %v5836 = vsub.f32 %v2731, %v5324
        %v5837 = vsub.f32 %v2732, %v5325
        %v5838 = vsub.f32 %v2733, %v5326
        %v5839 = vsub.f32 %v2734, %v5327
        %v5840 = vsub.f32 %v2735, %v5328
        %v5841 = vsub.f32 %v2736, %v5329
        %v5842 = vsub.f32 %v2737, %v5330
        %v5843 = vsub.f32 %v2738, %v5331
        %v5844 = vsub.f32 %v2739, %v5332
        %v5845 = vsub.f32 %v2740, %v5333
        %v5846 = vsub.f32 %v2741, %v5334
        %v5847 = vsub.f32 %v2742, %v5335
        %v5848 = vsub.f32 %v2743, %v5336
        %v5849 = vsub.f32 %v2744, %v5337
        %v5850 = vsub.f32 %v2745, %v5338
        %v5851 = vsub.f32 %v2746, %v5339
        %v5852 = vsub.f32 %v2747, %v5340
        %v5853 = vsub.f32 %v2748, %v5341
        %v5854 = vsub.f32 %v2749, %v5342
        %v5855 = vsub.f32 %v2750, %v5343
        %v5856 = vsub.f32 %v2751, %v5344
        %v5857 = vsub.f32 %v2752, %v5345
        %v5858 = vsub.f32 %v2753, %v5346
        %v5859 = vsub.f32 %v2754, %v5347
        %v5860 = vsub.f32 %v2755, %v5348
        %v5861 = vsub.f32 %v2756, %v5349
        %v5862 = vsub.f32 %v2757, %v5350
        %v5863 = vsub.f32 %v2758, %v5351
        %v5864 = vsub.f32 %v2759, %v5352
        %v5865 = vsub.f32 %v2760, %v5353
        %v5866 = vsub.f32 %v2761, %v5354
        %v5867 = vsub.f32 %v2762, %v5355
        %v5868 = vsub.f32 %v2763, %v5356
        %v5869 = vsub.f32 %v2764, %v5357
        %v5870 = vsub.f32 %v2765, %v5358
        %v5871 = vsub.f32 %v2766, %v5359
        %v5872 = vsub.f32 %v2767, %v5360
        %v5873 = vsub.f32 %v2768, %v5361
        %v5874 = vsub.f32 %v2769, %v5362
        %v5875 = vsub.f32 %v2770, %v5363
        %v5876 = vsub.f32 %v2771, %v5364
        %v5877 = vsub.f32 %v2772, %v5365
        %v5878 = vsub.f32 %v2773, %v5366
        %v5879 = vsub.f32 %v2774, %v5367
        %v5880 = vsub.f32 %v2775, %v5368
        %v5881 = vsub.f32 %v2776, %v5369
        %v5882 = vsub.f32 %v2777, %v5370
        %v5883 = vsub.f32 %v2778, %v5371
        %v5884 = vsub.f32 %v2779, %v5372
        %v5885 = vsub.f32 %v2780, %v5373
        %v5886 = vsub.f32 %v2781, %v5374
        %v5887 = vsub.f32 %v2782, %v5375
        %v5888 = vsub.f32 %v2783, %v5376
        %v5889 = vsub.f32 %v2784, %v5377
        %v5890 = vsub.f32 %v2785, %v5378
        %v5891 = vsub.f32 %v2786, %v5379
        %v5892 = vsub.f32 %v2787, %v5380
        %v5893 = vsub.f32 %v2788, %v5381
        %v5894 = vsub.f32 %v2789, %v5382
        %v5895 = vsub.f32 %v2790, %v5383
        %v5896 = vsub.f32 %v2791, %v5384
        %v5897 = vsub.f32 %v2792, %v5385
        %v5898 = vsub.f32 %v2793, %v5386
        %v5899 = vsub.f32 %v2794, %v5387
        %v5900 = vsub.f32 %v2795, %v5388
        %v5901 = vsub.f32 %v2796, %v5389
        %v5902 = vsub.f32 %v2797, %v5390
        %v5903 = vsub.f32 %v2798, %v5391
        %v5904 = vsub.f32 %v2799, %v5392
        %v5905 = vsub.f32 %v2800, %v5393
        %v5906 = vsub.f32 %v2801, %v5394
        %v5907 = vsub.f32 %v2802, %v5395
        %v5908 = vsub.f32 %v2803, %v5396
        %v5909 = vsub.f32 %v2804, %v5397
        %v5910 = vsub.f32 %v2805, %v5398
        %v5911 = vsub.f32 %v2806, %v5399
        %v5912 = vsub.f32 %v2807, %v5400
        %v5913 = vsub.f32 %v2808, %v5401
        %v5914 = vsub.f32 %v2809, %v5402
        %v5915 = vsub.f32 %v2810, %v5403
        %v5916 = vsub.f32 %v2811, %v5404
        %v5917 = vsub.f32 %v2812, %v5405
        %v5918 = vsub.f32 %v2813, %v5406
        %v5919 = vsub.f32 %v2814, %v5407
        %v5920 = vsub.f32 %v2815, %v5408
        %v5921 = vsub.f32 %v2816, %v5409
        %v5922 = vsub.f32 %v2817, %v5410
        %v5923 = vsub.f32 %v2818, %v5411
        %v5924 = vsub.f32 %v2819, %v5412
        %v5925 = vsub.f32 %v2820, %v5413
        %v5926 = vsub.f32 %v2821, %v5414
        %v5927 = vsub.f32 %v2822, %v5415
        %v5928 = vsub.f32 %v2823, %v5416
        %v5929 = vsub.f32 %v2824, %v5417
        %v5930 = vsub.f32 %v2825, %v5418
        %v5931 = vsub.f32 %v2826, %v5419
        %v5932 = vsub.f32 %v2827, %v5420
        %v5933 = vsub.f32 %v2828, %v5421
        %v5934 = vsub.f32 %v2829, %v5422
        %v5935 = vsub.f32 %v2830, %v5423
        %v5936 = vsub.f32 %v2831, %v5424
        %v5937 = vsub.f32 %v2832, %v5425
        %v5938 = vsub.f32 %v2833, %v5426
        %v5939 = vsub.f32 %v2834, %v5427
        %v5940 = vsub.f32 %v2835, %v5428
        %v5941 = vsub.f32 %v2836, %v5429
        %v5942 = vsub.f32 %v2837, %v5430
        %v5943 = vsub.f32 %v2838, %v5431
        %v5944 = vsub.f32 %v2839, %v5432
        %v5945 = vsub.f32 %v2840, %v5433
        %v5946 = vsub.f32 %v2841, %v5434
        %v5947 = vsub.f32 %v2842, %v5435
        %v5948 = vsub.f32 %v2843, %v5436
        %v5949 = vsub.f32 %v2844, %v5437
        %v5950 = vsub.f32 %v2845, %v5438
        %v5951 = vsub.f32 %v2846, %v5439
        %v5952 = vsub.f32 %v2847, %v5440
        %v5953 = vsub.f32 %v2848, %v5441
        %v5954 = vsub.f32 %v2849, %v5442
        %v5955 = vsub.f32 %v2850, %v5443
        %v5956 = vsub.f32 %v2851, %v5444
        %v5957 = vsub.f32 %v2852, %v5445
        %v5958 = vsub.f32 %v2853, %v5446
        %v5959 = vsub.f32 %v2854, %v5447
        %v5960 = vsub.f32 %v2855, %v5448
        %v5961 = vsub.f32 %v2856, %v5449
        %v5962 = vsub.f32 %v2857, %v5450
        %v5963 = vsub.f32 %v2858, %v5451
        %v5964 = vsub.f32 %v2859, %v5452
        %v5965 = vsub.f32 %v2860, %v5453
        %v5966 = vsub.f32 %v2861, %v5454
        %v5967 = vsub.f32 %v2862, %v5455
        %v5968 = vsub.f32 %v2863, %v5456
        %v5969 = vsub.f32 %v2864, %v5457
        %v5970 = vsub.f32 %v2865, %v5458
        %v5971 = vsub.f32 %v2866, %v5459
        %v5972 = vsub.f32 %v2867, %v5460
        %v5973 = vsub.f32 %v2868, %v5461
        %v5974 = vsub.f32 %v2869, %v5462
        %v5975 = vsub.f32 %v2870, %v5463
        %v5976 = vsub.f32 %v2871, %v5464
        %v5977 = vsub.f32 %v2872, %v5465
        %v5978 = vsub.f32 %v2873, %v5466
        %v5979 = vsub.f32 %v2874, %v5467
        %v5980 = vsub.f32 %v2875, %v5468
        %v5981 = vsub.f32 %v2876, %v5469
        %v5982 = vsub.f32 %v2877, %v5470
        %v5983 = vsub.f32 %v2878, %v5471
        %v5984 = vsub.f32 %v2879, %v5472
        %v5985 = vsub.f32 %v2880, %v5473
        %v5986 = vsub.f32 %v2881, %v5474
        %v5987 = vsub.f32 %v2882, %v5475
        %v5988 = vsub.f32 %v2883, %v5476
        %v5989 = vsub.f32 %v2884, %v5477
        %v5990 = vsub.f32 %v2885, %v5478
        %v5991 = vsub.f32 %v2886, %v5479
        %v5992 = vsub.f32 %v2887, %v5480
        %v5993 = vsub.f32 %v2888, %v5481
        %v5994 = vsub.f32 %v2889, %v5482
        %v5995 = vsub.f32 %v2890, %v5483
        %v5996 = vmul.f32 %v4460, %v5484
        %v5997 = vmul.f32 %v4461, %v5485
        %v5998 = vmul.f32 %v4462, %v5486
        %v5999 = vmul.f32 %v4463, %v5487
        %v6000 = vmul.f32 %v4464, %v5488
        %v6001 = vmul.f32 %v4465, %v5489
        %v6002 = vmul.f32 %v4466, %v5490
        %v6003 = vmul.f32 %v4467, %v5491
        %v6004 = vmul.f32 %v4468, %v5492
        %v6005 = vmul.f32 %v4469, %v5493
        %v6006 = vmul.f32 %v4470, %v5494
        %v6007 = vmul.f32 %v4471, %v5495
        %v6008 = vmul.f32 %v4472, %v5496
        %v6009 = vmul.f32 %v4473, %v5497
        %v6010 = vmul.f32 %v4474, %v5498
        %v6011 = vmul.f32 %v4475, %v5499
        %v6012 = vmul.f32 %v4476, %v5500
        %v6013 = vmul.f32 %v4477, %v5501
        %v6014 = vmul.f32 %v4478, %v5502
        %v6015 = vmul.f32 %v4479, %v5503
        %v6016 = vmul.f32 %v4480, %v5504
        %v6017 = vmul.f32 %v4481, %v5505
        %v6018 = vmul.f32 %v4482, %v5506
        %v6019 = vmul.f32 %v4483, %v5507
        %v6020 = vmul.f32 %v4484, %v5508
        %v6021 = vmul.f32 %v4485, %v5509
        %v6022 = vmul.f32 %v4486, %v5510
        %v6023 = vmul.f32 %v4487, %v5511
        %v6024 = vmul.f32 %v4488, %v5512
        %v6025 = vmul.f32 %v4489, %v5513
        %v6026 = vmul.f32 %v4490, %v5514
        %v6027 = vmul.f32 %v4491, %v5515
        %v6028 = vmul.f32 %v4492, %v5516
        %v6029 = vmul.f32 %v4493, %v5517
        %v6030 = vmul.f32 %v4494, %v5518
        %v6031 = vmul.f32 %v4495, %v5519
        %v6032 = vmul.f32 %v4496, %v5520
        %v6033 = vmul.f32 %v4497, %v5521
        %v6034 = vmul.f32 %v4498, %v5522
        %v6035 = vmul.f32 %v4499, %v5523
        %v6036 = vmul.f32 %v4500, %v5524
        %v6037 = vmul.f32 %v4501, %v5525
        %v6038 = vmul.f32 %v4502, %v5526
        %v6039 = vmul.f32 %v4503, %v5527
        %v6040 = vmul.f32 %v4504, %v5528
        %v6041 = vmul.f32 %v4505, %v5529
        %v6042 = vmul.f32 %v4506, %v5530
        %v6043 = vmul.f32 %v4507, %v5531
        %v6044 = vmul.f32 %v4508, %v5532
        %v6045 = vmul.f32 %v4509, %v5533
        %v6046 = vmul.f32 %v4510, %v5534
        %v6047 = vmul.f32 %v4511, %v5535
        %v6048 = vmul.f32 %v4512, %v5536
        %v6049 = vmul.f32 %v4513, %v5537
        %v6050 = vmul.f32 %v4514, %v5538
        %v6051 = vmul.f32 %v4515, %v5539
        %v6052 = vmul.f32 %v4516, %v5540
        %v6053 = vmul.f32 %v4517, %v5541
        %v6054 = vmul.f32 %v4518, %v5542
        %v6055 = vmul.f32 %v4519, %v5543
        %v6056 = vmul.f32 %v4520, %v5544
        %v6057 = vmul.f32 %v4521, %v5545
        %v6058 = vmul.f32 %v4522, %v5546
        %v6059 = vmul.f32 %v4523, %v5547
        %v6060 = vmul.f32 %v4524, %v5548
        %v6061 = vmul.f32 %v4525, %v5549
        %v6062 = vmul.f32 %v4526, %v5550
        %v6063 = vmul.f32 %v4527, %v5551
        %v6064 = vmul.f32 %v4528, %v5552
        %v6065 = vmul.f32 %v4529, %v5553
        %v6066 = vmul.f32 %v4530, %v5554
        %v6067 = vmul.f32 %v4531, %v5555
        %v6068 = vmul.f32 %v4532, %v5556
        %v6069 = vmul.f32 %v4533, %v5557
        %v6070 = vmul.f32 %v4534, %v5558
        %v6071 = vmul.f32 %v4535, %v5559
        %v6072 = vmul.f32 %v4536, %v5560
        %v6073 = vmul.f32 %v4537, %v5561
        %v6074 = vmul.f32 %v4538, %v5562
        %v6075 = vmul.f32 %v4539, %v5563
        %v6076 = vmul.f32 %v4540, %v5564
        %v6077 = vmul.f32 %v4541, %v5565
        %v6078 = vmul.f32 %v4542, %v5566
        %v6079 = vmul.f32 %v4543, %v5567
        %v6080 = vmul.f32 %v4544, %v5568
        %v6081 = vmul.f32 %v4545, %v5569
        %v6082 = vmul.f32 %v4546, %v5570
        %v6083 = vmul.f32 %v4547, %v5571
        %v6084 = vmul.f32 %v4548, %v5572
        %v6085 = vmul.f32 %v4549, %v5573
        %v6086 = vmul.f32 %v4550, %v5574
        %v6087 = vmul.f32 %v4551, %v5575
        %v6088 = vmul.f32 %v4552, %v5576
        %v6089 = vmul.f32 %v4553, %v5577
        %v6090 = vmul.f32 %v4554, %v5578
        %v6091 = vmul.f32 %v4555, %v5579
        %v6092 = vmul.f32 %v4556, %v5580
        %v6093 = vmul.f32 %v4557, %v5581
        %v6094 = vmul.f32 %v4558, %v5582
        %v6095 = vmul.f32 %v4559, %v5583
        %v6096 = vmul.f32 %v4560, %v5584
        %v6097 = vmul.f32 %v4561, %v5585
        %v6098 = vmul.f32 %v4562, %v5586
        %v6099 = vmul.f32 %v4563, %v5587
        %v6100 = vmul.f32 %v4564, %v5588
        %v6101 = vmul.f32 %v4565, %v5589
        %v6102 = vmul.f32 %v4566, %v5590
        %v6103 = vmul.f32 %v4567, %v5591
        %v6104 = vmul.f32 %v4568, %v5592
        %v6105 = vmul.f32 %v4569, %v5593
        %v6106 = vmul.f32 %v4570, %v5594
        %v6107 = vmul.f32 %v4571, %v5595
        %v6108 = vmul.f32 %v4572, %v5596
        %v6109 = vmul.f32 %v4573, %v5597
        %v6110 = vmul.f32 %v4574, %v5598
        %v6111 = vmul.f32 %v4575, %v5599
        %v6112 = vmul.f32 %v4576, %v5600
        %v6113 = vmul.f32 %v4577, %v5601
        %v6114 = vmul.f32 %v4578, %v5602
        %v6115 = vmul.f32 %v4579, %v5603
        %v6116 = vmul.f32 %v4580, %v5604
        %v6117 = vmul.f32 %v4581, %v5605
        %v6118 = vmul.f32 %v4582, %v5606
        %v6119 = vmul.f32 %v4583, %v5607
        %v6120 = vmul.f32 %v4584, %v5608
        %v6121 = vmul.f32 %v4585, %v5609
        %v6122 = vmul.f32 %v4586, %v5610
        %v6123 = vmul.f32 %v4587, %v5611
        %v6124 = vmul.f32 %v4588, %v5612
        %v6125 = vmul.f32 %v4589, %v5613
        %v6126 = vmul.f32 %v4590, %v5614
        %v6127 = vmul.f32 %v4591, %v5615
        %v6128 = vmul.f32 %v4592, %v5616
        %v6129 = vmul.f32 %v4593, %v5617
        %v6130 = vmul.f32 %v4594, %v5618
        %v6131 = vmul.f32 %v4595, %v5619
        %v6132 = vmul.f32 %v4596, %v5620
        %v6133 = vmul.f32 %v4597, %v5621
        %v6134 = vmul.f32 %v4598, %v5622
        %v6135 = vmul.f32 %v4599, %v5623
        %v6136 = vmul.f32 %v4600, %v5624
        %v6137 = vmul.f32 %v4601, %v5625
        %v6138 = vmul.f32 %v4602, %v5626
        %v6139 = vmul.f32 %v4603, %v5627
        %v6140 = vmul.f32 %v4604, %v5628
        %v6141 = vmul.f32 %v4605, %v5629
        %v6142 = vmul.f32 %v4606, %v5630
        %v6143 = vmul.f32 %v4607, %v5631
        %v6144 = vmul.f32 %v4608, %v5632
        %v6145 = vmul.f32 %v4609, %v5633
        %v6146 = vmul.f32 %v4610, %v5634
        %v6147 = vmul.f32 %v4611, %v5635
        %v6148 = vmul.f32 %v4612, %v5636
        %v6149 = vmul.f32 %v4613, %v5637
        %v6150 = vmul.f32 %v4614, %v5638
        %v6151 = vmul.f32 %v4615, %v5639
        %v6152 = vmul.f32 %v4616, %v5640
        %v6153 = vmul.f32 %v4617, %v5641
        %v6154 = vmul.f32 %v4618, %v5642
        %v6155 = vmul.f32 %v4619, %v5643
        %v6156 = vmul.f32 %v4620, %v5644
        %v6157 = vmul.f32 %v4621, %v5645
        %v6158 = vmul.f32 %v4622, %v5646
        %v6159 = vmul.f32 %v4623, %v5647
        %v6160 = vmul.f32 %v4624, %v5648
        %v6161 = vmul.f32 %v4625, %v5649
        %v6162 = vmul.f32 %v4626, %v5650
        %v6163 = vmul.f32 %v4627, %v5651
        %v6164 = vmul.f32 %v4628, %v5652
        %v6165 = vmul.f32 %v4629, %v5653
        %v6166 = vmul.f32 %v4630, %v5654
        %v6167 = vmul.f32 %v4631, %v5655
        %v6168 = vmul.f32 %v4632, %v5656
        %v6169 = vmul.f32 %v4633, %v5657
        %v6170 = vmul.f32 %v4634, %v5658
        %v6171 = vmul.f32 %v4635, %v5659
        %v6172 = vmul.f32 %v4636, %v5660
        %v6173 = vmul.f32 %v4637, %v5661
        %v6174 = vmul.f32 %v4638, %v5662
        %v6175 = vmul.f32 %v4639, %v5663
        %v6176 = vmul.f32 %v4640, %v5664
        %v6177 = vmul.f32 %v4641, %v5665
        %v6178 = vmul.f32 %v4642, %v5666
        %v6179 = vmul.f32 %v4643, %v5667
        %v6180 = vmul.f32 %v4644, %v5668
        %v6181 = vmul.f32 %v4645, %v5669
        %v6182 = vmul.f32 %v4646, %v5670
        %v6183 = vmul.f32 %v4647, %v5671
        %v6184 = vmul.f32 %v4648, %v5672
        %v6185 = vmul.f32 %v4649, %v5673
        %v6186 = vmul.f32 %v4650, %v5674
        %v6187 = vmul.f32 %v4651, %v5675
        %v6188 = vmul.f32 %v4652, %v5676
        %v6189 = vmul.f32 %v4653, %v5677
        %v6190 = vmul.f32 %v4654, %v5678
        %v6191 = vmul.f32 %v4655, %v5679
        %v6192 = vmul.f32 %v4656, %v5680
        %v6193 = vmul.f32 %v4657, %v5681
        %v6194 = vmul.f32 %v4658, %v5682
        %v6195 = vmul.f32 %v4659, %v5683
        %v6196 = vmul.f32 %v4660, %v5684
        %v6197 = vmul.f32 %v4661, %v5685
        %v6198 = vmul.f32 %v4662, %v5686
        %v6199 = vmul.f32 %v4663, %v5687
        %v6200 = vmul.f32 %v4664, %v5688
        %v6201 = vmul.f32 %v4665, %v5689
        %v6202 = vmul.f32 %v4666, %v5690
        %v6203 = vmul.f32 %v4667, %v5691
        %v6204 = vmul.f32 %v4668, %v5692
        %v6205 = vmul.f32 %v4669, %v5693
        %v6206 = vmul.f32 %v4670, %v5694
        %v6207 = vmul.f32 %v4671, %v5695
        %v6208 = vmul.f32 %v4672, %v5696
        %v6209 = vmul.f32 %v4673, %v5697
        %v6210 = vmul.f32 %v4674, %v5698
        %v6211 = vmul.f32 %v4675, %v5699
        %v6212 = vmul.f32 %v4676, %v5700
        %v6213 = vmul.f32 %v4677, %v5701
        %v6214 = vmul.f32 %v4678, %v5702
        %v6215 = vmul.f32 %v4679, %v5703
        %v6216 = vmul.f32 %v4680, %v5704
        %v6217 = vmul.f32 %v4681, %v5705
        %v6218 = vmul.f32 %v4682, %v5706
        %v6219 = vmul.f32 %v4683, %v5707
        %v6220 = vmul.f32 %v4684, %v5708
        %v6221 = vmul.f32 %v4685, %v5709
        %v6222 = vmul.f32 %v4686, %v5710
        %v6223 = vmul.f32 %v4687, %v5711
        %v6224 = vmul.f32 %v4688, %v5712
        %v6225 = vmul.f32 %v4689, %v5713
        %v6226 = vmul.f32 %v4690, %v5714
        %v6227 = vmul.f32 %v4691, %v5715
        %v6228 = vmul.f32 %v4692, %v5716
        %v6229 = vmul.f32 %v4693, %v5717
        %v6230 = vmul.f32 %v4694, %v5718
        %v6231 = vmul.f32 %v4695, %v5719
        %v6232 = vmul.f32 %v4696, %v5720
        %v6233 = vmul.f32 %v4697, %v5721
        %v6234 = vmul.f32 %v4698, %v5722
        %v6235 = vmul.f32 %v4699, %v5723
        %v6236 = vmul.f32 %v4700, %v5724
        %v6237 = vmul.f32 %v4701, %v5725
        %v6238 = vmul.f32 %v4702, %v5726
        %v6239 = vmul.f32 %v4703, %v5727
        %v6240 = vmul.f32 %v4704, %v5728
        %v6241 = vmul.f32 %v4705, %v5729
        %v6242 = vmul.f32 %v4706, %v5730
        %v6243 = vmul.f32 %v4707, %v5731
        %v6244 = vmul.f32 %v4708, %v5732
        %v6245 = vmul.f32 %v4709, %v5733
        %v6246 = vmul.f32 %v4710, %v5734
        %v6247 = vmul.f32 %v4711, %v5735
        %v6248 = vmul.f32 %v4712, %v5736
        %v6249 = vmul.f32 %v4713, %v5737
        %v6250 = vmul.f32 %v4714, %v5738
        %v6251 = vmul.f32 %v4715, %v5739
        %v6252 = vmul.f32 %v4716, %v5740
        %v6253 = vmul.f32 %v4717, %v5741
        %v6254 = vmul.f32 %v4718, %v5742
        %v6255 = vmul.f32 %v4719, %v5743
        %v6256 = vmul.f32 %v4720, %v5744
        %v6257 = vmul.f32 %v4721, %v5745
        %v6258 = vmul.f32 %v4722, %v5746
        %v6259 = vmul.f32 %v4723, %v5747
        %v6260 = vmul.f32 %v4724, %v5748
        %v6261 = vmul.f32 %v4725, %v5749
        %v6262 = vmul.f32 %v4726, %v5750
        %v6263 = vmul.f32 %v4727, %v5751
        %v6264 = vmul.f32 %v4728, %v5752
        %v6265 = vmul.f32 %v4729, %v5753
        %v6266 = vmul.f32 %v4730, %v5754
        %v6267 = vmul.f32 %v4731, %v5755
        %v6268 = vmul.f32 %v4732, %v5756
        %v6269 = vmul.f32 %v4733, %v5757
        %v6270 = vmul.f32 %v4734, %v5758
        %v6271 = vmul.f32 %v4735, %v5759
        %v6272 = vmul.f32 %v4736, %v5760
        %v6273 = vmul.f32 %v4737, %v5761
        %v6274 = vmul.f32 %v4738, %v5762
        %v6275 = vmul.f32 %v4739, %v5763
        %v6276 = vmul.f32 %v4740, %v5764
        %v6277 = vmul.f32 %v4741, %v5765
        %v6278 = vmul.f32 %v4742, %v5766
        %v6279 = vmul.f32 %v4743, %v5767
        %v6280 = vmul.f32 %v4744, %v5768
        %v6281 = vmul.f32 %v4745, %v5769
        %v6282 = vmul.f32 %v4746, %v5770
        %v6283 = vmul.f32 %v4747, %v5771
        %v6284 = vmul.f32 %v4748, %v5772
        %v6285 = vmul.f32 %v4749, %v5773
        %v6286 = vmul.f32 %v4750, %v5774
        %v6287 = vmul.f32 %v4751, %v5775
        %v6288 = vmul.f32 %v4752, %v5776
        %v6289 = vmul.f32 %v4753, %v5777
        %v6290 = vmul.f32 %v4754, %v5778
        %v6291 = vmul.f32 %v4755, %v5779
        %v6292 = vmul.f32 %v4756, %v5780
        %v6293 = vmul.f32 %v4757, %v5781
        %v6294 = vmul.f32 %v4758, %v5782
        %v6295 = vmul.f32 %v4759, %v5783
        %v6296 = vmul.f32 %v4760, %v5784
        %v6297 = vmul.f32 %v4761, %v5785
        %v6298 = vmul.f32 %v4762, %v5786
        %v6299 = vmul.f32 %v4763, %v5787
        %v6300 = vmul.f32 %v4764, %v5788
        %v6301 = vmul.f32 %v4765, %v5789
        %v6302 = vmul.f32 %v4766, %v5790
        %v6303 = vmul.f32 %v4767, %v5791
        %v6304 = vmul.f32 %v4768, %v5792
        %v6305 = vmul.f32 %v4769, %v5793
        %v6306 = vmul.f32 %v4770, %v5794
        %v6307 = vmul.f32 %v4771, %v5795
        %v6308 = vmul.f32 %v4772, %v5796
        %v6309 = vmul.f32 %v4773, %v5797
        %v6310 = vmul.f32 %v4774, %v5798
        %v6311 = vmul.f32 %v4775, %v5799
        %v6312 = vmul.f32 %v4776, %v5800
        %v6313 = vmul.f32 %v4777, %v5801
        %v6314 = vmul.f32 %v4778, %v5802
        %v6315 = vmul.f32 %v4779, %v5803
        %v6316 = vmul.f32 %v4780, %v5804
        %v6317 = vmul.f32 %v4781, %v5805
        %v6318 = vmul.f32 %v4782, %v5806
        %v6319 = vmul.f32 %v4783, %v5807
        %v6320 = vmul.f32 %v4784, %v5808
        %v6321 = vmul.f32 %v4785, %v5809
        %v6322 = vmul.f32 %v4786, %v5810
        %v6323 = vmul.f32 %v4787, %v5811
        %v6324 = vmul.f32 %v4788, %v5812
        %v6325 = vmul.f32 %v4789, %v5813
        %v6326 = vmul.f32 %v4790, %v5814
        %v6327 = vmul.f32 %v4791, %v5815
        %v6328 = vmul.f32 %v4792, %v5816
        %v6329 = vmul.f32 %v4793, %v5817
        %v6330 = vmul.f32 %v4794, %v5818
        %v6331 = vmul.f32 %v4795, %v5819
        %v6332 = vmul.f32 %v4796, %v5820
        %v6333 = vmul.f32 %v4797, %v5821
        %v6334 = vmul.f32 %v4798, %v5822
        %v6335 = vmul.f32 %v4799, %v5823
        %v6336 = vmul.f32 %v4800, %v5824
        %v6337 = vmul.f32 %v4801, %v5825
        %v6338 = vmul.f32 %v4802, %v5826
        %v6339 = vmul.f32 %v4803, %v5827
        %v6340 = vmul.f32 %v4804, %v5828
        %v6341 = vmul.f32 %v4805, %v5829
        %v6342 = vmul.f32 %v4806, %v5830
        %v6343 = vmul.f32 %v4807, %v5831
        %v6344 = vmul.f32 %v4808, %v5832
        %v6345 = vmul.f32 %v4809, %v5833
        %v6346 = vmul.f32 %v4810, %v5834
        %v6347 = vmul.f32 %v4811, %v5835
        %v6348 = vmul.f32 %v4812, %v5836
        %v6349 = vmul.f32 %v4813, %v5837
        %v6350 = vmul.f32 %v4814, %v5838
        %v6351 = vmul.f32 %v4815, %v5839
        %v6352 = vmul.f32 %v4816, %v5840
        %v6353 = vmul.f32 %v4817, %v5841
        %v6354 = vmul.f32 %v4818, %v5842
        %v6355 = vmul.f32 %v4819, %v5843
        %v6356 = vmul.f32 %v4820, %v5844
        %v6357 = vmul.f32 %v4821, %v5845
        %v6358 = vmul.f32 %v4822, %v5846
        %v6359 = vmul.f32 %v4823, %v5847
        %v6360 = vmul.f32 %v4824, %v5848
        %v6361 = vmul.f32 %v4825, %v5849
        %v6362 = vmul.f32 %v4826, %v5850
        %v6363 = vmul.f32 %v4827, %v5851
        %v6364 = vmul.f32 %v4828, %v5852
        %v6365 = vmul.f32 %v4829, %v5853
        %v6366 = vmul.f32 %v4830, %v5854
        %v6367 = vmul.f32 %v4831, %v5855
        %v6368 = vmul.f32 %v4832, %v5856
        %v6369 = vmul.f32 %v4833, %v5857
        %v6370 = vmul.f32 %v4834, %v5858
        %v6371 = vmul.f32 %v4835, %v5859
        %v6372 = vmul.f32 %v4836, %v5860
        %v6373 = vmul.f32 %v4837, %v5861
        %v6374 = vmul.f32 %v4838, %v5862
        %v6375 = vmul.f32 %v4839, %v5863
        %v6376 = vmul.f32 %v4840, %v5864
        %v6377 = vmul.f32 %v4841, %v5865
        %v6378 = vmul.f32 %v4842, %v5866
        %v6379 = vmul.f32 %v4843, %v5867
        %v6380 = vmul.f32 %v4844, %v5868
        %v6381 = vmul.f32 %v4845, %v5869
        %v6382 = vmul.f32 %v4846, %v5870
        %v6383 = vmul.f32 %v4847, %v5871
        %v6384 = vmul.f32 %v4848, %v5872
        %v6385 = vmul.f32 %v4849, %v5873
        %v6386 = vmul.f32 %v4850, %v5874
        %v6387 = vmul.f32 %v4851, %v5875
        %v6388 = vmul.f32 %v4852, %v5876
        %v6389 = vmul.f32 %v4853, %v5877
        %v6390 = vmul.f32 %v4854, %v5878
        %v6391 = vmul.f32 %v4855, %v5879
        %v6392 = vmul.f32 %v4856, %v5880
        %v6393 = vmul.f32 %v4857, %v5881
        %v6394 = vmul.f32 %v4858, %v5882
        %v6395 = vmul.f32 %v4859, %v5883
        %v6396 = vmul.f32 %v4860, %v5884
        %v6397 = vmul.f32 %v4861, %v5885
        %v6398 = vmul.f32 %v4862, %v5886
        %v6399 = vmul.f32 %v4863, %v5887
        %v6400 = vmul.f32 %v4864, %v5888
        %v6401 = vmul.f32 %v4865, %v5889
        %v6402 = vmul.f32 %v4866, %v5890
        %v6403 = vmul.f32 %v4867, %v5891
        %v6404 = vmul.f32 %v4868, %v5892
        %v6405 = vmul.f32 %v4869, %v5893
        %v6406 = vmul.f32 %v4870, %v5894
        %v6407 = vmul.f32 %v4871, %v5895
        %v6408 = vmul.f32 %v4872, %v5896
        %v6409 = vmul.f32 %v4873, %v5897
        %v6410 = vmul.f32 %v4874, %v5898
        %v6411 = vmul.f32 %v4875, %v5899
        %v6412 = vmul.f32 %v4876, %v5900
        %v6413 = vmul.f32 %v4877, %v5901
        %v6414 = vmul.f32 %v4878, %v5902
        %v6415 = vmul.f32 %v4879, %v5903
        %v6416 = vmul.f32 %v4880, %v5904
        %v6417 = vmul.f32 %v4881, %v5905
        %v6418 = vmul.f32 %v4882, %v5906
        %v6419 = vmul.f32 %v4883, %v5907
        %v6420 = vmul.f32 %v4884, %v5908
        %v6421 = vmul.f32 %v4885, %v5909
        %v6422 = vmul.f32 %v4886, %v5910
        %v6423 = vmul.f32 %v4887, %v5911
        %v6424 = vmul.f32 %v4888, %v5912
        %v6425 = vmul.f32 %v4889, %v5913
        %v6426 = vmul.f32 %v4890, %v5914
        %v6427 = vmul.f32 %v4891, %v5915
        %v6428 = vmul.f32 %v4892, %v5916
        %v6429 = vmul.f32 %v4893, %v5917
        %v6430 = vmul.f32 %v4894, %v5918
        %v6431 = vmul.f32 %v4895, %v5919
        %v6432 = vmul.f32 %v4896, %v5920
        %v6433 = vmul.f32 %v4897, %v5921
        %v6434 = vmul.f32 %v4898, %v5922
        %v6435 = vmul.f32 %v4899, %v5923
        %v6436 = vmul.f32 %v4900, %v5924
        %v6437 = vmul.f32 %v4901, %v5925
        %v6438 = vmul.f32 %v4902, %v5926
        %v6439 = vmul.f32 %v4903, %v5927
        %v6440 = vmul.f32 %v4904, %v5928
        %v6441 = vmul.f32 %v4905, %v5929
        %v6442 = vmul.f32 %v4906, %v5930
        %v6443 = vmul.f32 %v4907, %v5931
        %v6444 = vmul.f32 %v4908, %v5932
        %v6445 = vmul.f32 %v4909, %v5933
        %v6446 = vmul.f32 %v4910, %v5934
        %v6447 = vmul.f32 %v4911, %v5935
        %v6448 = vmul.f32 %v4912, %v5936
        %v6449 = vmul.f32 %v4913, %v5937
        %v6450 = vmul.f32 %v4914, %v5938
        %v6451 = vmul.f32 %v4915, %v5939
        %v6452 = vmul.f32 %v4916, %v5940
        %v6453 = vmul.f32 %v4917, %v5941
        %v6454 = vmul.f32 %v4918, %v5942
        %v6455 = vmul.f32 %v4919, %v5943
        %v6456 = vmul.f32 %v4920, %v5944
        %v6457 = vmul.f32 %v4921, %v5945
        %v6458 = vmul.f32 %v4922, %v5946
        %v6459 = vmul.f32 %v4923, %v5947
        %v6460 = vmul.f32 %v4924, %v5948
        %v6461 = vmul.f32 %v4925, %v5949
        %v6462 = vmul.f32 %v4926, %v5950
        %v6463 = vmul.f32 %v4927, %v5951
        %v6464 = vmul.f32 %v4928, %v5952
        %v6465 = vmul.f32 %v4929, %v5953
        %v6466 = vmul.f32 %v4930, %v5954
        %v6467 = vmul.f32 %v4931, %v5955
        %v6468 = vmul.f32 %v4932, %v5956
        %v6469 = vmul.f32 %v4933, %v5957
        %v6470 = vmul.f32 %v4934, %v5958
        %v6471 = vmul.f32 %v4935, %v5959
        %v6472 = vmul.f32 %v4936, %v5960
        %v6473 = vmul.f32 %v4937, %v5961
        %v6474 = vmul.f32 %v4938, %v5962
        %v6475 = vmul.f32 %v4939, %v5963
        %v6476 = vmul.f32 %v4940, %v5964
        %v6477 = vmul.f32 %v4941, %v5965
        %v6478 = vmul.f32 %v4942, %v5966
        %v6479 = vmul.f32 %v4943, %v5967
        %v6480 = vmul.f32 %v4944, %v5968
        %v6481 = vmul.f32 %v4945, %v5969
        %v6482 = vmul.f32 %v4946, %v5970
        %v6483 = vmul.f32 %v4947, %v5971
        %v6484 = vmul.f32 %v4948, %v5972
        %v6485 = vmul.f32 %v4949, %v5973
        %v6486 = vmul.f32 %v4950, %v5974
        %v6487 = vmul.f32 %v4951, %v5975
        %v6488 = vmul.f32 %v4952, %v5976
        %v6489 = vmul.f32 %v4953, %v5977
        %v6490 = vmul.f32 %v4954, %v5978
        %v6491 = vmul.f32 %v4955, %v5979
        %v6492 = vmul.f32 %v4956, %v5980
        %v6493 = vmul.f32 %v4957, %v5981
        %v6494 = vmul.f32 %v4958, %v5982
        %v6495 = vmul.f32 %v4959, %v5983
        %v6496 = vmul.f32 %v4960, %v5984
        %v6497 = vmul.f32 %v4961, %v5985
        %v6498 = vmul.f32 %v4962, %v5986
        %v6499 = vmul.f32 %v4963, %v5987
        %v6500 = vmul.f32 %v4964, %v5988
        %v6501 = vmul.f32 %v4965, %v5989
        %v6502 = vmul.f32 %v4966, %v5990
        %v6503 = vmul.f32 %v4967, %v5991
        %v6504 = vmul.f32 %v4968, %v5992
        %v6505 = vmul.f32 %v4969, %v5993
        %v6506 = vmul.f32 %v4970, %v5994
        %v6507 = vmul.f32 %v4971, %v5995
        %v6508 = vrot.slane %v5996, 4
        %v6509 = vadd.f32 %v5996, %v6508
        %v6510 = vrot.slane %v6509, 2
        %v6511 = vadd.f32 %v6509, %v6510
        %v6512 = vrot.slane %v6511, 1
        %v6513 = vadd.f32 %v6511, %v6512
        %v6514 = vrot.slane %v5997, 4
        %v6515 = vadd.f32 %v5997, %v6514
        %v6516 = vrot.slane %v6515, 2
        %v6517 = vadd.f32 %v6515, %v6516
        %v6518 = vrot.slane %v6517, 1
        %v6519 = vadd.f32 %v6517, %v6518
        %v6520 = vrot.slane %v5998, 4
        %v6521 = vadd.f32 %v5998, %v6520
        %v6522 = vrot.slane %v6521, 2
        %v6523 = vadd.f32 %v6521, %v6522
        %v6524 = vrot.slane %v6523, 1
        %v6525 = vadd.f32 %v6523, %v6524
        %v6526 = vrot.slane %v5999, 4
        %v6527 = vadd.f32 %v5999, %v6526
        %v6528 = vrot.slane %v6527, 2
        %v6529 = vadd.f32 %v6527, %v6528
        %v6530 = vrot.slane %v6529, 1
        %v6531 = vadd.f32 %v6529, %v6530
        %v6532 = vrot.slane %v6000, 4
        %v6533 = vadd.f32 %v6000, %v6532
        %v6534 = vrot.slane %v6533, 2
        %v6535 = vadd.f32 %v6533, %v6534
        %v6536 = vrot.slane %v6535, 1
        %v6537 = vadd.f32 %v6535, %v6536
        %v6538 = vrot.slane %v6001, 4
        %v6539 = vadd.f32 %v6001, %v6538
        %v6540 = vrot.slane %v6539, 2
        %v6541 = vadd.f32 %v6539, %v6540
        %v6542 = vrot.slane %v6541, 1
        %v6543 = vadd.f32 %v6541, %v6542
        %v6544 = vrot.slane %v6002, 4
        %v6545 = vadd.f32 %v6002, %v6544
        %v6546 = vrot.slane %v6545, 2
        %v6547 = vadd.f32 %v6545, %v6546
        %v6548 = vrot.slane %v6547, 1
        %v6549 = vadd.f32 %v6547, %v6548
        %v6550 = vrot.slane %v6003, 4
        %v6551 = vadd.f32 %v6003, %v6550
        %v6552 = vrot.slane %v6551, 2
        %v6553 = vadd.f32 %v6551, %v6552
        %v6554 = vrot.slane %v6553, 1
        %v6555 = vadd.f32 %v6553, %v6554
        %v6556 = vrot.slane %v6004, 4
        %v6557 = vadd.f32 %v6004, %v6556
        %v6558 = vrot.slane %v6557, 2
        %v6559 = vadd.f32 %v6557, %v6558
        %v6560 = vrot.slane %v6559, 1
        %v6561 = vadd.f32 %v6559, %v6560
        %v6562 = vrot.slane %v6005, 4
        %v6563 = vadd.f32 %v6005, %v6562
        %v6564 = vrot.slane %v6563, 2
        %v6565 = vadd.f32 %v6563, %v6564
        %v6566 = vrot.slane %v6565, 1
        %v6567 = vadd.f32 %v6565, %v6566
        %v6568 = vrot.slane %v6006, 4
        %v6569 = vadd.f32 %v6006, %v6568
        %v6570 = vrot.slane %v6569, 2
        %v6571 = vadd.f32 %v6569, %v6570
        %v6572 = vrot.slane %v6571, 1
        %v6573 = vadd.f32 %v6571, %v6572
        %v6574 = vrot.slane %v6007, 4
        %v6575 = vadd.f32 %v6007, %v6574
        %v6576 = vrot.slane %v6575, 2
        %v6577 = vadd.f32 %v6575, %v6576
        %v6578 = vrot.slane %v6577, 1
        %v6579 = vadd.f32 %v6577, %v6578
        %v6580 = vrot.slane %v6008, 4
        %v6581 = vadd.f32 %v6008, %v6580
        %v6582 = vrot.slane %v6581, 2
        %v6583 = vadd.f32 %v6581, %v6582
        %v6584 = vrot.slane %v6583, 1
        %v6585 = vadd.f32 %v6583, %v6584
        %v6586 = vrot.slane %v6009, 4
        %v6587 = vadd.f32 %v6009, %v6586
        %v6588 = vrot.slane %v6587, 2
        %v6589 = vadd.f32 %v6587, %v6588
        %v6590 = vrot.slane %v6589, 1
        %v6591 = vadd.f32 %v6589, %v6590
        %v6592 = vrot.slane %v6010, 4
        %v6593 = vadd.f32 %v6010, %v6592
        %v6594 = vrot.slane %v6593, 2
        %v6595 = vadd.f32 %v6593, %v6594
        %v6596 = vrot.slane %v6595, 1
        %v6597 = vadd.f32 %v6595, %v6596
        %v6598 = vrot.slane %v6011, 4
        %v6599 = vadd.f32 %v6011, %v6598
        %v6600 = vrot.slane %v6599, 2
        %v6601 = vadd.f32 %v6599, %v6600
        %v6602 = vrot.slane %v6601, 1
        %v6603 = vadd.f32 %v6601, %v6602
        %v6604 = vrot.slane %v6012, 4
        %v6605 = vadd.f32 %v6012, %v6604
        %v6606 = vrot.slane %v6605, 2
        %v6607 = vadd.f32 %v6605, %v6606
        %v6608 = vrot.slane %v6607, 1
        %v6609 = vadd.f32 %v6607, %v6608
        %v6610 = vrot.slane %v6013, 4
        %v6611 = vadd.f32 %v6013, %v6610
        %v6612 = vrot.slane %v6611, 2
        %v6613 = vadd.f32 %v6611, %v6612
        %v6614 = vrot.slane %v6613, 1
        %v6615 = vadd.f32 %v6613, %v6614
        %v6616 = vrot.slane %v6014, 4
        %v6617 = vadd.f32 %v6014, %v6616
        %v6618 = vrot.slane %v6617, 2
        %v6619 = vadd.f32 %v6617, %v6618
        %v6620 = vrot.slane %v6619, 1
        %v6621 = vadd.f32 %v6619, %v6620
        %v6622 = vrot.slane %v6015, 4
        %v6623 = vadd.f32 %v6015, %v6622
        %v6624 = vrot.slane %v6623, 2
        %v6625 = vadd.f32 %v6623, %v6624
        %v6626 = vrot.slane %v6625, 1
        %v6627 = vadd.f32 %v6625, %v6626
        %v6628 = vrot.slane %v6016, 4
        %v6629 = vadd.f32 %v6016, %v6628
        %v6630 = vrot.slane %v6629, 2
        %v6631 = vadd.f32 %v6629, %v6630
        %v6632 = vrot.slane %v6631, 1
        %v6633 = vadd.f32 %v6631, %v6632
        %v6634 = vrot.slane %v6017, 4
        %v6635 = vadd.f32 %v6017, %v6634
        %v6636 = vrot.slane %v6635, 2
        %v6637 = vadd.f32 %v6635, %v6636
        %v6638 = vrot.slane %v6637, 1
        %v6639 = vadd.f32 %v6637, %v6638
        %v6640 = vrot.slane %v6018, 4
        %v6641 = vadd.f32 %v6018, %v6640
        %v6642 = vrot.slane %v6641, 2
        %v6643 = vadd.f32 %v6641, %v6642
        %v6644 = vrot.slane %v6643, 1
        %v6645 = vadd.f32 %v6643, %v6644
        %v6646 = vrot.slane %v6019, 4
        %v6647 = vadd.f32 %v6019, %v6646
        %v6648 = vrot.slane %v6647, 2
        %v6649 = vadd.f32 %v6647, %v6648
        %v6650 = vrot.slane %v6649, 1
        %v6651 = vadd.f32 %v6649, %v6650
        %v6652 = vrot.slane %v6020, 4
        %v6653 = vadd.f32 %v6020, %v6652
        %v6654 = vrot.slane %v6653, 2
        %v6655 = vadd.f32 %v6653, %v6654
        %v6656 = vrot.slane %v6655, 1
        %v6657 = vadd.f32 %v6655, %v6656
        %v6658 = vrot.slane %v6021, 4
        %v6659 = vadd.f32 %v6021, %v6658
        %v6660 = vrot.slane %v6659, 2
        %v6661 = vadd.f32 %v6659, %v6660
        %v6662 = vrot.slane %v6661, 1
        %v6663 = vadd.f32 %v6661, %v6662
        %v6664 = vrot.slane %v6022, 4
        %v6665 = vadd.f32 %v6022, %v6664
        %v6666 = vrot.slane %v6665, 2
        %v6667 = vadd.f32 %v6665, %v6666
        %v6668 = vrot.slane %v6667, 1
        %v6669 = vadd.f32 %v6667, %v6668
        %v6670 = vrot.slane %v6023, 4
        %v6671 = vadd.f32 %v6023, %v6670
        %v6672 = vrot.slane %v6671, 2
        %v6673 = vadd.f32 %v6671, %v6672
        %v6674 = vrot.slane %v6673, 1
        %v6675 = vadd.f32 %v6673, %v6674
        %v6676 = vrot.slane %v6024, 4
        %v6677 = vadd.f32 %v6024, %v6676
        %v6678 = vrot.slane %v6677, 2
        %v6679 = vadd.f32 %v6677, %v6678
        %v6680 = vrot.slane %v6679, 1
        %v6681 = vadd.f32 %v6679, %v6680
        %v6682 = vrot.slane %v6025, 4
        %v6683 = vadd.f32 %v6025, %v6682
        %v6684 = vrot.slane %v6683, 2
        %v6685 = vadd.f32 %v6683, %v6684
        %v6686 = vrot.slane %v6685, 1
        %v6687 = vadd.f32 %v6685, %v6686
        %v6688 = vrot.slane %v6026, 4
        %v6689 = vadd.f32 %v6026, %v6688
        %v6690 = vrot.slane %v6689, 2
        %v6691 = vadd.f32 %v6689, %v6690
        %v6692 = vrot.slane %v6691, 1
        %v6693 = vadd.f32 %v6691, %v6692
        %v6694 = vrot.slane %v6027, 4
        %v6695 = vadd.f32 %v6027, %v6694
        %v6696 = vrot.slane %v6695, 2
        %v6697 = vadd.f32 %v6695, %v6696
        %v6698 = vrot.slane %v6697, 1
        %v6699 = vadd.f32 %v6697, %v6698
        %v6700 = vrot.slane %v6028, 4
        %v6701 = vadd.f32 %v6028, %v6700
        %v6702 = vrot.slane %v6701, 2
        %v6703 = vadd.f32 %v6701, %v6702
        %v6704 = vrot.slane %v6703, 1
        %v6705 = vadd.f32 %v6703, %v6704
        %v6706 = vrot.slane %v6029, 4
        %v6707 = vadd.f32 %v6029, %v6706
        %v6708 = vrot.slane %v6707, 2
        %v6709 = vadd.f32 %v6707, %v6708
        %v6710 = vrot.slane %v6709, 1
        %v6711 = vadd.f32 %v6709, %v6710
        %v6712 = vrot.slane %v6030, 4
        %v6713 = vadd.f32 %v6030, %v6712
        %v6714 = vrot.slane %v6713, 2
        %v6715 = vadd.f32 %v6713, %v6714
        %v6716 = vrot.slane %v6715, 1
        %v6717 = vadd.f32 %v6715, %v6716
        %v6718 = vrot.slane %v6031, 4
        %v6719 = vadd.f32 %v6031, %v6718
        %v6720 = vrot.slane %v6719, 2
        %v6721 = vadd.f32 %v6719, %v6720
        %v6722 = vrot.slane %v6721, 1
        %v6723 = vadd.f32 %v6721, %v6722
        %v6724 = vrot.slane %v6032, 4
        %v6725 = vadd.f32 %v6032, %v6724
        %v6726 = vrot.slane %v6725, 2
        %v6727 = vadd.f32 %v6725, %v6726
        %v6728 = vrot.slane %v6727, 1
        %v6729 = vadd.f32 %v6727, %v6728
        %v6730 = vrot.slane %v6033, 4
        %v6731 = vadd.f32 %v6033, %v6730
        %v6732 = vrot.slane %v6731, 2
        %v6733 = vadd.f32 %v6731, %v6732
        %v6734 = vrot.slane %v6733, 1
        %v6735 = vadd.f32 %v6733, %v6734
        %v6736 = vrot.slane %v6034, 4
        %v6737 = vadd.f32 %v6034, %v6736
        %v6738 = vrot.slane %v6737, 2
        %v6739 = vadd.f32 %v6737, %v6738
        %v6740 = vrot.slane %v6739, 1
        %v6741 = vadd.f32 %v6739, %v6740
        %v6742 = vrot.slane %v6035, 4
        %v6743 = vadd.f32 %v6035, %v6742
        %v6744 = vrot.slane %v6743, 2
        %v6745 = vadd.f32 %v6743, %v6744
        %v6746 = vrot.slane %v6745, 1
        %v6747 = vadd.f32 %v6745, %v6746
        %v6748 = vrot.slane %v6036, 4
        %v6749 = vadd.f32 %v6036, %v6748
        %v6750 = vrot.slane %v6749, 2
        %v6751 = vadd.f32 %v6749, %v6750
        %v6752 = vrot.slane %v6751, 1
        %v6753 = vadd.f32 %v6751, %v6752
        %v6754 = vrot.slane %v6037, 4
        %v6755 = vadd.f32 %v6037, %v6754
        %v6756 = vrot.slane %v6755, 2
        %v6757 = vadd.f32 %v6755, %v6756
        %v6758 = vrot.slane %v6757, 1
        %v6759 = vadd.f32 %v6757, %v6758
        %v6760 = vrot.slane %v6038, 4
        %v6761 = vadd.f32 %v6038, %v6760
        %v6762 = vrot.slane %v6761, 2
        %v6763 = vadd.f32 %v6761, %v6762
        %v6764 = vrot.slane %v6763, 1
        %v6765 = vadd.f32 %v6763, %v6764
        %v6766 = vrot.slane %v6039, 4
        %v6767 = vadd.f32 %v6039, %v6766
        %v6768 = vrot.slane %v6767, 2
        %v6769 = vadd.f32 %v6767, %v6768
        %v6770 = vrot.slane %v6769, 1
        %v6771 = vadd.f32 %v6769, %v6770
        %v6772 = vrot.slane %v6040, 4
        %v6773 = vadd.f32 %v6040, %v6772
        %v6774 = vrot.slane %v6773, 2
        %v6775 = vadd.f32 %v6773, %v6774
        %v6776 = vrot.slane %v6775, 1
        %v6777 = vadd.f32 %v6775, %v6776
        %v6778 = vrot.slane %v6041, 4
        %v6779 = vadd.f32 %v6041, %v6778
        %v6780 = vrot.slane %v6779, 2
        %v6781 = vadd.f32 %v6779, %v6780
        %v6782 = vrot.slane %v6781, 1
        %v6783 = vadd.f32 %v6781, %v6782
        %v6784 = vrot.slane %v6042, 4
        %v6785 = vadd.f32 %v6042, %v6784
        %v6786 = vrot.slane %v6785, 2
        %v6787 = vadd.f32 %v6785, %v6786
        %v6788 = vrot.slane %v6787, 1
        %v6789 = vadd.f32 %v6787, %v6788
        %v6790 = vrot.slane %v6043, 4
        %v6791 = vadd.f32 %v6043, %v6790
        %v6792 = vrot.slane %v6791, 2
        %v6793 = vadd.f32 %v6791, %v6792
        %v6794 = vrot.slane %v6793, 1
        %v6795 = vadd.f32 %v6793, %v6794
        %v6796 = vrot.slane %v6044, 4
        %v6797 = vadd.f32 %v6044, %v6796
        %v6798 = vrot.slane %v6797, 2
        %v6799 = vadd.f32 %v6797, %v6798
        %v6800 = vrot.slane %v6799, 1
        %v6801 = vadd.f32 %v6799, %v6800
        %v6802 = vrot.slane %v6045, 4
        %v6803 = vadd.f32 %v6045, %v6802
        %v6804 = vrot.slane %v6803, 2
        %v6805 = vadd.f32 %v6803, %v6804
        %v6806 = vrot.slane %v6805, 1
        %v6807 = vadd.f32 %v6805, %v6806
        %v6808 = vrot.slane %v6046, 4
        %v6809 = vadd.f32 %v6046, %v6808
        %v6810 = vrot.slane %v6809, 2
        %v6811 = vadd.f32 %v6809, %v6810
        %v6812 = vrot.slane %v6811, 1
        %v6813 = vadd.f32 %v6811, %v6812
        %v6814 = vrot.slane %v6047, 4
        %v6815 = vadd.f32 %v6047, %v6814
        %v6816 = vrot.slane %v6815, 2
        %v6817 = vadd.f32 %v6815, %v6816
        %v6818 = vrot.slane %v6817, 1
        %v6819 = vadd.f32 %v6817, %v6818
        %v6820 = vrot.slane %v6048, 4
        %v6821 = vadd.f32 %v6048, %v6820
        %v6822 = vrot.slane %v6821, 2
        %v6823 = vadd.f32 %v6821, %v6822
        %v6824 = vrot.slane %v6823, 1
        %v6825 = vadd.f32 %v6823, %v6824
        %v6826 = vrot.slane %v6049, 4
        %v6827 = vadd.f32 %v6049, %v6826
        %v6828 = vrot.slane %v6827, 2
        %v6829 = vadd.f32 %v6827, %v6828
        %v6830 = vrot.slane %v6829, 1
        %v6831 = vadd.f32 %v6829, %v6830
        %v6832 = vrot.slane %v6050, 4
        %v6833 = vadd.f32 %v6050, %v6832
        %v6834 = vrot.slane %v6833, 2
        %v6835 = vadd.f32 %v6833, %v6834
        %v6836 = vrot.slane %v6835, 1
        %v6837 = vadd.f32 %v6835, %v6836
        %v6838 = vrot.slane %v6051, 4
        %v6839 = vadd.f32 %v6051, %v6838
        %v6840 = vrot.slane %v6839, 2
        %v6841 = vadd.f32 %v6839, %v6840
        %v6842 = vrot.slane %v6841, 1
        %v6843 = vadd.f32 %v6841, %v6842
        %v6844 = vrot.slane %v6052, 4
        %v6845 = vadd.f32 %v6052, %v6844
        %v6846 = vrot.slane %v6845, 2
        %v6847 = vadd.f32 %v6845, %v6846
        %v6848 = vrot.slane %v6847, 1
        %v6849 = vadd.f32 %v6847, %v6848
        %v6850 = vrot.slane %v6053, 4
        %v6851 = vadd.f32 %v6053, %v6850
        %v6852 = vrot.slane %v6851, 2
        %v6853 = vadd.f32 %v6851, %v6852
        %v6854 = vrot.slane %v6853, 1
        %v6855 = vadd.f32 %v6853, %v6854
        %v6856 = vrot.slane %v6054, 4
        %v6857 = vadd.f32 %v6054, %v6856
        %v6858 = vrot.slane %v6857, 2
        %v6859 = vadd.f32 %v6857, %v6858
        %v6860 = vrot.slane %v6859, 1
        %v6861 = vadd.f32 %v6859, %v6860
        %v6862 = vrot.slane %v6055, 4
        %v6863 = vadd.f32 %v6055, %v6862
        %v6864 = vrot.slane %v6863, 2
        %v6865 = vadd.f32 %v6863, %v6864
        %v6866 = vrot.slane %v6865, 1
        %v6867 = vadd.f32 %v6865, %v6866
        %v6868 = vrot.slane %v6056, 4
        %v6869 = vadd.f32 %v6056, %v6868
        %v6870 = vrot.slane %v6869, 2
        %v6871 = vadd.f32 %v6869, %v6870
        %v6872 = vrot.slane %v6871, 1
        %v6873 = vadd.f32 %v6871, %v6872
        %v6874 = vrot.slane %v6057, 4
        %v6875 = vadd.f32 %v6057, %v6874
        %v6876 = vrot.slane %v6875, 2
        %v6877 = vadd.f32 %v6875, %v6876
        %v6878 = vrot.slane %v6877, 1
        %v6879 = vadd.f32 %v6877, %v6878
        %v6880 = vrot.slane %v6058, 4
        %v6881 = vadd.f32 %v6058, %v6880
        %v6882 = vrot.slane %v6881, 2
        %v6883 = vadd.f32 %v6881, %v6882
        %v6884 = vrot.slane %v6883, 1
        %v6885 = vadd.f32 %v6883, %v6884
        %v6886 = vrot.slane %v6059, 4
        %v6887 = vadd.f32 %v6059, %v6886
        %v6888 = vrot.slane %v6887, 2
        %v6889 = vadd.f32 %v6887, %v6888
        %v6890 = vrot.slane %v6889, 1
        %v6891 = vadd.f32 %v6889, %v6890
        %v6892 = vrot.slane %v6060, 4
        %v6893 = vadd.f32 %v6060, %v6892
        %v6894 = vrot.slane %v6893, 2
        %v6895 = vadd.f32 %v6893, %v6894
        %v6896 = vrot.slane %v6895, 1
        %v6897 = vadd.f32 %v6895, %v6896
        %v6898 = vrot.slane %v6061, 4
        %v6899 = vadd.f32 %v6061, %v6898
        %v6900 = vrot.slane %v6899, 2
        %v6901 = vadd.f32 %v6899, %v6900
        %v6902 = vrot.slane %v6901, 1
        %v6903 = vadd.f32 %v6901, %v6902
        %v6904 = vrot.slane %v6062, 4
        %v6905 = vadd.f32 %v6062, %v6904
        %v6906 = vrot.slane %v6905, 2
        %v6907 = vadd.f32 %v6905, %v6906
        %v6908 = vrot.slane %v6907, 1
        %v6909 = vadd.f32 %v6907, %v6908
        %v6910 = vrot.slane %v6063, 4
        %v6911 = vadd.f32 %v6063, %v6910
        %v6912 = vrot.slane %v6911, 2
        %v6913 = vadd.f32 %v6911, %v6912
        %v6914 = vrot.slane %v6913, 1
        %v6915 = vadd.f32 %v6913, %v6914
        %v6916 = vrot.slane %v6064, 4
        %v6917 = vadd.f32 %v6064, %v6916
        %v6918 = vrot.slane %v6917, 2
        %v6919 = vadd.f32 %v6917, %v6918
        %v6920 = vrot.slane %v6919, 1
        %v6921 = vadd.f32 %v6919, %v6920
        %v6922 = vrot.slane %v6065, 4
        %v6923 = vadd.f32 %v6065, %v6922
        %v6924 = vrot.slane %v6923, 2
        %v6925 = vadd.f32 %v6923, %v6924
        %v6926 = vrot.slane %v6925, 1
        %v6927 = vadd.f32 %v6925, %v6926
        %v6928 = vrot.slane %v6066, 4
        %v6929 = vadd.f32 %v6066, %v6928
        %v6930 = vrot.slane %v6929, 2
        %v6931 = vadd.f32 %v6929, %v6930
        %v6932 = vrot.slane %v6931, 1
        %v6933 = vadd.f32 %v6931, %v6932
        %v6934 = vrot.slane %v6067, 4
        %v6935 = vadd.f32 %v6067, %v6934
        %v6936 = vrot.slane %v6935, 2
        %v6937 = vadd.f32 %v6935, %v6936
        %v6938 = vrot.slane %v6937, 1
        %v6939 = vadd.f32 %v6937, %v6938
        %v6940 = vrot.slane %v6068, 4
        %v6941 = vadd.f32 %v6068, %v6940
        %v6942 = vrot.slane %v6941, 2
        %v6943 = vadd.f32 %v6941, %v6942
        %v6944 = vrot.slane %v6943, 1
        %v6945 = vadd.f32 %v6943, %v6944
        %v6946 = vrot.slane %v6069, 4
        %v6947 = vadd.f32 %v6069, %v6946
        %v6948 = vrot.slane %v6947, 2
        %v6949 = vadd.f32 %v6947, %v6948
        %v6950 = vrot.slane %v6949, 1
        %v6951 = vadd.f32 %v6949, %v6950
        %v6952 = vrot.slane %v6070, 4
        %v6953 = vadd.f32 %v6070, %v6952
        %v6954 = vrot.slane %v6953, 2
        %v6955 = vadd.f32 %v6953, %v6954
        %v6956 = vrot.slane %v6955, 1
        %v6957 = vadd.f32 %v6955, %v6956
        %v6958 = vrot.slane %v6071, 4
        %v6959 = vadd.f32 %v6071, %v6958
        %v6960 = vrot.slane %v6959, 2
        %v6961 = vadd.f32 %v6959, %v6960
        %v6962 = vrot.slane %v6961, 1
        %v6963 = vadd.f32 %v6961, %v6962
        %v6964 = vrot.slane %v6072, 4
        %v6965 = vadd.f32 %v6072, %v6964
        %v6966 = vrot.slane %v6965, 2
        %v6967 = vadd.f32 %v6965, %v6966
        %v6968 = vrot.slane %v6967, 1
        %v6969 = vadd.f32 %v6967, %v6968
        %v6970 = vrot.slane %v6073, 4
        %v6971 = vadd.f32 %v6073, %v6970
        %v6972 = vrot.slane %v6971, 2
        %v6973 = vadd.f32 %v6971, %v6972
        %v6974 = vrot.slane %v6973, 1
        %v6975 = vadd.f32 %v6973, %v6974
        %v6976 = vrot.slane %v6074, 4
        %v6977 = vadd.f32 %v6074, %v6976
        %v6978 = vrot.slane %v6977, 2
        %v6979 = vadd.f32 %v6977, %v6978
        %v6980 = vrot.slane %v6979, 1
        %v6981 = vadd.f32 %v6979, %v6980
        %v6982 = vrot.slane %v6075, 4
        %v6983 = vadd.f32 %v6075, %v6982
        %v6984 = vrot.slane %v6983, 2
        %v6985 = vadd.f32 %v6983, %v6984
        %v6986 = vrot.slane %v6985, 1
        %v6987 = vadd.f32 %v6985, %v6986
        %v6988 = vrot.slane %v6076, 4
        %v6989 = vadd.f32 %v6076, %v6988
        %v6990 = vrot.slane %v6989, 2
        %v6991 = vadd.f32 %v6989, %v6990
        %v6992 = vrot.slane %v6991, 1
        %v6993 = vadd.f32 %v6991, %v6992
        %v6994 = vrot.slane %v6077, 4
        %v6995 = vadd.f32 %v6077, %v6994
        %v6996 = vrot.slane %v6995, 2
        %v6997 = vadd.f32 %v6995, %v6996
        %v6998 = vrot.slane %v6997, 1
        %v6999 = vadd.f32 %v6997, %v6998
        %v7000 = vrot.slane %v6078, 4
        %v7001 = vadd.f32 %v6078, %v7000
        %v7002 = vrot.slane %v7001, 2
        %v7003 = vadd.f32 %v7001, %v7002
        %v7004 = vrot.slane %v7003, 1
        %v7005 = vadd.f32 %v7003, %v7004
        %v7006 = vrot.slane %v6079, 4
        %v7007 = vadd.f32 %v6079, %v7006
        %v7008 = vrot.slane %v7007, 2
        %v7009 = vadd.f32 %v7007, %v7008
        %v7010 = vrot.slane %v7009, 1
        %v7011 = vadd.f32 %v7009, %v7010
        %v7012 = vrot.slane %v6080, 4
        %v7013 = vadd.f32 %v6080, %v7012
        %v7014 = vrot.slane %v7013, 2
        %v7015 = vadd.f32 %v7013, %v7014
        %v7016 = vrot.slane %v7015, 1
        %v7017 = vadd.f32 %v7015, %v7016
        %v7018 = vrot.slane %v6081, 4
        %v7019 = vadd.f32 %v6081, %v7018
        %v7020 = vrot.slane %v7019, 2
        %v7021 = vadd.f32 %v7019, %v7020
        %v7022 = vrot.slane %v7021, 1
        %v7023 = vadd.f32 %v7021, %v7022
        %v7024 = vrot.slane %v6082, 4
        %v7025 = vadd.f32 %v6082, %v7024
        %v7026 = vrot.slane %v7025, 2
        %v7027 = vadd.f32 %v7025, %v7026
        %v7028 = vrot.slane %v7027, 1
        %v7029 = vadd.f32 %v7027, %v7028
        %v7030 = vrot.slane %v6083, 4
        %v7031 = vadd.f32 %v6083, %v7030
        %v7032 = vrot.slane %v7031, 2
        %v7033 = vadd.f32 %v7031, %v7032
        %v7034 = vrot.slane %v7033, 1
        %v7035 = vadd.f32 %v7033, %v7034
        %v7036 = vrot.slane %v6084, 4
        %v7037 = vadd.f32 %v6084, %v7036
        %v7038 = vrot.slane %v7037, 2
        %v7039 = vadd.f32 %v7037, %v7038
        %v7040 = vrot.slane %v7039, 1
        %v7041 = vadd.f32 %v7039, %v7040
        %v7042 = vrot.slane %v6085, 4
        %v7043 = vadd.f32 %v6085, %v7042
        %v7044 = vrot.slane %v7043, 2
        %v7045 = vadd.f32 %v7043, %v7044
        %v7046 = vrot.slane %v7045, 1
        %v7047 = vadd.f32 %v7045, %v7046
        %v7048 = vrot.slane %v6086, 4
        %v7049 = vadd.f32 %v6086, %v7048
        %v7050 = vrot.slane %v7049, 2
        %v7051 = vadd.f32 %v7049, %v7050
        %v7052 = vrot.slane %v7051, 1
        %v7053 = vadd.f32 %v7051, %v7052
        %v7054 = vrot.slane %v6087, 4
        %v7055 = vadd.f32 %v6087, %v7054
        %v7056 = vrot.slane %v7055, 2
        %v7057 = vadd.f32 %v7055, %v7056
        %v7058 = vrot.slane %v7057, 1
        %v7059 = vadd.f32 %v7057, %v7058
        %v7060 = vrot.slane %v6088, 4
        %v7061 = vadd.f32 %v6088, %v7060
        %v7062 = vrot.slane %v7061, 2
        %v7063 = vadd.f32 %v7061, %v7062
        %v7064 = vrot.slane %v7063, 1
        %v7065 = vadd.f32 %v7063, %v7064
        %v7066 = vrot.slane %v6089, 4
        %v7067 = vadd.f32 %v6089, %v7066
        %v7068 = vrot.slane %v7067, 2
        %v7069 = vadd.f32 %v7067, %v7068
        %v7070 = vrot.slane %v7069, 1
        %v7071 = vadd.f32 %v7069, %v7070
        %v7072 = vrot.slane %v6090, 4
        %v7073 = vadd.f32 %v6090, %v7072
        %v7074 = vrot.slane %v7073, 2
        %v7075 = vadd.f32 %v7073, %v7074
        %v7076 = vrot.slane %v7075, 1
        %v7077 = vadd.f32 %v7075, %v7076
        %v7078 = vrot.slane %v6091, 4
        %v7079 = vadd.f32 %v6091, %v7078
        %v7080 = vrot.slane %v7079, 2
        %v7081 = vadd.f32 %v7079, %v7080
        %v7082 = vrot.slane %v7081, 1
        %v7083 = vadd.f32 %v7081, %v7082
        %v7084 = vrot.slane %v6092, 4
        %v7085 = vadd.f32 %v6092, %v7084
        %v7086 = vrot.slane %v7085, 2
        %v7087 = vadd.f32 %v7085, %v7086
        %v7088 = vrot.slane %v7087, 1
        %v7089 = vadd.f32 %v7087, %v7088
        %v7090 = vrot.slane %v6093, 4
        %v7091 = vadd.f32 %v6093, %v7090
        %v7092 = vrot.slane %v7091, 2
        %v7093 = vadd.f32 %v7091, %v7092
        %v7094 = vrot.slane %v7093, 1
        %v7095 = vadd.f32 %v7093, %v7094
        %v7096 = vrot.slane %v6094, 4
        %v7097 = vadd.f32 %v6094, %v7096
        %v7098 = vrot.slane %v7097, 2
        %v7099 = vadd.f32 %v7097, %v7098
        %v7100 = vrot.slane %v7099, 1
        %v7101 = vadd.f32 %v7099, %v7100
        %v7102 = vrot.slane %v6095, 4
        %v7103 = vadd.f32 %v6095, %v7102
        %v7104 = vrot.slane %v7103, 2
        %v7105 = vadd.f32 %v7103, %v7104
        %v7106 = vrot.slane %v7105, 1
        %v7107 = vadd.f32 %v7105, %v7106
        %v7108 = vrot.slane %v6096, 4
        %v7109 = vadd.f32 %v6096, %v7108
        %v7110 = vrot.slane %v7109, 2
        %v7111 = vadd.f32 %v7109, %v7110
        %v7112 = vrot.slane %v7111, 1
        %v7113 = vadd.f32 %v7111, %v7112
        %v7114 = vrot.slane %v6097, 4
        %v7115 = vadd.f32 %v6097, %v7114
        %v7116 = vrot.slane %v7115, 2
        %v7117 = vadd.f32 %v7115, %v7116
        %v7118 = vrot.slane %v7117, 1
        %v7119 = vadd.f32 %v7117, %v7118
        %v7120 = vrot.slane %v6098, 4
        %v7121 = vadd.f32 %v6098, %v7120
        %v7122 = vrot.slane %v7121, 2
        %v7123 = vadd.f32 %v7121, %v7122
        %v7124 = vrot.slane %v7123, 1
        %v7125 = vadd.f32 %v7123, %v7124
        %v7126 = vrot.slane %v6099, 4
        %v7127 = vadd.f32 %v6099, %v7126
        %v7128 = vrot.slane %v7127, 2
        %v7129 = vadd.f32 %v7127, %v7128
        %v7130 = vrot.slane %v7129, 1
        %v7131 = vadd.f32 %v7129, %v7130
        %v7132 = vrot.slane %v6100, 4
        %v7133 = vadd.f32 %v6100, %v7132
        %v7134 = vrot.slane %v7133, 2
        %v7135 = vadd.f32 %v7133, %v7134
        %v7136 = vrot.slane %v7135, 1
        %v7137 = vadd.f32 %v7135, %v7136
        %v7138 = vrot.slane %v6101, 4
        %v7139 = vadd.f32 %v6101, %v7138
        %v7140 = vrot.slane %v7139, 2
        %v7141 = vadd.f32 %v7139, %v7140
        %v7142 = vrot.slane %v7141, 1
        %v7143 = vadd.f32 %v7141, %v7142
        %v7144 = vrot.slane %v6102, 4
        %v7145 = vadd.f32 %v6102, %v7144
        %v7146 = vrot.slane %v7145, 2
        %v7147 = vadd.f32 %v7145, %v7146
        %v7148 = vrot.slane %v7147, 1
        %v7149 = vadd.f32 %v7147, %v7148
        %v7150 = vrot.slane %v6103, 4
        %v7151 = vadd.f32 %v6103, %v7150
        %v7152 = vrot.slane %v7151, 2
        %v7153 = vadd.f32 %v7151, %v7152
        %v7154 = vrot.slane %v7153, 1
        %v7155 = vadd.f32 %v7153, %v7154
        %v7156 = vrot.slane %v6104, 4
        %v7157 = vadd.f32 %v6104, %v7156
        %v7158 = vrot.slane %v7157, 2
        %v7159 = vadd.f32 %v7157, %v7158
        %v7160 = vrot.slane %v7159, 1
        %v7161 = vadd.f32 %v7159, %v7160
        %v7162 = vrot.slane %v6105, 4
        %v7163 = vadd.f32 %v6105, %v7162
        %v7164 = vrot.slane %v7163, 2
        %v7165 = vadd.f32 %v7163, %v7164
        %v7166 = vrot.slane %v7165, 1
        %v7167 = vadd.f32 %v7165, %v7166
        %v7168 = vrot.slane %v6106, 4
        %v7169 = vadd.f32 %v6106, %v7168
        %v7170 = vrot.slane %v7169, 2
        %v7171 = vadd.f32 %v7169, %v7170
        %v7172 = vrot.slane %v7171, 1
        %v7173 = vadd.f32 %v7171, %v7172
        %v7174 = vrot.slane %v6107, 4
        %v7175 = vadd.f32 %v6107, %v7174
        %v7176 = vrot.slane %v7175, 2
        %v7177 = vadd.f32 %v7175, %v7176
        %v7178 = vrot.slane %v7177, 1
        %v7179 = vadd.f32 %v7177, %v7178
        %v7180 = vrot.slane %v6108, 4
        %v7181 = vadd.f32 %v6108, %v7180
        %v7182 = vrot.slane %v7181, 2
        %v7183 = vadd.f32 %v7181, %v7182
        %v7184 = vrot.slane %v7183, 1
        %v7185 = vadd.f32 %v7183, %v7184
        %v7186 = vrot.slane %v6109, 4
        %v7187 = vadd.f32 %v6109, %v7186
        %v7188 = vrot.slane %v7187, 2
        %v7189 = vadd.f32 %v7187, %v7188
        %v7190 = vrot.slane %v7189, 1
        %v7191 = vadd.f32 %v7189, %v7190
        %v7192 = vrot.slane %v6110, 4
        %v7193 = vadd.f32 %v6110, %v7192
        %v7194 = vrot.slane %v7193, 2
        %v7195 = vadd.f32 %v7193, %v7194
        %v7196 = vrot.slane %v7195, 1
        %v7197 = vadd.f32 %v7195, %v7196
        %v7198 = vrot.slane %v6111, 4
        %v7199 = vadd.f32 %v6111, %v7198
        %v7200 = vrot.slane %v7199, 2
        %v7201 = vadd.f32 %v7199, %v7200
        %v7202 = vrot.slane %v7201, 1
        %v7203 = vadd.f32 %v7201, %v7202
        %v7204 = vrot.slane %v6112, 4
        %v7205 = vadd.f32 %v6112, %v7204
        %v7206 = vrot.slane %v7205, 2
        %v7207 = vadd.f32 %v7205, %v7206
        %v7208 = vrot.slane %v7207, 1
        %v7209 = vadd.f32 %v7207, %v7208
        %v7210 = vrot.slane %v6113, 4
        %v7211 = vadd.f32 %v6113, %v7210
        %v7212 = vrot.slane %v7211, 2
        %v7213 = vadd.f32 %v7211, %v7212
        %v7214 = vrot.slane %v7213, 1
        %v7215 = vadd.f32 %v7213, %v7214
        %v7216 = vrot.slane %v6114, 4
        %v7217 = vadd.f32 %v6114, %v7216
        %v7218 = vrot.slane %v7217, 2
        %v7219 = vadd.f32 %v7217, %v7218
        %v7220 = vrot.slane %v7219, 1
        %v7221 = vadd.f32 %v7219, %v7220
        %v7222 = vrot.slane %v6115, 4
        %v7223 = vadd.f32 %v6115, %v7222
        %v7224 = vrot.slane %v7223, 2
        %v7225 = vadd.f32 %v7223, %v7224
        %v7226 = vrot.slane %v7225, 1
        %v7227 = vadd.f32 %v7225, %v7226
        %v7228 = vrot.slane %v6116, 4
        %v7229 = vadd.f32 %v6116, %v7228
        %v7230 = vrot.slane %v7229, 2
        %v7231 = vadd.f32 %v7229, %v7230
        %v7232 = vrot.slane %v7231, 1
        %v7233 = vadd.f32 %v7231, %v7232
        %v7234 = vrot.slane %v6117, 4
        %v7235 = vadd.f32 %v6117, %v7234
        %v7236 = vrot.slane %v7235, 2
        %v7237 = vadd.f32 %v7235, %v7236
        %v7238 = vrot.slane %v7237, 1
        %v7239 = vadd.f32 %v7237, %v7238
        %v7240 = vrot.slane %v6118, 4
        %v7241 = vadd.f32 %v6118, %v7240
        %v7242 = vrot.slane %v7241, 2
        %v7243 = vadd.f32 %v7241, %v7242
        %v7244 = vrot.slane %v7243, 1
        %v7245 = vadd.f32 %v7243, %v7244
        %v7246 = vrot.slane %v6119, 4
        %v7247 = vadd.f32 %v6119, %v7246
        %v7248 = vrot.slane %v7247, 2
        %v7249 = vadd.f32 %v7247, %v7248
        %v7250 = vrot.slane %v7249, 1
        %v7251 = vadd.f32 %v7249, %v7250
        %v7252 = vrot.slane %v6120, 4
        %v7253 = vadd.f32 %v6120, %v7252
        %v7254 = vrot.slane %v7253, 2
        %v7255 = vadd.f32 %v7253, %v7254
        %v7256 = vrot.slane %v7255, 1
        %v7257 = vadd.f32 %v7255, %v7256
        %v7258 = vrot.slane %v6121, 4
        %v7259 = vadd.f32 %v6121, %v7258
        %v7260 = vrot.slane %v7259, 2
        %v7261 = vadd.f32 %v7259, %v7260
        %v7262 = vrot.slane %v7261, 1
        %v7263 = vadd.f32 %v7261, %v7262
        %v7264 = vrot.slane %v6122, 4
        %v7265 = vadd.f32 %v6122, %v7264
        %v7266 = vrot.slane %v7265, 2
        %v7267 = vadd.f32 %v7265, %v7266
        %v7268 = vrot.slane %v7267, 1
        %v7269 = vadd.f32 %v7267, %v7268
        %v7270 = vrot.slane %v6123, 4
        %v7271 = vadd.f32 %v6123, %v7270
        %v7272 = vrot.slane %v7271, 2
        %v7273 = vadd.f32 %v7271, %v7272
        %v7274 = vrot.slane %v7273, 1
        %v7275 = vadd.f32 %v7273, %v7274
        %v7276 = vrot.slane %v6124, 4
        %v7277 = vadd.f32 %v6124, %v7276
        %v7278 = vrot.slane %v7277, 2
        %v7279 = vadd.f32 %v7277, %v7278
        %v7280 = vrot.slane %v7279, 1
        %v7281 = vadd.f32 %v7279, %v7280
        %v7282 = vrot.slane %v6125, 4
        %v7283 = vadd.f32 %v6125, %v7282
        %v7284 = vrot.slane %v7283, 2
        %v7285 = vadd.f32 %v7283, %v7284
        %v7286 = vrot.slane %v7285, 1
        %v7287 = vadd.f32 %v7285, %v7286
        %v7288 = vrot.slane %v6126, 4
        %v7289 = vadd.f32 %v6126, %v7288
        %v7290 = vrot.slane %v7289, 2
        %v7291 = vadd.f32 %v7289, %v7290
        %v7292 = vrot.slane %v7291, 1
        %v7293 = vadd.f32 %v7291, %v7292
        %v7294 = vrot.slane %v6127, 4
        %v7295 = vadd.f32 %v6127, %v7294
        %v7296 = vrot.slane %v7295, 2
        %v7297 = vadd.f32 %v7295, %v7296
        %v7298 = vrot.slane %v7297, 1
        %v7299 = vadd.f32 %v7297, %v7298
        %v7300 = vrot.slane %v6128, 4
        %v7301 = vadd.f32 %v6128, %v7300
        %v7302 = vrot.slane %v7301, 2
        %v7303 = vadd.f32 %v7301, %v7302
        %v7304 = vrot.slane %v7303, 1
        %v7305 = vadd.f32 %v7303, %v7304
        %v7306 = vrot.slane %v6129, 4
        %v7307 = vadd.f32 %v6129, %v7306
        %v7308 = vrot.slane %v7307, 2
        %v7309 = vadd.f32 %v7307, %v7308
        %v7310 = vrot.slane %v7309, 1
        %v7311 = vadd.f32 %v7309, %v7310
        %v7312 = vrot.slane %v6130, 4
        %v7313 = vadd.f32 %v6130, %v7312
        %v7314 = vrot.slane %v7313, 2
        %v7315 = vadd.f32 %v7313, %v7314
        %v7316 = vrot.slane %v7315, 1
        %v7317 = vadd.f32 %v7315, %v7316
        %v7318 = vrot.slane %v6131, 4
        %v7319 = vadd.f32 %v6131, %v7318
        %v7320 = vrot.slane %v7319, 2
        %v7321 = vadd.f32 %v7319, %v7320
        %v7322 = vrot.slane %v7321, 1
        %v7323 = vadd.f32 %v7321, %v7322
        %v7324 = vrot.slane %v6132, 4
        %v7325 = vadd.f32 %v6132, %v7324
        %v7326 = vrot.slane %v7325, 2
        %v7327 = vadd.f32 %v7325, %v7326
        %v7328 = vrot.slane %v7327, 1
        %v7329 = vadd.f32 %v7327, %v7328
        %v7330 = vrot.slane %v6133, 4
        %v7331 = vadd.f32 %v6133, %v7330
        %v7332 = vrot.slane %v7331, 2
        %v7333 = vadd.f32 %v7331, %v7332
        %v7334 = vrot.slane %v7333, 1
        %v7335 = vadd.f32 %v7333, %v7334
        %v7336 = vrot.slane %v6134, 4
        %v7337 = vadd.f32 %v6134, %v7336
        %v7338 = vrot.slane %v7337, 2
        %v7339 = vadd.f32 %v7337, %v7338
        %v7340 = vrot.slane %v7339, 1
        %v7341 = vadd.f32 %v7339, %v7340
        %v7342 = vrot.slane %v6135, 4
        %v7343 = vadd.f32 %v6135, %v7342
        %v7344 = vrot.slane %v7343, 2
        %v7345 = vadd.f32 %v7343, %v7344
        %v7346 = vrot.slane %v7345, 1
        %v7347 = vadd.f32 %v7345, %v7346
        %v7348 = vrot.slane %v6136, 4
        %v7349 = vadd.f32 %v6136, %v7348
        %v7350 = vrot.slane %v7349, 2
        %v7351 = vadd.f32 %v7349, %v7350
        %v7352 = vrot.slane %v7351, 1
        %v7353 = vadd.f32 %v7351, %v7352
        %v7354 = vrot.slane %v6137, 4
        %v7355 = vadd.f32 %v6137, %v7354
        %v7356 = vrot.slane %v7355, 2
        %v7357 = vadd.f32 %v7355, %v7356
        %v7358 = vrot.slane %v7357, 1
        %v7359 = vadd.f32 %v7357, %v7358
        %v7360 = vrot.slane %v6138, 4
        %v7361 = vadd.f32 %v6138, %v7360
        %v7362 = vrot.slane %v7361, 2
        %v7363 = vadd.f32 %v7361, %v7362
        %v7364 = vrot.slane %v7363, 1
        %v7365 = vadd.f32 %v7363, %v7364
        %v7366 = vrot.slane %v6139, 4
        %v7367 = vadd.f32 %v6139, %v7366
        %v7368 = vrot.slane %v7367, 2
        %v7369 = vadd.f32 %v7367, %v7368
        %v7370 = vrot.slane %v7369, 1
        %v7371 = vadd.f32 %v7369, %v7370
        %v7372 = vrot.slane %v6140, 4
        %v7373 = vadd.f32 %v6140, %v7372
        %v7374 = vrot.slane %v7373, 2
        %v7375 = vadd.f32 %v7373, %v7374
        %v7376 = vrot.slane %v7375, 1
        %v7377 = vadd.f32 %v7375, %v7376
        %v7378 = vrot.slane %v6141, 4
        %v7379 = vadd.f32 %v6141, %v7378
        %v7380 = vrot.slane %v7379, 2
        %v7381 = vadd.f32 %v7379, %v7380
        %v7382 = vrot.slane %v7381, 1
        %v7383 = vadd.f32 %v7381, %v7382
        %v7384 = vrot.slane %v6142, 4
        %v7385 = vadd.f32 %v6142, %v7384
        %v7386 = vrot.slane %v7385, 2
        %v7387 = vadd.f32 %v7385, %v7386
        %v7388 = vrot.slane %v7387, 1
        %v7389 = vadd.f32 %v7387, %v7388
        %v7390 = vrot.slane %v6143, 4
        %v7391 = vadd.f32 %v6143, %v7390
        %v7392 = vrot.slane %v7391, 2
        %v7393 = vadd.f32 %v7391, %v7392
        %v7394 = vrot.slane %v7393, 1
        %v7395 = vadd.f32 %v7393, %v7394
        %v7396 = vrot.slane %v6144, 4
        %v7397 = vadd.f32 %v6144, %v7396
        %v7398 = vrot.slane %v7397, 2
        %v7399 = vadd.f32 %v7397, %v7398
        %v7400 = vrot.slane %v7399, 1
        %v7401 = vadd.f32 %v7399, %v7400
        %v7402 = vrot.slane %v6145, 4
        %v7403 = vadd.f32 %v6145, %v7402
        %v7404 = vrot.slane %v7403, 2
        %v7405 = vadd.f32 %v7403, %v7404
        %v7406 = vrot.slane %v7405, 1
        %v7407 = vadd.f32 %v7405, %v7406
        %v7408 = vrot.slane %v6146, 4
        %v7409 = vadd.f32 %v6146, %v7408
        %v7410 = vrot.slane %v7409, 2
        %v7411 = vadd.f32 %v7409, %v7410
        %v7412 = vrot.slane %v7411, 1
        %v7413 = vadd.f32 %v7411, %v7412
        %v7414 = vrot.slane %v6147, 4
        %v7415 = vadd.f32 %v6147, %v7414
        %v7416 = vrot.slane %v7415, 2
        %v7417 = vadd.f32 %v7415, %v7416
        %v7418 = vrot.slane %v7417, 1
        %v7419 = vadd.f32 %v7417, %v7418
        %v7420 = vrot.slane %v6148, 4
        %v7421 = vadd.f32 %v6148, %v7420
        %v7422 = vrot.slane %v7421, 2
        %v7423 = vadd.f32 %v7421, %v7422
        %v7424 = vrot.slane %v7423, 1
        %v7425 = vadd.f32 %v7423, %v7424
        %v7426 = vrot.slane %v6149, 4
        %v7427 = vadd.f32 %v6149, %v7426
        %v7428 = vrot.slane %v7427, 2
        %v7429 = vadd.f32 %v7427, %v7428
        %v7430 = vrot.slane %v7429, 1
        %v7431 = vadd.f32 %v7429, %v7430
        %v7432 = vrot.slane %v6150, 4
        %v7433 = vadd.f32 %v6150, %v7432
        %v7434 = vrot.slane %v7433, 2
        %v7435 = vadd.f32 %v7433, %v7434
        %v7436 = vrot.slane %v7435, 1
        %v7437 = vadd.f32 %v7435, %v7436
        %v7438 = vrot.slane %v6151, 4
        %v7439 = vadd.f32 %v6151, %v7438
        %v7440 = vrot.slane %v7439, 2
        %v7441 = vadd.f32 %v7439, %v7440
        %v7442 = vrot.slane %v7441, 1
        %v7443 = vadd.f32 %v7441, %v7442
        %v7444 = vrot.slane %v6152, 4
        %v7445 = vadd.f32 %v6152, %v7444
        %v7446 = vrot.slane %v7445, 2
        %v7447 = vadd.f32 %v7445, %v7446
        %v7448 = vrot.slane %v7447, 1
        %v7449 = vadd.f32 %v7447, %v7448
        %v7450 = vrot.slane %v6153, 4
        %v7451 = vadd.f32 %v6153, %v7450
        %v7452 = vrot.slane %v7451, 2
        %v7453 = vadd.f32 %v7451, %v7452
        %v7454 = vrot.slane %v7453, 1
        %v7455 = vadd.f32 %v7453, %v7454
        %v7456 = vrot.slane %v6154, 4
        %v7457 = vadd.f32 %v6154, %v7456
        %v7458 = vrot.slane %v7457, 2
        %v7459 = vadd.f32 %v7457, %v7458
        %v7460 = vrot.slane %v7459, 1
        %v7461 = vadd.f32 %v7459, %v7460
        %v7462 = vrot.slane %v6155, 4
        %v7463 = vadd.f32 %v6155, %v7462
        %v7464 = vrot.slane %v7463, 2
        %v7465 = vadd.f32 %v7463, %v7464
        %v7466 = vrot.slane %v7465, 1
        %v7467 = vadd.f32 %v7465, %v7466
        %v7468 = vrot.slane %v6156, 4
        %v7469 = vadd.f32 %v6156, %v7468
        %v7470 = vrot.slane %v7469, 2
        %v7471 = vadd.f32 %v7469, %v7470
        %v7472 = vrot.slane %v7471, 1
        %v7473 = vadd.f32 %v7471, %v7472
        %v7474 = vrot.slane %v6157, 4
        %v7475 = vadd.f32 %v6157, %v7474
        %v7476 = vrot.slane %v7475, 2
        %v7477 = vadd.f32 %v7475, %v7476
        %v7478 = vrot.slane %v7477, 1
        %v7479 = vadd.f32 %v7477, %v7478
        %v7480 = vrot.slane %v6158, 4
        %v7481 = vadd.f32 %v6158, %v7480
        %v7482 = vrot.slane %v7481, 2
        %v7483 = vadd.f32 %v7481, %v7482
        %v7484 = vrot.slane %v7483, 1
        %v7485 = vadd.f32 %v7483, %v7484
        %v7486 = vrot.slane %v6159, 4
        %v7487 = vadd.f32 %v6159, %v7486
        %v7488 = vrot.slane %v7487, 2
        %v7489 = vadd.f32 %v7487, %v7488
        %v7490 = vrot.slane %v7489, 1
        %v7491 = vadd.f32 %v7489, %v7490
        %v7492 = vrot.slane %v6160, 4
        %v7493 = vadd.f32 %v6160, %v7492
        %v7494 = vrot.slane %v7493, 2
        %v7495 = vadd.f32 %v7493, %v7494
        %v7496 = vrot.slane %v7495, 1
        %v7497 = vadd.f32 %v7495, %v7496
        %v7498 = vrot.slane %v6161, 4
        %v7499 = vadd.f32 %v6161, %v7498
        %v7500 = vrot.slane %v7499, 2
        %v7501 = vadd.f32 %v7499, %v7500
        %v7502 = vrot.slane %v7501, 1
        %v7503 = vadd.f32 %v7501, %v7502
        %v7504 = vrot.slane %v6162, 4
        %v7505 = vadd.f32 %v6162, %v7504
        %v7506 = vrot.slane %v7505, 2
        %v7507 = vadd.f32 %v7505, %v7506
        %v7508 = vrot.slane %v7507, 1
        %v7509 = vadd.f32 %v7507, %v7508
        %v7510 = vrot.slane %v6163, 4
        %v7511 = vadd.f32 %v6163, %v7510
        %v7512 = vrot.slane %v7511, 2
        %v7513 = vadd.f32 %v7511, %v7512
        %v7514 = vrot.slane %v7513, 1
        %v7515 = vadd.f32 %v7513, %v7514
        %v7516 = vrot.slane %v6164, 4
        %v7517 = vadd.f32 %v6164, %v7516
        %v7518 = vrot.slane %v7517, 2
        %v7519 = vadd.f32 %v7517, %v7518
        %v7520 = vrot.slane %v7519, 1
        %v7521 = vadd.f32 %v7519, %v7520
        %v7522 = vrot.slane %v6165, 4
        %v7523 = vadd.f32 %v6165, %v7522
        %v7524 = vrot.slane %v7523, 2
        %v7525 = vadd.f32 %v7523, %v7524
        %v7526 = vrot.slane %v7525, 1
        %v7527 = vadd.f32 %v7525, %v7526
        %v7528 = vrot.slane %v6166, 4
        %v7529 = vadd.f32 %v6166, %v7528
        %v7530 = vrot.slane %v7529, 2
        %v7531 = vadd.f32 %v7529, %v7530
        %v7532 = vrot.slane %v7531, 1
        %v7533 = vadd.f32 %v7531, %v7532
        %v7534 = vrot.slane %v6167, 4
        %v7535 = vadd.f32 %v6167, %v7534
        %v7536 = vrot.slane %v7535, 2
        %v7537 = vadd.f32 %v7535, %v7536
        %v7538 = vrot.slane %v7537, 1
        %v7539 = vadd.f32 %v7537, %v7538
        %v7540 = vrot.slane %v6168, 4
        %v7541 = vadd.f32 %v6168, %v7540
        %v7542 = vrot.slane %v7541, 2
        %v7543 = vadd.f32 %v7541, %v7542
        %v7544 = vrot.slane %v7543, 1
        %v7545 = vadd.f32 %v7543, %v7544
        %v7546 = vrot.slane %v6169, 4
        %v7547 = vadd.f32 %v6169, %v7546
        %v7548 = vrot.slane %v7547, 2
        %v7549 = vadd.f32 %v7547, %v7548
        %v7550 = vrot.slane %v7549, 1
        %v7551 = vadd.f32 %v7549, %v7550
        %v7552 = vrot.slane %v6170, 4
        %v7553 = vadd.f32 %v6170, %v7552
        %v7554 = vrot.slane %v7553, 2
        %v7555 = vadd.f32 %v7553, %v7554
        %v7556 = vrot.slane %v7555, 1
        %v7557 = vadd.f32 %v7555, %v7556
        %v7558 = vrot.slane %v6171, 4
        %v7559 = vadd.f32 %v6171, %v7558
        %v7560 = vrot.slane %v7559, 2
        %v7561 = vadd.f32 %v7559, %v7560
        %v7562 = vrot.slane %v7561, 1
        %v7563 = vadd.f32 %v7561, %v7562
        %v7564 = vrot.slane %v6172, 4
        %v7565 = vadd.f32 %v6172, %v7564
        %v7566 = vrot.slane %v7565, 2
        %v7567 = vadd.f32 %v7565, %v7566
        %v7568 = vrot.slane %v7567, 1
        %v7569 = vadd.f32 %v7567, %v7568
        %v7570 = vrot.slane %v6173, 4
        %v7571 = vadd.f32 %v6173, %v7570
        %v7572 = vrot.slane %v7571, 2
        %v7573 = vadd.f32 %v7571, %v7572
        %v7574 = vrot.slane %v7573, 1
        %v7575 = vadd.f32 %v7573, %v7574
        %v7576 = vrot.slane %v6174, 4
        %v7577 = vadd.f32 %v6174, %v7576
        %v7578 = vrot.slane %v7577, 2
        %v7579 = vadd.f32 %v7577, %v7578
        %v7580 = vrot.slane %v7579, 1
        %v7581 = vadd.f32 %v7579, %v7580
        %v7582 = vrot.slane %v6175, 4
        %v7583 = vadd.f32 %v6175, %v7582
        %v7584 = vrot.slane %v7583, 2
        %v7585 = vadd.f32 %v7583, %v7584
        %v7586 = vrot.slane %v7585, 1
        %v7587 = vadd.f32 %v7585, %v7586
        %v7588 = vrot.slane %v6176, 4
        %v7589 = vadd.f32 %v6176, %v7588
        %v7590 = vrot.slane %v7589, 2
        %v7591 = vadd.f32 %v7589, %v7590
        %v7592 = vrot.slane %v7591, 1
        %v7593 = vadd.f32 %v7591, %v7592
        %v7594 = vrot.slane %v6177, 4
        %v7595 = vadd.f32 %v6177, %v7594
        %v7596 = vrot.slane %v7595, 2
        %v7597 = vadd.f32 %v7595, %v7596
        %v7598 = vrot.slane %v7597, 1
        %v7599 = vadd.f32 %v7597, %v7598
        %v7600 = vrot.slane %v6178, 4
        %v7601 = vadd.f32 %v6178, %v7600
        %v7602 = vrot.slane %v7601, 2
        %v7603 = vadd.f32 %v7601, %v7602
        %v7604 = vrot.slane %v7603, 1
        %v7605 = vadd.f32 %v7603, %v7604
        %v7606 = vrot.slane %v6179, 4
        %v7607 = vadd.f32 %v6179, %v7606
        %v7608 = vrot.slane %v7607, 2
        %v7609 = vadd.f32 %v7607, %v7608
        %v7610 = vrot.slane %v7609, 1
        %v7611 = vadd.f32 %v7609, %v7610
        %v7612 = vrot.slane %v6180, 4
        %v7613 = vadd.f32 %v6180, %v7612
        %v7614 = vrot.slane %v7613, 2
        %v7615 = vadd.f32 %v7613, %v7614
        %v7616 = vrot.slane %v7615, 1
        %v7617 = vadd.f32 %v7615, %v7616
        %v7618 = vrot.slane %v6181, 4
        %v7619 = vadd.f32 %v6181, %v7618
        %v7620 = vrot.slane %v7619, 2
        %v7621 = vadd.f32 %v7619, %v7620
        %v7622 = vrot.slane %v7621, 1
        %v7623 = vadd.f32 %v7621, %v7622
        %v7624 = vrot.slane %v6182, 4
        %v7625 = vadd.f32 %v6182, %v7624
        %v7626 = vrot.slane %v7625, 2
        %v7627 = vadd.f32 %v7625, %v7626
        %v7628 = vrot.slane %v7627, 1
        %v7629 = vadd.f32 %v7627, %v7628
        %v7630 = vrot.slane %v6183, 4
        %v7631 = vadd.f32 %v6183, %v7630
        %v7632 = vrot.slane %v7631, 2
        %v7633 = vadd.f32 %v7631, %v7632
        %v7634 = vrot.slane %v7633, 1
        %v7635 = vadd.f32 %v7633, %v7634
        %v7636 = vrot.slane %v6184, 4
        %v7637 = vadd.f32 %v6184, %v7636
        %v7638 = vrot.slane %v7637, 2
        %v7639 = vadd.f32 %v7637, %v7638
        %v7640 = vrot.slane %v7639, 1
        %v7641 = vadd.f32 %v7639, %v7640
        %v7642 = vrot.slane %v6185, 4
        %v7643 = vadd.f32 %v6185, %v7642
        %v7644 = vrot.slane %v7643, 2
        %v7645 = vadd.f32 %v7643, %v7644
        %v7646 = vrot.slane %v7645, 1
        %v7647 = vadd.f32 %v7645, %v7646
        %v7648 = vrot.slane %v6186, 4
        %v7649 = vadd.f32 %v6186, %v7648
        %v7650 = vrot.slane %v7649, 2
        %v7651 = vadd.f32 %v7649, %v7650
        %v7652 = vrot.slane %v7651, 1
        %v7653 = vadd.f32 %v7651, %v7652
        %v7654 = vrot.slane %v6187, 4
        %v7655 = vadd.f32 %v6187, %v7654
        %v7656 = vrot.slane %v7655, 2
        %v7657 = vadd.f32 %v7655, %v7656
        %v7658 = vrot.slane %v7657, 1
        %v7659 = vadd.f32 %v7657, %v7658
        %v7660 = vrot.slane %v6188, 4
        %v7661 = vadd.f32 %v6188, %v7660
        %v7662 = vrot.slane %v7661, 2
        %v7663 = vadd.f32 %v7661, %v7662
        %v7664 = vrot.slane %v7663, 1
        %v7665 = vadd.f32 %v7663, %v7664
        %v7666 = vrot.slane %v6189, 4
        %v7667 = vadd.f32 %v6189, %v7666
        %v7668 = vrot.slane %v7667, 2
        %v7669 = vadd.f32 %v7667, %v7668
        %v7670 = vrot.slane %v7669, 1
        %v7671 = vadd.f32 %v7669, %v7670
        %v7672 = vrot.slane %v6190, 4
        %v7673 = vadd.f32 %v6190, %v7672
        %v7674 = vrot.slane %v7673, 2
        %v7675 = vadd.f32 %v7673, %v7674
        %v7676 = vrot.slane %v7675, 1
        %v7677 = vadd.f32 %v7675, %v7676
        %v7678 = vrot.slane %v6191, 4
        %v7679 = vadd.f32 %v6191, %v7678
        %v7680 = vrot.slane %v7679, 2
        %v7681 = vadd.f32 %v7679, %v7680
        %v7682 = vrot.slane %v7681, 1
        %v7683 = vadd.f32 %v7681, %v7682
        %v7684 = vrot.slane %v6192, 4
        %v7685 = vadd.f32 %v6192, %v7684
        %v7686 = vrot.slane %v7685, 2
        %v7687 = vadd.f32 %v7685, %v7686
        %v7688 = vrot.slane %v7687, 1
        %v7689 = vadd.f32 %v7687, %v7688
        %v7690 = vrot.slane %v6193, 4
        %v7691 = vadd.f32 %v6193, %v7690
        %v7692 = vrot.slane %v7691, 2
        %v7693 = vadd.f32 %v7691, %v7692
        %v7694 = vrot.slane %v7693, 1
        %v7695 = vadd.f32 %v7693, %v7694
        %v7696 = vrot.slane %v6194, 4
        %v7697 = vadd.f32 %v6194, %v7696
        %v7698 = vrot.slane %v7697, 2
        %v7699 = vadd.f32 %v7697, %v7698
        %v7700 = vrot.slane %v7699, 1
        %v7701 = vadd.f32 %v7699, %v7700
        %v7702 = vrot.slane %v6195, 4
        %v7703 = vadd.f32 %v6195, %v7702
        %v7704 = vrot.slane %v7703, 2
        %v7705 = vadd.f32 %v7703, %v7704
        %v7706 = vrot.slane %v7705, 1
        %v7707 = vadd.f32 %v7705, %v7706
        %v7708 = vrot.slane %v6196, 4
        %v7709 = vadd.f32 %v6196, %v7708
        %v7710 = vrot.slane %v7709, 2
        %v7711 = vadd.f32 %v7709, %v7710
        %v7712 = vrot.slane %v7711, 1
        %v7713 = vadd.f32 %v7711, %v7712
        %v7714 = vrot.slane %v6197, 4
        %v7715 = vadd.f32 %v6197, %v7714
        %v7716 = vrot.slane %v7715, 2
        %v7717 = vadd.f32 %v7715, %v7716
        %v7718 = vrot.slane %v7717, 1
        %v7719 = vadd.f32 %v7717, %v7718
        %v7720 = vrot.slane %v6198, 4
        %v7721 = vadd.f32 %v6198, %v7720
        %v7722 = vrot.slane %v7721, 2
        %v7723 = vadd.f32 %v7721, %v7722
        %v7724 = vrot.slane %v7723, 1
        %v7725 = vadd.f32 %v7723, %v7724
        %v7726 = vrot.slane %v6199, 4
        %v7727 = vadd.f32 %v6199, %v7726
        %v7728 = vrot.slane %v7727, 2
        %v7729 = vadd.f32 %v7727, %v7728
        %v7730 = vrot.slane %v7729, 1
        %v7731 = vadd.f32 %v7729, %v7730
        %v7732 = vrot.slane %v6200, 4
        %v7733 = vadd.f32 %v6200, %v7732
        %v7734 = vrot.slane %v7733, 2
        %v7735 = vadd.f32 %v7733, %v7734
        %v7736 = vrot.slane %v7735, 1
        %v7737 = vadd.f32 %v7735, %v7736
        %v7738 = vrot.slane %v6201, 4
        %v7739 = vadd.f32 %v6201, %v7738
        %v7740 = vrot.slane %v7739, 2
        %v7741 = vadd.f32 %v7739, %v7740
        %v7742 = vrot.slane %v7741, 1
        %v7743 = vadd.f32 %v7741, %v7742
        %v7744 = vrot.slane %v6202, 4
        %v7745 = vadd.f32 %v6202, %v7744
        %v7746 = vrot.slane %v7745, 2
        %v7747 = vadd.f32 %v7745, %v7746
        %v7748 = vrot.slane %v7747, 1
        %v7749 = vadd.f32 %v7747, %v7748
        %v7750 = vrot.slane %v6203, 4
        %v7751 = vadd.f32 %v6203, %v7750
        %v7752 = vrot.slane %v7751, 2
        %v7753 = vadd.f32 %v7751, %v7752
        %v7754 = vrot.slane %v7753, 1
        %v7755 = vadd.f32 %v7753, %v7754
        %v7756 = vrot.slane %v6204, 4
        %v7757 = vadd.f32 %v6204, %v7756
        %v7758 = vrot.slane %v7757, 2
        %v7759 = vadd.f32 %v7757, %v7758
        %v7760 = vrot.slane %v7759, 1
        %v7761 = vadd.f32 %v7759, %v7760
        %v7762 = vrot.slane %v6205, 4
        %v7763 = vadd.f32 %v6205, %v7762
        %v7764 = vrot.slane %v7763, 2
        %v7765 = vadd.f32 %v7763, %v7764
        %v7766 = vrot.slane %v7765, 1
        %v7767 = vadd.f32 %v7765, %v7766
        %v7768 = vrot.slane %v6206, 4
        %v7769 = vadd.f32 %v6206, %v7768
        %v7770 = vrot.slane %v7769, 2
        %v7771 = vadd.f32 %v7769, %v7770
        %v7772 = vrot.slane %v7771, 1
        %v7773 = vadd.f32 %v7771, %v7772
        %v7774 = vrot.slane %v6207, 4
        %v7775 = vadd.f32 %v6207, %v7774
        %v7776 = vrot.slane %v7775, 2
        %v7777 = vadd.f32 %v7775, %v7776
        %v7778 = vrot.slane %v7777, 1
        %v7779 = vadd.f32 %v7777, %v7778
        %v7780 = vrot.slane %v6208, 4
        %v7781 = vadd.f32 %v6208, %v7780
        %v7782 = vrot.slane %v7781, 2
        %v7783 = vadd.f32 %v7781, %v7782
        %v7784 = vrot.slane %v7783, 1
        %v7785 = vadd.f32 %v7783, %v7784
        %v7786 = vrot.slane %v6209, 4
        %v7787 = vadd.f32 %v6209, %v7786
        %v7788 = vrot.slane %v7787, 2
        %v7789 = vadd.f32 %v7787, %v7788
        %v7790 = vrot.slane %v7789, 1
        %v7791 = vadd.f32 %v7789, %v7790
        %v7792 = vrot.slane %v6210, 4
        %v7793 = vadd.f32 %v6210, %v7792
        %v7794 = vrot.slane %v7793, 2
        %v7795 = vadd.f32 %v7793, %v7794
        %v7796 = vrot.slane %v7795, 1
        %v7797 = vadd.f32 %v7795, %v7796
        %v7798 = vrot.slane %v6211, 4
        %v7799 = vadd.f32 %v6211, %v7798
        %v7800 = vrot.slane %v7799, 2
        %v7801 = vadd.f32 %v7799, %v7800
        %v7802 = vrot.slane %v7801, 1
        %v7803 = vadd.f32 %v7801, %v7802
        %v7804 = vrot.slane %v6212, 4
        %v7805 = vadd.f32 %v6212, %v7804
        %v7806 = vrot.slane %v7805, 2
        %v7807 = vadd.f32 %v7805, %v7806
        %v7808 = vrot.slane %v7807, 1
        %v7809 = vadd.f32 %v7807, %v7808
        %v7810 = vrot.slane %v6213, 4
        %v7811 = vadd.f32 %v6213, %v7810
        %v7812 = vrot.slane %v7811, 2
        %v7813 = vadd.f32 %v7811, %v7812
        %v7814 = vrot.slane %v7813, 1
        %v7815 = vadd.f32 %v7813, %v7814
        %v7816 = vrot.slane %v6214, 4
        %v7817 = vadd.f32 %v6214, %v7816
        %v7818 = vrot.slane %v7817, 2
        %v7819 = vadd.f32 %v7817, %v7818
        %v7820 = vrot.slane %v7819, 1
        %v7821 = vadd.f32 %v7819, %v7820
        %v7822 = vrot.slane %v6215, 4
        %v7823 = vadd.f32 %v6215, %v7822
        %v7824 = vrot.slane %v7823, 2
        %v7825 = vadd.f32 %v7823, %v7824
        %v7826 = vrot.slane %v7825, 1
        %v7827 = vadd.f32 %v7825, %v7826
        %v7828 = vrot.slane %v6216, 4
        %v7829 = vadd.f32 %v6216, %v7828
        %v7830 = vrot.slane %v7829, 2
        %v7831 = vadd.f32 %v7829, %v7830
        %v7832 = vrot.slane %v7831, 1
        %v7833 = vadd.f32 %v7831, %v7832
        %v7834 = vrot.slane %v6217, 4
        %v7835 = vadd.f32 %v6217, %v7834
        %v7836 = vrot.slane %v7835, 2
        %v7837 = vadd.f32 %v7835, %v7836
        %v7838 = vrot.slane %v7837, 1
        %v7839 = vadd.f32 %v7837, %v7838
        %v7840 = vrot.slane %v6218, 4
        %v7841 = vadd.f32 %v6218, %v7840
        %v7842 = vrot.slane %v7841, 2
        %v7843 = vadd.f32 %v7841, %v7842
        %v7844 = vrot.slane %v7843, 1
        %v7845 = vadd.f32 %v7843, %v7844
        %v7846 = vrot.slane %v6219, 4
        %v7847 = vadd.f32 %v6219, %v7846
        %v7848 = vrot.slane %v7847, 2
        %v7849 = vadd.f32 %v7847, %v7848
        %v7850 = vrot.slane %v7849, 1
        %v7851 = vadd.f32 %v7849, %v7850
        %v7852 = vrot.slane %v6220, 4
        %v7853 = vadd.f32 %v6220, %v7852
        %v7854 = vrot.slane %v7853, 2
        %v7855 = vadd.f32 %v7853, %v7854
        %v7856 = vrot.slane %v7855, 1
        %v7857 = vadd.f32 %v7855, %v7856
        %v7858 = vrot.slane %v6221, 4
        %v7859 = vadd.f32 %v6221, %v7858
        %v7860 = vrot.slane %v7859, 2
        %v7861 = vadd.f32 %v7859, %v7860
        %v7862 = vrot.slane %v7861, 1
        %v7863 = vadd.f32 %v7861, %v7862
        %v7864 = vrot.slane %v6222, 4
        %v7865 = vadd.f32 %v6222, %v7864
        %v7866 = vrot.slane %v7865, 2
        %v7867 = vadd.f32 %v7865, %v7866
        %v7868 = vrot.slane %v7867, 1
        %v7869 = vadd.f32 %v7867, %v7868
        %v7870 = vrot.slane %v6223, 4
        %v7871 = vadd.f32 %v6223, %v7870
        %v7872 = vrot.slane %v7871, 2
        %v7873 = vadd.f32 %v7871, %v7872
        %v7874 = vrot.slane %v7873, 1
        %v7875 = vadd.f32 %v7873, %v7874
        %v7876 = vrot.slane %v6224, 4
        %v7877 = vadd.f32 %v6224, %v7876
        %v7878 = vrot.slane %v7877, 2
        %v7879 = vadd.f32 %v7877, %v7878
        %v7880 = vrot.slane %v7879, 1
        %v7881 = vadd.f32 %v7879, %v7880
        %v7882 = vrot.slane %v6225, 4
        %v7883 = vadd.f32 %v6225, %v7882
        %v7884 = vrot.slane %v7883, 2
        %v7885 = vadd.f32 %v7883, %v7884
        %v7886 = vrot.slane %v7885, 1
        %v7887 = vadd.f32 %v7885, %v7886
        %v7888 = vrot.slane %v6226, 4
        %v7889 = vadd.f32 %v6226, %v7888
        %v7890 = vrot.slane %v7889, 2
        %v7891 = vadd.f32 %v7889, %v7890
        %v7892 = vrot.slane %v7891, 1
        %v7893 = vadd.f32 %v7891, %v7892
        %v7894 = vrot.slane %v6227, 4
        %v7895 = vadd.f32 %v6227, %v7894
        %v7896 = vrot.slane %v7895, 2
        %v7897 = vadd.f32 %v7895, %v7896
        %v7898 = vrot.slane %v7897, 1
        %v7899 = vadd.f32 %v7897, %v7898
        %v7900 = vrot.slane %v6228, 4
        %v7901 = vadd.f32 %v6228, %v7900
        %v7902 = vrot.slane %v7901, 2
        %v7903 = vadd.f32 %v7901, %v7902
        %v7904 = vrot.slane %v7903, 1
        %v7905 = vadd.f32 %v7903, %v7904
        %v7906 = vrot.slane %v6229, 4
        %v7907 = vadd.f32 %v6229, %v7906
        %v7908 = vrot.slane %v7907, 2
        %v7909 = vadd.f32 %v7907, %v7908
        %v7910 = vrot.slane %v7909, 1
        %v7911 = vadd.f32 %v7909, %v7910
        %v7912 = vrot.slane %v6230, 4
        %v7913 = vadd.f32 %v6230, %v7912
        %v7914 = vrot.slane %v7913, 2
        %v7915 = vadd.f32 %v7913, %v7914
        %v7916 = vrot.slane %v7915, 1
        %v7917 = vadd.f32 %v7915, %v7916
        %v7918 = vrot.slane %v6231, 4
        %v7919 = vadd.f32 %v6231, %v7918
        %v7920 = vrot.slane %v7919, 2
        %v7921 = vadd.f32 %v7919, %v7920
        %v7922 = vrot.slane %v7921, 1
        %v7923 = vadd.f32 %v7921, %v7922
        %v7924 = vrot.slane %v6232, 4
        %v7925 = vadd.f32 %v6232, %v7924
        %v7926 = vrot.slane %v7925, 2
        %v7927 = vadd.f32 %v7925, %v7926
        %v7928 = vrot.slane %v7927, 1
        %v7929 = vadd.f32 %v7927, %v7928
        %v7930 = vrot.slane %v6233, 4
        %v7931 = vadd.f32 %v6233, %v7930
        %v7932 = vrot.slane %v7931, 2
        %v7933 = vadd.f32 %v7931, %v7932
        %v7934 = vrot.slane %v7933, 1
        %v7935 = vadd.f32 %v7933, %v7934
        %v7936 = vrot.slane %v6234, 4
        %v7937 = vadd.f32 %v6234, %v7936
        %v7938 = vrot.slane %v7937, 2
        %v7939 = vadd.f32 %v7937, %v7938
        %v7940 = vrot.slane %v7939, 1
        %v7941 = vadd.f32 %v7939, %v7940
        %v7942 = vrot.slane %v6235, 4
        %v7943 = vadd.f32 %v6235, %v7942
        %v7944 = vrot.slane %v7943, 2
        %v7945 = vadd.f32 %v7943, %v7944
        %v7946 = vrot.slane %v7945, 1
        %v7947 = vadd.f32 %v7945, %v7946
        %v7948 = vrot.slane %v6236, 4
        %v7949 = vadd.f32 %v6236, %v7948
        %v7950 = vrot.slane %v7949, 2
        %v7951 = vadd.f32 %v7949, %v7950
        %v7952 = vrot.slane %v7951, 1
        %v7953 = vadd.f32 %v7951, %v7952
        %v7954 = vrot.slane %v6237, 4
        %v7955 = vadd.f32 %v6237, %v7954
        %v7956 = vrot.slane %v7955, 2
        %v7957 = vadd.f32 %v7955, %v7956
        %v7958 = vrot.slane %v7957, 1
        %v7959 = vadd.f32 %v7957, %v7958
        %v7960 = vrot.slane %v6238, 4
        %v7961 = vadd.f32 %v6238, %v7960
        %v7962 = vrot.slane %v7961, 2
        %v7963 = vadd.f32 %v7961, %v7962
        %v7964 = vrot.slane %v7963, 1
        %v7965 = vadd.f32 %v7963, %v7964
        %v7966 = vrot.slane %v6239, 4
        %v7967 = vadd.f32 %v6239, %v7966
        %v7968 = vrot.slane %v7967, 2
        %v7969 = vadd.f32 %v7967, %v7968
        %v7970 = vrot.slane %v7969, 1
        %v7971 = vadd.f32 %v7969, %v7970
        %v7972 = vrot.slane %v6240, 4
        %v7973 = vadd.f32 %v6240, %v7972
        %v7974 = vrot.slane %v7973, 2
        %v7975 = vadd.f32 %v7973, %v7974
        %v7976 = vrot.slane %v7975, 1
        %v7977 = vadd.f32 %v7975, %v7976
        %v7978 = vrot.slane %v6241, 4
        %v7979 = vadd.f32 %v6241, %v7978
        %v7980 = vrot.slane %v7979, 2
        %v7981 = vadd.f32 %v7979, %v7980
        %v7982 = vrot.slane %v7981, 1
        %v7983 = vadd.f32 %v7981, %v7982
        %v7984 = vrot.slane %v6242, 4
        %v7985 = vadd.f32 %v6242, %v7984
        %v7986 = vrot.slane %v7985, 2
        %v7987 = vadd.f32 %v7985, %v7986
        %v7988 = vrot.slane %v7987, 1
        %v7989 = vadd.f32 %v7987, %v7988
        %v7990 = vrot.slane %v6243, 4
        %v7991 = vadd.f32 %v6243, %v7990
        %v7992 = vrot.slane %v7991, 2
        %v7993 = vadd.f32 %v7991, %v7992
        %v7994 = vrot.slane %v7993, 1
        %v7995 = vadd.f32 %v7993, %v7994
        %v7996 = vrot.slane %v6244, 4
        %v7997 = vadd.f32 %v6244, %v7996
        %v7998 = vrot.slane %v7997, 2
        %v7999 = vadd.f32 %v7997, %v7998
        %v8000 = vrot.slane %v7999, 1
        %v8001 = vadd.f32 %v7999, %v8000
        %v8002 = vrot.slane %v6245, 4
        %v8003 = vadd.f32 %v6245, %v8002
        %v8004 = vrot.slane %v8003, 2
        %v8005 = vadd.f32 %v8003, %v8004
        %v8006 = vrot.slane %v8005, 1
        %v8007 = vadd.f32 %v8005, %v8006
        %v8008 = vrot.slane %v6246, 4
        %v8009 = vadd.f32 %v6246, %v8008
        %v8010 = vrot.slane %v8009, 2
        %v8011 = vadd.f32 %v8009, %v8010
        %v8012 = vrot.slane %v8011, 1
        %v8013 = vadd.f32 %v8011, %v8012
        %v8014 = vrot.slane %v6247, 4
        %v8015 = vadd.f32 %v6247, %v8014
        %v8016 = vrot.slane %v8015, 2
        %v8017 = vadd.f32 %v8015, %v8016
        %v8018 = vrot.slane %v8017, 1
        %v8019 = vadd.f32 %v8017, %v8018
        %v8020 = vrot.slane %v6248, 4
        %v8021 = vadd.f32 %v6248, %v8020
        %v8022 = vrot.slane %v8021, 2
        %v8023 = vadd.f32 %v8021, %v8022
        %v8024 = vrot.slane %v8023, 1
        %v8025 = vadd.f32 %v8023, %v8024
        %v8026 = vrot.slane %v6249, 4
        %v8027 = vadd.f32 %v6249, %v8026
        %v8028 = vrot.slane %v8027, 2
        %v8029 = vadd.f32 %v8027, %v8028
        %v8030 = vrot.slane %v8029, 1
        %v8031 = vadd.f32 %v8029, %v8030
        %v8032 = vrot.slane %v6250, 4
        %v8033 = vadd.f32 %v6250, %v8032
        %v8034 = vrot.slane %v8033, 2
        %v8035 = vadd.f32 %v8033, %v8034
        %v8036 = vrot.slane %v8035, 1
        %v8037 = vadd.f32 %v8035, %v8036
        %v8038 = vrot.slane %v6251, 4
        %v8039 = vadd.f32 %v6251, %v8038
        %v8040 = vrot.slane %v8039, 2
        %v8041 = vadd.f32 %v8039, %v8040
        %v8042 = vrot.slane %v8041, 1
        %v8043 = vadd.f32 %v8041, %v8042
        %v8044 = vrot.slane %v6252, 4
        %v8045 = vadd.f32 %v6252, %v8044
        %v8046 = vrot.slane %v8045, 2
        %v8047 = vadd.f32 %v8045, %v8046
        %v8048 = vrot.slane %v8047, 1
        %v8049 = vadd.f32 %v8047, %v8048
        %v8050 = vrot.slane %v6253, 4
        %v8051 = vadd.f32 %v6253, %v8050
        %v8052 = vrot.slane %v8051, 2
        %v8053 = vadd.f32 %v8051, %v8052
        %v8054 = vrot.slane %v8053, 1
        %v8055 = vadd.f32 %v8053, %v8054
        %v8056 = vrot.slane %v6254, 4
        %v8057 = vadd.f32 %v6254, %v8056
        %v8058 = vrot.slane %v8057, 2
        %v8059 = vadd.f32 %v8057, %v8058
        %v8060 = vrot.slane %v8059, 1
        %v8061 = vadd.f32 %v8059, %v8060
        %v8062 = vrot.slane %v6255, 4
        %v8063 = vadd.f32 %v6255, %v8062
        %v8064 = vrot.slane %v8063, 2
        %v8065 = vadd.f32 %v8063, %v8064
        %v8066 = vrot.slane %v8065, 1
        %v8067 = vadd.f32 %v8065, %v8066
        %v8068 = vrot.slane %v6256, 4
        %v8069 = vadd.f32 %v6256, %v8068
        %v8070 = vrot.slane %v8069, 2
        %v8071 = vadd.f32 %v8069, %v8070
        %v8072 = vrot.slane %v8071, 1
        %v8073 = vadd.f32 %v8071, %v8072
        %v8074 = vrot.slane %v6257, 4
        %v8075 = vadd.f32 %v6257, %v8074
        %v8076 = vrot.slane %v8075, 2
        %v8077 = vadd.f32 %v8075, %v8076
        %v8078 = vrot.slane %v8077, 1
        %v8079 = vadd.f32 %v8077, %v8078
        %v8080 = vrot.slane %v6258, 4
        %v8081 = vadd.f32 %v6258, %v8080
        %v8082 = vrot.slane %v8081, 2
        %v8083 = vadd.f32 %v8081, %v8082
        %v8084 = vrot.slane %v8083, 1
        %v8085 = vadd.f32 %v8083, %v8084
        %v8086 = vrot.slane %v6259, 4
        %v8087 = vadd.f32 %v6259, %v8086
        %v8088 = vrot.slane %v8087, 2
        %v8089 = vadd.f32 %v8087, %v8088
        %v8090 = vrot.slane %v8089, 1
        %v8091 = vadd.f32 %v8089, %v8090
        %v8092 = vrot.slane %v6260, 4
        %v8093 = vadd.f32 %v6260, %v8092
        %v8094 = vrot.slane %v8093, 2
        %v8095 = vadd.f32 %v8093, %v8094
        %v8096 = vrot.slane %v8095, 1
        %v8097 = vadd.f32 %v8095, %v8096
        %v8098 = vrot.slane %v6261, 4
        %v8099 = vadd.f32 %v6261, %v8098
        %v8100 = vrot.slane %v8099, 2
        %v8101 = vadd.f32 %v8099, %v8100
        %v8102 = vrot.slane %v8101, 1
        %v8103 = vadd.f32 %v8101, %v8102
        %v8104 = vrot.slane %v6262, 4
        %v8105 = vadd.f32 %v6262, %v8104
        %v8106 = vrot.slane %v8105, 2
        %v8107 = vadd.f32 %v8105, %v8106
        %v8108 = vrot.slane %v8107, 1
        %v8109 = vadd.f32 %v8107, %v8108
        %v8110 = vrot.slane %v6263, 4
        %v8111 = vadd.f32 %v6263, %v8110
        %v8112 = vrot.slane %v8111, 2
        %v8113 = vadd.f32 %v8111, %v8112
        %v8114 = vrot.slane %v8113, 1
        %v8115 = vadd.f32 %v8113, %v8114
        %v8116 = vrot.slane %v6264, 4
        %v8117 = vadd.f32 %v6264, %v8116
        %v8118 = vrot.slane %v8117, 2
        %v8119 = vadd.f32 %v8117, %v8118
        %v8120 = vrot.slane %v8119, 1
        %v8121 = vadd.f32 %v8119, %v8120
        %v8122 = vrot.slane %v6265, 4
        %v8123 = vadd.f32 %v6265, %v8122
        %v8124 = vrot.slane %v8123, 2
        %v8125 = vadd.f32 %v8123, %v8124
        %v8126 = vrot.slane %v8125, 1
        %v8127 = vadd.f32 %v8125, %v8126
        %v8128 = vrot.slane %v6266, 4
        %v8129 = vadd.f32 %v6266, %v8128
        %v8130 = vrot.slane %v8129, 2
        %v8131 = vadd.f32 %v8129, %v8130
        %v8132 = vrot.slane %v8131, 1
        %v8133 = vadd.f32 %v8131, %v8132
        %v8134 = vrot.slane %v6267, 4
        %v8135 = vadd.f32 %v6267, %v8134
        %v8136 = vrot.slane %v8135, 2
        %v8137 = vadd.f32 %v8135, %v8136
        %v8138 = vrot.slane %v8137, 1
        %v8139 = vadd.f32 %v8137, %v8138
        %v8140 = vrot.slane %v6268, 4
        %v8141 = vadd.f32 %v6268, %v8140
        %v8142 = vrot.slane %v8141, 2
        %v8143 = vadd.f32 %v8141, %v8142
        %v8144 = vrot.slane %v8143, 1
        %v8145 = vadd.f32 %v8143, %v8144
        %v8146 = vrot.slane %v6269, 4
        %v8147 = vadd.f32 %v6269, %v8146
        %v8148 = vrot.slane %v8147, 2
        %v8149 = vadd.f32 %v8147, %v8148
        %v8150 = vrot.slane %v8149, 1
        %v8151 = vadd.f32 %v8149, %v8150
        %v8152 = vrot.slane %v6270, 4
        %v8153 = vadd.f32 %v6270, %v8152
        %v8154 = vrot.slane %v8153, 2
        %v8155 = vadd.f32 %v8153, %v8154
        %v8156 = vrot.slane %v8155, 1
        %v8157 = vadd.f32 %v8155, %v8156
        %v8158 = vrot.slane %v6271, 4
        %v8159 = vadd.f32 %v6271, %v8158
        %v8160 = vrot.slane %v8159, 2
        %v8161 = vadd.f32 %v8159, %v8160
        %v8162 = vrot.slane %v8161, 1
        %v8163 = vadd.f32 %v8161, %v8162
        %v8164 = vrot.slane %v6272, 4
        %v8165 = vadd.f32 %v6272, %v8164
        %v8166 = vrot.slane %v8165, 2
        %v8167 = vadd.f32 %v8165, %v8166
        %v8168 = vrot.slane %v8167, 1
        %v8169 = vadd.f32 %v8167, %v8168
        %v8170 = vrot.slane %v6273, 4
        %v8171 = vadd.f32 %v6273, %v8170
        %v8172 = vrot.slane %v8171, 2
        %v8173 = vadd.f32 %v8171, %v8172
        %v8174 = vrot.slane %v8173, 1
        %v8175 = vadd.f32 %v8173, %v8174
        %v8176 = vrot.slane %v6274, 4
        %v8177 = vadd.f32 %v6274, %v8176
        %v8178 = vrot.slane %v8177, 2
        %v8179 = vadd.f32 %v8177, %v8178
        %v8180 = vrot.slane %v8179, 1
        %v8181 = vadd.f32 %v8179, %v8180
        %v8182 = vrot.slane %v6275, 4
        %v8183 = vadd.f32 %v6275, %v8182
        %v8184 = vrot.slane %v8183, 2
        %v8185 = vadd.f32 %v8183, %v8184
        %v8186 = vrot.slane %v8185, 1
        %v8187 = vadd.f32 %v8185, %v8186
        %v8188 = vrot.slane %v6276, 4
        %v8189 = vadd.f32 %v6276, %v8188
        %v8190 = vrot.slane %v8189, 2
        %v8191 = vadd.f32 %v8189, %v8190
        %v8192 = vrot.slane %v8191, 1
        %v8193 = vadd.f32 %v8191, %v8192
        %v8194 = vrot.slane %v6277, 4
        %v8195 = vadd.f32 %v6277, %v8194
        %v8196 = vrot.slane %v8195, 2
        %v8197 = vadd.f32 %v8195, %v8196
        %v8198 = vrot.slane %v8197, 1
        %v8199 = vadd.f32 %v8197, %v8198
        %v8200 = vrot.slane %v6278, 4
        %v8201 = vadd.f32 %v6278, %v8200
        %v8202 = vrot.slane %v8201, 2
        %v8203 = vadd.f32 %v8201, %v8202
        %v8204 = vrot.slane %v8203, 1
        %v8205 = vadd.f32 %v8203, %v8204
        %v8206 = vrot.slane %v6279, 4
        %v8207 = vadd.f32 %v6279, %v8206
        %v8208 = vrot.slane %v8207, 2
        %v8209 = vadd.f32 %v8207, %v8208
        %v8210 = vrot.slane %v8209, 1
        %v8211 = vadd.f32 %v8209, %v8210
        %v8212 = vrot.slane %v6280, 4
        %v8213 = vadd.f32 %v6280, %v8212
        %v8214 = vrot.slane %v8213, 2
        %v8215 = vadd.f32 %v8213, %v8214
        %v8216 = vrot.slane %v8215, 1
        %v8217 = vadd.f32 %v8215, %v8216
        %v8218 = vrot.slane %v6281, 4
        %v8219 = vadd.f32 %v6281, %v8218
        %v8220 = vrot.slane %v8219, 2
        %v8221 = vadd.f32 %v8219, %v8220
        %v8222 = vrot.slane %v8221, 1
        %v8223 = vadd.f32 %v8221, %v8222
        %v8224 = vrot.slane %v6282, 4
        %v8225 = vadd.f32 %v6282, %v8224
        %v8226 = vrot.slane %v8225, 2
        %v8227 = vadd.f32 %v8225, %v8226
        %v8228 = vrot.slane %v8227, 1
        %v8229 = vadd.f32 %v8227, %v8228
        %v8230 = vrot.slane %v6283, 4
        %v8231 = vadd.f32 %v6283, %v8230
        %v8232 = vrot.slane %v8231, 2
        %v8233 = vadd.f32 %v8231, %v8232
        %v8234 = vrot.slane %v8233, 1
        %v8235 = vadd.f32 %v8233, %v8234
        %v8236 = vrot.slane %v6284, 4
        %v8237 = vadd.f32 %v6284, %v8236
        %v8238 = vrot.slane %v8237, 2
        %v8239 = vadd.f32 %v8237, %v8238
        %v8240 = vrot.slane %v8239, 1
        %v8241 = vadd.f32 %v8239, %v8240
        %v8242 = vrot.slane %v6285, 4
        %v8243 = vadd.f32 %v6285, %v8242
        %v8244 = vrot.slane %v8243, 2
        %v8245 = vadd.f32 %v8243, %v8244
        %v8246 = vrot.slane %v8245, 1
        %v8247 = vadd.f32 %v8245, %v8246
        %v8248 = vrot.slane %v6286, 4
        %v8249 = vadd.f32 %v6286, %v8248
        %v8250 = vrot.slane %v8249, 2
        %v8251 = vadd.f32 %v8249, %v8250
        %v8252 = vrot.slane %v8251, 1
        %v8253 = vadd.f32 %v8251, %v8252
        %v8254 = vrot.slane %v6287, 4
        %v8255 = vadd.f32 %v6287, %v8254
        %v8256 = vrot.slane %v8255, 2
        %v8257 = vadd.f32 %v8255, %v8256
        %v8258 = vrot.slane %v8257, 1
        %v8259 = vadd.f32 %v8257, %v8258
        %v8260 = vrot.slane %v6288, 4
        %v8261 = vadd.f32 %v6288, %v8260
        %v8262 = vrot.slane %v8261, 2
        %v8263 = vadd.f32 %v8261, %v8262
        %v8264 = vrot.slane %v8263, 1
        %v8265 = vadd.f32 %v8263, %v8264
        %v8266 = vrot.slane %v6289, 4
        %v8267 = vadd.f32 %v6289, %v8266
        %v8268 = vrot.slane %v8267, 2
        %v8269 = vadd.f32 %v8267, %v8268
        %v8270 = vrot.slane %v8269, 1
        %v8271 = vadd.f32 %v8269, %v8270
        %v8272 = vrot.slane %v6290, 4
        %v8273 = vadd.f32 %v6290, %v8272
        %v8274 = vrot.slane %v8273, 2
        %v8275 = vadd.f32 %v8273, %v8274
        %v8276 = vrot.slane %v8275, 1
        %v8277 = vadd.f32 %v8275, %v8276
        %v8278 = vrot.slane %v6291, 4
        %v8279 = vadd.f32 %v6291, %v8278
        %v8280 = vrot.slane %v8279, 2
        %v8281 = vadd.f32 %v8279, %v8280
        %v8282 = vrot.slane %v8281, 1
        %v8283 = vadd.f32 %v8281, %v8282
        %v8284 = vrot.slane %v6292, 4
        %v8285 = vadd.f32 %v6292, %v8284
        %v8286 = vrot.slane %v8285, 2
        %v8287 = vadd.f32 %v8285, %v8286
        %v8288 = vrot.slane %v8287, 1
        %v8289 = vadd.f32 %v8287, %v8288
        %v8290 = vrot.slane %v6293, 4
        %v8291 = vadd.f32 %v6293, %v8290
        %v8292 = vrot.slane %v8291, 2
        %v8293 = vadd.f32 %v8291, %v8292
        %v8294 = vrot.slane %v8293, 1
        %v8295 = vadd.f32 %v8293, %v8294
        %v8296 = vrot.slane %v6294, 4
        %v8297 = vadd.f32 %v6294, %v8296
        %v8298 = vrot.slane %v8297, 2
        %v8299 = vadd.f32 %v8297, %v8298
        %v8300 = vrot.slane %v8299, 1
        %v8301 = vadd.f32 %v8299, %v8300
        %v8302 = vrot.slane %v6295, 4
        %v8303 = vadd.f32 %v6295, %v8302
        %v8304 = vrot.slane %v8303, 2
        %v8305 = vadd.f32 %v8303, %v8304
        %v8306 = vrot.slane %v8305, 1
        %v8307 = vadd.f32 %v8305, %v8306
        %v8308 = vrot.slane %v6296, 4
        %v8309 = vadd.f32 %v6296, %v8308
        %v8310 = vrot.slane %v8309, 2
        %v8311 = vadd.f32 %v8309, %v8310
        %v8312 = vrot.slane %v8311, 1
        %v8313 = vadd.f32 %v8311, %v8312
        %v8314 = vrot.slane %v6297, 4
        %v8315 = vadd.f32 %v6297, %v8314
        %v8316 = vrot.slane %v8315, 2
        %v8317 = vadd.f32 %v8315, %v8316
        %v8318 = vrot.slane %v8317, 1
        %v8319 = vadd.f32 %v8317, %v8318
        %v8320 = vrot.slane %v6298, 4
        %v8321 = vadd.f32 %v6298, %v8320
        %v8322 = vrot.slane %v8321, 2
        %v8323 = vadd.f32 %v8321, %v8322
        %v8324 = vrot.slane %v8323, 1
        %v8325 = vadd.f32 %v8323, %v8324
        %v8326 = vrot.slane %v6299, 4
        %v8327 = vadd.f32 %v6299, %v8326
        %v8328 = vrot.slane %v8327, 2
        %v8329 = vadd.f32 %v8327, %v8328
        %v8330 = vrot.slane %v8329, 1
        %v8331 = vadd.f32 %v8329, %v8330
        %v8332 = vrot.slane %v6300, 4
        %v8333 = vadd.f32 %v6300, %v8332
        %v8334 = vrot.slane %v8333, 2
        %v8335 = vadd.f32 %v8333, %v8334
        %v8336 = vrot.slane %v8335, 1
        %v8337 = vadd.f32 %v8335, %v8336
        %v8338 = vrot.slane %v6301, 4
        %v8339 = vadd.f32 %v6301, %v8338
        %v8340 = vrot.slane %v8339, 2
        %v8341 = vadd.f32 %v8339, %v8340
        %v8342 = vrot.slane %v8341, 1
        %v8343 = vadd.f32 %v8341, %v8342
        %v8344 = vrot.slane %v6302, 4
        %v8345 = vadd.f32 %v6302, %v8344
        %v8346 = vrot.slane %v8345, 2
        %v8347 = vadd.f32 %v8345, %v8346
        %v8348 = vrot.slane %v8347, 1
        %v8349 = vadd.f32 %v8347, %v8348
        %v8350 = vrot.slane %v6303, 4
        %v8351 = vadd.f32 %v6303, %v8350
        %v8352 = vrot.slane %v8351, 2
        %v8353 = vadd.f32 %v8351, %v8352
        %v8354 = vrot.slane %v8353, 1
        %v8355 = vadd.f32 %v8353, %v8354
        %v8356 = vrot.slane %v6304, 4
        %v8357 = vadd.f32 %v6304, %v8356
        %v8358 = vrot.slane %v8357, 2
        %v8359 = vadd.f32 %v8357, %v8358
        %v8360 = vrot.slane %v8359, 1
        %v8361 = vadd.f32 %v8359, %v8360
        %v8362 = vrot.slane %v6305, 4
        %v8363 = vadd.f32 %v6305, %v8362
        %v8364 = vrot.slane %v8363, 2
        %v8365 = vadd.f32 %v8363, %v8364
        %v8366 = vrot.slane %v8365, 1
        %v8367 = vadd.f32 %v8365, %v8366
        %v8368 = vrot.slane %v6306, 4
        %v8369 = vadd.f32 %v6306, %v8368
        %v8370 = vrot.slane %v8369, 2
        %v8371 = vadd.f32 %v8369, %v8370
        %v8372 = vrot.slane %v8371, 1
        %v8373 = vadd.f32 %v8371, %v8372
        %v8374 = vrot.slane %v6307, 4
        %v8375 = vadd.f32 %v6307, %v8374
        %v8376 = vrot.slane %v8375, 2
        %v8377 = vadd.f32 %v8375, %v8376
        %v8378 = vrot.slane %v8377, 1
        %v8379 = vadd.f32 %v8377, %v8378
        %v8380 = vrot.slane %v6308, 4
        %v8381 = vadd.f32 %v6308, %v8380
        %v8382 = vrot.slane %v8381, 2
        %v8383 = vadd.f32 %v8381, %v8382
        %v8384 = vrot.slane %v8383, 1
        %v8385 = vadd.f32 %v8383, %v8384
        %v8386 = vrot.slane %v6309, 4
        %v8387 = vadd.f32 %v6309, %v8386
        %v8388 = vrot.slane %v8387, 2
        %v8389 = vadd.f32 %v8387, %v8388
        %v8390 = vrot.slane %v8389, 1
        %v8391 = vadd.f32 %v8389, %v8390
        %v8392 = vrot.slane %v6310, 4
        %v8393 = vadd.f32 %v6310, %v8392
        %v8394 = vrot.slane %v8393, 2
        %v8395 = vadd.f32 %v8393, %v8394
        %v8396 = vrot.slane %v8395, 1
        %v8397 = vadd.f32 %v8395, %v8396
        %v8398 = vrot.slane %v6311, 4
        %v8399 = vadd.f32 %v6311, %v8398
        %v8400 = vrot.slane %v8399, 2
        %v8401 = vadd.f32 %v8399, %v8400
        %v8402 = vrot.slane %v8401, 1
        %v8403 = vadd.f32 %v8401, %v8402
        %v8404 = vrot.slane %v6312, 4
        %v8405 = vadd.f32 %v6312, %v8404
        %v8406 = vrot.slane %v8405, 2
        %v8407 = vadd.f32 %v8405, %v8406
        %v8408 = vrot.slane %v8407, 1
        %v8409 = vadd.f32 %v8407, %v8408
        %v8410 = vrot.slane %v6313, 4
        %v8411 = vadd.f32 %v6313, %v8410
        %v8412 = vrot.slane %v8411, 2
        %v8413 = vadd.f32 %v8411, %v8412
        %v8414 = vrot.slane %v8413, 1
        %v8415 = vadd.f32 %v8413, %v8414
        %v8416 = vrot.slane %v6314, 4
        %v8417 = vadd.f32 %v6314, %v8416
        %v8418 = vrot.slane %v8417, 2
        %v8419 = vadd.f32 %v8417, %v8418
        %v8420 = vrot.slane %v8419, 1
        %v8421 = vadd.f32 %v8419, %v8420
        %v8422 = vrot.slane %v6315, 4
        %v8423 = vadd.f32 %v6315, %v8422
        %v8424 = vrot.slane %v8423, 2
        %v8425 = vadd.f32 %v8423, %v8424
        %v8426 = vrot.slane %v8425, 1
        %v8427 = vadd.f32 %v8425, %v8426
        %v8428 = vrot.slane %v6316, 4
        %v8429 = vadd.f32 %v6316, %v8428
        %v8430 = vrot.slane %v8429, 2
        %v8431 = vadd.f32 %v8429, %v8430
        %v8432 = vrot.slane %v8431, 1
        %v8433 = vadd.f32 %v8431, %v8432
        %v8434 = vrot.slane %v6317, 4
        %v8435 = vadd.f32 %v6317, %v8434
        %v8436 = vrot.slane %v8435, 2
        %v8437 = vadd.f32 %v8435, %v8436
        %v8438 = vrot.slane %v8437, 1
        %v8439 = vadd.f32 %v8437, %v8438
        %v8440 = vrot.slane %v6318, 4
        %v8441 = vadd.f32 %v6318, %v8440
        %v8442 = vrot.slane %v8441, 2
        %v8443 = vadd.f32 %v8441, %v8442
        %v8444 = vrot.slane %v8443, 1
        %v8445 = vadd.f32 %v8443, %v8444
        %v8446 = vrot.slane %v6319, 4
        %v8447 = vadd.f32 %v6319, %v8446
        %v8448 = vrot.slane %v8447, 2
        %v8449 = vadd.f32 %v8447, %v8448
        %v8450 = vrot.slane %v8449, 1
        %v8451 = vadd.f32 %v8449, %v8450
        %v8452 = vrot.slane %v6320, 4
        %v8453 = vadd.f32 %v6320, %v8452
        %v8454 = vrot.slane %v8453, 2
        %v8455 = vadd.f32 %v8453, %v8454
        %v8456 = vrot.slane %v8455, 1
        %v8457 = vadd.f32 %v8455, %v8456
        %v8458 = vrot.slane %v6321, 4
        %v8459 = vadd.f32 %v6321, %v8458
        %v8460 = vrot.slane %v8459, 2
        %v8461 = vadd.f32 %v8459, %v8460
        %v8462 = vrot.slane %v8461, 1
        %v8463 = vadd.f32 %v8461, %v8462
        %v8464 = vrot.slane %v6322, 4
        %v8465 = vadd.f32 %v6322, %v8464
        %v8466 = vrot.slane %v8465, 2
        %v8467 = vadd.f32 %v8465, %v8466
        %v8468 = vrot.slane %v8467, 1
        %v8469 = vadd.f32 %v8467, %v8468
        %v8470 = vrot.slane %v6323, 4
        %v8471 = vadd.f32 %v6323, %v8470
        %v8472 = vrot.slane %v8471, 2
        %v8473 = vadd.f32 %v8471, %v8472
        %v8474 = vrot.slane %v8473, 1
        %v8475 = vadd.f32 %v8473, %v8474
        %v8476 = vrot.slane %v6324, 4
        %v8477 = vadd.f32 %v6324, %v8476
        %v8478 = vrot.slane %v8477, 2
        %v8479 = vadd.f32 %v8477, %v8478
        %v8480 = vrot.slane %v8479, 1
        %v8481 = vadd.f32 %v8479, %v8480
        %v8482 = vrot.slane %v6325, 4
        %v8483 = vadd.f32 %v6325, %v8482
        %v8484 = vrot.slane %v8483, 2
        %v8485 = vadd.f32 %v8483, %v8484
        %v8486 = vrot.slane %v8485, 1
        %v8487 = vadd.f32 %v8485, %v8486
        %v8488 = vrot.slane %v6326, 4
        %v8489 = vadd.f32 %v6326, %v8488
        %v8490 = vrot.slane %v8489, 2
        %v8491 = vadd.f32 %v8489, %v8490
        %v8492 = vrot.slane %v8491, 1
        %v8493 = vadd.f32 %v8491, %v8492
        %v8494 = vrot.slane %v6327, 4
        %v8495 = vadd.f32 %v6327, %v8494
        %v8496 = vrot.slane %v8495, 2
        %v8497 = vadd.f32 %v8495, %v8496
        %v8498 = vrot.slane %v8497, 1
        %v8499 = vadd.f32 %v8497, %v8498
        %v8500 = vrot.slane %v6328, 4
        %v8501 = vadd.f32 %v6328, %v8500
        %v8502 = vrot.slane %v8501, 2
        %v8503 = vadd.f32 %v8501, %v8502
        %v8504 = vrot.slane %v8503, 1
        %v8505 = vadd.f32 %v8503, %v8504
        %v8506 = vrot.slane %v6329, 4
        %v8507 = vadd.f32 %v6329, %v8506
        %v8508 = vrot.slane %v8507, 2
        %v8509 = vadd.f32 %v8507, %v8508
        %v8510 = vrot.slane %v8509, 1
        %v8511 = vadd.f32 %v8509, %v8510
        %v8512 = vrot.slane %v6330, 4
        %v8513 = vadd.f32 %v6330, %v8512
        %v8514 = vrot.slane %v8513, 2
        %v8515 = vadd.f32 %v8513, %v8514
        %v8516 = vrot.slane %v8515, 1
        %v8517 = vadd.f32 %v8515, %v8516
        %v8518 = vrot.slane %v6331, 4
        %v8519 = vadd.f32 %v6331, %v8518
        %v8520 = vrot.slane %v8519, 2
        %v8521 = vadd.f32 %v8519, %v8520
        %v8522 = vrot.slane %v8521, 1
        %v8523 = vadd.f32 %v8521, %v8522
        %v8524 = vrot.slane %v6332, 4
        %v8525 = vadd.f32 %v6332, %v8524
        %v8526 = vrot.slane %v8525, 2
        %v8527 = vadd.f32 %v8525, %v8526
        %v8528 = vrot.slane %v8527, 1
        %v8529 = vadd.f32 %v8527, %v8528
        %v8530 = vrot.slane %v6333, 4
        %v8531 = vadd.f32 %v6333, %v8530
        %v8532 = vrot.slane %v8531, 2
        %v8533 = vadd.f32 %v8531, %v8532
        %v8534 = vrot.slane %v8533, 1
        %v8535 = vadd.f32 %v8533, %v8534
        %v8536 = vrot.slane %v6334, 4
        %v8537 = vadd.f32 %v6334, %v8536
        %v8538 = vrot.slane %v8537, 2
        %v8539 = vadd.f32 %v8537, %v8538
        %v8540 = vrot.slane %v8539, 1
        %v8541 = vadd.f32 %v8539, %v8540
        %v8542 = vrot.slane %v6335, 4
        %v8543 = vadd.f32 %v6335, %v8542
        %v8544 = vrot.slane %v8543, 2
        %v8545 = vadd.f32 %v8543, %v8544
        %v8546 = vrot.slane %v8545, 1
        %v8547 = vadd.f32 %v8545, %v8546
        %v8548 = vrot.slane %v6336, 4
        %v8549 = vadd.f32 %v6336, %v8548
        %v8550 = vrot.slane %v8549, 2
        %v8551 = vadd.f32 %v8549, %v8550
        %v8552 = vrot.slane %v8551, 1
        %v8553 = vadd.f32 %v8551, %v8552
        %v8554 = vrot.slane %v6337, 4
        %v8555 = vadd.f32 %v6337, %v8554
        %v8556 = vrot.slane %v8555, 2
        %v8557 = vadd.f32 %v8555, %v8556
        %v8558 = vrot.slane %v8557, 1
        %v8559 = vadd.f32 %v8557, %v8558
        %v8560 = vrot.slane %v6338, 4
        %v8561 = vadd.f32 %v6338, %v8560
        %v8562 = vrot.slane %v8561, 2
        %v8563 = vadd.f32 %v8561, %v8562
        %v8564 = vrot.slane %v8563, 1
        %v8565 = vadd.f32 %v8563, %v8564
        %v8566 = vrot.slane %v6339, 4
        %v8567 = vadd.f32 %v6339, %v8566
        %v8568 = vrot.slane %v8567, 2
        %v8569 = vadd.f32 %v8567, %v8568
        %v8570 = vrot.slane %v8569, 1
        %v8571 = vadd.f32 %v8569, %v8570
        %v8572 = vrot.slane %v6340, 4
        %v8573 = vadd.f32 %v6340, %v8572
        %v8574 = vrot.slane %v8573, 2
        %v8575 = vadd.f32 %v8573, %v8574
        %v8576 = vrot.slane %v8575, 1
        %v8577 = vadd.f32 %v8575, %v8576
        %v8578 = vrot.slane %v6341, 4
        %v8579 = vadd.f32 %v6341, %v8578
        %v8580 = vrot.slane %v8579, 2
        %v8581 = vadd.f32 %v8579, %v8580
        %v8582 = vrot.slane %v8581, 1
        %v8583 = vadd.f32 %v8581, %v8582
        %v8584 = vrot.slane %v6342, 4
        %v8585 = vadd.f32 %v6342, %v8584
        %v8586 = vrot.slane %v8585, 2
        %v8587 = vadd.f32 %v8585, %v8586
        %v8588 = vrot.slane %v8587, 1
        %v8589 = vadd.f32 %v8587, %v8588
        %v8590 = vrot.slane %v6343, 4
        %v8591 = vadd.f32 %v6343, %v8590
        %v8592 = vrot.slane %v8591, 2
        %v8593 = vadd.f32 %v8591, %v8592
        %v8594 = vrot.slane %v8593, 1
        %v8595 = vadd.f32 %v8593, %v8594
        %v8596 = vrot.slane %v6344, 4
        %v8597 = vadd.f32 %v6344, %v8596
        %v8598 = vrot.slane %v8597, 2
        %v8599 = vadd.f32 %v8597, %v8598
        %v8600 = vrot.slane %v8599, 1
        %v8601 = vadd.f32 %v8599, %v8600
        %v8602 = vrot.slane %v6345, 4
        %v8603 = vadd.f32 %v6345, %v8602
        %v8604 = vrot.slane %v8603, 2
        %v8605 = vadd.f32 %v8603, %v8604
        %v8606 = vrot.slane %v8605, 1
        %v8607 = vadd.f32 %v8605, %v8606
        %v8608 = vrot.slane %v6346, 4
        %v8609 = vadd.f32 %v6346, %v8608
        %v8610 = vrot.slane %v8609, 2
        %v8611 = vadd.f32 %v8609, %v8610
        %v8612 = vrot.slane %v8611, 1
        %v8613 = vadd.f32 %v8611, %v8612
        %v8614 = vrot.slane %v6347, 4
        %v8615 = vadd.f32 %v6347, %v8614
        %v8616 = vrot.slane %v8615, 2
        %v8617 = vadd.f32 %v8615, %v8616
        %v8618 = vrot.slane %v8617, 1
        %v8619 = vadd.f32 %v8617, %v8618
        %v8620 = vrot.slane %v6348, 4
        %v8621 = vadd.f32 %v6348, %v8620
        %v8622 = vrot.slane %v8621, 2
        %v8623 = vadd.f32 %v8621, %v8622
        %v8624 = vrot.slane %v8623, 1
        %v8625 = vadd.f32 %v8623, %v8624
        %v8626 = vrot.slane %v6349, 4
        %v8627 = vadd.f32 %v6349, %v8626
        %v8628 = vrot.slane %v8627, 2
        %v8629 = vadd.f32 %v8627, %v8628
        %v8630 = vrot.slane %v8629, 1
        %v8631 = vadd.f32 %v8629, %v8630
        %v8632 = vrot.slane %v6350, 4
        %v8633 = vadd.f32 %v6350, %v8632
        %v8634 = vrot.slane %v8633, 2
        %v8635 = vadd.f32 %v8633, %v8634
        %v8636 = vrot.slane %v8635, 1
        %v8637 = vadd.f32 %v8635, %v8636
        %v8638 = vrot.slane %v6351, 4
        %v8639 = vadd.f32 %v6351, %v8638
        %v8640 = vrot.slane %v8639, 2
        %v8641 = vadd.f32 %v8639, %v8640
        %v8642 = vrot.slane %v8641, 1
        %v8643 = vadd.f32 %v8641, %v8642
        %v8644 = vrot.slane %v6352, 4
        %v8645 = vadd.f32 %v6352, %v8644
        %v8646 = vrot.slane %v8645, 2
        %v8647 = vadd.f32 %v8645, %v8646
        %v8648 = vrot.slane %v8647, 1
        %v8649 = vadd.f32 %v8647, %v8648
        %v8650 = vrot.slane %v6353, 4
        %v8651 = vadd.f32 %v6353, %v8650
        %v8652 = vrot.slane %v8651, 2
        %v8653 = vadd.f32 %v8651, %v8652
        %v8654 = vrot.slane %v8653, 1
        %v8655 = vadd.f32 %v8653, %v8654
        %v8656 = vrot.slane %v6354, 4
        %v8657 = vadd.f32 %v6354, %v8656
        %v8658 = vrot.slane %v8657, 2
        %v8659 = vadd.f32 %v8657, %v8658
        %v8660 = vrot.slane %v8659, 1
        %v8661 = vadd.f32 %v8659, %v8660
        %v8662 = vrot.slane %v6355, 4
        %v8663 = vadd.f32 %v6355, %v8662
        %v8664 = vrot.slane %v8663, 2
        %v8665 = vadd.f32 %v8663, %v8664
        %v8666 = vrot.slane %v8665, 1
        %v8667 = vadd.f32 %v8665, %v8666
        %v8668 = vrot.slane %v6356, 4
        %v8669 = vadd.f32 %v6356, %v8668
        %v8670 = vrot.slane %v8669, 2
        %v8671 = vadd.f32 %v8669, %v8670
        %v8672 = vrot.slane %v8671, 1
        %v8673 = vadd.f32 %v8671, %v8672
        %v8674 = vrot.slane %v6357, 4
        %v8675 = vadd.f32 %v6357, %v8674
        %v8676 = vrot.slane %v8675, 2
        %v8677 = vadd.f32 %v8675, %v8676
        %v8678 = vrot.slane %v8677, 1
        %v8679 = vadd.f32 %v8677, %v8678
        %v8680 = vrot.slane %v6358, 4
        %v8681 = vadd.f32 %v6358, %v8680
        %v8682 = vrot.slane %v8681, 2
        %v8683 = vadd.f32 %v8681, %v8682
        %v8684 = vrot.slane %v8683, 1
        %v8685 = vadd.f32 %v8683, %v8684
        %v8686 = vrot.slane %v6359, 4
        %v8687 = vadd.f32 %v6359, %v8686
        %v8688 = vrot.slane %v8687, 2
        %v8689 = vadd.f32 %v8687, %v8688
        %v8690 = vrot.slane %v8689, 1
        %v8691 = vadd.f32 %v8689, %v8690
        %v8692 = vrot.slane %v6360, 4
        %v8693 = vadd.f32 %v6360, %v8692
        %v8694 = vrot.slane %v8693, 2
        %v8695 = vadd.f32 %v8693, %v8694
        %v8696 = vrot.slane %v8695, 1
        %v8697 = vadd.f32 %v8695, %v8696
        %v8698 = vrot.slane %v6361, 4
        %v8699 = vadd.f32 %v6361, %v8698
        %v8700 = vrot.slane %v8699, 2
        %v8701 = vadd.f32 %v8699, %v8700
        %v8702 = vrot.slane %v8701, 1
        %v8703 = vadd.f32 %v8701, %v8702
        %v8704 = vrot.slane %v6362, 4
        %v8705 = vadd.f32 %v6362, %v8704
        %v8706 = vrot.slane %v8705, 2
        %v8707 = vadd.f32 %v8705, %v8706
        %v8708 = vrot.slane %v8707, 1
        %v8709 = vadd.f32 %v8707, %v8708
        %v8710 = vrot.slane %v6363, 4
        %v8711 = vadd.f32 %v6363, %v8710
        %v8712 = vrot.slane %v8711, 2
        %v8713 = vadd.f32 %v8711, %v8712
        %v8714 = vrot.slane %v8713, 1
        %v8715 = vadd.f32 %v8713, %v8714
        %v8716 = vrot.slane %v6364, 4
        %v8717 = vadd.f32 %v6364, %v8716
        %v8718 = vrot.slane %v8717, 2
        %v8719 = vadd.f32 %v8717, %v8718
        %v8720 = vrot.slane %v8719, 1
        %v8721 = vadd.f32 %v8719, %v8720
        %v8722 = vrot.slane %v6365, 4
        %v8723 = vadd.f32 %v6365, %v8722
        %v8724 = vrot.slane %v8723, 2
        %v8725 = vadd.f32 %v8723, %v8724
        %v8726 = vrot.slane %v8725, 1
        %v8727 = vadd.f32 %v8725, %v8726
        %v8728 = vrot.slane %v6366, 4
        %v8729 = vadd.f32 %v6366, %v8728
        %v8730 = vrot.slane %v8729, 2
        %v8731 = vadd.f32 %v8729, %v8730
        %v8732 = vrot.slane %v8731, 1
        %v8733 = vadd.f32 %v8731, %v8732
        %v8734 = vrot.slane %v6367, 4
        %v8735 = vadd.f32 %v6367, %v8734
        %v8736 = vrot.slane %v8735, 2
        %v8737 = vadd.f32 %v8735, %v8736
        %v8738 = vrot.slane %v8737, 1
        %v8739 = vadd.f32 %v8737, %v8738
        %v8740 = vrot.slane %v6368, 4
        %v8741 = vadd.f32 %v6368, %v8740
        %v8742 = vrot.slane %v8741, 2
        %v8743 = vadd.f32 %v8741, %v8742
        %v8744 = vrot.slane %v8743, 1
        %v8745 = vadd.f32 %v8743, %v8744
        %v8746 = vrot.slane %v6369, 4
        %v8747 = vadd.f32 %v6369, %v8746
        %v8748 = vrot.slane %v8747, 2
        %v8749 = vadd.f32 %v8747, %v8748
        %v8750 = vrot.slane %v8749, 1
        %v8751 = vadd.f32 %v8749, %v8750
        %v8752 = vrot.slane %v6370, 4
        %v8753 = vadd.f32 %v6370, %v8752
        %v8754 = vrot.slane %v8753, 2
        %v8755 = vadd.f32 %v8753, %v8754
        %v8756 = vrot.slane %v8755, 1
        %v8757 = vadd.f32 %v8755, %v8756
        %v8758 = vrot.slane %v6371, 4
        %v8759 = vadd.f32 %v6371, %v8758
        %v8760 = vrot.slane %v8759, 2
        %v8761 = vadd.f32 %v8759, %v8760
        %v8762 = vrot.slane %v8761, 1
        %v8763 = vadd.f32 %v8761, %v8762
        %v8764 = vrot.slane %v6372, 4
        %v8765 = vadd.f32 %v6372, %v8764
        %v8766 = vrot.slane %v8765, 2
        %v8767 = vadd.f32 %v8765, %v8766
        %v8768 = vrot.slane %v8767, 1
        %v8769 = vadd.f32 %v8767, %v8768
        %v8770 = vrot.slane %v6373, 4
        %v8771 = vadd.f32 %v6373, %v8770
        %v8772 = vrot.slane %v8771, 2
        %v8773 = vadd.f32 %v8771, %v8772
        %v8774 = vrot.slane %v8773, 1
        %v8775 = vadd.f32 %v8773, %v8774
        %v8776 = vrot.slane %v6374, 4
        %v8777 = vadd.f32 %v6374, %v8776
        %v8778 = vrot.slane %v8777, 2
        %v8779 = vadd.f32 %v8777, %v8778
        %v8780 = vrot.slane %v8779, 1
        %v8781 = vadd.f32 %v8779, %v8780
        %v8782 = vrot.slane %v6375, 4
        %v8783 = vadd.f32 %v6375, %v8782
        %v8784 = vrot.slane %v8783, 2
        %v8785 = vadd.f32 %v8783, %v8784
        %v8786 = vrot.slane %v8785, 1
        %v8787 = vadd.f32 %v8785, %v8786
        %v8788 = vrot.slane %v6376, 4
        %v8789 = vadd.f32 %v6376, %v8788
        %v8790 = vrot.slane %v8789, 2
        %v8791 = vadd.f32 %v8789, %v8790
        %v8792 = vrot.slane %v8791, 1
        %v8793 = vadd.f32 %v8791, %v8792
        %v8794 = vrot.slane %v6377, 4
        %v8795 = vadd.f32 %v6377, %v8794
        %v8796 = vrot.slane %v8795, 2
        %v8797 = vadd.f32 %v8795, %v8796
        %v8798 = vrot.slane %v8797, 1
        %v8799 = vadd.f32 %v8797, %v8798
        %v8800 = vrot.slane %v6378, 4
        %v8801 = vadd.f32 %v6378, %v8800
        %v8802 = vrot.slane %v8801, 2
        %v8803 = vadd.f32 %v8801, %v8802
        %v8804 = vrot.slane %v8803, 1
        %v8805 = vadd.f32 %v8803, %v8804
        %v8806 = vrot.slane %v6379, 4
        %v8807 = vadd.f32 %v6379, %v8806
        %v8808 = vrot.slane %v8807, 2
        %v8809 = vadd.f32 %v8807, %v8808
        %v8810 = vrot.slane %v8809, 1
        %v8811 = vadd.f32 %v8809, %v8810
        %v8812 = vrot.slane %v6380, 4
        %v8813 = vadd.f32 %v6380, %v8812
        %v8814 = vrot.slane %v8813, 2
        %v8815 = vadd.f32 %v8813, %v8814
        %v8816 = vrot.slane %v8815, 1
        %v8817 = vadd.f32 %v8815, %v8816
        %v8818 = vrot.slane %v6381, 4
        %v8819 = vadd.f32 %v6381, %v8818
        %v8820 = vrot.slane %v8819, 2
        %v8821 = vadd.f32 %v8819, %v8820
        %v8822 = vrot.slane %v8821, 1
        %v8823 = vadd.f32 %v8821, %v8822
        %v8824 = vrot.slane %v6382, 4
        %v8825 = vadd.f32 %v6382, %v8824
        %v8826 = vrot.slane %v8825, 2
        %v8827 = vadd.f32 %v8825, %v8826
        %v8828 = vrot.slane %v8827, 1
        %v8829 = vadd.f32 %v8827, %v8828
        %v8830 = vrot.slane %v6383, 4
        %v8831 = vadd.f32 %v6383, %v8830
        %v8832 = vrot.slane %v8831, 2
        %v8833 = vadd.f32 %v8831, %v8832
        %v8834 = vrot.slane %v8833, 1
        %v8835 = vadd.f32 %v8833, %v8834
        %v8836 = vrot.slane %v6384, 4
        %v8837 = vadd.f32 %v6384, %v8836
        %v8838 = vrot.slane %v8837, 2
        %v8839 = vadd.f32 %v8837, %v8838
        %v8840 = vrot.slane %v8839, 1
        %v8841 = vadd.f32 %v8839, %v8840
        %v8842 = vrot.slane %v6385, 4
        %v8843 = vadd.f32 %v6385, %v8842
        %v8844 = vrot.slane %v8843, 2
        %v8845 = vadd.f32 %v8843, %v8844
        %v8846 = vrot.slane %v8845, 1
        %v8847 = vadd.f32 %v8845, %v8846
        %v8848 = vrot.slane %v6386, 4
        %v8849 = vadd.f32 %v6386, %v8848
        %v8850 = vrot.slane %v8849, 2
        %v8851 = vadd.f32 %v8849, %v8850
        %v8852 = vrot.slane %v8851, 1
        %v8853 = vadd.f32 %v8851, %v8852
        %v8854 = vrot.slane %v6387, 4
        %v8855 = vadd.f32 %v6387, %v8854
        %v8856 = vrot.slane %v8855, 2
        %v8857 = vadd.f32 %v8855, %v8856
        %v8858 = vrot.slane %v8857, 1
        %v8859 = vadd.f32 %v8857, %v8858
        %v8860 = vrot.slane %v6388, 4
        %v8861 = vadd.f32 %v6388, %v8860
        %v8862 = vrot.slane %v8861, 2
        %v8863 = vadd.f32 %v8861, %v8862
        %v8864 = vrot.slane %v8863, 1
        %v8865 = vadd.f32 %v8863, %v8864
        %v8866 = vrot.slane %v6389, 4
        %v8867 = vadd.f32 %v6389, %v8866
        %v8868 = vrot.slane %v8867, 2
        %v8869 = vadd.f32 %v8867, %v8868
        %v8870 = vrot.slane %v8869, 1
        %v8871 = vadd.f32 %v8869, %v8870
        %v8872 = vrot.slane %v6390, 4
        %v8873 = vadd.f32 %v6390, %v8872
        %v8874 = vrot.slane %v8873, 2
        %v8875 = vadd.f32 %v8873, %v8874
        %v8876 = vrot.slane %v8875, 1
        %v8877 = vadd.f32 %v8875, %v8876
        %v8878 = vrot.slane %v6391, 4
        %v8879 = vadd.f32 %v6391, %v8878
        %v8880 = vrot.slane %v8879, 2
        %v8881 = vadd.f32 %v8879, %v8880
        %v8882 = vrot.slane %v8881, 1
        %v8883 = vadd.f32 %v8881, %v8882
        %v8884 = vrot.slane %v6392, 4
        %v8885 = vadd.f32 %v6392, %v8884
        %v8886 = vrot.slane %v8885, 2
        %v8887 = vadd.f32 %v8885, %v8886
        %v8888 = vrot.slane %v8887, 1
        %v8889 = vadd.f32 %v8887, %v8888
        %v8890 = vrot.slane %v6393, 4
        %v8891 = vadd.f32 %v6393, %v8890
        %v8892 = vrot.slane %v8891, 2
        %v8893 = vadd.f32 %v8891, %v8892
        %v8894 = vrot.slane %v8893, 1
        %v8895 = vadd.f32 %v8893, %v8894
        %v8896 = vrot.slane %v6394, 4
        %v8897 = vadd.f32 %v6394, %v8896
        %v8898 = vrot.slane %v8897, 2
        %v8899 = vadd.f32 %v8897, %v8898
        %v8900 = vrot.slane %v8899, 1
        %v8901 = vadd.f32 %v8899, %v8900
        %v8902 = vrot.slane %v6395, 4
        %v8903 = vadd.f32 %v6395, %v8902
        %v8904 = vrot.slane %v8903, 2
        %v8905 = vadd.f32 %v8903, %v8904
        %v8906 = vrot.slane %v8905, 1
        %v8907 = vadd.f32 %v8905, %v8906
        %v8908 = vrot.slane %v6396, 4
        %v8909 = vadd.f32 %v6396, %v8908
        %v8910 = vrot.slane %v8909, 2
        %v8911 = vadd.f32 %v8909, %v8910
        %v8912 = vrot.slane %v8911, 1
        %v8913 = vadd.f32 %v8911, %v8912
        %v8914 = vrot.slane %v6397, 4
        %v8915 = vadd.f32 %v6397, %v8914
        %v8916 = vrot.slane %v8915, 2
        %v8917 = vadd.f32 %v8915, %v8916
        %v8918 = vrot.slane %v8917, 1
        %v8919 = vadd.f32 %v8917, %v8918
        %v8920 = vrot.slane %v6398, 4
        %v8921 = vadd.f32 %v6398, %v8920
        %v8922 = vrot.slane %v8921, 2
        %v8923 = vadd.f32 %v8921, %v8922
        %v8924 = vrot.slane %v8923, 1
        %v8925 = vadd.f32 %v8923, %v8924
        %v8926 = vrot.slane %v6399, 4
        %v8927 = vadd.f32 %v6399, %v8926
        %v8928 = vrot.slane %v8927, 2
        %v8929 = vadd.f32 %v8927, %v8928
        %v8930 = vrot.slane %v8929, 1
        %v8931 = vadd.f32 %v8929, %v8930
        %v8932 = vrot.slane %v6400, 4
        %v8933 = vadd.f32 %v6400, %v8932
        %v8934 = vrot.slane %v8933, 2
        %v8935 = vadd.f32 %v8933, %v8934
        %v8936 = vrot.slane %v8935, 1
        %v8937 = vadd.f32 %v8935, %v8936
        %v8938 = vrot.slane %v6401, 4
        %v8939 = vadd.f32 %v6401, %v8938
        %v8940 = vrot.slane %v8939, 2
        %v8941 = vadd.f32 %v8939, %v8940
        %v8942 = vrot.slane %v8941, 1
        %v8943 = vadd.f32 %v8941, %v8942
        %v8944 = vrot.slane %v6402, 4
        %v8945 = vadd.f32 %v6402, %v8944
        %v8946 = vrot.slane %v8945, 2
        %v8947 = vadd.f32 %v8945, %v8946
        %v8948 = vrot.slane %v8947, 1
        %v8949 = vadd.f32 %v8947, %v8948
        %v8950 = vrot.slane %v6403, 4
        %v8951 = vadd.f32 %v6403, %v8950
        %v8952 = vrot.slane %v8951, 2
        %v8953 = vadd.f32 %v8951, %v8952
        %v8954 = vrot.slane %v8953, 1
        %v8955 = vadd.f32 %v8953, %v8954
        %v8956 = vrot.slane %v6404, 4
        %v8957 = vadd.f32 %v6404, %v8956
        %v8958 = vrot.slane %v8957, 2
        %v8959 = vadd.f32 %v8957, %v8958
        %v8960 = vrot.slane %v8959, 1
        %v8961 = vadd.f32 %v8959, %v8960
        %v8962 = vrot.slane %v6405, 4
        %v8963 = vadd.f32 %v6405, %v8962
        %v8964 = vrot.slane %v8963, 2
        %v8965 = vadd.f32 %v8963, %v8964
        %v8966 = vrot.slane %v8965, 1
        %v8967 = vadd.f32 %v8965, %v8966
        %v8968 = vrot.slane %v6406, 4
        %v8969 = vadd.f32 %v6406, %v8968
        %v8970 = vrot.slane %v8969, 2
        %v8971 = vadd.f32 %v8969, %v8970
        %v8972 = vrot.slane %v8971, 1
        %v8973 = vadd.f32 %v8971, %v8972
        %v8974 = vrot.slane %v6407, 4
        %v8975 = vadd.f32 %v6407, %v8974
        %v8976 = vrot.slane %v8975, 2
        %v8977 = vadd.f32 %v8975, %v8976
        %v8978 = vrot.slane %v8977, 1
        %v8979 = vadd.f32 %v8977, %v8978
        %v8980 = vrot.slane %v6408, 4
        %v8981 = vadd.f32 %v6408, %v8980
        %v8982 = vrot.slane %v8981, 2
        %v8983 = vadd.f32 %v8981, %v8982
        %v8984 = vrot.slane %v8983, 1
        %v8985 = vadd.f32 %v8983, %v8984
        %v8986 = vrot.slane %v6409, 4
        %v8987 = vadd.f32 %v6409, %v8986
        %v8988 = vrot.slane %v8987, 2
        %v8989 = vadd.f32 %v8987, %v8988
        %v8990 = vrot.slane %v8989, 1
        %v8991 = vadd.f32 %v8989, %v8990
        %v8992 = vrot.slane %v6410, 4
        %v8993 = vadd.f32 %v6410, %v8992
        %v8994 = vrot.slane %v8993, 2
        %v8995 = vadd.f32 %v8993, %v8994
        %v8996 = vrot.slane %v8995, 1
        %v8997 = vadd.f32 %v8995, %v8996
        %v8998 = vrot.slane %v6411, 4
        %v8999 = vadd.f32 %v6411, %v8998
        %v9000 = vrot.slane %v8999, 2
        %v9001 = vadd.f32 %v8999, %v9000
        %v9002 = vrot.slane %v9001, 1
        %v9003 = vadd.f32 %v9001, %v9002
        %v9004 = vrot.slane %v6412, 4
        %v9005 = vadd.f32 %v6412, %v9004
        %v9006 = vrot.slane %v9005, 2
        %v9007 = vadd.f32 %v9005, %v9006
        %v9008 = vrot.slane %v9007, 1
        %v9009 = vadd.f32 %v9007, %v9008
        %v9010 = vrot.slane %v6413, 4
        %v9011 = vadd.f32 %v6413, %v9010
        %v9012 = vrot.slane %v9011, 2
        %v9013 = vadd.f32 %v9011, %v9012
        %v9014 = vrot.slane %v9013, 1
        %v9015 = vadd.f32 %v9013, %v9014
        %v9016 = vrot.slane %v6414, 4
        %v9017 = vadd.f32 %v6414, %v9016
        %v9018 = vrot.slane %v9017, 2
        %v9019 = vadd.f32 %v9017, %v9018
        %v9020 = vrot.slane %v9019, 1
        %v9021 = vadd.f32 %v9019, %v9020
        %v9022 = vrot.slane %v6415, 4
        %v9023 = vadd.f32 %v6415, %v9022
        %v9024 = vrot.slane %v9023, 2
        %v9025 = vadd.f32 %v9023, %v9024
        %v9026 = vrot.slane %v9025, 1
        %v9027 = vadd.f32 %v9025, %v9026
        %v9028 = vrot.slane %v6416, 4
        %v9029 = vadd.f32 %v6416, %v9028
        %v9030 = vrot.slane %v9029, 2
        %v9031 = vadd.f32 %v9029, %v9030
        %v9032 = vrot.slane %v9031, 1
        %v9033 = vadd.f32 %v9031, %v9032
        %v9034 = vrot.slane %v6417, 4
        %v9035 = vadd.f32 %v6417, %v9034
        %v9036 = vrot.slane %v9035, 2
        %v9037 = vadd.f32 %v9035, %v9036
        %v9038 = vrot.slane %v9037, 1
        %v9039 = vadd.f32 %v9037, %v9038
        %v9040 = vrot.slane %v6418, 4
        %v9041 = vadd.f32 %v6418, %v9040
        %v9042 = vrot.slane %v9041, 2
        %v9043 = vadd.f32 %v9041, %v9042
        %v9044 = vrot.slane %v9043, 1
        %v9045 = vadd.f32 %v9043, %v9044
        %v9046 = vrot.slane %v6419, 4
        %v9047 = vadd.f32 %v6419, %v9046
        %v9048 = vrot.slane %v9047, 2
        %v9049 = vadd.f32 %v9047, %v9048
        %v9050 = vrot.slane %v9049, 1
        %v9051 = vadd.f32 %v9049, %v9050
        %v9052 = vrot.slane %v6420, 4
        %v9053 = vadd.f32 %v6420, %v9052
        %v9054 = vrot.slane %v9053, 2
        %v9055 = vadd.f32 %v9053, %v9054
        %v9056 = vrot.slane %v9055, 1
        %v9057 = vadd.f32 %v9055, %v9056
        %v9058 = vrot.slane %v6421, 4
        %v9059 = vadd.f32 %v6421, %v9058
        %v9060 = vrot.slane %v9059, 2
        %v9061 = vadd.f32 %v9059, %v9060
        %v9062 = vrot.slane %v9061, 1
        %v9063 = vadd.f32 %v9061, %v9062
        %v9064 = vrot.slane %v6422, 4
        %v9065 = vadd.f32 %v6422, %v9064
        %v9066 = vrot.slane %v9065, 2
        %v9067 = vadd.f32 %v9065, %v9066
        %v9068 = vrot.slane %v9067, 1
        %v9069 = vadd.f32 %v9067, %v9068
        %v9070 = vrot.slane %v6423, 4
        %v9071 = vadd.f32 %v6423, %v9070
        %v9072 = vrot.slane %v9071, 2
        %v9073 = vadd.f32 %v9071, %v9072
        %v9074 = vrot.slane %v9073, 1
        %v9075 = vadd.f32 %v9073, %v9074
        %v9076 = vrot.slane %v6424, 4
        %v9077 = vadd.f32 %v6424, %v9076
        %v9078 = vrot.slane %v9077, 2
        %v9079 = vadd.f32 %v9077, %v9078
        %v9080 = vrot.slane %v9079, 1
        %v9081 = vadd.f32 %v9079, %v9080
        %v9082 = vrot.slane %v6425, 4
        %v9083 = vadd.f32 %v6425, %v9082
        %v9084 = vrot.slane %v9083, 2
        %v9085 = vadd.f32 %v9083, %v9084
        %v9086 = vrot.slane %v9085, 1
        %v9087 = vadd.f32 %v9085, %v9086
        %v9088 = vrot.slane %v6426, 4
        %v9089 = vadd.f32 %v6426, %v9088
        %v9090 = vrot.slane %v9089, 2
        %v9091 = vadd.f32 %v9089, %v9090
        %v9092 = vrot.slane %v9091, 1
        %v9093 = vadd.f32 %v9091, %v9092
        %v9094 = vrot.slane %v6427, 4
        %v9095 = vadd.f32 %v6427, %v9094
        %v9096 = vrot.slane %v9095, 2
        %v9097 = vadd.f32 %v9095, %v9096
        %v9098 = vrot.slane %v9097, 1
        %v9099 = vadd.f32 %v9097, %v9098
        %v9100 = vrot.slane %v6428, 4
        %v9101 = vadd.f32 %v6428, %v9100
        %v9102 = vrot.slane %v9101, 2
        %v9103 = vadd.f32 %v9101, %v9102
        %v9104 = vrot.slane %v9103, 1
        %v9105 = vadd.f32 %v9103, %v9104
        %v9106 = vrot.slane %v6429, 4
        %v9107 = vadd.f32 %v6429, %v9106
        %v9108 = vrot.slane %v9107, 2
        %v9109 = vadd.f32 %v9107, %v9108
        %v9110 = vrot.slane %v9109, 1
        %v9111 = vadd.f32 %v9109, %v9110
        %v9112 = vrot.slane %v6430, 4
        %v9113 = vadd.f32 %v6430, %v9112
        %v9114 = vrot.slane %v9113, 2
        %v9115 = vadd.f32 %v9113, %v9114
        %v9116 = vrot.slane %v9115, 1
        %v9117 = vadd.f32 %v9115, %v9116
        %v9118 = vrot.slane %v6431, 4
        %v9119 = vadd.f32 %v6431, %v9118
        %v9120 = vrot.slane %v9119, 2
        %v9121 = vadd.f32 %v9119, %v9120
        %v9122 = vrot.slane %v9121, 1
        %v9123 = vadd.f32 %v9121, %v9122
        %v9124 = vrot.slane %v6432, 4
        %v9125 = vadd.f32 %v6432, %v9124
        %v9126 = vrot.slane %v9125, 2
        %v9127 = vadd.f32 %v9125, %v9126
        %v9128 = vrot.slane %v9127, 1
        %v9129 = vadd.f32 %v9127, %v9128
        %v9130 = vrot.slane %v6433, 4
        %v9131 = vadd.f32 %v6433, %v9130
        %v9132 = vrot.slane %v9131, 2
        %v9133 = vadd.f32 %v9131, %v9132
        %v9134 = vrot.slane %v9133, 1
        %v9135 = vadd.f32 %v9133, %v9134
        %v9136 = vrot.slane %v6434, 4
        %v9137 = vadd.f32 %v6434, %v9136
        %v9138 = vrot.slane %v9137, 2
        %v9139 = vadd.f32 %v9137, %v9138
        %v9140 = vrot.slane %v9139, 1
        %v9141 = vadd.f32 %v9139, %v9140
        %v9142 = vrot.slane %v6435, 4
        %v9143 = vadd.f32 %v6435, %v9142
        %v9144 = vrot.slane %v9143, 2
        %v9145 = vadd.f32 %v9143, %v9144
        %v9146 = vrot.slane %v9145, 1
        %v9147 = vadd.f32 %v9145, %v9146
        %v9148 = vrot.slane %v6436, 4
        %v9149 = vadd.f32 %v6436, %v9148
        %v9150 = vrot.slane %v9149, 2
        %v9151 = vadd.f32 %v9149, %v9150
        %v9152 = vrot.slane %v9151, 1
        %v9153 = vadd.f32 %v9151, %v9152
        %v9154 = vrot.slane %v6437, 4
        %v9155 = vadd.f32 %v6437, %v9154
        %v9156 = vrot.slane %v9155, 2
        %v9157 = vadd.f32 %v9155, %v9156
        %v9158 = vrot.slane %v9157, 1
        %v9159 = vadd.f32 %v9157, %v9158
        %v9160 = vrot.slane %v6438, 4
        %v9161 = vadd.f32 %v6438, %v9160
        %v9162 = vrot.slane %v9161, 2
        %v9163 = vadd.f32 %v9161, %v9162
        %v9164 = vrot.slane %v9163, 1
        %v9165 = vadd.f32 %v9163, %v9164
        %v9166 = vrot.slane %v6439, 4
        %v9167 = vadd.f32 %v6439, %v9166
        %v9168 = vrot.slane %v9167, 2
        %v9169 = vadd.f32 %v9167, %v9168
        %v9170 = vrot.slane %v9169, 1
        %v9171 = vadd.f32 %v9169, %v9170
        %v9172 = vrot.slane %v6440, 4
        %v9173 = vadd.f32 %v6440, %v9172
        %v9174 = vrot.slane %v9173, 2
        %v9175 = vadd.f32 %v9173, %v9174
        %v9176 = vrot.slane %v9175, 1
        %v9177 = vadd.f32 %v9175, %v9176
        %v9178 = vrot.slane %v6441, 4
        %v9179 = vadd.f32 %v6441, %v9178
        %v9180 = vrot.slane %v9179, 2
        %v9181 = vadd.f32 %v9179, %v9180
        %v9182 = vrot.slane %v9181, 1
        %v9183 = vadd.f32 %v9181, %v9182
        %v9184 = vrot.slane %v6442, 4
        %v9185 = vadd.f32 %v6442, %v9184
        %v9186 = vrot.slane %v9185, 2
        %v9187 = vadd.f32 %v9185, %v9186
        %v9188 = vrot.slane %v9187, 1
        %v9189 = vadd.f32 %v9187, %v9188
        %v9190 = vrot.slane %v6443, 4
        %v9191 = vadd.f32 %v6443, %v9190
        %v9192 = vrot.slane %v9191, 2
        %v9193 = vadd.f32 %v9191, %v9192
        %v9194 = vrot.slane %v9193, 1
        %v9195 = vadd.f32 %v9193, %v9194
        %v9196 = vrot.slane %v6444, 4
        %v9197 = vadd.f32 %v6444, %v9196
        %v9198 = vrot.slane %v9197, 2
        %v9199 = vadd.f32 %v9197, %v9198
        %v9200 = vrot.slane %v9199, 1
        %v9201 = vadd.f32 %v9199, %v9200
        %v9202 = vrot.slane %v6445, 4
        %v9203 = vadd.f32 %v6445, %v9202
        %v9204 = vrot.slane %v9203, 2
        %v9205 = vadd.f32 %v9203, %v9204
        %v9206 = vrot.slane %v9205, 1
        %v9207 = vadd.f32 %v9205, %v9206
        %v9208 = vrot.slane %v6446, 4
        %v9209 = vadd.f32 %v6446, %v9208
        %v9210 = vrot.slane %v9209, 2
        %v9211 = vadd.f32 %v9209, %v9210
        %v9212 = vrot.slane %v9211, 1
        %v9213 = vadd.f32 %v9211, %v9212
        %v9214 = vrot.slane %v6447, 4
        %v9215 = vadd.f32 %v6447, %v9214
        %v9216 = vrot.slane %v9215, 2
        %v9217 = vadd.f32 %v9215, %v9216
        %v9218 = vrot.slane %v9217, 1
        %v9219 = vadd.f32 %v9217, %v9218
        %v9220 = vrot.slane %v6448, 4
        %v9221 = vadd.f32 %v6448, %v9220
        %v9222 = vrot.slane %v9221, 2
        %v9223 = vadd.f32 %v9221, %v9222
        %v9224 = vrot.slane %v9223, 1
        %v9225 = vadd.f32 %v9223, %v9224
        %v9226 = vrot.slane %v6449, 4
        %v9227 = vadd.f32 %v6449, %v9226
        %v9228 = vrot.slane %v9227, 2
        %v9229 = vadd.f32 %v9227, %v9228
        %v9230 = vrot.slane %v9229, 1
        %v9231 = vadd.f32 %v9229, %v9230
        %v9232 = vrot.slane %v6450, 4
        %v9233 = vadd.f32 %v6450, %v9232
        %v9234 = vrot.slane %v9233, 2
        %v9235 = vadd.f32 %v9233, %v9234
        %v9236 = vrot.slane %v9235, 1
        %v9237 = vadd.f32 %v9235, %v9236
        %v9238 = vrot.slane %v6451, 4
        %v9239 = vadd.f32 %v6451, %v9238
        %v9240 = vrot.slane %v9239, 2
        %v9241 = vadd.f32 %v9239, %v9240
        %v9242 = vrot.slane %v9241, 1
        %v9243 = vadd.f32 %v9241, %v9242
        %v9244 = vrot.slane %v6452, 4
        %v9245 = vadd.f32 %v6452, %v9244
        %v9246 = vrot.slane %v9245, 2
        %v9247 = vadd.f32 %v9245, %v9246
        %v9248 = vrot.slane %v9247, 1
        %v9249 = vadd.f32 %v9247, %v9248
        %v9250 = vrot.slane %v6453, 4
        %v9251 = vadd.f32 %v6453, %v9250
        %v9252 = vrot.slane %v9251, 2
        %v9253 = vadd.f32 %v9251, %v9252
        %v9254 = vrot.slane %v9253, 1
        %v9255 = vadd.f32 %v9253, %v9254
        %v9256 = vrot.slane %v6454, 4
        %v9257 = vadd.f32 %v6454, %v9256
        %v9258 = vrot.slane %v9257, 2
        %v9259 = vadd.f32 %v9257, %v9258
        %v9260 = vrot.slane %v9259, 1
        %v9261 = vadd.f32 %v9259, %v9260
        %v9262 = vrot.slane %v6455, 4
        %v9263 = vadd.f32 %v6455, %v9262
        %v9264 = vrot.slane %v9263, 2
        %v9265 = vadd.f32 %v9263, %v9264
        %v9266 = vrot.slane %v9265, 1
        %v9267 = vadd.f32 %v9265, %v9266
        %v9268 = vrot.slane %v6456, 4
        %v9269 = vadd.f32 %v6456, %v9268
        %v9270 = vrot.slane %v9269, 2
        %v9271 = vadd.f32 %v9269, %v9270
        %v9272 = vrot.slane %v9271, 1
        %v9273 = vadd.f32 %v9271, %v9272
        %v9274 = vrot.slane %v6457, 4
        %v9275 = vadd.f32 %v6457, %v9274
        %v9276 = vrot.slane %v9275, 2
        %v9277 = vadd.f32 %v9275, %v9276
        %v9278 = vrot.slane %v9277, 1
        %v9279 = vadd.f32 %v9277, %v9278
        %v9280 = vrot.slane %v6458, 4
        %v9281 = vadd.f32 %v6458, %v9280
        %v9282 = vrot.slane %v9281, 2
        %v9283 = vadd.f32 %v9281, %v9282
        %v9284 = vrot.slane %v9283, 1
        %v9285 = vadd.f32 %v9283, %v9284
        %v9286 = vrot.slane %v6459, 4
        %v9287 = vadd.f32 %v6459, %v9286
        %v9288 = vrot.slane %v9287, 2
        %v9289 = vadd.f32 %v9287, %v9288
        %v9290 = vrot.slane %v9289, 1
        %v9291 = vadd.f32 %v9289, %v9290
        %v9292 = vrot.slane %v6460, 4
        %v9293 = vadd.f32 %v6460, %v9292
        %v9294 = vrot.slane %v9293, 2
        %v9295 = vadd.f32 %v9293, %v9294
        %v9296 = vrot.slane %v9295, 1
        %v9297 = vadd.f32 %v9295, %v9296
        %v9298 = vrot.slane %v6461, 4
        %v9299 = vadd.f32 %v6461, %v9298
        %v9300 = vrot.slane %v9299, 2
        %v9301 = vadd.f32 %v9299, %v9300
        %v9302 = vrot.slane %v9301, 1
        %v9303 = vadd.f32 %v9301, %v9302
        %v9304 = vrot.slane %v6462, 4
        %v9305 = vadd.f32 %v6462, %v9304
        %v9306 = vrot.slane %v9305, 2
        %v9307 = vadd.f32 %v9305, %v9306
        %v9308 = vrot.slane %v9307, 1
        %v9309 = vadd.f32 %v9307, %v9308
        %v9310 = vrot.slane %v6463, 4
        %v9311 = vadd.f32 %v6463, %v9310
        %v9312 = vrot.slane %v9311, 2
        %v9313 = vadd.f32 %v9311, %v9312
        %v9314 = vrot.slane %v9313, 1
        %v9315 = vadd.f32 %v9313, %v9314
        %v9316 = vrot.slane %v6464, 4
        %v9317 = vadd.f32 %v6464, %v9316
        %v9318 = vrot.slane %v9317, 2
        %v9319 = vadd.f32 %v9317, %v9318
        %v9320 = vrot.slane %v9319, 1
        %v9321 = vadd.f32 %v9319, %v9320
        %v9322 = vrot.slane %v6465, 4
        %v9323 = vadd.f32 %v6465, %v9322
        %v9324 = vrot.slane %v9323, 2
        %v9325 = vadd.f32 %v9323, %v9324
        %v9326 = vrot.slane %v9325, 1
        %v9327 = vadd.f32 %v9325, %v9326
        %v9328 = vrot.slane %v6466, 4
        %v9329 = vadd.f32 %v6466, %v9328
        %v9330 = vrot.slane %v9329, 2
        %v9331 = vadd.f32 %v9329, %v9330
        %v9332 = vrot.slane %v9331, 1
        %v9333 = vadd.f32 %v9331, %v9332
        %v9334 = vrot.slane %v6467, 4
        %v9335 = vadd.f32 %v6467, %v9334
        %v9336 = vrot.slane %v9335, 2
        %v9337 = vadd.f32 %v9335, %v9336
        %v9338 = vrot.slane %v9337, 1
        %v9339 = vadd.f32 %v9337, %v9338
        %v9340 = vrot.slane %v6468, 4
        %v9341 = vadd.f32 %v6468, %v9340
        %v9342 = vrot.slane %v9341, 2
        %v9343 = vadd.f32 %v9341, %v9342
        %v9344 = vrot.slane %v9343, 1
        %v9345 = vadd.f32 %v9343, %v9344
        %v9346 = vrot.slane %v6469, 4
        %v9347 = vadd.f32 %v6469, %v9346
        %v9348 = vrot.slane %v9347, 2
        %v9349 = vadd.f32 %v9347, %v9348
        %v9350 = vrot.slane %v9349, 1
        %v9351 = vadd.f32 %v9349, %v9350
        %v9352 = vrot.slane %v6470, 4
        %v9353 = vadd.f32 %v6470, %v9352
        %v9354 = vrot.slane %v9353, 2
        %v9355 = vadd.f32 %v9353, %v9354
        %v9356 = vrot.slane %v9355, 1
        %v9357 = vadd.f32 %v9355, %v9356
        %v9358 = vrot.slane %v6471, 4
        %v9359 = vadd.f32 %v6471, %v9358
        %v9360 = vrot.slane %v9359, 2
        %v9361 = vadd.f32 %v9359, %v9360
        %v9362 = vrot.slane %v9361, 1
        %v9363 = vadd.f32 %v9361, %v9362
        %v9364 = vrot.slane %v6472, 4
        %v9365 = vadd.f32 %v6472, %v9364
        %v9366 = vrot.slane %v9365, 2
        %v9367 = vadd.f32 %v9365, %v9366
        %v9368 = vrot.slane %v9367, 1
        %v9369 = vadd.f32 %v9367, %v9368
        %v9370 = vrot.slane %v6473, 4
        %v9371 = vadd.f32 %v6473, %v9370
        %v9372 = vrot.slane %v9371, 2
        %v9373 = vadd.f32 %v9371, %v9372
        %v9374 = vrot.slane %v9373, 1
        %v9375 = vadd.f32 %v9373, %v9374
        %v9376 = vrot.slane %v6474, 4
        %v9377 = vadd.f32 %v6474, %v9376
        %v9378 = vrot.slane %v9377, 2
        %v9379 = vadd.f32 %v9377, %v9378
        %v9380 = vrot.slane %v9379, 1
        %v9381 = vadd.f32 %v9379, %v9380
        %v9382 = vrot.slane %v6475, 4
        %v9383 = vadd.f32 %v6475, %v9382
        %v9384 = vrot.slane %v9383, 2
        %v9385 = vadd.f32 %v9383, %v9384
        %v9386 = vrot.slane %v9385, 1
        %v9387 = vadd.f32 %v9385, %v9386
        %v9388 = vrot.slane %v6476, 4
        %v9389 = vadd.f32 %v6476, %v9388
        %v9390 = vrot.slane %v9389, 2
        %v9391 = vadd.f32 %v9389, %v9390
        %v9392 = vrot.slane %v9391, 1
        %v9393 = vadd.f32 %v9391, %v9392
        %v9394 = vrot.slane %v6477, 4
        %v9395 = vadd.f32 %v6477, %v9394
        %v9396 = vrot.slane %v9395, 2
        %v9397 = vadd.f32 %v9395, %v9396
        %v9398 = vrot.slane %v9397, 1
        %v9399 = vadd.f32 %v9397, %v9398
        %v9400 = vrot.slane %v6478, 4
        %v9401 = vadd.f32 %v6478, %v9400
        %v9402 = vrot.slane %v9401, 2
        %v9403 = vadd.f32 %v9401, %v9402
        %v9404 = vrot.slane %v9403, 1
        %v9405 = vadd.f32 %v9403, %v9404
        %v9406 = vrot.slane %v6479, 4
        %v9407 = vadd.f32 %v6479, %v9406
        %v9408 = vrot.slane %v9407, 2
        %v9409 = vadd.f32 %v9407, %v9408
        %v9410 = vrot.slane %v9409, 1
        %v9411 = vadd.f32 %v9409, %v9410
        %v9412 = vrot.slane %v6480, 4
        %v9413 = vadd.f32 %v6480, %v9412
        %v9414 = vrot.slane %v9413, 2
        %v9415 = vadd.f32 %v9413, %v9414
        %v9416 = vrot.slane %v9415, 1
        %v9417 = vadd.f32 %v9415, %v9416
        %v9418 = vrot.slane %v6481, 4
        %v9419 = vadd.f32 %v6481, %v9418
        %v9420 = vrot.slane %v9419, 2
        %v9421 = vadd.f32 %v9419, %v9420
        %v9422 = vrot.slane %v9421, 1
        %v9423 = vadd.f32 %v9421, %v9422
        %v9424 = vrot.slane %v6482, 4
        %v9425 = vadd.f32 %v6482, %v9424
        %v9426 = vrot.slane %v9425, 2
        %v9427 = vadd.f32 %v9425, %v9426
        %v9428 = vrot.slane %v9427, 1
        %v9429 = vadd.f32 %v9427, %v9428
        %v9430 = vrot.slane %v6483, 4
        %v9431 = vadd.f32 %v6483, %v9430
        %v9432 = vrot.slane %v9431, 2
        %v9433 = vadd.f32 %v9431, %v9432
        %v9434 = vrot.slane %v9433, 1
        %v9435 = vadd.f32 %v9433, %v9434
        %v9436 = vrot.slane %v6484, 4
        %v9437 = vadd.f32 %v6484, %v9436
        %v9438 = vrot.slane %v9437, 2
        %v9439 = vadd.f32 %v9437, %v9438
        %v9440 = vrot.slane %v9439, 1
        %v9441 = vadd.f32 %v9439, %v9440
        %v9442 = vrot.slane %v6485, 4
        %v9443 = vadd.f32 %v6485, %v9442
        %v9444 = vrot.slane %v9443, 2
        %v9445 = vadd.f32 %v9443, %v9444
        %v9446 = vrot.slane %v9445, 1
        %v9447 = vadd.f32 %v9445, %v9446
        %v9448 = vrot.slane %v6486, 4
        %v9449 = vadd.f32 %v6486, %v9448
        %v9450 = vrot.slane %v9449, 2
        %v9451 = vadd.f32 %v9449, %v9450
        %v9452 = vrot.slane %v9451, 1
        %v9453 = vadd.f32 %v9451, %v9452
        %v9454 = vrot.slane %v6487, 4
        %v9455 = vadd.f32 %v6487, %v9454
        %v9456 = vrot.slane %v9455, 2
        %v9457 = vadd.f32 %v9455, %v9456
        %v9458 = vrot.slane %v9457, 1
        %v9459 = vadd.f32 %v9457, %v9458
        %v9460 = vrot.slane %v6488, 4
        %v9461 = vadd.f32 %v6488, %v9460
        %v9462 = vrot.slane %v9461, 2
        %v9463 = vadd.f32 %v9461, %v9462
        %v9464 = vrot.slane %v9463, 1
        %v9465 = vadd.f32 %v9463, %v9464
        %v9466 = vrot.slane %v6489, 4
        %v9467 = vadd.f32 %v6489, %v9466
        %v9468 = vrot.slane %v9467, 2
        %v9469 = vadd.f32 %v9467, %v9468
        %v9470 = vrot.slane %v9469, 1
        %v9471 = vadd.f32 %v9469, %v9470
        %v9472 = vrot.slane %v6490, 4
        %v9473 = vadd.f32 %v6490, %v9472
        %v9474 = vrot.slane %v9473, 2
        %v9475 = vadd.f32 %v9473, %v9474
        %v9476 = vrot.slane %v9475, 1
        %v9477 = vadd.f32 %v9475, %v9476
        %v9478 = vrot.slane %v6491, 4
        %v9479 = vadd.f32 %v6491, %v9478
        %v9480 = vrot.slane %v9479, 2
        %v9481 = vadd.f32 %v9479, %v9480
        %v9482 = vrot.slane %v9481, 1
        %v9483 = vadd.f32 %v9481, %v9482
        %v9484 = vrot.slane %v6492, 4
        %v9485 = vadd.f32 %v6492, %v9484
        %v9486 = vrot.slane %v9485, 2
        %v9487 = vadd.f32 %v9485, %v9486
        %v9488 = vrot.slane %v9487, 1
        %v9489 = vadd.f32 %v9487, %v9488
        %v9490 = vrot.slane %v6493, 4
        %v9491 = vadd.f32 %v6493, %v9490
        %v9492 = vrot.slane %v9491, 2
        %v9493 = vadd.f32 %v9491, %v9492
        %v9494 = vrot.slane %v9493, 1
        %v9495 = vadd.f32 %v9493, %v9494
        %v9496 = vrot.slane %v6494, 4
        %v9497 = vadd.f32 %v6494, %v9496
        %v9498 = vrot.slane %v9497, 2
        %v9499 = vadd.f32 %v9497, %v9498
        %v9500 = vrot.slane %v9499, 1
        %v9501 = vadd.f32 %v9499, %v9500
        %v9502 = vrot.slane %v6495, 4
        %v9503 = vadd.f32 %v6495, %v9502
        %v9504 = vrot.slane %v9503, 2
        %v9505 = vadd.f32 %v9503, %v9504
        %v9506 = vrot.slane %v9505, 1
        %v9507 = vadd.f32 %v9505, %v9506
        %v9508 = vrot.slane %v6496, 4
        %v9509 = vadd.f32 %v6496, %v9508
        %v9510 = vrot.slane %v9509, 2
        %v9511 = vadd.f32 %v9509, %v9510
        %v9512 = vrot.slane %v9511, 1
        %v9513 = vadd.f32 %v9511, %v9512
        %v9514 = vrot.slane %v6497, 4
        %v9515 = vadd.f32 %v6497, %v9514
        %v9516 = vrot.slane %v9515, 2
        %v9517 = vadd.f32 %v9515, %v9516
        %v9518 = vrot.slane %v9517, 1
        %v9519 = vadd.f32 %v9517, %v9518
        %v9520 = vrot.slane %v6498, 4
        %v9521 = vadd.f32 %v6498, %v9520
        %v9522 = vrot.slane %v9521, 2
        %v9523 = vadd.f32 %v9521, %v9522
        %v9524 = vrot.slane %v9523, 1
        %v9525 = vadd.f32 %v9523, %v9524
        %v9526 = vrot.slane %v6499, 4
        %v9527 = vadd.f32 %v6499, %v9526
        %v9528 = vrot.slane %v9527, 2
        %v9529 = vadd.f32 %v9527, %v9528
        %v9530 = vrot.slane %v9529, 1
        %v9531 = vadd.f32 %v9529, %v9530
        %v9532 = vrot.slane %v6500, 4
        %v9533 = vadd.f32 %v6500, %v9532
        %v9534 = vrot.slane %v9533, 2
        %v9535 = vadd.f32 %v9533, %v9534
        %v9536 = vrot.slane %v9535, 1
        %v9537 = vadd.f32 %v9535, %v9536
        %v9538 = vrot.slane %v6501, 4
        %v9539 = vadd.f32 %v6501, %v9538
        %v9540 = vrot.slane %v9539, 2
        %v9541 = vadd.f32 %v9539, %v9540
        %v9542 = vrot.slane %v9541, 1
        %v9543 = vadd.f32 %v9541, %v9542
        %v9544 = vrot.slane %v6502, 4
        %v9545 = vadd.f32 %v6502, %v9544
        %v9546 = vrot.slane %v9545, 2
        %v9547 = vadd.f32 %v9545, %v9546
        %v9548 = vrot.slane %v9547, 1
        %v9549 = vadd.f32 %v9547, %v9548
        %v9550 = vrot.slane %v6503, 4
        %v9551 = vadd.f32 %v6503, %v9550
        %v9552 = vrot.slane %v9551, 2
        %v9553 = vadd.f32 %v9551, %v9552
        %v9554 = vrot.slane %v9553, 1
        %v9555 = vadd.f32 %v9553, %v9554
        %v9556 = vrot.slane %v6504, 4
        %v9557 = vadd.f32 %v6504, %v9556
        %v9558 = vrot.slane %v9557, 2
        %v9559 = vadd.f32 %v9557, %v9558
        %v9560 = vrot.slane %v9559, 1
        %v9561 = vadd.f32 %v9559, %v9560
        %v9562 = vrot.slane %v6505, 4
        %v9563 = vadd.f32 %v6505, %v9562
        %v9564 = vrot.slane %v9563, 2
        %v9565 = vadd.f32 %v9563, %v9564
        %v9566 = vrot.slane %v9565, 1
        %v9567 = vadd.f32 %v9565, %v9566
        %v9568 = vrot.slane %v6506, 4
        %v9569 = vadd.f32 %v6506, %v9568
        %v9570 = vrot.slane %v9569, 2
        %v9571 = vadd.f32 %v9569, %v9570
        %v9572 = vrot.slane %v9571, 1
        %v9573 = vadd.f32 %v9571, %v9572
        %v9574 = vrot.slane %v6507, 4
        %v9575 = vadd.f32 %v6507, %v9574
        %v9576 = vrot.slane %v9575, 2
        %v9577 = vadd.f32 %v9575, %v9576
        %v9578 = vrot.slane %v9577, 1
        %v9579 = vadd.f32 %v9577, %v9578
        %vm10092 = vcmask 1041409
        %v10093 = vsel %vm10092, %v6519, %v6513
        %vm10094 = vcmask 1042434
        %v10095 = vsel %vm10094, %v6525, %v10093
        %vm10096 = vcmask 1043459
        %v10097 = vsel %vm10096, %v6531, %v10095
        %vm10098 = vcmask 1044484
        %v10099 = vsel %vm10098, %v6537, %v10097
        %vm10100 = vcmask 1045509
        %v10101 = vsel %vm10100, %v6543, %v10099
        %vm10102 = vcmask 1046534
        %v10103 = vsel %vm10102, %v6549, %v10101
        %vm10104 = vcmask 1047559
        %v10105 = vsel %vm10104, %v6555, %v10103
        %v10106 = vsel %vm10092, %v6567, %v6561
        %v10107 = vsel %vm10094, %v6573, %v10106
        %v10108 = vsel %vm10096, %v6579, %v10107
        %v10109 = vsel %vm10098, %v6585, %v10108
        %v10110 = vsel %vm10100, %v6591, %v10109
        %v10111 = vsel %vm10102, %v6597, %v10110
        %v10112 = vsel %vm10104, %v6603, %v10111
        %v10113 = vsel %vm10092, %v6615, %v6609
        %v10114 = vsel %vm10094, %v6621, %v10113
        %v10115 = vsel %vm10096, %v6627, %v10114
        %v10116 = vsel %vm10098, %v6633, %v10115
        %v10117 = vsel %vm10100, %v6639, %v10116
        %v10118 = vsel %vm10102, %v6645, %v10117
        %v10119 = vsel %vm10104, %v6651, %v10118
        %v10120 = vsel %vm10092, %v6663, %v6657
        %v10121 = vsel %vm10094, %v6669, %v10120
        %v10122 = vsel %vm10096, %v6675, %v10121
        %v10123 = vsel %vm10098, %v6681, %v10122
        %v10124 = vsel %vm10100, %v6687, %v10123
        %v10125 = vsel %vm10102, %v6693, %v10124
        %v10126 = vsel %vm10104, %v6699, %v10125
        %v10127 = vsel %vm10092, %v6711, %v6705
        %v10128 = vsel %vm10094, %v6717, %v10127
        %v10129 = vsel %vm10096, %v6723, %v10128
        %v10130 = vsel %vm10098, %v6729, %v10129
        %v10131 = vsel %vm10100, %v6735, %v10130
        %v10132 = vsel %vm10102, %v6741, %v10131
        %v10133 = vsel %vm10104, %v6747, %v10132
        %v10134 = vsel %vm10092, %v6759, %v6753
        %v10135 = vsel %vm10094, %v6765, %v10134
        %v10136 = vsel %vm10096, %v6771, %v10135
        %v10137 = vsel %vm10098, %v6777, %v10136
        %v10138 = vsel %vm10100, %v6783, %v10137
        %v10139 = vsel %vm10102, %v6789, %v10138
        %v10140 = vsel %vm10104, %v6795, %v10139
        %v10141 = vsel %vm10092, %v6807, %v6801
        %v10142 = vsel %vm10094, %v6813, %v10141
        %v10143 = vsel %vm10096, %v6819, %v10142
        %v10144 = vsel %vm10098, %v6825, %v10143
        %v10145 = vsel %vm10100, %v6831, %v10144
        %v10146 = vsel %vm10102, %v6837, %v10145
        %v10147 = vsel %vm10104, %v6843, %v10146
        %v10148 = vsel %vm10092, %v6855, %v6849
        %v10149 = vsel %vm10094, %v6861, %v10148
        %v10150 = vsel %vm10096, %v6867, %v10149
        %v10151 = vsel %vm10098, %v6873, %v10150
        %v10152 = vsel %vm10100, %v6879, %v10151
        %v10153 = vsel %vm10102, %v6885, %v10152
        %v10154 = vsel %vm10104, %v6891, %v10153
        %v10155 = vsel %vm10092, %v6903, %v6897
        %v10156 = vsel %vm10094, %v6909, %v10155
        %v10157 = vsel %vm10096, %v6915, %v10156
        %v10158 = vsel %vm10098, %v6921, %v10157
        %v10159 = vsel %vm10100, %v6927, %v10158
        %v10160 = vsel %vm10102, %v6933, %v10159
        %v10161 = vsel %vm10104, %v6939, %v10160
        %v10162 = vsel %vm10092, %v6951, %v6945
        %v10163 = vsel %vm10094, %v6957, %v10162
        %v10164 = vsel %vm10096, %v6963, %v10163
        %v10165 = vsel %vm10098, %v6969, %v10164
        %v10166 = vsel %vm10100, %v6975, %v10165
        %v10167 = vsel %vm10102, %v6981, %v10166
        %v10168 = vsel %vm10104, %v6987, %v10167
        %v10169 = vsel %vm10092, %v6999, %v6993
        %v10170 = vsel %vm10094, %v7005, %v10169
        %v10171 = vsel %vm10096, %v7011, %v10170
        %v10172 = vsel %vm10098, %v7017, %v10171
        %v10173 = vsel %vm10100, %v7023, %v10172
        %v10174 = vsel %vm10102, %v7029, %v10173
        %v10175 = vsel %vm10104, %v7035, %v10174
        %v10176 = vsel %vm10092, %v7047, %v7041
        %v10177 = vsel %vm10094, %v7053, %v10176
        %v10178 = vsel %vm10096, %v7059, %v10177
        %v10179 = vsel %vm10098, %v7065, %v10178
        %v10180 = vsel %vm10100, %v7071, %v10179
        %v10181 = vsel %vm10102, %v7077, %v10180
        %v10182 = vsel %vm10104, %v7083, %v10181
        %v10183 = vsel %vm10092, %v7095, %v7089
        %v10184 = vsel %vm10094, %v7101, %v10183
        %v10185 = vsel %vm10096, %v7107, %v10184
        %v10186 = vsel %vm10098, %v7113, %v10185
        %v10187 = vsel %vm10100, %v7119, %v10186
        %v10188 = vsel %vm10102, %v7125, %v10187
        %v10189 = vsel %vm10104, %v7131, %v10188
        %v10190 = vsel %vm10092, %v7143, %v7137
        %v10191 = vsel %vm10094, %v7149, %v10190
        %v10192 = vsel %vm10096, %v7155, %v10191
        %v10193 = vsel %vm10098, %v7161, %v10192
        %v10194 = vsel %vm10100, %v7167, %v10193
        %v10195 = vsel %vm10102, %v7173, %v10194
        %v10196 = vsel %vm10104, %v7179, %v10195
        %v10197 = vsel %vm10092, %v7191, %v7185
        %v10198 = vsel %vm10094, %v7197, %v10197
        %v10199 = vsel %vm10096, %v7203, %v10198
        %v10200 = vsel %vm10098, %v7209, %v10199
        %v10201 = vsel %vm10100, %v7215, %v10200
        %v10202 = vsel %vm10102, %v7221, %v10201
        %v10203 = vsel %vm10104, %v7227, %v10202
        %v10204 = vsel %vm10092, %v7239, %v7233
        %v10205 = vsel %vm10094, %v7245, %v10204
        %v10206 = vsel %vm10096, %v7251, %v10205
        %v10207 = vsel %vm10098, %v7257, %v10206
        %v10208 = vsel %vm10100, %v7263, %v10207
        %v10209 = vsel %vm10102, %v7269, %v10208
        %v10210 = vsel %vm10104, %v7275, %v10209
        %v10211 = vsel %vm10092, %v7287, %v7281
        %v10212 = vsel %vm10094, %v7293, %v10211
        %v10213 = vsel %vm10096, %v7299, %v10212
        %v10214 = vsel %vm10098, %v7305, %v10213
        %v10215 = vsel %vm10100, %v7311, %v10214
        %v10216 = vsel %vm10102, %v7317, %v10215
        %v10217 = vsel %vm10104, %v7323, %v10216
        %v10218 = vsel %vm10092, %v7335, %v7329
        %v10219 = vsel %vm10094, %v7341, %v10218
        %v10220 = vsel %vm10096, %v7347, %v10219
        %v10221 = vsel %vm10098, %v7353, %v10220
        %v10222 = vsel %vm10100, %v7359, %v10221
        %v10223 = vsel %vm10102, %v7365, %v10222
        %v10224 = vsel %vm10104, %v7371, %v10223
        %v10225 = vsel %vm10092, %v7383, %v7377
        %v10226 = vsel %vm10094, %v7389, %v10225
        %v10227 = vsel %vm10096, %v7395, %v10226
        %v10228 = vsel %vm10098, %v7401, %v10227
        %v10229 = vsel %vm10100, %v7407, %v10228
        %v10230 = vsel %vm10102, %v7413, %v10229
        %v10231 = vsel %vm10104, %v7419, %v10230
        %v10232 = vsel %vm10092, %v7431, %v7425
        %v10233 = vsel %vm10094, %v7437, %v10232
        %v10234 = vsel %vm10096, %v7443, %v10233
        %v10235 = vsel %vm10098, %v7449, %v10234
        %v10236 = vsel %vm10100, %v7455, %v10235
        %v10237 = vsel %vm10102, %v7461, %v10236
        %v10238 = vsel %vm10104, %v7467, %v10237
        %v10239 = vsel %vm10092, %v7479, %v7473
        %v10240 = vsel %vm10094, %v7485, %v10239
        %v10241 = vsel %vm10096, %v7491, %v10240
        %v10242 = vsel %vm10098, %v7497, %v10241
        %v10243 = vsel %vm10100, %v7503, %v10242
        %v10244 = vsel %vm10102, %v7509, %v10243
        %v10245 = vsel %vm10104, %v7515, %v10244
        %v10246 = vsel %vm10092, %v7527, %v7521
        %v10247 = vsel %vm10094, %v7533, %v10246
        %v10248 = vsel %vm10096, %v7539, %v10247
        %v10249 = vsel %vm10098, %v7545, %v10248
        %v10250 = vsel %vm10100, %v7551, %v10249
        %v10251 = vsel %vm10102, %v7557, %v10250
        %v10252 = vsel %vm10104, %v7563, %v10251
        %v10253 = vsel %vm10092, %v7575, %v7569
        %v10254 = vsel %vm10094, %v7581, %v10253
        %v10255 = vsel %vm10096, %v7587, %v10254
        %v10256 = vsel %vm10098, %v7593, %v10255
        %v10257 = vsel %vm10100, %v7599, %v10256
        %v10258 = vsel %vm10102, %v7605, %v10257
        %v10259 = vsel %vm10104, %v7611, %v10258
        %v10260 = vsel %vm10092, %v7623, %v7617
        %v10261 = vsel %vm10094, %v7629, %v10260
        %v10262 = vsel %vm10096, %v7635, %v10261
        %v10263 = vsel %vm10098, %v7641, %v10262
        %v10264 = vsel %vm10100, %v7647, %v10263
        %v10265 = vsel %vm10102, %v7653, %v10264
        %v10266 = vsel %vm10104, %v7659, %v10265
        %v10267 = vsel %vm10092, %v7671, %v7665
        %v10268 = vsel %vm10094, %v7677, %v10267
        %v10269 = vsel %vm10096, %v7683, %v10268
        %v10270 = vsel %vm10098, %v7689, %v10269
        %v10271 = vsel %vm10100, %v7695, %v10270
        %v10272 = vsel %vm10102, %v7701, %v10271
        %v10273 = vsel %vm10104, %v7707, %v10272
        %v10274 = vsel %vm10092, %v7719, %v7713
        %v10275 = vsel %vm10094, %v7725, %v10274
        %v10276 = vsel %vm10096, %v7731, %v10275
        %v10277 = vsel %vm10098, %v7737, %v10276
        %v10278 = vsel %vm10100, %v7743, %v10277
        %v10279 = vsel %vm10102, %v7749, %v10278
        %v10280 = vsel %vm10104, %v7755, %v10279
        %v10281 = vsel %vm10092, %v7767, %v7761
        %v10282 = vsel %vm10094, %v7773, %v10281
        %v10283 = vsel %vm10096, %v7779, %v10282
        %v10284 = vsel %vm10098, %v7785, %v10283
        %v10285 = vsel %vm10100, %v7791, %v10284
        %v10286 = vsel %vm10102, %v7797, %v10285
        %v10287 = vsel %vm10104, %v7803, %v10286
        %v10288 = vsel %vm10092, %v7815, %v7809
        %v10289 = vsel %vm10094, %v7821, %v10288
        %v10290 = vsel %vm10096, %v7827, %v10289
        %v10291 = vsel %vm10098, %v7833, %v10290
        %v10292 = vsel %vm10100, %v7839, %v10291
        %v10293 = vsel %vm10102, %v7845, %v10292
        %v10294 = vsel %vm10104, %v7851, %v10293
        %v10295 = vsel %vm10092, %v7863, %v7857
        %v10296 = vsel %vm10094, %v7869, %v10295
        %v10297 = vsel %vm10096, %v7875, %v10296
        %v10298 = vsel %vm10098, %v7881, %v10297
        %v10299 = vsel %vm10100, %v7887, %v10298
        %v10300 = vsel %vm10102, %v7893, %v10299
        %v10301 = vsel %vm10104, %v7899, %v10300
        %v10302 = vsel %vm10092, %v7911, %v7905
        %v10303 = vsel %vm10094, %v7917, %v10302
        %v10304 = vsel %vm10096, %v7923, %v10303
        %v10305 = vsel %vm10098, %v7929, %v10304
        %v10306 = vsel %vm10100, %v7935, %v10305
        %v10307 = vsel %vm10102, %v7941, %v10306
        %v10308 = vsel %vm10104, %v7947, %v10307
        %v10309 = vsel %vm10092, %v7959, %v7953
        %v10310 = vsel %vm10094, %v7965, %v10309
        %v10311 = vsel %vm10096, %v7971, %v10310
        %v10312 = vsel %vm10098, %v7977, %v10311
        %v10313 = vsel %vm10100, %v7983, %v10312
        %v10314 = vsel %vm10102, %v7989, %v10313
        %v10315 = vsel %vm10104, %v7995, %v10314
        %v10316 = vsel %vm10092, %v8007, %v8001
        %v10317 = vsel %vm10094, %v8013, %v10316
        %v10318 = vsel %vm10096, %v8019, %v10317
        %v10319 = vsel %vm10098, %v8025, %v10318
        %v10320 = vsel %vm10100, %v8031, %v10319
        %v10321 = vsel %vm10102, %v8037, %v10320
        %v10322 = vsel %vm10104, %v8043, %v10321
        %v10323 = vsel %vm10092, %v8055, %v8049
        %v10324 = vsel %vm10094, %v8061, %v10323
        %v10325 = vsel %vm10096, %v8067, %v10324
        %v10326 = vsel %vm10098, %v8073, %v10325
        %v10327 = vsel %vm10100, %v8079, %v10326
        %v10328 = vsel %vm10102, %v8085, %v10327
        %v10329 = vsel %vm10104, %v8091, %v10328
        %v10330 = vsel %vm10092, %v8103, %v8097
        %v10331 = vsel %vm10094, %v8109, %v10330
        %v10332 = vsel %vm10096, %v8115, %v10331
        %v10333 = vsel %vm10098, %v8121, %v10332
        %v10334 = vsel %vm10100, %v8127, %v10333
        %v10335 = vsel %vm10102, %v8133, %v10334
        %v10336 = vsel %vm10104, %v8139, %v10335
        %v10337 = vsel %vm10092, %v8151, %v8145
        %v10338 = vsel %vm10094, %v8157, %v10337
        %v10339 = vsel %vm10096, %v8163, %v10338
        %v10340 = vsel %vm10098, %v8169, %v10339
        %v10341 = vsel %vm10100, %v8175, %v10340
        %v10342 = vsel %vm10102, %v8181, %v10341
        %v10343 = vsel %vm10104, %v8187, %v10342
        %v10344 = vsel %vm10092, %v8199, %v8193
        %v10345 = vsel %vm10094, %v8205, %v10344
        %v10346 = vsel %vm10096, %v8211, %v10345
        %v10347 = vsel %vm10098, %v8217, %v10346
        %v10348 = vsel %vm10100, %v8223, %v10347
        %v10349 = vsel %vm10102, %v8229, %v10348
        %v10350 = vsel %vm10104, %v8235, %v10349
        %v10351 = vsel %vm10092, %v8247, %v8241
        %v10352 = vsel %vm10094, %v8253, %v10351
        %v10353 = vsel %vm10096, %v8259, %v10352
        %v10354 = vsel %vm10098, %v8265, %v10353
        %v10355 = vsel %vm10100, %v8271, %v10354
        %v10356 = vsel %vm10102, %v8277, %v10355
        %v10357 = vsel %vm10104, %v8283, %v10356
        %v10358 = vsel %vm10092, %v8295, %v8289
        %v10359 = vsel %vm10094, %v8301, %v10358
        %v10360 = vsel %vm10096, %v8307, %v10359
        %v10361 = vsel %vm10098, %v8313, %v10360
        %v10362 = vsel %vm10100, %v8319, %v10361
        %v10363 = vsel %vm10102, %v8325, %v10362
        %v10364 = vsel %vm10104, %v8331, %v10363
        %v10365 = vsel %vm10092, %v8343, %v8337
        %v10366 = vsel %vm10094, %v8349, %v10365
        %v10367 = vsel %vm10096, %v8355, %v10366
        %v10368 = vsel %vm10098, %v8361, %v10367
        %v10369 = vsel %vm10100, %v8367, %v10368
        %v10370 = vsel %vm10102, %v8373, %v10369
        %v10371 = vsel %vm10104, %v8379, %v10370
        %v10372 = vsel %vm10092, %v8391, %v8385
        %v10373 = vsel %vm10094, %v8397, %v10372
        %v10374 = vsel %vm10096, %v8403, %v10373
        %v10375 = vsel %vm10098, %v8409, %v10374
        %v10376 = vsel %vm10100, %v8415, %v10375
        %v10377 = vsel %vm10102, %v8421, %v10376
        %v10378 = vsel %vm10104, %v8427, %v10377
        %v10379 = vsel %vm10092, %v8439, %v8433
        %v10380 = vsel %vm10094, %v8445, %v10379
        %v10381 = vsel %vm10096, %v8451, %v10380
        %v10382 = vsel %vm10098, %v8457, %v10381
        %v10383 = vsel %vm10100, %v8463, %v10382
        %v10384 = vsel %vm10102, %v8469, %v10383
        %v10385 = vsel %vm10104, %v8475, %v10384
        %v10386 = vsel %vm10092, %v8487, %v8481
        %v10387 = vsel %vm10094, %v8493, %v10386
        %v10388 = vsel %vm10096, %v8499, %v10387
        %v10389 = vsel %vm10098, %v8505, %v10388
        %v10390 = vsel %vm10100, %v8511, %v10389
        %v10391 = vsel %vm10102, %v8517, %v10390
        %v10392 = vsel %vm10104, %v8523, %v10391
        %v10393 = vsel %vm10092, %v8535, %v8529
        %v10394 = vsel %vm10094, %v8541, %v10393
        %v10395 = vsel %vm10096, %v8547, %v10394
        %v10396 = vsel %vm10098, %v8553, %v10395
        %v10397 = vsel %vm10100, %v8559, %v10396
        %v10398 = vsel %vm10102, %v8565, %v10397
        %v10399 = vsel %vm10104, %v8571, %v10398
        %v10400 = vsel %vm10092, %v8583, %v8577
        %v10401 = vsel %vm10094, %v8589, %v10400
        %v10402 = vsel %vm10096, %v8595, %v10401
        %v10403 = vsel %vm10098, %v8601, %v10402
        %v10404 = vsel %vm10100, %v8607, %v10403
        %v10405 = vsel %vm10102, %v8613, %v10404
        %v10406 = vsel %vm10104, %v8619, %v10405
        %v10407 = vsel %vm10092, %v8631, %v8625
        %v10408 = vsel %vm10094, %v8637, %v10407
        %v10409 = vsel %vm10096, %v8643, %v10408
        %v10410 = vsel %vm10098, %v8649, %v10409
        %v10411 = vsel %vm10100, %v8655, %v10410
        %v10412 = vsel %vm10102, %v8661, %v10411
        %v10413 = vsel %vm10104, %v8667, %v10412
        %v10414 = vsel %vm10092, %v8679, %v8673
        %v10415 = vsel %vm10094, %v8685, %v10414
        %v10416 = vsel %vm10096, %v8691, %v10415
        %v10417 = vsel %vm10098, %v8697, %v10416
        %v10418 = vsel %vm10100, %v8703, %v10417
        %v10419 = vsel %vm10102, %v8709, %v10418
        %v10420 = vsel %vm10104, %v8715, %v10419
        %v10421 = vsel %vm10092, %v8727, %v8721
        %v10422 = vsel %vm10094, %v8733, %v10421
        %v10423 = vsel %vm10096, %v8739, %v10422
        %v10424 = vsel %vm10098, %v8745, %v10423
        %v10425 = vsel %vm10100, %v8751, %v10424
        %v10426 = vsel %vm10102, %v8757, %v10425
        %v10427 = vsel %vm10104, %v8763, %v10426
        %v10428 = vsel %vm10092, %v8775, %v8769
        %v10429 = vsel %vm10094, %v8781, %v10428
        %v10430 = vsel %vm10096, %v8787, %v10429
        %v10431 = vsel %vm10098, %v8793, %v10430
        %v10432 = vsel %vm10100, %v8799, %v10431
        %v10433 = vsel %vm10102, %v8805, %v10432
        %v10434 = vsel %vm10104, %v8811, %v10433
        %v10435 = vsel %vm10092, %v8823, %v8817
        %v10436 = vsel %vm10094, %v8829, %v10435
        %v10437 = vsel %vm10096, %v8835, %v10436
        %v10438 = vsel %vm10098, %v8841, %v10437
        %v10439 = vsel %vm10100, %v8847, %v10438
        %v10440 = vsel %vm10102, %v8853, %v10439
        %v10441 = vsel %vm10104, %v8859, %v10440
        %v10442 = vsel %vm10092, %v8871, %v8865
        %v10443 = vsel %vm10094, %v8877, %v10442
        %v10444 = vsel %vm10096, %v8883, %v10443
        %v10445 = vsel %vm10098, %v8889, %v10444
        %v10446 = vsel %vm10100, %v8895, %v10445
        %v10447 = vsel %vm10102, %v8901, %v10446
        %v10448 = vsel %vm10104, %v8907, %v10447
        %v10449 = vsel %vm10092, %v8919, %v8913
        %v10450 = vsel %vm10094, %v8925, %v10449
        %v10451 = vsel %vm10096, %v8931, %v10450
        %v10452 = vsel %vm10098, %v8937, %v10451
        %v10453 = vsel %vm10100, %v8943, %v10452
        %v10454 = vsel %vm10102, %v8949, %v10453
        %v10455 = vsel %vm10104, %v8955, %v10454
        %v10456 = vsel %vm10092, %v8967, %v8961
        %v10457 = vsel %vm10094, %v8973, %v10456
        %v10458 = vsel %vm10096, %v8979, %v10457
        %v10459 = vsel %vm10098, %v8985, %v10458
        %v10460 = vsel %vm10100, %v8991, %v10459
        %v10461 = vsel %vm10102, %v8997, %v10460
        %v10462 = vsel %vm10104, %v9003, %v10461
        %v10463 = vsel %vm10092, %v9015, %v9009
        %v10464 = vsel %vm10094, %v9021, %v10463
        %v10465 = vsel %vm10096, %v9027, %v10464
        %v10466 = vsel %vm10098, %v9033, %v10465
        %v10467 = vsel %vm10100, %v9039, %v10466
        %v10468 = vsel %vm10102, %v9045, %v10467
        %v10469 = vsel %vm10104, %v9051, %v10468
        %v10470 = vsel %vm10092, %v9063, %v9057
        %v10471 = vsel %vm10094, %v9069, %v10470
        %v10472 = vsel %vm10096, %v9075, %v10471
        %v10473 = vsel %vm10098, %v9081, %v10472
        %v10474 = vsel %vm10100, %v9087, %v10473
        %v10475 = vsel %vm10102, %v9093, %v10474
        %v10476 = vsel %vm10104, %v9099, %v10475
        %v10477 = vsel %vm10092, %v9111, %v9105
        %v10478 = vsel %vm10094, %v9117, %v10477
        %v10479 = vsel %vm10096, %v9123, %v10478
        %v10480 = vsel %vm10098, %v9129, %v10479
        %v10481 = vsel %vm10100, %v9135, %v10480
        %v10482 = vsel %vm10102, %v9141, %v10481
        %v10483 = vsel %vm10104, %v9147, %v10482
        %v10484 = vsel %vm10092, %v9159, %v9153
        %v10485 = vsel %vm10094, %v9165, %v10484
        %v10486 = vsel %vm10096, %v9171, %v10485
        %v10487 = vsel %vm10098, %v9177, %v10486
        %v10488 = vsel %vm10100, %v9183, %v10487
        %v10489 = vsel %vm10102, %v9189, %v10488
        %v10490 = vsel %vm10104, %v9195, %v10489
        %v10491 = vsel %vm10092, %v9207, %v9201
        %v10492 = vsel %vm10094, %v9213, %v10491
        %v10493 = vsel %vm10096, %v9219, %v10492
        %v10494 = vsel %vm10098, %v9225, %v10493
        %v10495 = vsel %vm10100, %v9231, %v10494
        %v10496 = vsel %vm10102, %v9237, %v10495
        %v10497 = vsel %vm10104, %v9243, %v10496
        %v10498 = vsel %vm10092, %v9255, %v9249
        %v10499 = vsel %vm10094, %v9261, %v10498
        %v10500 = vsel %vm10096, %v9267, %v10499
        %v10501 = vsel %vm10098, %v9273, %v10500
        %v10502 = vsel %vm10100, %v9279, %v10501
        %v10503 = vsel %vm10102, %v9285, %v10502
        %v10504 = vsel %vm10104, %v9291, %v10503
        %v10505 = vsel %vm10092, %v9303, %v9297
        %v10506 = vsel %vm10094, %v9309, %v10505
        %v10507 = vsel %vm10096, %v9315, %v10506
        %v10508 = vsel %vm10098, %v9321, %v10507
        %v10509 = vsel %vm10100, %v9327, %v10508
        %v10510 = vsel %vm10102, %v9333, %v10509
        %v10511 = vsel %vm10104, %v9339, %v10510
        %v10512 = vsel %vm10092, %v9351, %v9345
        %v10513 = vsel %vm10094, %v9357, %v10512
        %v10514 = vsel %vm10096, %v9363, %v10513
        %v10515 = vsel %vm10098, %v9369, %v10514
        %v10516 = vsel %vm10100, %v9375, %v10515
        %v10517 = vsel %vm10102, %v9381, %v10516
        %v10518 = vsel %vm10104, %v9387, %v10517
        %v10519 = vsel %vm10092, %v9399, %v9393
        %v10520 = vsel %vm10094, %v9405, %v10519
        %v10521 = vsel %vm10096, %v9411, %v10520
        %v10522 = vsel %vm10098, %v9417, %v10521
        %v10523 = vsel %vm10100, %v9423, %v10522
        %v10524 = vsel %vm10102, %v9429, %v10523
        %v10525 = vsel %vm10104, %v9435, %v10524
        %v10526 = vsel %vm10092, %v9447, %v9441
        %v10527 = vsel %vm10094, %v9453, %v10526
        %v10528 = vsel %vm10096, %v9459, %v10527
        %v10529 = vsel %vm10098, %v9465, %v10528
        %v10530 = vsel %vm10100, %v9471, %v10529
        %v10531 = vsel %vm10102, %v9477, %v10530
        %v10532 = vsel %vm10104, %v9483, %v10531
        %v10533 = vsel %vm10092, %v9495, %v9489
        %v10534 = vsel %vm10094, %v9501, %v10533
        %v10535 = vsel %vm10096, %v9507, %v10534
        %v10536 = vsel %vm10098, %v9513, %v10535
        %v10537 = vsel %vm10100, %v9519, %v10536
        %v10538 = vsel %vm10102, %v9525, %v10537
        %v10539 = vsel %vm10104, %v9531, %v10538
        %v10540 = vsel %vm10092, %v9543, %v9537
        %v10541 = vsel %vm10094, %v9549, %v10540
        %v10542 = vsel %vm10096, %v9555, %v10541
        %v10543 = vsel %vm10098, %v9561, %v10542
        %v10544 = vsel %vm10100, %v9567, %v10543
        %v10545 = vsel %vm10102, %v9573, %v10544
        %v10546 = vsel %vm10104, %v9579, %v10545
        %10611 = vadd.xlane.f32.xlu0 %v10105
        %v10612 = vpop.xlane.xlu0 %10611
        %10613 = vadd.xlane.f32.xlu0 %v10112
        %v10614 = vpop.xlane.xlu0 %10613
        %10615 = vadd.xlane.f32.xlu0 %v10119
        %v10616 = vpop.xlane.xlu0 %10615
        %10617 = vadd.xlane.f32.xlu0 %v10126
        %v10618 = vpop.xlane.xlu0 %10617
        %10619 = vadd.xlane.f32.xlu0 %v10133
        %v10620 = vpop.xlane.xlu0 %10619
        %10621 = vadd.xlane.f32.xlu0 %v10140
        %v10622 = vpop.xlane.xlu0 %10621
        %10623 = vadd.xlane.f32.xlu0 %v10147
        %v10624 = vpop.xlane.xlu0 %10623
        %10625 = vadd.xlane.f32.xlu0 %v10154
        %v10626 = vpop.xlane.xlu0 %10625
        %10627 = vadd.xlane.f32.xlu0 %v10161
        %v10628 = vpop.xlane.xlu0 %10627
        %10629 = vadd.xlane.f32.xlu0 %v10168
        %v10630 = vpop.xlane.xlu0 %10629
        %10631 = vadd.xlane.f32.xlu0 %v10175
        %v10632 = vpop.xlane.xlu0 %10631
        %10633 = vadd.xlane.f32.xlu0 %v10182
        %v10634 = vpop.xlane.xlu0 %10633
        %10635 = vadd.xlane.f32.xlu0 %v10189
        %v10636 = vpop.xlane.xlu0 %10635
        %10637 = vadd.xlane.f32.xlu0 %v10196
        %v10638 = vpop.xlane.xlu0 %10637
        %10639 = vadd.xlane.f32.xlu0 %v10203
        %v10640 = vpop.xlane.xlu0 %10639
        %10641 = vadd.xlane.f32.xlu0 %v10210
        %v10642 = vpop.xlane.xlu0 %10641
        %10643 = vadd.xlane.f32.xlu0 %v10217
        %v10644 = vpop.xlane.xlu0 %10643
        %10645 = vadd.xlane.f32.xlu0 %v10224
        %v10646 = vpop.xlane.xlu0 %10645
        %10647 = vadd.xlane.f32.xlu0 %v10231
        %v10648 = vpop.xlane.xlu0 %10647
        %10649 = vadd.xlane.f32.xlu0 %v10238
        %v10650 = vpop.xlane.xlu0 %10649
        %10651 = vadd.xlane.f32.xlu0 %v10245
        %v10652 = vpop.xlane.xlu0 %10651
        %10653 = vadd.xlane.f32.xlu0 %v10252
        %v10654 = vpop.xlane.xlu0 %10653
        %10655 = vadd.xlane.f32.xlu0 %v10259
        %v10656 = vpop.xlane.xlu0 %10655
        %10657 = vadd.xlane.f32.xlu0 %v10266
        %v10658 = vpop.xlane.xlu0 %10657
        %10659 = vadd.xlane.f32.xlu0 %v10273
        %v10660 = vpop.xlane.xlu0 %10659
        %10661 = vadd.xlane.f32.xlu0 %v10280
        %v10662 = vpop.xlane.xlu0 %10661
        %10663 = vadd.xlane.f32.xlu0 %v10287
        %v10664 = vpop.xlane.xlu0 %10663
        %10665 = vadd.xlane.f32.xlu0 %v10294
        %v10666 = vpop.xlane.xlu0 %10665
        %10667 = vadd.xlane.f32.xlu0 %v10301
        %v10668 = vpop.xlane.xlu0 %10667
        %10669 = vadd.xlane.f32.xlu0 %v10308
        %v10670 = vpop.xlane.xlu0 %10669
        %10671 = vadd.xlane.f32.xlu0 %v10315
        %v10672 = vpop.xlane.xlu0 %10671
        %10673 = vadd.xlane.f32.xlu0 %v10322
        %v10674 = vpop.xlane.xlu0 %10673
        %10675 = vadd.xlane.f32.xlu0 %v10329
        %v10676 = vpop.xlane.xlu0 %10675
        %10677 = vadd.xlane.f32.xlu0 %v10336
        %v10678 = vpop.xlane.xlu0 %10677
        %10679 = vadd.xlane.f32.xlu0 %v10343
        %v10680 = vpop.xlane.xlu0 %10679
        %10681 = vadd.xlane.f32.xlu0 %v10350
        %v10682 = vpop.xlane.xlu0 %10681
        %10683 = vadd.xlane.f32.xlu0 %v10357
        %v10684 = vpop.xlane.xlu0 %10683
        %10685 = vadd.xlane.f32.xlu0 %v10364
        %v10686 = vpop.xlane.xlu0 %10685
        %10687 = vadd.xlane.f32.xlu0 %v10371
        %v10688 = vpop.xlane.xlu0 %10687
        %10689 = vadd.xlane.f32.xlu0 %v10378
        %v10690 = vpop.xlane.xlu0 %10689
        %10691 = vadd.xlane.f32.xlu0 %v10385
        %v10692 = vpop.xlane.xlu0 %10691
        %10693 = vadd.xlane.f32.xlu0 %v10392
        %v10694 = vpop.xlane.xlu0 %10693
        %10695 = vadd.xlane.f32.xlu0 %v10399
        %v10696 = vpop.xlane.xlu0 %10695
        %10697 = vadd.xlane.f32.xlu0 %v10406
        %v10698 = vpop.xlane.xlu0 %10697
        %10699 = vadd.xlane.f32.xlu0 %v10413
        %v10700 = vpop.xlane.xlu0 %10699
        %10701 = vadd.xlane.f32.xlu0 %v10420
        %v10702 = vpop.xlane.xlu0 %10701
        %10703 = vadd.xlane.f32.xlu0 %v10427
        %v10704 = vpop.xlane.xlu0 %10703
        %10705 = vadd.xlane.f32.xlu0 %v10434
        %v10706 = vpop.xlane.xlu0 %10705
        %10707 = vadd.xlane.f32.xlu0 %v10441
        %v10708 = vpop.xlane.xlu0 %10707
        %10709 = vadd.xlane.f32.xlu0 %v10448
        %v10710 = vpop.xlane.xlu0 %10709
        %10711 = vadd.xlane.f32.xlu0 %v10455
        %v10712 = vpop.xlane.xlu0 %10711
        %10713 = vadd.xlane.f32.xlu0 %v10462
        %v10714 = vpop.xlane.xlu0 %10713
        %10715 = vadd.xlane.f32.xlu0 %v10469
        %v10716 = vpop.xlane.xlu0 %10715
        %10717 = vadd.xlane.f32.xlu0 %v10476
        %v10718 = vpop.xlane.xlu0 %10717
        %10719 = vadd.xlane.f32.xlu0 %v10483
        %v10720 = vpop.xlane.xlu0 %10719
        %10721 = vadd.xlane.f32.xlu0 %v10490
        %v10722 = vpop.xlane.xlu0 %10721
        %10723 = vadd.xlane.f32.xlu0 %v10497
        %v10724 = vpop.xlane.xlu0 %10723
        %10725 = vadd.xlane.f32.xlu0 %v10504
        %v10726 = vpop.xlane.xlu0 %10725
        %10727 = vadd.xlane.f32.xlu0 %v10511
        %v10728 = vpop.xlane.xlu0 %10727
        %10729 = vadd.xlane.f32.xlu0 %v10518
        %v10730 = vpop.xlane.xlu0 %10729
        %10731 = vadd.xlane.f32.xlu0 %v10525
        %v10732 = vpop.xlane.xlu0 %10731
        %10733 = vadd.xlane.f32.xlu0 %v10532
        %v10734 = vpop.xlane.xlu0 %10733
        %10735 = vadd.xlane.f32.xlu0 %v10539
        %v10736 = vpop.xlane.xlu0 %10735
        %10737 = vadd.xlane.f32.xlu0 %v10546
        %v10738 = vpop.xlane.xlu0 %10737
        %vm10739 = vcmask 7168
        %10740 = vst.msk [vmem:[%s296] sm:$0xff] %vm10739, %v10612
        %10741 = vst.msk [vmem:[%s296 + $0x8] sm:$0xff] %vm10739, %v10614
        %10742 = vst.msk [vmem:[%s296 + $0x10] sm:$0xff] %vm10739, %v10616
        %10743 = vst.msk [vmem:[%s296 + $0x18] sm:$0xff] %vm10739, %v10618
        %10744 = vst.msk [vmem:[%s296 + $0x20] sm:$0xff] %vm10739, %v10620
        %10745 = vst.msk [vmem:[%s296 + $0x28] sm:$0xff] %vm10739, %v10622
        %10746 = vst.msk [vmem:[%s296 + $0x30] sm:$0xff] %vm10739, %v10624
        %10747 = vst.msk [vmem:[%s296 + $0x38] sm:$0xff] %vm10739, %v10626
        %10748 = vst.msk [vmem:[%s296 + $0x40] sm:$0xff] %vm10739, %v10628
        %10749 = vst.msk [vmem:[%s296 + $0x48] sm:$0xff] %vm10739, %v10630
        %10750 = vst.msk [vmem:[%s296 + $0x50] sm:$0xff] %vm10739, %v10632
        %10751 = vst.msk [vmem:[%s296 + $0x58] sm:$0xff] %vm10739, %v10634
        %10752 = vst.msk [vmem:[%s296 + $0x60] sm:$0xff] %vm10739, %v10636
        %10753 = vst.msk [vmem:[%s296 + $0x68] sm:$0xff] %vm10739, %v10638
        %10754 = vst.msk [vmem:[%s296 + $0x70] sm:$0xff] %vm10739, %v10640
        %10755 = vst.msk [vmem:[%s296 + $0x78] sm:$0xff] %vm10739, %v10642
        %10756 = vst.msk [vmem:[%s296 + $0x80] sm:$0xff] %vm10739, %v10644
        %10757 = vst.msk [vmem:[%s296 + $0x88] sm:$0xff] %vm10739, %v10646
        %10758 = vst.msk [vmem:[%s296 + $0x90] sm:$0xff] %vm10739, %v10648
        %10759 = vst.msk [vmem:[%s296 + $0x98] sm:$0xff] %vm10739, %v10650
        %10760 = vst.msk [vmem:[%s296 + $0xa0] sm:$0xff] %vm10739, %v10652
        %10761 = vst.msk [vmem:[%s296 + $0xa8] sm:$0xff] %vm10739, %v10654
        %10762 = vst.msk [vmem:[%s296 + $0xb0] sm:$0xff] %vm10739, %v10656
        %10763 = vst.msk [vmem:[%s296 + $0xb8] sm:$0xff] %vm10739, %v10658
        %10764 = vst.msk [vmem:[%s296 + $0xc0] sm:$0xff] %vm10739, %v10660
        %10765 = vst.msk [vmem:[%s296 + $0xc8] sm:$0xff] %vm10739, %v10662
        %10766 = vst.msk [vmem:[%s296 + $0xd0] sm:$0xff] %vm10739, %v10664
        %10767 = vst.msk [vmem:[%s296 + $0xd8] sm:$0xff] %vm10739, %v10666
        %10768 = vst.msk [vmem:[%s296 + $0xe0] sm:$0xff] %vm10739, %v10668
        %10769 = vst.msk [vmem:[%s296 + $0xe8] sm:$0xff] %vm10739, %v10670
        %10770 = vst.msk [vmem:[%s296 + $0xf0] sm:$0xff] %vm10739, %v10672
        %10771 = vst.msk [vmem:[%s296 + $0xf8] sm:$0xff] %vm10739, %v10674
        %10772 = vst.msk [vmem:[%s296 + $0x100] sm:$0xff] %vm10739, %v10676
        %10773 = vst.msk [vmem:[%s296 + $0x108] sm:$0xff] %vm10739, %v10678
        %10774 = vst.msk [vmem:[%s296 + $0x110] sm:$0xff] %vm10739, %v10680
        %10775 = vst.msk [vmem:[%s296 + $0x118] sm:$0xff] %vm10739, %v10682
        %10776 = vst.msk [vmem:[%s296 + $0x120] sm:$0xff] %vm10739, %v10684
        %10777 = vst.msk [vmem:[%s296 + $0x128] sm:$0xff] %vm10739, %v10686
        %10778 = vst.msk [vmem:[%s296 + $0x130] sm:$0xff] %vm10739, %v10688
        %10779 = vst.msk [vmem:[%s296 + $0x138] sm:$0xff] %vm10739, %v10690
        %10780 = vst.msk [vmem:[%s296 + $0x140] sm:$0xff] %vm10739, %v10692
        %10781 = vst.msk [vmem:[%s296 + $0x148] sm:$0xff] %vm10739, %v10694
        %10782 = vst.msk [vmem:[%s296 + $0x150] sm:$0xff] %vm10739, %v10696
        %10783 = vst.msk [vmem:[%s296 + $0x158] sm:$0xff] %vm10739, %v10698
        %10784 = vst.msk [vmem:[%s296 + $0x160] sm:$0xff] %vm10739, %v10700
        %10785 = vst.msk [vmem:[%s296 + $0x168] sm:$0xff] %vm10739, %v10702
        %10786 = vst.msk [vmem:[%s296 + $0x170] sm:$0xff] %vm10739, %v10704
        %10787 = vst.msk [vmem:[%s296 + $0x178] sm:$0xff] %vm10739, %v10706
        %10788 = vst.msk [vmem:[%s296 + $0x180] sm:$0xff] %vm10739, %v10708
        %10789 = vst.msk [vmem:[%s296 + $0x188] sm:$0xff] %vm10739, %v10710
        %10790 = vst.msk [vmem:[%s296 + $0x190] sm:$0xff] %vm10739, %v10712
        %10791 = vst.msk [vmem:[%s296 + $0x198] sm:$0xff] %vm10739, %v10714
        %10792 = vst.msk [vmem:[%s296 + $0x1a0] sm:$0xff] %vm10739, %v10716
        %10793 = vst.msk [vmem:[%s296 + $0x1a8] sm:$0xff] %vm10739, %v10718
        %10794 = vst.msk [vmem:[%s296 + $0x1b0] sm:$0xff] %vm10739, %v10720
        %10795 = vst.msk [vmem:[%s296 + $0x1b8] sm:$0xff] %vm10739, %v10722
        %10796 = vst.msk [vmem:[%s296 + $0x1c0] sm:$0xff] %vm10739, %v10724
        %10797 = vst.msk [vmem:[%s296 + $0x1c8] sm:$0xff] %vm10739, %v10726
        %10798 = vst.msk [vmem:[%s296 + $0x1d0] sm:$0xff] %vm10739, %v10728
        %10799 = vst.msk [vmem:[%s296 + $0x1d8] sm:$0xff] %vm10739, %v10730
        %10800 = vst.msk [vmem:[%s296 + $0x1e0] sm:$0xff] %vm10739, %v10732
        %10801 = vst.msk [vmem:[%s296 + $0x1e8] sm:$0xff] %vm10739, %v10734
        %10802 = vst.msk [vmem:[%s296 + $0x1f0] sm:$0xff] %vm10739, %v10736
        %10803 = vst.msk [vmem:[%s296 + $0x1f8] sm:$0xff] %vm10739, %v10738
        %s10804 = smul.u32 64, %s22
        %p10805 = scmp.lt.s32.totalorder %s10804, 255
        %s10806 = scalar_select %p10805, %s10804, 255
        %s10807 = smul.addr %s10806, 8
        %s10808 = scalar_lea.vmem %s4, %s10807
        // Predicated region
        $region53: #{tpu_custom_call.1} parent=35 // pred_check
          %p10809 = pneg %p134
        $region54: #{tpu_custom_call.1} parent=35 // pred_check_branch
          %10811 = sbr.rel (%p10809) target = $region56
        $region55: #{tpu_custom_call.1} parent=35 // pred_region
          %s10812 = smul.u32 64, %s22
        $region56: #{tpu_custom_call.1} parent=35 // pred_fallthru
          _
      $region36: #{tpu_custom_call.1} parent=5 // pred_fallthru
        _
      %p10813 = scmp.le.s32.totalorder 2, %s17
      // Predicated region
      $region57: #{tpu_custom_call.1} parent=5 // pred_check
        %p10814 = pneg %p10813
      $region58: #{tpu_custom_call.1} parent=5 // pred_check_branch
        %10816 = sbr.rel (%p10814) target = $region60
      $region59: #{tpu_custom_call.1} parent=5 // pred_region
        %s10817 = ssub.s32 %s17, 2
        // Predicated region
        $region61: #{tpu_custom_call.1} parent=59 // pred_check
          %p10818 = pneg %p140
        $region62: #{tpu_custom_call.1} parent=59 // pred_check_branch
          %10820 = sbr.rel (%p10818) target = $region64
        $region63: #{tpu_custom_call.1} parent=59 // pred_region
          %s10821 = smul.u32 64, %s23
          %p10822 = scmp.lt.s32.totalorder %s10821, 255
          %s10823 = scalar_select %p10822, %s10821, 255
          %s10824 = smul.addr %s10823, 8
          %s10825 = scalar_lea.vmem %s4, %s10824
        $region64: #{tpu_custom_call.1} parent=59 // pred_fallthru
          _
      $region60: #{tpu_custom_call.1} parent=5 // pred_fallthru
        _
    $region6: #{tpu_custom_call.1} parent=1 // loop_footer
      %s21 = sadd.s32 1, %s17
    $region7: #{tpu_custom_call.1} parent=1 // loop_footer_branch
      %16 = sbr.rel target = $region3
    $region8: #{tpu_custom_call.1} parent=1 // loop_exit
      _
    %10826 = vsyncpa [#allocation3], 1
    %s10827 = scalar_lea.sflag [#allocation3], 1
    %10828 = vsyncpa %s10827, 1
    %10829 = vsyncpa [#allocation5], 1
    %s10830 = scalar_lea.sflag [#allocation5], 1
    %10831 = vsyncpa %s10830, 1
    %10832 = vsyncpa [#allocation8], 1

</llo_original>
